<compile_context>
chip_gen: v5e
topology: v5e:2x2
jax: 0.10.0
libtpu: 0.0.40
codegen_flags: <defaults>
</compile_context>

<pallas_src>
import jax
import jax.numpy as jnp
from jax.experimental import pallas as pl
from jax.experimental.pallas import tpu as pltpu

C_IN = 100       # input channels
C1 = 200         # conv_1 output channels
C2 = 400         # conv_2 output channels
LIN_IN = 1200    # = C2 * 3 time steps after the second pool
LIN_OUT = 900    # = 30 * 30
PAD = 2          # Conv1d padding (both sides)
NEG_SLOPE = 0.1  # LeakyReLU slope

# lane-aligned padded sizes used by the kernel (zero-filled padding -> exact)
CP = 128         # C_IN  100 -> 128
C1P = 256        # C1    200 -> 256
LOUT_P = 1024    # LIN_OUT 900 -> 1024


def _conv_out_len(l):
    # Conv1d(k=2, padding=2): L -> L + 2*PAD - 1
    return l + 2 * PAD - 1


def cmr_kernel(x_ref, w1_ref, b1_ref, w2_ref, b2_ref, wl_ref, bl_ref,
               o_ref, a2_ref):
    """Fused forward for one batch tile.

    x_ref  : (1, l_out1*tb, 2*CP) bf16  pre-padded, tap-fused conv_1 input
    w1_ref : (2*CP, C1P)   bf16 ; b1_ref : (1, C1P)  f32
    w2_ref : (2*C1P, C2)   bf16 ; b2_ref : (1, C2)   f32
    wl_ref : (l2, C2, LOUT_P) bf16 ; bl_ref : (1, LOUT_P) f32
    o_ref  : (tb, LOUT_P) f32
    a2_ref : ((l1+3)*tb, 2*C1P) bf16 scratch (tap-fused conv_2 input)
    """
    tb = o_ref.shape[0]
    l_out1 = x_ref.shape[1] // tb
    l1 = l_out1 // 2                      # MaxPool1d(2) drops the odd tail
    l2 = wl_ref.shape[0]

    # ---- conv_1: one fused-tap MXU matmul (K = 2*CP = 256) -----------------
    y1 = jnp.dot(x_ref[0], w1_ref[...], preferred_element_type=jnp.float32)
    y1 = y1 + b1_ref[...]
    y1 = jnp.maximum(y1, NEG_SLOPE * y1)              # LeakyReLU(0.1)

    # ---- MaxPool1d(2) + build fused conv_2 input directly in bf16 scratch --
    zero_blk = jnp.zeros((tb, C1P), jnp.bfloat16)
    for j in range(l1):
        p = jnp.maximum(y1[(2 * j) * tb:(2 * j + 1) * tb],
                        y1[(2 * j + 1) * tb:(2 * j + 2) * tb])
        p = p.astype(jnp.bfloat16)                    # cast once per block
        # tap 0 of conv_2 output position t = j + PAD
        a2_ref[(j + PAD) * tb:(j + PAD + 1) * tb, 0:C1P] = p
        # tap 1 of conv_2 output position t = j + PAD - 1
        a2_ref[(j + PAD - 1) * tb:(j + PAD) * tb, C1P:2 * C1P] = p
    for t in (0, 1, l1 + PAD):                        # zero-pad rows, tap 0
        a2_ref[t * tb:(t + 1) * tb, 0:C1P] = zero_blk
    for t in (0, l1 + 1, l1 + PAD):                   # zero-pad rows, tap 1
        a2_ref[t * tb:(t + 1) * tb, C1P:2 * C1P] = zero_blk

    # ---- conv_2: one fused-tap MXU matmul (K = 2*C1P = 512) ----------------
    y2 = jnp.dot(a2_ref[...], w2_ref[...], preferred_element_type=jnp.float32)
    y2 = y2 + b2_ref[...]
    y2 = jnp.maximum(y2, NEG_SLOPE * y2)              # LeakyReLU(0.1)

    # ---- MaxPool1d(2) + Linear(1200, 900) (PyTorch flatten order) + ReLU ---
    acc = bl_ref[...]
    for t in range(l2):
        h2 = jnp.maximum(y2[(2 * t) * tb:(2 * t + 1) * tb],
                         y2[(2 * t + 1) * tb:(2 * t + 2) * tb])
        acc = acc + jnp.dot(h2.astype(jnp.bfloat16), wl_ref[t],
                            preferred_element_type=jnp.float32)
    o_ref[...] = jnp.maximum(acc, 0.0)


def init_params(key):
    """Deterministic xavier-uniform init with PyTorch-layout parameter tensors."""
    def xavier(k, shape, fan_in, fan_out, scale=1.0):
        limit = jnp.sqrt(6.0 / (fan_in + fan_out)) * scale
        return jax.random.uniform(k, shape, jnp.float32, -limit, limit)

    k1, k2, k3, k4, k5, k6 = jax.random.split(key, 6)
    w1 = xavier(k1, (C1, C_IN, 2), C_IN * 2, C1 * 2)      # Conv1d (out, in, k)
    b1 = xavier(k2, (C1,), C_IN * 2, C1 * 2, 0.1)
    w2 = xavier(k3, (C2, C1, 2), C1 * 2, C2 * 2)
    b2 = xavier(k4, (C2,), C1 * 2, C2 * 2, 0.1)
    wl = xavier(k5, (LIN_OUT, LIN_IN), LIN_IN, LIN_OUT)   # Linear (out, in)
    bl = xavier(k6, (LIN_OUT,), LIN_IN, LIN_OUT, 0.1)
    return (w1, b1), (w2, b2), (wl, bl)


def coulomb_matrix_rebuilder(x, params, *, batch_tile=256):
    """x: (B, 100, L) float -> (B, 30, 30) float32."""
    (w1, b1), (w2, b2), (wl, bl) = params
    x = jnp.asarray(x, jnp.float32)
    B, c_in, L = x.shape
    assert c_in == C_IN, c_in
    l_out1 = _conv_out_len(L)
    l1 = l_out1 // 2
    l_out2 = _conv_out_len(l1)
    l2 = l_out2 // 2
    assert C2 * l2 == LIN_IN, (
        f"input length {L} is incompatible with Linear({LIN_IN}, {LIN_OUT})")

    # ---- batch tile: multiple of 16 (bf16 packing), >= 2 grid steps for
    # large B (2-TC sharding), capped at 512 for v7x's 64 MiB VMEM.
    tb = min(int(batch_tile), max(16, -(-B // 2)))
    tb = -(-tb // 16) * 16
    tb = min(tb, 512)
    b_pad = -(-B // tb) * tb
    n_tiles = b_pad // tb

    # ---- input layout plumbing (wrapper / XLA side):
    #  pad channels 100->128 and time with PAD zero steps, fuse the two conv_1
    #  taps along the lane axis, cast to bf16, tile-major flatten.
    xp = jnp.pad(x, ((0, b_pad - B), (0, CP - C_IN), (PAD, PAD)))
    xf = jnp.concatenate([xp[:, :, 0:l_out1], xp[:, :, 1:l_out1 + 1]], axis=1)
    xt = jnp.transpose(xf, (2, 0, 1)).astype(jnp.bfloat16)  # (l_out1, b_pad, 2CP)
    xt = xt.reshape(l_out1, n_tiles, tb, 2 * CP).transpose(1, 0, 2, 3)
    xt = xt.reshape(n_tiles, l_out1 * tb, 2 * CP)

    # ---- kernel-layout weights: tap-fused, zero-padded, bf16 for the MXU ---
    w1f = jnp.zeros((2 * CP, C1P), jnp.float32)
    w1f = w1f.at[0:C_IN, 0:C1].set(w1[:, :, 0].T)
    w1f = w1f.at[CP:CP + C_IN, 0:C1].set(w1[:, :, 1].T)
    w1f = w1f.astype(jnp.bfloat16)
    b1k = jnp.zeros((1, C1P), jnp.float32).at[0, 0:C1].set(b1)

    w2f = jnp.zeros((2 * C1P, C2), jnp.float32)
    w2f = w2f.at[0:C1, :].set(w2[:, :, 0].T)
    w2f = w2f.at[C1P:C1P + C1, :].set(w2[:, :, 1].T)
    w2f = w2f.astype(jnp.bfloat16)
    b2k = jnp.asarray(b2, jnp.float32).reshape(1, C2)

    # PyTorch flatten order of (B, C2, l2) is index c*l2 + t.
    wl3 = jnp.asarray(wl, jnp.float32).reshape(LIN_OUT, C2, l2)
    wlk = jnp.zeros((l2, C2, LOUT_P), jnp.float32)
    wlk = wlk.at[:, :, 0:LIN_OUT].set(jnp.transpose(wl3, (2, 1, 0)))
    wlk = wlk.astype(jnp.bfloat16)
    blk = jnp.zeros((1, LOUT_P), jnp.float32).at[0, 0:LIN_OUT].set(bl)

    const2 = lambda i: (0, 0)
    in_specs = [
        pl.BlockSpec((1, l_out1 * tb, 2 * CP), lambda i: (i, 0, 0)),
        pl.BlockSpec((2 * CP, C1P), const2),
        pl.BlockSpec((1, C1P), const2),
        pl.BlockSpec((2 * C1P, C2), const2),
        pl.BlockSpec((1, C2), const2),
        pl.BlockSpec((l2, C2, LOUT_P), lambda i: (0, 0, 0)),
        pl.BlockSpec((1, LOUT_P), const2),
    ]
    out_spec = pl.BlockSpec((tb, LOUT_P), lambda i: (i, 0))

    flops_per_row = (l_out1 * 2 * (2 * CP) * C1P
                     + l_out2 * 2 * (2 * C1P) * C2
                     + l2 * 2 * C2 * LOUT_P)
    bytes_accessed = (xt.size * 2 + b_pad * LOUT_P * 4
                      + 2 * (w1f.size + w2f.size + wlk.size)
                      + 4 * (b1k.size + b2k.size + blk.size))
    cost = pl.CostEstimate(flops=b_pad * flops_per_row, transcendentals=0,
                           bytes_accessed=int(bytes_accessed))

    out = pl.pallas_call(
        cmr_kernel,
        out_shape=jax.ShapeDtypeStruct((b_pad, LOUT_P), jnp.float32),
        grid_spec=pltpu.PrefetchScalarGridSpec(
            num_scalar_prefetch=0,
            grid=(n_tiles,),
            in_specs=in_specs,
            out_specs=out_spec,
            scratch_shapes=[pltpu.VMEM((l_out2 * tb, 2 * C1P), jnp.bfloat16)],
        ),
        compiler_params=pltpu.CompilerParams(
            dimension_semantics=("parallel",),
            vmem_limit_bytes=48 * 1024 * 1024,
        ),
        cost_estimate=cost,
    )(xt, w1f, b1k, w2f, b2k, wlk, blk)

    return out[:B, :LIN_OUT].reshape(B, 30, 30)


def reference_forward(x, params):
    """Pure-jnp f32 reference of the PyTorch module forward."""
    (w1, b1), (w2, b2), (wl, bl) = params
    x = jnp.asarray(x, jnp.float32)

    def conv_lrelu_pool(h, w, b):
        bsz, _, l = h.shape
        hp = jnp.pad(h, ((0, 0), (0, 0), (PAD, PAD)))
        l_out = l + 2 * PAD - 1
        y = (jnp.einsum("bct,oc->bot", hp[:, :, 0:l_out], w[:, :, 0])
             + jnp.einsum("bct,oc->bot", hp[:, :, 1:l_out + 1], w[:, :, 1])
             + b[None, :, None])
        y = jnp.where(y > 0, y, NEG_SLOPE * y)
        l_pool = l_out // 2
        return y[:, :, :2 * l_pool].reshape(bsz, -1, l_pool, 2).max(axis=-1)

    h = conv_lrelu_pool(x, w1, b1)
    h = conv_lrelu_pool(h, w2, b2)
    bsz = h.shape[0]
    flat = h.reshape(bsz, -1)                      # (B, 400*3), channel-major
    out = jnp.maximum(flat @ wl.T + bl, 0.0)
    return out.reshape(bsz, 30, 30)


if __name__ == "__main__":
    key = jax.random.PRNGKey(0)
    key, xk, pk = jax.random.split(key, 3)

    batch, length = 4, 6          # (B, 100, 6) -> flatten 1200 -> Linear(1200, 900)
    x = jax.random.normal(xk, (batch, C_IN, length), jnp.float32)
    params = init_params(pk)

    out = coulomb_matrix_rebuilder(x, params)
    out = jax.block_until_ready(out)

    assert out.shape == (batch, 30, 30), out.shape
    assert out.dtype == jnp.float32, out.dtype

    ref = reference_forward(x, params)
    # bf16 MXU operands with f32 accumulation -> small drift vs f32 reference.
    assert jnp.allclose(out, ref, rtol=5e-2, atol=5e-2), \
        float(jnp.max(jnp.abs(out - ref)))

    print("KERNEL_OK")
</pallas_src>

<mosaic_0001>
module attributes {stable_mosaic.version = 11 : i64} {
  func.func @cmr_kernel(%arg0: i32, %arg1: memref<1x144x256xbf16, #tpu.memory_space<vmem>>, %arg2: memref<256x256xbf16, #tpu.memory_space<vmem>>, %arg3: memref<1x256xf32, #tpu.memory_space<vmem>>, %arg4: memref<512x400xbf16, #tpu.memory_space<vmem>>, %arg5: memref<1x400xf32, #tpu.memory_space<vmem>>, %arg6: memref<3x400x1024xbf16, #tpu.memory_space<vmem>>, %arg7: memref<1x1024xf32, #tpu.memory_space<vmem>>, %arg8: memref<16x1024xf32, #tpu.memory_space<vmem>>, %arg9: memref<112x512xbf16, #tpu.memory_space<vmem>>) attributes {dimension_semantics = [#tpu.dimension_semantics<parallel>], iteration_bounds = array<i64: 1>, scalar_prefetch = 0 : i64, scratch_operands = 1 : i64, tpu.core_type = #tpu.core_type<tc>, window_params = [{transform_indices = @transform_0, window_bounds = array<i64: 1, 144, 256>}, {pipeline_mode = #tpu.pipeline_mode<synchronous>, transform_indices = @transform_1, window_bounds = array<i64: 256, 256>}, {pipeline_mode = #tpu.pipeline_mode<synchronous>, transform_indices = @transform_2, window_bounds = array<i64: 1, 256>}, {pipeline_mode = #tpu.pipeline_mode<synchronous>, transform_indices = @transform_3, window_bounds = array<i64: 512, 400>}, {pipeline_mode = #tpu.pipeline_mode<synchronous>, transform_indices = @transform_4, window_bounds = array<i64: 1, 400>}, {pipeline_mode = #tpu.pipeline_mode<synchronous>, transform_indices = @transform_5, window_bounds = array<i64: 3, 400, 1024>}, {pipeline_mode = #tpu.pipeline_mode<synchronous>, transform_indices = @transform_6, window_bounds = array<i64: 1, 1024>}, {transform_indices = @transform_7, window_bounds = array<i64: 16, 1024>}]} {
    %c0 = arith.constant 0 : index
    %c0_0 = arith.constant 0 : index
    %c0_1 = arith.constant 0 : index
    %0 = vector.load %arg1[%c0, %c0_0, %c0_1] : memref<1x144x256xbf16, #tpu.memory_space<vmem>>, vector<1x144x256xbf16>
    %1 = vector.shape_cast %0 : vector<1x144x256xbf16> to vector<144x256xbf16>
    %c0_2 = arith.constant 0 : index
    %c0_3 = arith.constant 0 : index
    %2 = vector.load %arg2[%c0_2, %c0_3] : memref<256x256xbf16, #tpu.memory_space<vmem>>, vector<256x256xbf16>
    %cst = arith.constant dense<0.000000e+00> : vector<144x256xf32>
    %3 = tpu.matmul %1, %2, %cst {dimension_numbers = #tpu.dot_dimension_numbers<[1], [0], [0], [1], [0, 0, 1, 1], [], []>} : vector<144x256xbf16>, vector<256x256xbf16>, vector<144x256xf32> -> vector<144x256xf32>
    %c0_4 = arith.constant 0 : index
    %c0_5 = arith.constant 0 : index
    %4 = vector.load %arg3[%c0_4, %c0_5] : memref<1x256xf32, #tpu.memory_space<vmem>>, vector<1x256xf32>
    %5 = vector.broadcast %4 : vector<1x256xf32> to vector<144x256xf32>
    %6 = arith.addf %3, %5 : vector<144x256xf32>
    %cst_6 = arith.constant 1.000000e-01 : f32
    %7 = vector.broadcast %cst_6 : f32 to vector<144x256xf32>
    %8 = arith.mulf %7, %6 : vector<144x256xf32>
    %9 = arith.maximumf %6, %8 : vector<144x256xf32>
    %cst_7 = arith.constant 0.000000e+00 : bf16
    %10 = vector.broadcast %cst_7 : bf16 to vector<16x256xbf16>
    %11 = vector.extract_strided_slice %9 {offsets = [0, 0], sizes = [16, 256], strides = [1, 1]} : vector<144x256xf32> to vector<16x256xf32>
    %12 = vector.extract_strided_slice %9 {offsets = [16, 0], sizes = [16, 256], strides = [1, 1]} : vector<144x256xf32> to vector<16x256xf32>
    %13 = arith.maximumf %11, %12 : vector<16x256xf32>
    %14 = arith.truncf %13 : vector<16x256xf32> to vector<16x256xbf16>
    %c32 = arith.constant 32 : index
    %c0_8 = arith.constant 0 : index
    %15 = vector.load %arg9[%c32, %c0_8] : memref<112x512xbf16, #tpu.memory_space<vmem>>, vector<16x256xbf16>
    tpu.vector_store %arg9[%c32, %c0_8], %14 {strides = array<i32>} : memref<112x512xbf16, #tpu.memory_space<vmem>>, vector<16x256xbf16>,
    %c16 = arith.constant 16 : index
    %c256 = arith.constant 256 : index
    %16 = vector.load %arg9[%c16, %c256] : memref<112x512xbf16, #tpu.memory_space<vmem>>, vector<16x256xbf16>
    tpu.vector_store %arg9[%c16, %c256], %14 {strides = array<i32>} : memref<112x512xbf16, #tpu.memory_space<vmem>>, vector<16x256xbf16>,
    %17 = vector.extract_strided_slice %9 {offsets = [32, 0], sizes = [16, 256], strides = [1, 1]} : vector<144x256xf32> to vector<16x256xf32>
    %18 = vector.extract_strided_slice %9 {offsets = [48, 0], sizes = [16, 256], strides = [1, 1]} : vector<144x256xf32> to vector<16x256xf32>
    %19 = arith.maximumf %17, %18 : vector<16x256xf32>
    %20 = arith.truncf %19 : vector<16x256xf32> to vector<16x256xbf16>
    %c48 = arith.constant 48 : index
    %c0_9 = arith.constant 0 : index
    %21 = vector.load %arg9[%c48, %c0_9] : memref<112x512xbf16, #tpu.memory_space<vmem>>, vector<16x256xbf16>
    tpu.vector_store %arg9[%c48, %c0_9], %20 {strides = array<i32>} : memref<112x512xbf16, #tpu.memory_space<vmem>>, vector<16x256xbf16>,
    %c32_10 = arith.constant 32 : index
    %c256_11 = arith.constant 256 : index
    %22 = vector.load %arg9[%c32_10, %c256_11] : memref<112x512xbf16, #tpu.memory_space<vmem>>, vector<16x256xbf16>
    tpu.vector_store %arg9[%c32_10, %c256_11], %20 {strides = array<i32>} : memref<112x512xbf16, #tpu.memory_space<vmem>>, vector<16x256xbf16>,
    %23 = vector.extract_strided_slice %9 {offsets = [64, 0], sizes = [16, 256], strides = [1, 1]} : vector<144x256xf32> to vector<16x256xf32>
    %24 = vector.extract_strided_slice %9 {offsets = [80, 0], sizes = [16, 256], strides = [1, 1]} : vector<144x256xf32> to vector<16x256xf32>
    %25 = arith.maximumf %23, %24 : vector<16x256xf32>
    %26 = arith.truncf %25 : vector<16x256xf32> to vector<16x256xbf16>
    %c64 = arith.constant 64 : index
    %c0_12 = arith.constant 0 : index
    %27 = vector.load %arg9[%c64, %c0_12] : memref<112x512xbf16, #tpu.memory_space<vmem>>, vector<16x256xbf16>
    tpu.vector_store %arg9[%c64, %c0_12], %26 {strides = array<i32>} : memref<112x512xbf16, #tpu.memory_space<vmem>>, vector<16x256xbf16>,
    %c48_13 = arith.constant 48 : index
    %c256_14 = arith.constant 256 : index
    %28 = vector.load %arg9[%c48_13, %c256_14] : memref<112x512xbf16, #tpu.memory_space<vmem>>, vector<16x256xbf16>
    tpu.vector_store %arg9[%c48_13, %c256_14], %26 {strides = array<i32>} : memref<112x512xbf16, #tpu.memory_space<vmem>>, vector<16x256xbf16>,
    %29 = vector.extract_strided_slice %9 {offsets = [96, 0], sizes = [16, 256], strides = [1, 1]} : vector<144x256xf32> to vector<16x256xf32>
    %30 = vector.extract_strided_slice %9 {offsets = [112, 0], sizes = [16, 256], strides = [1, 1]} : vector<144x256xf32> to vector<16x256xf32>
    %31 = arith.maximumf %29, %30 : vector<16x256xf32>
    %32 = arith.truncf %31 : vector<16x256xf32> to vector<16x256xbf16>
    %c80 = arith.constant 80 : index
    %c0_15 = arith.constant 0 : index
    %33 = vector.load %arg9[%c80, %c0_15] : memref<112x512xbf16, #tpu.memory_space<vmem>>, vector<16x256xbf16>
    tpu.vector_store %arg9[%c80, %c0_15], %32 {strides = array<i32>} : memref<112x512xbf16, #tpu.memory_space<vmem>>, vector<16x256xbf16>,
    %c64_16 = arith.constant 64 : index
    %c256_17 = arith.constant 256 : index
    %34 = vector.load %arg9[%c64_16, %c256_17] : memref<112x512xbf16, #tpu.memory_space<vmem>>, vector<16x256xbf16>
    tpu.vector_store %arg9[%c64_16, %c256_17], %32 {strides = array<i32>} : memref<112x512xbf16, #tpu.memory_space<vmem>>, vector<16x256xbf16>,
    %c0_18 = arith.constant 0 : index
    %c0_19 = arith.constant 0 : index
    %35 = vector.load %arg9[%c0_18, %c0_19] : memref<112x512xbf16, #tpu.memory_space<vmem>>, vector<16x256xbf16>
    tpu.vector_store %arg9[%c0_18, %c0_19], %10 {strides = array<i32>} : memref<112x512xbf16, #tpu.memory_space<vmem>>, vector<16x256xbf16>,
    %c16_20 = arith.constant 16 : index
    %c0_21 = arith.constant 0 : index
    %36 = vector.load %arg9[%c16_20, %c0_21] : memref<112x512xbf16, #tpu.memory_space<vmem>>, vector<16x256xbf16>
    tpu.vector_store %arg9[%c16_20, %c0_21], %10 {strides = array<i32>} : memref<112x512xbf16, #tpu.memory_space<vmem>>, vector<16x256xbf16>,
    %c96 = arith.constant 96 : index
    %c0_22 = arith.constant 0 : index
    %37 = vector.load %arg9[%c96, %c0_22] : memref<112x512xbf16, #tpu.memory_space<vmem>>, vector<16x256xbf16>
    tpu.vector_store %arg9[%c96, %c0_22], %10 {strides = array<i32>} : memref<112x512xbf16, #tpu.memory_space<vmem>>, vector<16x256xbf16>,
    %c0_23 = arith.constant 0 : index
    %c256_24 = arith.constant 256 : index
    %38 = vector.load %arg9[%c0_23, %c256_24] : memref<112x512xbf16, #tpu.memory_space<vmem>>, vector<16x256xbf16>
    tpu.vector_store %arg9[%c0_23, %c256_24], %10 {strides = array<i32>} : memref<112x512xbf16, #tpu.memory_space<vmem>>, vector<16x256xbf16>,
    %c80_25 = arith.constant 80 : index
    %c256_26 = arith.constant 256 : index
    %39 = vector.load %arg9[%c80_25, %c256_26] : memref<112x512xbf16, #tpu.memory_space<vmem>>, vector<16x256xbf16>
    tpu.vector_store %arg9[%c80_25, %c256_26], %10 {strides = array<i32>} : memref<112x512xbf16, #tpu.memory_space<vmem>>, vector<16x256xbf16>,
    %c96_27 = arith.constant 96 : index
    %c256_28 = arith.constant 256 : index
    %40 = vector.load %arg9[%c96_27, %c256_28] : memref<112x512xbf16, #tpu.memory_space<vmem>>, vector<16x256xbf16>
    tpu.vector_store %arg9[%c96_27, %c256_28], %10 {strides = array<i32>} : memref<112x512xbf16, #tpu.memory_space<vmem>>, vector<16x256xbf16>,
    %c0_29 = arith.constant 0 : index
    %c0_30 = arith.constant 0 : index
    %41 = vector.load %arg9[%c0_29, %c0_30] : memref<112x512xbf16, #tpu.memory_space<vmem>>, vector<112x512xbf16>
    %c0_31 = arith.constant 0 : index
    %c0_32 = arith.constant 0 : index
    %42 = vector.load %arg4[%c0_31, %c0_32] : memref<512x400xbf16, #tpu.memory_space<vmem>>, vector<512x400xbf16>
    %cst_33 = arith.constant dense<0.000000e+00> : vector<112x400xf32>
    %43 = tpu.matmul %41, %42, %cst_33 {dimension_numbers = #tpu.dot_dimension_numbers<[1], [0], [0], [1], [0, 0, 1, 1], [], []>} : vector<112x512xbf16>, vector<512x400xbf16>, vector<112x400xf32> -> vector<112x400xf32>
    %c0_34 = arith.constant 0 : index
    %c0_35 = arith.constant 0 : index
    %44 = vector.load %arg5[%c0_34, %c0_35] : memref<1x400xf32, #tpu.memory_space<vmem>>, vector<1x400xf32>
    %45 = vector.broadcast %44 : vector<1x400xf32> to vector<112x400xf32>
    %46 = arith.addf %43, %45 : vector<112x400xf32>
    %cst_36 = arith.constant 1.000000e-01 : f32
    %47 = vector.broadcast %cst_36 : f32 to vector<112x400xf32>
    %48 = arith.mulf %47, %46 : vector<112x400xf32>
    %49 = arith.maximumf %46, %48 : vector<112x400xf32>
    %c0_37 = arith.constant 0 : index
    %c0_38 = arith.constant 0 : index
    %50 = vector.load %arg7[%c0_37, %c0_38] : memref<1x1024xf32, #tpu.memory_space<vmem>>, vector<1x1024xf32>
    %51 = vector.extract_strided_slice %49 {offsets = [0, 0], sizes = [16, 400], strides = [1, 1]} : vector<112x400xf32> to vector<16x400xf32>
    %52 = vector.extract_strided_slice %49 {offsets = [16, 0], sizes = [16, 400], strides = [1, 1]} : vector<112x400xf32> to vector<16x400xf32>
    %53 = arith.maximumf %51, %52 : vector<16x400xf32>
    %54 = arith.truncf %53 : vector<16x400xf32> to vector<16x400xbf16>
    %c0_39 = arith.constant 0 : index
    %c0_40 = arith.constant 0 : index
    %c0_41 = arith.constant 0 : index
    %55 = vector.load %arg6[%c0_39, %c0_40, %c0_41] : memref<3x400x1024xbf16, #tpu.memory_space<vmem>>, vector<1x400x1024xbf16>
    %56 = vector.shape_cast %55 : vector<1x400x1024xbf16> to vector<400x1024xbf16>
    %cst_42 = arith.constant dense<0.000000e+00> : vector<16x1024xf32>
    %57 = tpu.matmul %54, %56, %cst_42 {dimension_numbers = #tpu.dot_dimension_numbers<[1], [0], [0], [1], [0, 0, 1, 1], [], []>} : vector<16x400xbf16>, vector<400x1024xbf16>, vector<16x1024xf32> -> vector<16x1024xf32>
    %58 = vector.broadcast %50 : vector<1x1024xf32> to vector<16x1024xf32>
    %59 = arith.addf %58, %57 : vector<16x1024xf32>
    %60 = vector.extract_strided_slice %49 {offsets = [32, 0], sizes = [16, 400], strides = [1, 1]} : vector<112x400xf32> to vector<16x400xf32>
    %61 = vector.extract_strided_slice %49 {offsets = [48, 0], sizes = [16, 400], strides = [1, 1]} : vector<112x400xf32> to vector<16x400xf32>
    %62 = arith.maximumf %60, %61 : vector<16x400xf32>
    %63 = arith.truncf %62 : vector<16x400xf32> to vector<16x400xbf16>
    %c1 = arith.constant 1 : index
    %c0_43 = arith.constant 0 : index
    %c0_44 = arith.constant 0 : index
    %64 = vector.load %arg6[%c1, %c0_43, %c0_44] : memref<3x400x1024xbf16, #tpu.memory_space<vmem>>, vector<1x400x1024xbf16>
    %65 = vector.shape_cast %64 : vector<1x400x1024xbf16> to vector<400x1024xbf16>
    %cst_45 = arith.constant dense<0.000000e+00> : vector<16x1024xf32>
    %66 = tpu.matmul %63, %65, %cst_45 {dimension_numbers = #tpu.dot_dimension_numbers<[1], [0], [0], [1], [0, 0, 1, 1], [], []>} : vector<16x400xbf16>, vector<400x1024xbf16>, vector<16x1024xf32> -> vector<16x1024xf32>
    %67 = arith.addf %59, %66 : vector<16x1024xf32>
    %68 = vector.extract_strided_slice %49 {offsets = [64, 0], sizes = [16, 400], strides = [1, 1]} : vector<112x400xf32> to vector<16x400xf32>
    %69 = vector.extract_strided_slice %49 {offsets = [80, 0], sizes = [16, 400], strides = [1, 1]} : vector<112x400xf32> to vector<16x400xf32>
    %70 = arith.maximumf %68, %69 : vector<16x400xf32>
    %71 = arith.truncf %70 : vector<16x400xf32> to vector<16x400xbf16>
    %c2 = arith.constant 2 : index
    %c0_46 = arith.constant 0 : index
    %c0_47 = arith.constant 0 : index
    %72 = vector.load %arg6[%c2, %c0_46, %c0_47] : memref<3x400x1024xbf16, #tpu.memory_space<vmem>>, vector<1x400x1024xbf16>
    %73 = vector.shape_cast %72 : vector<1x400x1024xbf16> to vector<400x1024xbf16>
    %cst_48 = arith.constant dense<0.000000e+00> : vector<16x1024xf32>
    %74 = tpu.matmul %71, %73, %cst_48 {dimension_numbers = #tpu.dot_dimension_numbers<[1], [0], [0], [1], [0, 0, 1, 1], [], []>} : vector<16x400xbf16>, vector<400x1024xbf16>, vector<16x1024xf32> -> vector<16x1024xf32>
    %75 = arith.addf %67, %74 : vector<16x1024xf32>
    %cst_49 = arith.constant 0.000000e+00 : f32
    %76 = vector.broadcast %cst_49 : f32 to vector<16x1024xf32>
    %77 = arith.maximumf %75, %76 : vector<16x1024xf32>
    %c0_50 = arith.constant 0 : index
    %c0_51 = arith.constant 0 : index
    %78 = vector.load %arg8[%c0_50, %c0_51] : memref<16x1024xf32, #tpu.memory_space<vmem>>, vector<16x1024xf32>
    tpu.vector_store %arg8[%c0_50, %c0_51], %77 {strides = array<i32>} : memref<16x1024xf32, #tpu.memory_space<vmem>>, vector<16x1024xf32>,
    return
  }
  func.func @transform_0(%arg0: i32) -> (i32, i32, i32) {
    %c0_i32 = arith.constant 0 : i32
    %c0_i32_0 = arith.constant 0 : i32
    %c0_i32_1 = arith.constant 0 : i32
    return %arg0, %c0_i32, %c0_i32_0 : i32, i32, i32
  }
  func.func @transform_1(%arg0: i32) -> (i32, i32) {
    %c0_i32 = arith.constant 0 : i32
    %c0_i32_0 = arith.constant 0 : i32
    %c0_i32_1 = arith.constant 0 : i32
    return %c0_i32, %c0_i32_0 : i32, i32
  }
  func.func @transform_2(%arg0: i32) -> (i32, i32) {
    %c0_i32 = arith.constant 0 : i32
    %c0_i32_0 = arith.constant 0 : i32
    %c0_i32_1 = arith.constant 0 : i32
    return %c0_i32, %c0_i32_0 : i32, i32
  }
  func.func @transform_3(%arg0: i32) -> (i32, i32) {
    %c0_i32 = arith.constant 0 : i32
    %c0_i32_0 = arith.constant 0 : i32
    %c0_i32_1 = arith.constant 0 : i32
    return %c0_i32, %c0_i32_0 : i32, i32
  }
  func.func @transform_4(%arg0: i32) -> (i32, i32) {
    %c0_i32 = arith.constant 0 : i32
    %c0_i32_0 = arith.constant 0 : i32
    %c0_i32_1 = arith.constant 0 : i32
    return %c0_i32, %c0_i32_0 : i32, i32
  }
  func.func @transform_5(%arg0: i32) -> (i32, i32, i32) {
    %c0_i32 = arith.constant 0 : i32
    %c0_i32_0 = arith.constant 0 : i32
    %c0_i32_1 = arith.constant 0 : i32
    %c0_i32_2 = arith.constant 0 : i32
    return %c0_i32, %c0_i32_0, %c0_i32_1 : i32, i32, i32
  }
  func.func @transform_6(%arg0: i32) -> (i32, i32) {
    %c0_i32 = arith.constant 0 : i32
    %c0_i32_0 = arith.constant 0 : i32
    %c0_i32_1 = arith.constant 0 : i32
    return %c0_i32, %c0_i32_0 : i32, i32
  }
  func.func @transform_7(%arg0: i32) -> (i32, i32) {
    %c0_i32 = arith.constant 0 : i32
    %c0_i32_0 = arith.constant 0 : i32
    return %arg0, %c0_i32 : i32, i32
  }
}

</mosaic_0001>

<llo_original>
// kernel: tpu_custom_call.1
$region0: #{tpu_custom_call.1}
  #allocation0 [shape = 'u32[]', space=smem, size = 0x4, offset = 0x4, fixed_abs, tag = 'smem constant byte address 0x4 - core index']
  #allocation1 [shape = 'u32[72,128]{1,0:T(1,128)}', space=vmem, size = 0x9000, scoped, tag = 'internal scratch']
  #allocation2 [shape = 'bf16[112,512]{1,0:T(8,128)(2,1)}', space=vmem, size = 0x1c000, scoped, tag = 'scratch operand']
  %s0 = inlined_call_operand.hbm [shape: bf16[1,144,256], index: 0, kind: input, shape index: {}]
  %s1 = inlined_call_operand.hbm [shape: bf16[256,256], index: 1, kind: input, shape index: {}]
  %s2 = inlined_call_operand.hbm [shape: f32[1,256], index: 2, kind: input, shape index: {}]
  %s3 = inlined_call_operand.vmem [shape: bf16[512,400], index: 3, kind: input, shape index: {}]
  %s4 = inlined_call_operand.hbm [shape: f32[1,400], index: 4, kind: input, shape index: {}]
  %s5 = inlined_call_operand.hbm [shape: bf16[3,400,1024], index: 5, kind: input, shape index: {}]
  %s6 = inlined_call_operand.hbm [shape: f32[1,1024], index: 6, kind: input, shape index: {}]
  %s7 = inlined_call_operand.hbm [shape: f32[16,1024], index: 7, kind: output, shape index: {}]
  %s8 = sld [smem:[#allocation0]]
  $region62: #{tpu_custom_call.1} parent=0
    _
  %s10 = ssub.s32 1, %s8
  %s11 = scalar_select 0, %s10, %s8
  $region1: #{tpu_custom_call.1} parent=0
    #allocation3 [shape = 'u8[73728]{0}', space=vmem, size = 0x12000, scoped, tag = 'input window, operand 0, single buffered']
    #allocation4 [shape = 's32[1]{0}', space=sflag, size = 0x4, scoped, tag = 'scoped memory for tpu_custom_call.1']
    #allocation5 [shape = 's32[1]{0}', space=sflag, size = 0x4, scoped, tag = 'scoped memory for tpu_custom_call.1']
    #allocation6 [shape = 'u8[131072]{0}', space=vmem, size = 0x20000, scoped, tag = 'input window, operand 1, single buffered']
    #allocation7 [shape = 's32[1]{0}', space=sflag, size = 0x4, scoped, tag = 'scoped memory for tpu_custom_call.1']
    #allocation8 [shape = 'u8[1024]{0}', space=vmem, size = 0x400, scoped, tag = 'input window, operand 2, single buffered']
    #allocation9 [shape = 'u8[2048]{0}', space=vmem, size = 0x800, scoped, tag = 'input window, operand 4, single buffered']
    #allocation10 [shape = 's32[1]{0}', space=sflag, size = 0x4, scoped, tag = 'scoped memory for tpu_custom_call.1']
    #allocation11 [shape = 'u8[2457600]{0}', space=vmem, size = 0x258000, scoped, tag = 'input window, operand 5, single buffered']
    #allocation12 [shape = 'u8[4096]{0}', space=vmem, size = 0x1000, scoped, tag = 'input window, operand 6, single buffered']
    #allocation13 [shape = 's32[1]{0}', space=sflag, size = 0x4, scoped, tag = 'scoped memory for tpu_custom_call.1']
    #allocation14 [shape = 'u8[65536]{0}', space=vmem, size = 0x10000, scoped, tag = 'output window, operand 0, single buffered']
    %12 = vsyncpa [#allocation4], 0
    %13 = vsyncpa [#allocation7], 0
    %14 = vsyncpa [#allocation10], 0
    %15 = vsyncpa [#allocation13], 0
    %16 = vsyncpa [#allocation5], 0
    // Predicated region
    $region2: #{tpu_custom_call.1} parent=1 // pred_check
      _
    $region3: #{tpu_custom_call.1} parent=1 // pred_check_branch
      %18 = sbr.rel (0) target = $region5
    $region4: #{tpu_custom_call.1} parent=1 // pred_region
      %20 = vsyncadd [#allocation4], 0
      %s21 = sshll.u32 %s0, 4
      %s22 = int_to_ptr.hbm [resolvable:$true] %s21
      %s23 = sshll.u32 [#allocation3], 4
      %s24 = int_to_ptr.vmem [resolvable:$true] %s23
      %29 = dma.hbm_to_vmem [thread:$0]  %s22, 2304, %s24, [#allocation4], 128, 128, 8
    $region5: #{tpu_custom_call.1} parent=1 // pred_fallthru
      _
    // Predicated region
    $region6: #{tpu_custom_call.1} parent=1 // pred_check
      _
    $region7: #{tpu_custom_call.1} parent=1 // pred_check_branch
      %31 = sbr.rel (0) target = $region9
    $region8: #{tpu_custom_call.1} parent=1 // pred_region
      %33 = vsyncadd [#allocation7], 0
      %s34 = sshll.u32 %s1, 4
      %s35 = int_to_ptr.hbm [resolvable:$true] %s34
      %s36 = sshll.u32 [#allocation6], 4
      %s37 = int_to_ptr.vmem [resolvable:$true] %s36
      %42 = dma.hbm_to_vmem [thread:$0]  %s35, 4096, %s37, [#allocation7], 128, 128, 8
    $region9: #{tpu_custom_call.1} parent=1 // pred_fallthru
      _
    // Predicated region
    $region10: #{tpu_custom_call.1} parent=1 // pred_check
      _
    $region11: #{tpu_custom_call.1} parent=1 // pred_check_branch
      %44 = sbr.rel (0) target = $region13
    $region12: #{tpu_custom_call.1} parent=1 // pred_region
      %46 = vsyncadd [#allocation7], 0
      %s48 = sshll.u32 %s2, 4
      %s49 = int_to_ptr.hbm [resolvable:$true] %s48
      %s50 = sshll.u32 [#allocation8], 4
      %s51 = int_to_ptr.vmem [resolvable:$true] %s50
      %53 = dma.hbm_to_vmem [thread:$0]  %s49, 32, %s51, [#allocation7]
    $region13: #{tpu_custom_call.1} parent=1 // pred_fallthru
      _
    // Predicated region
    $region14: #{tpu_custom_call.1} parent=1 // pred_check
      _
    $region15: #{tpu_custom_call.1} parent=1 // pred_check_branch
      %55 = sbr.rel (0) target = $region17
    $region16: #{tpu_custom_call.1} parent=1 // pred_region
      _
    $region17: #{tpu_custom_call.1} parent=1 // pred_fallthru
      _
    // Predicated region
    $region18: #{tpu_custom_call.1} parent=1 // pred_check
      _
    $region19: #{tpu_custom_call.1} parent=1 // pred_check_branch
      %57 = sbr.rel (0) target = $region21
    $region20: #{tpu_custom_call.1} parent=1 // pred_region
      %59 = vsyncadd [#allocation10], 0
      %s61 = sshll.u32 %s4, 4
      %s62 = int_to_ptr.hbm [resolvable:$true] %s61
      %s63 = sshll.u32 [#allocation9], 4
      %s64 = int_to_ptr.vmem [resolvable:$true] %s63
      %66 = dma.hbm_to_vmem [thread:$0]  %s62, 64, %s64, [#allocation10]
    $region21: #{tpu_custom_call.1} parent=1 // pred_fallthru
      _
    // Predicated region
    $region22: #{tpu_custom_call.1} parent=1 // pred_check
      _
    $region23: #{tpu_custom_call.1} parent=1 // pred_check_branch
      %68 = sbr.rel (0) target = $region25
    $region24: #{tpu_custom_call.1} parent=1 // pred_region
      %70 = vsyncadd [#allocation10], 0
      %s71 = sshll.u32 %s5, 4
      %s72 = int_to_ptr.hbm [resolvable:$true] %s71
      %s73 = sshll.u32 [#allocation11], 4
      %s74 = int_to_ptr.vmem [resolvable:$true] %s73
      %79 = dma.hbm_to_vmem [thread:$0]  %s72, 76800, %s74, [#allocation10], 512, 512, 32
    $region25: #{tpu_custom_call.1} parent=1 // pred_fallthru
      _
    // Predicated region
    $region26: #{tpu_custom_call.1} parent=1 // pred_check
      _
    $region27: #{tpu_custom_call.1} parent=1 // pred_check_branch
      %81 = sbr.rel (0) target = $region29
    $region28: #{tpu_custom_call.1} parent=1 // pred_region
      %83 = vsyncadd [#allocation13], 0
      %s85 = sshll.u32 %s6, 4
      %s86 = int_to_ptr.hbm [resolvable:$true] %s85
      %s87 = sshll.u32 [#allocation12], 4
      %s88 = int_to_ptr.vmem [resolvable:$true] %s87
      %90 = dma.hbm_to_vmem [thread:$0]  %s86, 128, %s88, [#allocation13]
    $region29: #{tpu_custom_call.1} parent=1 // pred_fallthru
      _
    // Predicated region
    $region30: #{tpu_custom_call.1} parent=1 // pred_check
      _
    $region31: #{tpu_custom_call.1} parent=1 // pred_check_branch
      %92 = sbr.rel (0) target = $region33
    $region32: #{tpu_custom_call.1} parent=1 // pred_region
      %94 = dma.done [#allocation4], 2304
    $region33: #{tpu_custom_call.1} parent=1 // pred_fallthru
      _
    // Predicated region
    $region34: #{tpu_custom_call.1} parent=1 // pred_check
      _
    $region35: #{tpu_custom_call.1} parent=1 // pred_check_branch
      %96 = sbr.rel (0) target = $region37
    $region36: #{tpu_custom_call.1} parent=1 // pred_region
      %98 = dma.done [#allocation7], 4096
    $region37: #{tpu_custom_call.1} parent=1 // pred_fallthru
      _
    // Predicated region
    $region38: #{tpu_custom_call.1} parent=1 // pred_check
      _
    $region39: #{tpu_custom_call.1} parent=1 // pred_check_branch
      %100 = sbr.rel (0) target = $region41
    $region40: #{tpu_custom_call.1} parent=1 // pred_region
      %102 = dma.done [#allocation7], 32
    $region41: #{tpu_custom_call.1} parent=1 // pred_fallthru
      _
    // Predicated region
    $region42: #{tpu_custom_call.1} parent=1 // pred_check
      _
    $region43: #{tpu_custom_call.1} parent=1 // pred_check_branch
      %104 = sbr.rel (0) target = $region45
    $region44: #{tpu_custom_call.1} parent=1 // pred_region
      %106 = dma.done [#allocation10], 64
    $region45: #{tpu_custom_call.1} parent=1 // pred_fallthru
      _
    // Predicated region
    $region46: #{tpu_custom_call.1} parent=1 // pred_check
      _
    $region47: #{tpu_custom_call.1} parent=1 // pred_check_branch
      %108 = sbr.rel (0) target = $region49
    $region48: #{tpu_custom_call.1} parent=1 // pred_region
      %110 = dma.done [#allocation10], 76800
    $region49: #{tpu_custom_call.1} parent=1 // pred_fallthru
      _
    // Predicated region
    $region50: #{tpu_custom_call.1} parent=1 // pred_check
      _
    $region51: #{tpu_custom_call.1} parent=1 // pred_check_branch
      %112 = sbr.rel (0) target = $region53
    $region52: #{tpu_custom_call.1} parent=1 // pred_region
      %114 = dma.done [#allocation13], 128
    $region53: #{tpu_custom_call.1} parent=1 // pred_fallthru
      _
    %v116 = vld [vmem:[#allocation3] sm:$0xff]
    %v117 = vld [vmem:[#allocation3 + $0x8] sm:$0xff]
    %v118 = vld [vmem:[#allocation3 + $0x10] sm:$0xff]
    %v119 = vld [vmem:[#allocation3 + $0x18] sm:$0xff]
    %v120 = vld [vmem:[#allocation3 + $0x20] sm:$0xff]
    %v121 = vld [vmem:[#allocation3 + $0x28] sm:$0xff]
    %v122 = vld [vmem:[#allocation3 + $0x30] sm:$0xff]
    %v123 = vld [vmem:[#allocation3 + $0x38] sm:$0xff]
    %v124 = vld [vmem:[#allocation3 + $0x40] sm:$0xff]
    %v125 = vld [vmem:[#allocation3 + $0x48] sm:$0xff]
    %v126 = vld [vmem:[#allocation3 + $0x50] sm:$0xff]
    %v127 = vld [vmem:[#allocation3 + $0x58] sm:$0xff]
    %v128 = vld [vmem:[#allocation3 + $0x60] sm:$0xff]
    %v129 = vld [vmem:[#allocation3 + $0x68] sm:$0xff]
    %v130 = vld [vmem:[#allocation3 + $0x70] sm:$0xff]
    %v131 = vld [vmem:[#allocation3 + $0x78] sm:$0xff]
    %v132 = vld [vmem:[#allocation3 + $0x80] sm:$0xff]
    %v133 = vld [vmem:[#allocation3 + $0x88] sm:$0xff]
    %v134 = vld [vmem:[#allocation6] sm:$0xff]
    %v135 = vld [vmem:[#allocation6 + $0x8] sm:$0xff]
    %v136 = vld [vmem:[#allocation6 + $0x10] sm:$0xff]
    %v137 = vld [vmem:[#allocation6 + $0x18] sm:$0xff]
    %v138 = vld [vmem:[#allocation6 + $0x20] sm:$0xff]
    %v139 = vld [vmem:[#allocation6 + $0x28] sm:$0xff]
    %v140 = vld [vmem:[#allocation6 + $0x30] sm:$0xff]
    %v141 = vld [vmem:[#allocation6 + $0x38] sm:$0xff]
    %v142 = vld [vmem:[#allocation6 + $0x40] sm:$0xff]
    %v143 = vld [vmem:[#allocation6 + $0x48] sm:$0xff]
    %v144 = vld [vmem:[#allocation6 + $0x50] sm:$0xff]
    %v145 = vld [vmem:[#allocation6 + $0x58] sm:$0xff]
    %v146 = vld [vmem:[#allocation6 + $0x60] sm:$0xff]
    %v147 = vld [vmem:[#allocation6 + $0x68] sm:$0xff]
    %v148 = vld [vmem:[#allocation6 + $0x70] sm:$0xff]
    %v149 = vld [vmem:[#allocation6 + $0x78] sm:$0xff]
    %v150 = vld [vmem:[#allocation6 + $0x80] sm:$0xff]
    %v151 = vld [vmem:[#allocation6 + $0x88] sm:$0xff]
    %v152 = vld [vmem:[#allocation6 + $0x90] sm:$0xff]
    %v153 = vld [vmem:[#allocation6 + $0x98] sm:$0xff]
    %v154 = vld [vmem:[#allocation6 + $0xa0] sm:$0xff]
    %v155 = vld [vmem:[#allocation6 + $0xa8] sm:$0xff]
    %v156 = vld [vmem:[#allocation6 + $0xb0] sm:$0xff]
    %v157 = vld [vmem:[#allocation6 + $0xb8] sm:$0xff]
    %v158 = vld [vmem:[#allocation6 + $0xc0] sm:$0xff]
    %v159 = vld [vmem:[#allocation6 + $0xc8] sm:$0xff]
    %v160 = vld [vmem:[#allocation6 + $0xd0] sm:$0xff]
    %v161 = vld [vmem:[#allocation6 + $0xd8] sm:$0xff]
    %v162 = vld [vmem:[#allocation6 + $0xe0] sm:$0xff]
    %v163 = vld [vmem:[#allocation6 + $0xe8] sm:$0xff]
    %v164 = vld [vmem:[#allocation6 + $0xf0] sm:$0xff]
    %v165 = vld [vmem:[#allocation6 + $0xf8] sm:$0xff]
    %v166 = vld [vmem:[#allocation8] sm:$0x3]
    %v168 = vperm.slane %v166, 0
    %v169 = vperm.slane %v166, 1
    %v190 = vunpack.c.l.b16 %v116
    %v191 = vunpack.c.h.b16 %v116
    %v192 = vunpack.c.l.b16 %v117
    %v193 = vunpack.c.h.b16 %v117
    %v194 = vunpack.c.l.b16 %v118
    %v195 = vunpack.c.h.b16 %v118
    %v196 = vunpack.c.l.b16 %v119
    %v197 = vunpack.c.h.b16 %v119
    %v198 = vunpack.c.l.b16 %v120
    %v199 = vunpack.c.h.b16 %v120
    %v200 = vunpack.c.l.b16 %v121
    %v201 = vunpack.c.h.b16 %v121
    %v202 = vunpack.c.l.b16 %v122
    %v203 = vunpack.c.h.b16 %v122
    %v204 = vunpack.c.l.b16 %v123
    %v205 = vunpack.c.h.b16 %v123
    %v206 = vunpack.c.l.b16 %v124
    %v207 = vunpack.c.h.b16 %v124
    %v208 = vunpack.c.l.b16 %v125
    %v209 = vunpack.c.h.b16 %v125
    %v210 = vunpack.c.l.b16 %v126
    %v211 = vunpack.c.h.b16 %v126
    %v212 = vunpack.c.l.b16 %v127
    %v213 = vunpack.c.h.b16 %v127
    %v214 = vunpack.c.l.b16 %v128
    %v215 = vunpack.c.h.b16 %v128
    %v216 = vunpack.c.l.b16 %v129
    %v217 = vunpack.c.h.b16 %v129
    %v218 = vunpack.c.l.b16 %v130
    %v219 = vunpack.c.h.b16 %v130
    %v220 = vunpack.c.l.b16 %v131
    %v221 = vunpack.c.h.b16 %v131
    %v222 = vunpack.c.l.b16 %v132
    %v223 = vunpack.c.h.b16 %v132
    %v224 = vunpack.c.l.b16 %v133
    %v225 = vunpack.c.h.b16 %v133
    %v226 = vpack.c.b16 %v192, %v190
    %v227 = vpack.c.b16 %v193, %v191
    %v228 = vpack.c.b16 %v196, %v194
    %v229 = vpack.c.b16 %v197, %v195
    %v230 = vpack.c.b16 %v200, %v198
    %v231 = vpack.c.b16 %v201, %v199
    %v232 = vpack.c.b16 %v204, %v202
    %v233 = vpack.c.b16 %v205, %v203
    %v234 = vpack.c.b16 %v208, %v206
    %v235 = vpack.c.b16 %v209, %v207
    %v236 = vpack.c.b16 %v212, %v210
    %v237 = vpack.c.b16 %v213, %v211
    %v238 = vpack.c.b16 %v216, %v214
    %v239 = vpack.c.b16 %v217, %v215
    %v240 = vpack.c.b16 %v220, %v218
    %v241 = vpack.c.b16 %v221, %v219
    %v242 = vpack.c.b16 %v224, %v222
    %v243 = vpack.c.b16 %v225, %v223
    %v294 = vunpack.c.l.b16 %v134
    %v295 = vunpack.c.h.b16 %v134
    %v296 = vunpack.c.l.b16 %v135
    %v297 = vunpack.c.h.b16 %v135
    %v298 = vunpack.c.l.b16 %v136
    %v299 = vunpack.c.h.b16 %v136
    %v300 = vunpack.c.l.b16 %v137
    %v301 = vunpack.c.h.b16 %v137
    %v302 = vunpack.c.l.b16 %v138
    %v303 = vunpack.c.h.b16 %v138
    %v304 = vunpack.c.l.b16 %v139
    %v305 = vunpack.c.h.b16 %v139
    %v306 = vunpack.c.l.b16 %v140
    %v307 = vunpack.c.h.b16 %v140
    %v308 = vunpack.c.l.b16 %v141
    %v309 = vunpack.c.h.b16 %v141
    %v310 = vunpack.c.l.b16 %v142
    %v311 = vunpack.c.h.b16 %v142
    %v312 = vunpack.c.l.b16 %v143
    %v313 = vunpack.c.h.b16 %v143
    %v314 = vunpack.c.l.b16 %v144
    %v315 = vunpack.c.h.b16 %v144
    %v316 = vunpack.c.l.b16 %v145
    %v317 = vunpack.c.h.b16 %v145
    %v318 = vunpack.c.l.b16 %v146
    %v319 = vunpack.c.h.b16 %v146
    %v320 = vunpack.c.l.b16 %v147
    %v321 = vunpack.c.h.b16 %v147
    %v322 = vunpack.c.l.b16 %v148
    %v323 = vunpack.c.h.b16 %v148
    %v324 = vunpack.c.l.b16 %v149
    %v325 = vunpack.c.h.b16 %v149
    %v326 = vunpack.c.l.b16 %v150
    %v327 = vunpack.c.h.b16 %v150
    %v328 = vunpack.c.l.b16 %v151
    %v329 = vunpack.c.h.b16 %v151
    %v330 = vunpack.c.l.b16 %v152
    %v331 = vunpack.c.h.b16 %v152
    %v332 = vunpack.c.l.b16 %v153
    %v333 = vunpack.c.h.b16 %v153
    %v334 = vunpack.c.l.b16 %v154
    %v335 = vunpack.c.h.b16 %v154
    %v336 = vunpack.c.l.b16 %v155
    %v337 = vunpack.c.h.b16 %v155
    %v338 = vunpack.c.l.b16 %v156
    %v339 = vunpack.c.h.b16 %v156
    %v340 = vunpack.c.l.b16 %v157
    %v341 = vunpack.c.h.b16 %v157
    %v342 = vunpack.c.l.b16 %v158
    %v343 = vunpack.c.h.b16 %v158
    %v344 = vunpack.c.l.b16 %v159
    %v345 = vunpack.c.h.b16 %v159
    %v346 = vunpack.c.l.b16 %v160
    %v347 = vunpack.c.h.b16 %v160
    %v348 = vunpack.c.l.b16 %v161
    %v349 = vunpack.c.h.b16 %v161
    %v350 = vunpack.c.l.b16 %v162
    %v351 = vunpack.c.h.b16 %v162
    %v352 = vunpack.c.l.b16 %v163
    %v353 = vunpack.c.h.b16 %v163
    %v354 = vunpack.c.l.b16 %v164
    %v355 = vunpack.c.h.b16 %v164
    %v356 = vunpack.c.l.b16 %v165
    %v357 = vunpack.c.h.b16 %v165
    %v358 = vpack.c.b16 %v296, %v294
    %v359 = vpack.c.b16 %v297, %v295
    %v360 = vpack.c.b16 %v300, %v298
    %v361 = vpack.c.b16 %v301, %v299
    %v362 = vpack.c.b16 %v304, %v302
    %v363 = vpack.c.b16 %v305, %v303
    %v364 = vpack.c.b16 %v308, %v306
    %v365 = vpack.c.b16 %v309, %v307
    %v366 = vpack.c.b16 %v312, %v310
    %v367 = vpack.c.b16 %v313, %v311
    %v368 = vpack.c.b16 %v316, %v314
    %v369 = vpack.c.b16 %v317, %v315
    %v370 = vpack.c.b16 %v320, %v318
    %v371 = vpack.c.b16 %v321, %v319
    %v372 = vpack.c.b16 %v324, %v322
    %v373 = vpack.c.b16 %v325, %v323
    %v374 = vpack.c.b16 %v328, %v326
    %v375 = vpack.c.b16 %v329, %v327
    %v376 = vpack.c.b16 %v332, %v330
    %v377 = vpack.c.b16 %v333, %v331
    %v378 = vpack.c.b16 %v336, %v334
    %v379 = vpack.c.b16 %v337, %v335
    %v380 = vpack.c.b16 %v340, %v338
    %v381 = vpack.c.b16 %v341, %v339
    %v382 = vpack.c.b16 %v344, %v342
    %v383 = vpack.c.b16 %v345, %v343
    %v384 = vpack.c.b16 %v348, %v346
    %v385 = vpack.c.b16 %v349, %v347
    %v386 = vpack.c.b16 %v352, %v350
    %v387 = vpack.c.b16 %v353, %v351
    %v388 = vpack.c.b16 %v356, %v354
    %v389 = vpack.c.b16 %v357, %v355
    %422 = vmatpush.bf16.msra.mxu0 %v372
    %423 = vmatpush.bf16.msra.mxu0 %v370
    %424 = vmatpush.bf16.msra.mxu0 %v368
    %425 = vmatpush.bf16.msra.mxu0 %v366
    %426 = vmatpush.bf16.msra.mxu0 %v364
    %427 = vmatpush.bf16.msra.mxu0 %v362
    %428 = vmatpush.bf16.msra.mxu0 %v360
    %429 = vmatpush.bf16.msra.mxu0 %v358
    %430 = vmatmul.bf16.gmra.mxu0 %v226
    %v431 = vpop.f32.mrf.mxu0
    %v432 = vadd.f32 %v168, %v431
    %v433 = vpop.f32.mrf.mxu0
    %v434 = vadd.f32 %v168, %v433
    %435 = vmatmul.bf16.gmra.mxu0 %v228
    %v436 = vpop.f32.mrf.mxu0
    %v437 = vadd.f32 %v168, %v436
    %v438 = vpop.f32.mrf.mxu0
    %v439 = vadd.f32 %v168, %v438
    %440 = vmatmul.bf16.gmra.mxu0 %v230
    %v441 = vpop.f32.mrf.mxu0
    %v442 = vadd.f32 %v168, %v441
    %v443 = vpop.f32.mrf.mxu0
    %v444 = vadd.f32 %v168, %v443
    %445 = vmatmul.bf16.gmra.mxu0 %v232
    %v446 = vpop.f32.mrf.mxu0
    %v447 = vadd.f32 %v168, %v446
    %v448 = vpop.f32.mrf.mxu0
    %v449 = vadd.f32 %v168, %v448
    %450 = vmatmul.bf16.gmra.mxu0 %v234
    %v451 = vpop.f32.mrf.mxu0
    %v452 = vadd.f32 %v168, %v451
    %v453 = vpop.f32.mrf.mxu0
    %v454 = vadd.f32 %v168, %v453
    %455 = vmatmul.bf16.gmra.mxu0 %v236
    %v456 = vpop.f32.mrf.mxu0
    %v457 = vadd.f32 %v168, %v456
    %v458 = vpop.f32.mrf.mxu0
    %v459 = vadd.f32 %v168, %v458
    %460 = vmatmul.bf16.gmra.mxu0 %v238
    %v461 = vpop.f32.mrf.mxu0
    %v462 = vadd.f32 %v168, %v461
    %v463 = vpop.f32.mrf.mxu0
    %v464 = vadd.f32 %v168, %v463
    %465 = vmatmul.bf16.gmra.mxu0 %v240
    %v466 = vpop.f32.mrf.mxu0
    %v467 = vadd.f32 %v168, %v466
    %v468 = vpop.f32.mrf.mxu0
    %v469 = vadd.f32 %v168, %v468
    %470 = vmatmul.bf16.gmra.mxu0 %v242
    %v471 = vpop.f32.mrf.mxu0
    %v472 = vpop.f32.mrf.mxu0
    %473 = vdwg.mxu0
    %474 = vmatpush.bf16.msra.mxu0 %v388
    %475 = vmatpush.bf16.msra.mxu0 %v386
    %476 = vmatpush.bf16.msra.mxu0 %v384
    %477 = vmatpush.bf16.msra.mxu0 %v382
    %478 = vmatpush.bf16.msra.mxu0 %v380
    %479 = vmatpush.bf16.msra.mxu0 %v378
    %480 = vmatpush.bf16.msra.mxu0 %v376
    %481 = vmatpush.bf16.msra.mxu0 %v374
    %482 = vmatmul.bf16.gmra.mxu0 %v227
    %v483 = vpop.f32.mrf.mxu0
    %v484 = vadd.f32 %v432, %v483
    %v485 = vpop.f32.mrf.mxu0
    %v486 = vadd.f32 %v434, %v485
    %487 = vmatmul.bf16.gmra.mxu0 %v229
    %v488 = vpop.f32.mrf.mxu0
    %v489 = vadd.f32 %v437, %v488
    %v490 = vpop.f32.mrf.mxu0
    %v491 = vadd.f32 %v439, %v490
    %492 = vmatmul.bf16.gmra.mxu0 %v231
    %v493 = vpop.f32.mrf.mxu0
    %v494 = vadd.f32 %v442, %v493
    %v495 = vpop.f32.mrf.mxu0
    %v496 = vadd.f32 %v444, %v495
    %497 = vmatmul.bf16.gmra.mxu0 %v233
    %v498 = vpop.f32.mrf.mxu0
    %v499 = vadd.f32 %v447, %v498
    %v500 = vpop.f32.mrf.mxu0
    %v501 = vadd.f32 %v449, %v500
    %502 = vmatmul.bf16.gmra.mxu0 %v235
    %v503 = vpop.f32.mrf.mxu0
    %v504 = vadd.f32 %v452, %v503
    %v505 = vpop.f32.mrf.mxu0
    %v506 = vadd.f32 %v454, %v505
    %507 = vmatmul.bf16.gmra.mxu0 %v237
    %v508 = vpop.f32.mrf.mxu0
    %v509 = vadd.f32 %v457, %v508
    %v510 = vpop.f32.mrf.mxu0
    %v511 = vadd.f32 %v459, %v510
    %512 = vmatmul.bf16.gmra.mxu0 %v239
    %v513 = vpop.f32.mrf.mxu0
    %v514 = vadd.f32 %v462, %v513
    %v515 = vpop.f32.mrf.mxu0
    %v516 = vadd.f32 %v464, %v515
    %517 = vmatmul.bf16.gmra.mxu0 %v241
    %v518 = vpop.f32.mrf.mxu0
    %v519 = vadd.f32 %v467, %v518
    %v520 = vpop.f32.mrf.mxu0
    %v521 = vadd.f32 %v469, %v520
    %522 = vmatmul.bf16.gmra.mxu0 %v243
    %v523 = vpop.f32.mrf.mxu0
    %v524 = vpop.f32.mrf.mxu0
    %525 = vdwg.mxu0
    %526 = vmatpush.bf16.msra.mxu0 %v373
    %527 = vmatpush.bf16.msra.mxu0 %v371
    %528 = vmatpush.bf16.msra.mxu0 %v369
    %529 = vmatpush.bf16.msra.mxu0 %v367
    %530 = vmatpush.bf16.msra.mxu0 %v365
    %531 = vmatpush.bf16.msra.mxu0 %v363
    %532 = vmatpush.bf16.msra.mxu0 %v361
    %533 = vmatpush.bf16.msra.mxu0 %v359
    %534 = vmatmul.bf16.gmra.mxu0 %v226
    %v535 = vpop.f32.mrf.mxu0
    %v536 = vadd.f32 %v169, %v535
    %v537 = vpop.f32.mrf.mxu0
    %v538 = vadd.f32 %v169, %v537
    %539 = vmatmul.bf16.gmra.mxu0 %v228
    %v540 = vpop.f32.mrf.mxu0
    %v541 = vadd.f32 %v169, %v540
    %v542 = vpop.f32.mrf.mxu0
    %v543 = vadd.f32 %v169, %v542
    %544 = vmatmul.bf16.gmra.mxu0 %v230
    %v545 = vpop.f32.mrf.mxu0
    %v546 = vadd.f32 %v169, %v545
    %v547 = vpop.f32.mrf.mxu0
    %v548 = vadd.f32 %v169, %v547
    %549 = vmatmul.bf16.gmra.mxu0 %v232
    %v550 = vpop.f32.mrf.mxu0
    %v551 = vadd.f32 %v169, %v550
    %v552 = vpop.f32.mrf.mxu0
    %v553 = vadd.f32 %v169, %v552
    %554 = vmatmul.bf16.gmra.mxu0 %v234
    %v555 = vpop.f32.mrf.mxu0
    %v556 = vadd.f32 %v169, %v555
    %v557 = vpop.f32.mrf.mxu0
    %v558 = vadd.f32 %v169, %v557
    %559 = vmatmul.bf16.gmra.mxu0 %v236
    %v560 = vpop.f32.mrf.mxu0
    %v561 = vadd.f32 %v169, %v560
    %v562 = vpop.f32.mrf.mxu0
    %v563 = vadd.f32 %v169, %v562
    %564 = vmatmul.bf16.gmra.mxu0 %v238
    %v565 = vpop.f32.mrf.mxu0
    %v566 = vadd.f32 %v169, %v565
    %v567 = vpop.f32.mrf.mxu0
    %v568 = vadd.f32 %v169, %v567
    %569 = vmatmul.bf16.gmra.mxu0 %v240
    %v570 = vpop.f32.mrf.mxu0
    %v571 = vadd.f32 %v169, %v570
    %v572 = vpop.f32.mrf.mxu0
    %v573 = vadd.f32 %v169, %v572
    %574 = vmatmul.bf16.gmra.mxu0 %v242
    %v575 = vpop.f32.mrf.mxu0
    %v576 = vpop.f32.mrf.mxu0
    %577 = vdwg.mxu0
    %578 = vmatpush.bf16.msra.mxu0 %v389
    %579 = vmatpush.bf16.msra.mxu0 %v387
    %580 = vmatpush.bf16.msra.mxu0 %v385
    %581 = vmatpush.bf16.msra.mxu0 %v383
    %582 = vmatpush.bf16.msra.mxu0 %v381
    %583 = vmatpush.bf16.msra.mxu0 %v379
    %584 = vmatpush.bf16.msra.mxu0 %v377
    %585 = vmatpush.bf16.msra.mxu0 %v375
    %586 = vmatmul.bf16.gmra.mxu0 %v227
    %v587 = vpop.f32.mrf.mxu0
    %v588 = vadd.f32 %v536, %v587
    %v589 = vpop.f32.mrf.mxu0
    %v590 = vadd.f32 %v538, %v589
    %591 = vmatmul.bf16.gmra.mxu0 %v229
    %v592 = vpop.f32.mrf.mxu0
    %v593 = vadd.f32 %v541, %v592
    %v594 = vpop.f32.mrf.mxu0
    %v595 = vadd.f32 %v543, %v594
    %596 = vmatmul.bf16.gmra.mxu0 %v231
    %v597 = vpop.f32.mrf.mxu0
    %v598 = vadd.f32 %v546, %v597
    %v599 = vpop.f32.mrf.mxu0
    %v600 = vadd.f32 %v548, %v599
    %601 = vmatmul.bf16.gmra.mxu0 %v233
    %v602 = vpop.f32.mrf.mxu0
    %v603 = vadd.f32 %v551, %v602
    %v604 = vpop.f32.mrf.mxu0
    %v605 = vadd.f32 %v553, %v604
    %606 = vmatmul.bf16.gmra.mxu0 %v235
    %v607 = vpop.f32.mrf.mxu0
    %v608 = vadd.f32 %v556, %v607
    %v609 = vpop.f32.mrf.mxu0
    %v610 = vadd.f32 %v558, %v609
    %611 = vmatmul.bf16.gmra.mxu0 %v237
    %v612 = vpop.f32.mrf.mxu0
    %v613 = vadd.f32 %v561, %v612
    %v614 = vpop.f32.mrf.mxu0
    %v615 = vadd.f32 %v563, %v614
    %616 = vmatmul.bf16.gmra.mxu0 %v239
    %v617 = vpop.f32.mrf.mxu0
    %v618 = vadd.f32 %v566, %v617
    %v619 = vpop.f32.mrf.mxu0
    %v620 = vadd.f32 %v568, %v619
    %621 = vmatmul.bf16.gmra.mxu0 %v241
    %v622 = vpop.f32.mrf.mxu0
    %v623 = vadd.f32 %v571, %v622
    %v624 = vpop.f32.mrf.mxu0
    %v625 = vadd.f32 %v573, %v624
    %626 = vmatmul.bf16.gmra.mxu0 %v243
    %v627 = vpop.f32.mrf.mxu0
    %v628 = vpop.f32.mrf.mxu0
    %629 = vdwg.mxu0
    %v630 = vmul.f32 %v484, 0.1
    %v631 = vmul.f32 %v588, 0.1
    %v632 = vmul.f32 %v486, 0.1
    %v633 = vmul.f32 %v590, 0.1
    %v634 = vmul.f32 %v489, 0.1
    %v635 = vmul.f32 %v593, 0.1
    %v636 = vmul.f32 %v491, 0.1
    %v637 = vmul.f32 %v595, 0.1
    %v638 = vmul.f32 %v494, 0.1
    %v639 = vmul.f32 %v598, 0.1
    %v640 = vmul.f32 %v496, 0.1
    %v641 = vmul.f32 %v600, 0.1
    %v642 = vmul.f32 %v499, 0.1
    %v643 = vmul.f32 %v603, 0.1
    %v644 = vmul.f32 %v501, 0.1
    %v645 = vmul.f32 %v605, 0.1
    %v646 = vmul.f32 %v504, 0.1
    %v647 = vmul.f32 %v608, 0.1
    %v648 = vmul.f32 %v506, 0.1
    %v649 = vmul.f32 %v610, 0.1
    %v650 = vmul.f32 %v509, 0.1
    %v651 = vmul.f32 %v613, 0.1
    %v652 = vmul.f32 %v511, 0.1
    %v653 = vmul.f32 %v615, 0.1
    %v654 = vmul.f32 %v514, 0.1
    %v655 = vmul.f32 %v618, 0.1
    %v656 = vmul.f32 %v516, 0.1
    %v657 = vmul.f32 %v620, 0.1
    %v658 = vmul.f32 %v519, 0.1
    %v659 = vmul.f32 %v623, 0.1
    %v660 = vmul.f32 %v521, 0.1
    %v661 = vmul.f32 %v625, 0.1
    %v662 = vmax.f32 %v484, %v630
    %v663 = vmax.f32 %v588, %v631
    %v664 = vmax.f32 %v486, %v632
    %v665 = vmax.f32 %v590, %v633
    %v666 = vmax.f32 %v489, %v634
    %v667 = vmax.f32 %v593, %v635
    %v668 = vmax.f32 %v491, %v636
    %v669 = vmax.f32 %v595, %v637
    %v670 = vmax.f32 %v494, %v638
    %v671 = vmax.f32 %v598, %v639
    %v672 = vmax.f32 %v496, %v640
    %v673 = vmax.f32 %v600, %v641
    %v674 = vmax.f32 %v499, %v642
    %v675 = vmax.f32 %v603, %v643
    %v676 = vmax.f32 %v501, %v644
    %v677 = vmax.f32 %v605, %v645
    %v678 = vmax.f32 %v504, %v646
    %v679 = vmax.f32 %v608, %v647
    %v680 = vmax.f32 %v506, %v648
    %v681 = vmax.f32 %v610, %v649
    %v682 = vmax.f32 %v509, %v650
    %v683 = vmax.f32 %v613, %v651
    %v684 = vmax.f32 %v511, %v652
    %v685 = vmax.f32 %v615, %v653
    %v686 = vmax.f32 %v514, %v654
    %v687 = vmax.f32 %v618, %v655
    %v688 = vmax.f32 %v516, %v656
    %v689 = vmax.f32 %v620, %v657
    %v690 = vmax.f32 %v519, %v658
    %v691 = vmax.f32 %v623, %v659
    %v692 = vmax.f32 %v521, %v660
    %v693 = vmax.f32 %v625, %v661
    %v694 = vmax.f32 %v662, %v666
    %v695 = vmax.f32 %v663, %v667
    %v696 = vmax.f32 %v664, %v668
    %v697 = vmax.f32 %v665, %v669
    %v698 = vpack.c.bf16 %v695, %v694
    %v699 = vpack.c.bf16 %v697, %v696
    %700 = vst [vmem:[#allocation2 + $0x40] sm:$0xff] %v698
    %701 = vst [vmem:[#allocation2 + $0x50] sm:$0xff] %v699
    %702 = vst [vmem:[#allocation2 + $0x28] sm:$0xff] %v698
    %703 = vst [vmem:[#allocation2 + $0x38] sm:$0xff] %v699
    %v704 = vmax.f32 %v670, %v674
    %v705 = vmax.f32 %v671, %v675
    %v706 = vmax.f32 %v672, %v676
    %v707 = vmax.f32 %v673, %v677
    %v708 = vpack.c.bf16 %v705, %v704
    %v709 = vpack.c.bf16 %v707, %v706
    %710 = vst [vmem:[#allocation2 + $0x60] sm:$0xff] %v708
    %711 = vst [vmem:[#allocation2 + $0x70] sm:$0xff] %v709
    %712 = vst [vmem:[#allocation2 + $0x48] sm:$0xff] %v708
    %713 = vst [vmem:[#allocation2 + $0x58] sm:$0xff] %v709
    %v714 = vmax.f32 %v678, %v682
    %v715 = vmax.f32 %v679, %v683
    %v716 = vmax.f32 %v680, %v684
    %v717 = vmax.f32 %v681, %v685
    %v718 = vpack.c.bf16 %v715, %v714
    %v719 = vpack.c.bf16 %v717, %v716
    %720 = vst [vmem:[#allocation2 + $0x80] sm:$0xff] %v718
    %721 = vst [vmem:[#allocation2 + $0x90] sm:$0xff] %v719
    %722 = vst [vmem:[#allocation2 + $0x68] sm:$0xff] %v718
    %723 = vst [vmem:[#allocation2 + $0x78] sm:$0xff] %v719
    %v724 = vmax.f32 %v686, %v690
    %v725 = vmax.f32 %v687, %v691
    %v726 = vmax.f32 %v688, %v692
    %v727 = vmax.f32 %v689, %v693
    %v728 = vpack.c.bf16 %v725, %v724
    %v729 = vpack.c.bf16 %v727, %v726
    %730 = vst [vmem:[#allocation2 + $0xa0] sm:$0xff] %v728
    %731 = vst [vmem:[#allocation2 + $0xb0] sm:$0xff] %v729
    %732 = vst [vmem:[#allocation2 + $0x88] sm:$0xff] %v728
    %733 = vst [vmem:[#allocation2 + $0x98] sm:$0xff] %v729
    %734 = vst [vmem:[#allocation2] sm:$0xff] 0
    %735 = vst [vmem:[#allocation2 + $0x10] sm:$0xff] 0
    %736 = vst [vmem:[#allocation2 + $0x20] sm:$0xff] 0
    %737 = vst [vmem:[#allocation2 + $0x30] sm:$0xff] 0
    %738 = vst [vmem:[#allocation2 + $0xc0] sm:$0xff] 0
    %739 = vst [vmem:[#allocation2 + $0xd0] sm:$0xff] 0
    %740 = vst [vmem:[#allocation2 + $0x8] sm:$0xff] 0
    %741 = vst [vmem:[#allocation2 + $0x18] sm:$0xff] 0
    %742 = vst [vmem:[#allocation2 + $0xa8] sm:$0xff] 0
    %743 = vst [vmem:[#allocation2 + $0xb8] sm:$0xff] 0
    %744 = vst [vmem:[#allocation2 + $0xc8] sm:$0xff] 0
    %745 = vst [vmem:[#allocation2 + $0xd8] sm:$0xff] 0
    %v746 = vld [vmem:[#allocation2] sm:$0xff]
    %v747 = vld [vmem:[#allocation2 + $0x8] sm:$0xff]
    %v748 = vld [vmem:[#allocation2 + $0x10] sm:$0xff]
    %v749 = vld [vmem:[#allocation2 + $0x18] sm:$0xff]
    %v750 = vld [vmem:[#allocation2 + $0x20] sm:$0xff]
    %v751 = vld [vmem:[#allocation2 + $0x28] sm:$0xff]
    %v752 = vld [vmem:[#allocation2 + $0x30] sm:$0xff]
    %v753 = vld [vmem:[#allocation2 + $0x38] sm:$0xff]
    %v754 = vld [vmem:[#allocation2 + $0x40] sm:$0xff]
    %v755 = vld [vmem:[#allocation2 + $0x48] sm:$0xff]
    %v756 = vld [vmem:[#allocation2 + $0x50] sm:$0xff]
    %v757 = vld [vmem:[#allocation2 + $0x58] sm:$0xff]
    %v758 = vld [vmem:[#allocation2 + $0x60] sm:$0xff]
    %v759 = vld [vmem:[#allocation2 + $0x68] sm:$0xff]
    %v760 = vld [vmem:[#allocation2 + $0x70] sm:$0xff]
    %v761 = vld [vmem:[#allocation2 + $0x78] sm:$0xff]
    %v762 = vld [vmem:[#allocation2 + $0x80] sm:$0xff]
    %v763 = vld [vmem:[#allocation2 + $0x88] sm:$0xff]
    %v764 = vld [vmem:[#allocation2 + $0x90] sm:$0xff]
    %v765 = vld [vmem:[#allocation2 + $0x98] sm:$0xff]
    %v766 = vld [vmem:[#allocation2 + $0xa0] sm:$0xff]
    %v767 = vld [vmem:[#allocation2 + $0xa8] sm:$0xff]
    %v768 = vld [vmem:[#allocation2 + $0xb0] sm:$0xff]
    %v769 = vld [vmem:[#allocation2 + $0xb8] sm:$0xff]
    %v770 = vld [vmem:[#allocation2 + $0xc0] sm:$0xff]
    %v771 = vld [vmem:[#allocation2 + $0xc8] sm:$0xff]
    %v772 = vld [vmem:[#allocation2 + $0xd0] sm:$0xff]
    %v773 = vld [vmem:[#allocation2 + $0xd8] sm:$0xff]
    %v774 = vld [vmem:[%s3] sm:$0xff]
    %v775 = vld [vmem:[%s3 + $0x8] sm:$0xff]
    %v776 = vld [vmem:[%s3 + $0x10] sm:$0xff]
    %v777 = vld [vmem:[%s3 + $0x18] sm:$0xff]
    %v778 = vld [vmem:[%s3 + $0x20] sm:$0xff]
    %v779 = vld [vmem:[%s3 + $0x28] sm:$0xff]
    %v780 = vld [vmem:[%s3 + $0x30] sm:$0xff]
    %v781 = vld [vmem:[%s3 + $0x38] sm:$0xff]
    %v782 = vld [vmem:[%s3 + $0x40] sm:$0xff]
    %v783 = vld [vmem:[%s3 + $0x48] sm:$0xff]
    %v784 = vld [vmem:[%s3 + $0x50] sm:$0xff]
    %v785 = vld [vmem:[%s3 + $0x58] sm:$0xff]
    %v786 = vld [vmem:[%s3 + $0x60] sm:$0xff]
    %v787 = vld [vmem:[%s3 + $0x68] sm:$0xff]
    %v788 = vld [vmem:[%s3 + $0x70] sm:$0xff]
    %v789 = vld [vmem:[%s3 + $0x78] sm:$0xff]
    %v790 = vld [vmem:[%s3 + $0x80] sm:$0xff]
    %v791 = vld [vmem:[%s3 + $0x88] sm:$0xff]
    %v792 = vld [vmem:[%s3 + $0x90] sm:$0xff]
    %v793 = vld [vmem:[%s3 + $0x98] sm:$0xff]
    %v794 = vld [vmem:[%s3 + $0xa0] sm:$0xff]
    %v795 = vld [vmem:[%s3 + $0xa8] sm:$0xff]
    %v796 = vld [vmem:[%s3 + $0xb0] sm:$0xff]
    %v797 = vld [vmem:[%s3 + $0xb8] sm:$0xff]
    %v798 = vld [vmem:[%s3 + $0xc0] sm:$0xff]
    %v799 = vld [vmem:[%s3 + $0xc8] sm:$0xff]
    %v800 = vld [vmem:[%s3 + $0xd0] sm:$0xff]
    %v801 = vld [vmem:[%s3 + $0xd8] sm:$0xff]
    %v802 = vld [vmem:[%s3 + $0xe0] sm:$0xff]
    %v803 = vld [vmem:[%s3 + $0xe8] sm:$0xff]
    %v804 = vld [vmem:[%s3 + $0xf0] sm:$0xff]
    %v805 = vld [vmem:[%s3 + $0xf8] sm:$0xff]
    %v806 = vld [vmem:[%s3 + $0x100] sm:$0xff]
    %v807 = vld [vmem:[%s3 + $0x108] sm:$0xff]
    %v808 = vld [vmem:[%s3 + $0x110] sm:$0xff]
    %v809 = vld [vmem:[%s3 + $0x118] sm:$0xff]
    %v810 = vld [vmem:[%s3 + $0x120] sm:$0xff]
    %v811 = vld [vmem:[%s3 + $0x128] sm:$0xff]
    %v812 = vld [vmem:[%s3 + $0x130] sm:$0xff]
    %v813 = vld [vmem:[%s3 + $0x138] sm:$0xff]
    %v814 = vld [vmem:[%s3 + $0x140] sm:$0xff]
    %v815 = vld [vmem:[%s3 + $0x148] sm:$0xff]
    %v816 = vld [vmem:[%s3 + $0x150] sm:$0xff]
    %v817 = vld [vmem:[%s3 + $0x158] sm:$0xff]
    %v818 = vld [vmem:[%s3 + $0x160] sm:$0xff]
    %v819 = vld [vmem:[%s3 + $0x168] sm:$0xff]
    %v820 = vld [vmem:[%s3 + $0x170] sm:$0xff]
    %v821 = vld [vmem:[%s3 + $0x178] sm:$0xff]
    %v822 = vld [vmem:[%s3 + $0x180] sm:$0xff]
    %v823 = vld [vmem:[%s3 + $0x188] sm:$0xff]
    %v824 = vld [vmem:[%s3 + $0x190] sm:$0xff]
    %v825 = vld [vmem:[%s3 + $0x198] sm:$0xff]
    %v826 = vld [vmem:[%s3 + $0x1a0] sm:$0xff]
    %v827 = vld [vmem:[%s3 + $0x1a8] sm:$0xff]
    %v828 = vld [vmem:[%s3 + $0x1b0] sm:$0xff]
    %v829 = vld [vmem:[%s3 + $0x1b8] sm:$0xff]
    %v830 = vld [vmem:[%s3 + $0x1c0] sm:$0xff]
    %v831 = vld [vmem:[%s3 + $0x1c8] sm:$0xff]
    %v832 = vld [vmem:[%s3 + $0x1d0] sm:$0xff]
    %v833 = vld [vmem:[%s3 + $0x1d8] sm:$0xff]
    %v834 = vld [vmem:[%s3 + $0x1e0] sm:$0xff]
    %v835 = vld [vmem:[%s3 + $0x1e8] sm:$0xff]
    %v836 = vld [vmem:[%s3 + $0x1f0] sm:$0xff]
    %v837 = vld [vmem:[%s3 + $0x1f8] sm:$0xff]
    %v838 = vld [vmem:[%s3 + $0x200] sm:$0xff]
    %v839 = vld [vmem:[%s3 + $0x208] sm:$0xff]
    %v840 = vld [vmem:[%s3 + $0x210] sm:$0xff]
    %v841 = vld [vmem:[%s3 + $0x218] sm:$0xff]
    %v842 = vld [vmem:[%s3 + $0x220] sm:$0xff]
    %v843 = vld [vmem:[%s3 + $0x228] sm:$0xff]
    %v844 = vld [vmem:[%s3 + $0x230] sm:$0xff]
    %v845 = vld [vmem:[%s3 + $0x238] sm:$0xff]
    %v846 = vld [vmem:[%s3 + $0x240] sm:$0xff]
    %v847 = vld [vmem:[%s3 + $0x248] sm:$0xff]
    %v848 = vld [vmem:[%s3 + $0x250] sm:$0xff]
    %v849 = vld [vmem:[%s3 + $0x258] sm:$0xff]
    %v850 = vld [vmem:[%s3 + $0x260] sm:$0xff]
    %v851 = vld [vmem:[%s3 + $0x268] sm:$0xff]
    %v852 = vld [vmem:[%s3 + $0x270] sm:$0xff]
    %v853 = vld [vmem:[%s3 + $0x278] sm:$0xff]
    %v854 = vld [vmem:[%s3 + $0x280] sm:$0xff]
    %v855 = vld [vmem:[%s3 + $0x288] sm:$0xff]
    %v856 = vld [vmem:[%s3 + $0x290] sm:$0xff]
    %v857 = vld [vmem:[%s3 + $0x298] sm:$0xff]
    %v858 = vld [vmem:[%s3 + $0x2a0] sm:$0xff]
    %v859 = vld [vmem:[%s3 + $0x2a8] sm:$0xff]
    %v860 = vld [vmem:[%s3 + $0x2b0] sm:$0xff]
    %v861 = vld [vmem:[%s3 + $0x2b8] sm:$0xff]
    %v862 = vld [vmem:[%s3 + $0x2c0] sm:$0xff]
    %v863 = vld [vmem:[%s3 + $0x2c8] sm:$0xff]
    %v864 = vld [vmem:[%s3 + $0x2d0] sm:$0xff]
    %v865 = vld [vmem:[%s3 + $0x2d8] sm:$0xff]
    %v866 = vld [vmem:[%s3 + $0x2e0] sm:$0xff]
    %v867 = vld [vmem:[%s3 + $0x2e8] sm:$0xff]
    %v868 = vld [vmem:[%s3 + $0x2f0] sm:$0xff]
    %v869 = vld [vmem:[%s3 + $0x2f8] sm:$0xff]
    %v870 = vld [vmem:[%s3 + $0x300] sm:$0xff]
    %v871 = vld [vmem:[%s3 + $0x308] sm:$0xff]
    %v872 = vld [vmem:[%s3 + $0x310] sm:$0xff]
    %v873 = vld [vmem:[%s3 + $0x318] sm:$0xff]
    %v874 = vld [vmem:[%s3 + $0x320] sm:$0xff]
    %v875 = vld [vmem:[%s3 + $0x328] sm:$0xff]
    %v876 = vld [vmem:[%s3 + $0x330] sm:$0xff]
    %v877 = vld [vmem:[%s3 + $0x338] sm:$0xff]
    %v878 = vld [vmem:[%s3 + $0x340] sm:$0xff]
    %v879 = vld [vmem:[%s3 + $0x348] sm:$0xff]
    %v880 = vld [vmem:[%s3 + $0x350] sm:$0xff]
    %v881 = vld [vmem:[%s3 + $0x358] sm:$0xff]
    %v882 = vld [vmem:[%s3 + $0x360] sm:$0xff]
    %v883 = vld [vmem:[%s3 + $0x368] sm:$0xff]
    %v884 = vld [vmem:[%s3 + $0x370] sm:$0xff]
    %v885 = vld [vmem:[%s3 + $0x378] sm:$0xff]
    %v886 = vld [vmem:[%s3 + $0x380] sm:$0xff]
    %v887 = vld [vmem:[%s3 + $0x388] sm:$0xff]
    %v888 = vld [vmem:[%s3 + $0x390] sm:$0xff]
    %v889 = vld [vmem:[%s3 + $0x398] sm:$0xff]
    %v890 = vld [vmem:[%s3 + $0x3a0] sm:$0xff]
    %v891 = vld [vmem:[%s3 + $0x3a8] sm:$0xff]
    %v892 = vld [vmem:[%s3 + $0x3b0] sm:$0xff]
    %v893 = vld [vmem:[%s3 + $0x3b8] sm:$0xff]
    %v894 = vld [vmem:[%s3 + $0x3c0] sm:$0xff]
    %v895 = vld [vmem:[%s3 + $0x3c8] sm:$0xff]
    %v896 = vld [vmem:[%s3 + $0x3d0] sm:$0xff]
    %v897 = vld [vmem:[%s3 + $0x3d8] sm:$0xff]
    %v898 = vld [vmem:[%s3 + $0x3e0] sm:$0xff]
    %v899 = vld [vmem:[%s3 + $0x3e8] sm:$0xff]
    %v900 = vld [vmem:[%s3 + $0x3f0] sm:$0xff]
    %v901 = vld [vmem:[%s3 + $0x3f8] sm:$0xff]
    %v902 = vld [vmem:[#allocation9] sm:$0xf]
    %v904 = vperm.slane %v902, 0
    %v905 = vperm.slane %v902, 1
    %v906 = vperm.slane %v902, 2
    %v907 = vperm.slane %v902, 3
    %v940 = vunpack.c.l.b16 %v746
    %v941 = vunpack.c.h.b16 %v746
    %v942 = vunpack.c.l.b16 %v747
    %v943 = vunpack.c.h.b16 %v747
    %v944 = vunpack.c.l.b16 %v748
    %v945 = vunpack.c.h.b16 %v748
    %v946 = vunpack.c.l.b16 %v749
    %v947 = vunpack.c.h.b16 %v749
    %v948 = vunpack.c.l.b16 %v750
    %v949 = vunpack.c.h.b16 %v750
    %v950 = vunpack.c.l.b16 %v751
    %v951 = vunpack.c.h.b16 %v751
    %v952 = vunpack.c.l.b16 %v752
    %v953 = vunpack.c.h.b16 %v752
    %v954 = vunpack.c.l.b16 %v753
    %v955 = vunpack.c.h.b16 %v753
    %v956 = vunpack.c.l.b16 %v754
    %v957 = vunpack.c.h.b16 %v754
    %v958 = vunpack.c.l.b16 %v755
    %v959 = vunpack.c.h.b16 %v755
    %v960 = vunpack.c.l.b16 %v756
    %v961 = vunpack.c.h.b16 %v756
    %v962 = vunpack.c.l.b16 %v757
    %v963 = vunpack.c.h.b16 %v757
    %v964 = vunpack.c.l.b16 %v758
    %v965 = vunpack.c.h.b16 %v758
    %v966 = vunpack.c.l.b16 %v759
    %v967 = vunpack.c.h.b16 %v759
    %v968 = vunpack.c.l.b16 %v760
    %v969 = vunpack.c.h.b16 %v760
    %v970 = vunpack.c.l.b16 %v761
    %v971 = vunpack.c.h.b16 %v761
    %v972 = vunpack.c.l.b16 %v762
    %v973 = vunpack.c.h.b16 %v762
    %v974 = vunpack.c.l.b16 %v763
    %v975 = vunpack.c.h.b16 %v763
    %v976 = vunpack.c.l.b16 %v764
    %v977 = vunpack.c.h.b16 %v764
    %v978 = vunpack.c.l.b16 %v765
    %v979 = vunpack.c.h.b16 %v765
    %v980 = vunpack.c.l.b16 %v766
    %v981 = vunpack.c.h.b16 %v766
    %v982 = vunpack.c.l.b16 %v767
    %v983 = vunpack.c.h.b16 %v767
    %v984 = vunpack.c.l.b16 %v768
    %v985 = vunpack.c.h.b16 %v768
    %v986 = vunpack.c.l.b16 %v769
    %v987 = vunpack.c.h.b16 %v769
    %v988 = vunpack.c.l.b16 %v770
    %v989 = vunpack.c.h.b16 %v770
    %v990 = vunpack.c.l.b16 %v771
    %v991 = vunpack.c.h.b16 %v771
    %v992 = vunpack.c.l.b16 %v772
    %v993 = vunpack.c.h.b16 %v772
    %v994 = vunpack.c.l.b16 %v773
    %v995 = vunpack.c.h.b16 %v773
    %v996 = vpack.c.b16 %v944, %v940
    %v997 = vpack.c.b16 %v945, %v941
    %v998 = vpack.c.b16 %v946, %v942
    %v999 = vpack.c.b16 %v947, %v943
    %v1000 = vpack.c.b16 %v952, %v948
    %v1001 = vpack.c.b16 %v953, %v949
    %v1002 = vpack.c.b16 %v954, %v950
    %v1003 = vpack.c.b16 %v955, %v951
    %v1004 = vpack.c.b16 %v960, %v956
    %v1005 = vpack.c.b16 %v961, %v957
    %v1006 = vpack.c.b16 %v962, %v958
    %v1007 = vpack.c.b16 %v963, %v959
    %v1008 = vpack.c.b16 %v968, %v964
    %v1009 = vpack.c.b16 %v969, %v965
    %v1010 = vpack.c.b16 %v970, %v966
    %v1011 = vpack.c.b16 %v971, %v967
    %v1012 = vpack.c.b16 %v976, %v972
    %v1013 = vpack.c.b16 %v977, %v973
    %v1014 = vpack.c.b16 %v978, %v974
    %v1015 = vpack.c.b16 %v979, %v975
    %v1016 = vpack.c.b16 %v984, %v980
    %v1017 = vpack.c.b16 %v985, %v981
    %v1018 = vpack.c.b16 %v986, %v982
    %v1019 = vpack.c.b16 %v987, %v983
    %v1020 = vpack.c.b16 %v992, %v988
    %v1021 = vpack.c.b16 %v993, %v989
    %v1022 = vpack.c.b16 %v994, %v990
    %v1023 = vpack.c.b16 %v995, %v991
    %v1180 = vunpack.c.l.b16 %v774
    %v1181 = vunpack.c.h.b16 %v774
    %v1182 = vunpack.c.l.b16 %v775
    %v1183 = vunpack.c.h.b16 %v775
    %v1184 = vunpack.c.l.b16 %v776
    %v1185 = vunpack.c.h.b16 %v776
    %v1186 = vunpack.c.l.b16 %v777
    %v1187 = vunpack.c.h.b16 %v777
    %v1188 = vunpack.c.l.b16 %v778
    %v1189 = vunpack.c.h.b16 %v778
    %v1190 = vunpack.c.l.b16 %v779
    %v1191 = vunpack.c.h.b16 %v779
    %v1192 = vunpack.c.l.b16 %v780
    %v1193 = vunpack.c.h.b16 %v780
    %v1194 = vunpack.c.l.b16 %v781
    %v1195 = vunpack.c.h.b16 %v781
    %v1196 = vunpack.c.l.b16 %v782
    %v1197 = vunpack.c.h.b16 %v782
    %v1198 = vunpack.c.l.b16 %v783
    %v1199 = vunpack.c.h.b16 %v783
    %v1200 = vunpack.c.l.b16 %v784
    %v1201 = vunpack.c.h.b16 %v784
    %v1202 = vunpack.c.l.b16 %v785
    %v1203 = vunpack.c.h.b16 %v785
    %v1204 = vunpack.c.l.b16 %v786
    %v1205 = vunpack.c.h.b16 %v786
    %v1206 = vunpack.c.l.b16 %v787
    %v1207 = vunpack.c.h.b16 %v787
    %v1208 = vunpack.c.l.b16 %v788
    %v1209 = vunpack.c.h.b16 %v788
    %v1210 = vunpack.c.l.b16 %v789
    %v1211 = vunpack.c.h.b16 %v789
    %v1212 = vunpack.c.l.b16 %v790
    %v1213 = vunpack.c.h.b16 %v790
    %v1214 = vunpack.c.l.b16 %v791
    %v1215 = vunpack.c.h.b16 %v791
    %v1216 = vunpack.c.l.b16 %v792
    %v1217 = vunpack.c.h.b16 %v792
    %v1218 = vunpack.c.l.b16 %v793
    %v1219 = vunpack.c.h.b16 %v793
    %v1220 = vunpack.c.l.b16 %v794
    %v1221 = vunpack.c.h.b16 %v794
    %v1222 = vunpack.c.l.b16 %v795
    %v1223 = vunpack.c.h.b16 %v795
    %v1224 = vunpack.c.l.b16 %v796
    %v1225 = vunpack.c.h.b16 %v796
    %v1226 = vunpack.c.l.b16 %v797
    %v1227 = vunpack.c.h.b16 %v797
    %v1228 = vunpack.c.l.b16 %v798
    %v1229 = vunpack.c.h.b16 %v798
    %v1230 = vunpack.c.l.b16 %v799
    %v1231 = vunpack.c.h.b16 %v799
    %v1232 = vunpack.c.l.b16 %v800
    %v1233 = vunpack.c.h.b16 %v800
    %v1234 = vunpack.c.l.b16 %v801
    %v1235 = vunpack.c.h.b16 %v801
    %v1236 = vunpack.c.l.b16 %v802
    %v1237 = vunpack.c.h.b16 %v802
    %v1238 = vunpack.c.l.b16 %v803
    %v1239 = vunpack.c.h.b16 %v803
    %v1240 = vunpack.c.l.b16 %v804
    %v1241 = vunpack.c.h.b16 %v804
    %v1242 = vunpack.c.l.b16 %v805
    %v1243 = vunpack.c.h.b16 %v805
    %v1244 = vunpack.c.l.b16 %v806
    %v1245 = vunpack.c.h.b16 %v806
    %v1246 = vunpack.c.l.b16 %v807
    %v1247 = vunpack.c.h.b16 %v807
    %v1248 = vunpack.c.l.b16 %v808
    %v1249 = vunpack.c.h.b16 %v808
    %v1250 = vunpack.c.l.b16 %v809
    %v1251 = vunpack.c.h.b16 %v809
    %v1252 = vunpack.c.l.b16 %v810
    %v1253 = vunpack.c.h.b16 %v810
    %v1254 = vunpack.c.l.b16 %v811
    %v1255 = vunpack.c.h.b16 %v811
    %v1256 = vunpack.c.l.b16 %v812
    %v1257 = vunpack.c.h.b16 %v812
    %v1258 = vunpack.c.l.b16 %v813
    %v1259 = vunpack.c.h.b16 %v813
    %v1260 = vunpack.c.l.b16 %v814
    %v1261 = vunpack.c.h.b16 %v814
    %v1262 = vunpack.c.l.b16 %v815
    %v1263 = vunpack.c.h.b16 %v815
    %v1264 = vunpack.c.l.b16 %v816
    %v1265 = vunpack.c.h.b16 %v816
    %v1266 = vunpack.c.l.b16 %v817
    %v1267 = vunpack.c.h.b16 %v817
    %v1268 = vunpack.c.l.b16 %v818
    %v1269 = vunpack.c.h.b16 %v818
    %v1270 = vunpack.c.l.b16 %v819
    %v1271 = vunpack.c.h.b16 %v819
    %v1272 = vunpack.c.l.b16 %v820
    %v1273 = vunpack.c.h.b16 %v820
    %v1274 = vunpack.c.l.b16 %v821
    %v1275 = vunpack.c.h.b16 %v821
    %v1276 = vunpack.c.l.b16 %v822
    %v1277 = vunpack.c.h.b16 %v822
    %v1278 = vunpack.c.l.b16 %v823
    %v1279 = vunpack.c.h.b16 %v823
    %v1280 = vunpack.c.l.b16 %v824
    %v1281 = vunpack.c.h.b16 %v824
    %v1282 = vunpack.c.l.b16 %v825
    %v1283 = vunpack.c.h.b16 %v825
    %v1284 = vunpack.c.l.b16 %v826
    %v1285 = vunpack.c.h.b16 %v826
    %v1286 = vunpack.c.l.b16 %v827
    %v1287 = vunpack.c.h.b16 %v827
    %v1288 = vunpack.c.l.b16 %v828
    %v1289 = vunpack.c.h.b16 %v828
    %v1290 = vunpack.c.l.b16 %v829
    %v1291 = vunpack.c.h.b16 %v829
    %v1292 = vunpack.c.l.b16 %v830
    %v1293 = vunpack.c.h.b16 %v830
    %v1294 = vunpack.c.l.b16 %v831
    %v1295 = vunpack.c.h.b16 %v831
    %v1296 = vunpack.c.l.b16 %v832
    %v1297 = vunpack.c.h.b16 %v832
    %v1298 = vunpack.c.l.b16 %v833
    %v1299 = vunpack.c.h.b16 %v833
    %v1300 = vunpack.c.l.b16 %v834
    %v1301 = vunpack.c.h.b16 %v834
    %v1302 = vunpack.c.l.b16 %v835
    %v1303 = vunpack.c.h.b16 %v835
    %v1304 = vunpack.c.l.b16 %v836
    %v1305 = vunpack.c.h.b16 %v836
    %v1306 = vunpack.c.l.b16 %v837
    %v1307 = vunpack.c.h.b16 %v837
    %v1308 = vunpack.c.l.b16 %v838
    %v1309 = vunpack.c.h.b16 %v838
    %v1310 = vunpack.c.l.b16 %v839
    %v1311 = vunpack.c.h.b16 %v839
    %v1312 = vunpack.c.l.b16 %v840
    %v1313 = vunpack.c.h.b16 %v840
    %v1314 = vunpack.c.l.b16 %v841
    %v1315 = vunpack.c.h.b16 %v841
    %v1316 = vunpack.c.l.b16 %v842
    %v1317 = vunpack.c.h.b16 %v842
    %v1318 = vunpack.c.l.b16 %v843
    %v1319 = vunpack.c.h.b16 %v843
    %v1320 = vunpack.c.l.b16 %v844
    %v1321 = vunpack.c.h.b16 %v844
    %v1322 = vunpack.c.l.b16 %v845
    %v1323 = vunpack.c.h.b16 %v845
    %v1324 = vunpack.c.l.b16 %v846
    %v1325 = vunpack.c.h.b16 %v846
    %v1326 = vunpack.c.l.b16 %v847
    %v1327 = vunpack.c.h.b16 %v847
    %v1328 = vunpack.c.l.b16 %v848
    %v1329 = vunpack.c.h.b16 %v848
    %v1330 = vunpack.c.l.b16 %v849
    %v1331 = vunpack.c.h.b16 %v849
    %v1332 = vunpack.c.l.b16 %v850
    %v1333 = vunpack.c.h.b16 %v850
    %v1334 = vunpack.c.l.b16 %v851
    %v1335 = vunpack.c.h.b16 %v851
    %v1336 = vunpack.c.l.b16 %v852
    %v1337 = vunpack.c.h.b16 %v852
    %v1338 = vunpack.c.l.b16 %v853
    %v1339 = vunpack.c.h.b16 %v853
    %v1340 = vunpack.c.l.b16 %v854
    %v1341 = vunpack.c.h.b16 %v854
    %v1342 = vunpack.c.l.b16 %v855
    %v1343 = vunpack.c.h.b16 %v855
    %v1344 = vunpack.c.l.b16 %v856
    %v1345 = vunpack.c.h.b16 %v856
    %v1346 = vunpack.c.l.b16 %v857
    %v1347 = vunpack.c.h.b16 %v857
    %v1348 = vunpack.c.l.b16 %v858
    %v1349 = vunpack.c.h.b16 %v858
    %v1350 = vunpack.c.l.b16 %v859
    %v1351 = vunpack.c.h.b16 %v859
    %v1352 = vunpack.c.l.b16 %v860
    %v1353 = vunpack.c.h.b16 %v860
    %v1354 = vunpack.c.l.b16 %v861
    %v1355 = vunpack.c.h.b16 %v861
    %v1356 = vunpack.c.l.b16 %v862
    %v1357 = vunpack.c.h.b16 %v862
    %v1358 = vunpack.c.l.b16 %v863
    %v1359 = vunpack.c.h.b16 %v863
    %v1360 = vunpack.c.l.b16 %v864
    %v1361 = vunpack.c.h.b16 %v864
    %v1362 = vunpack.c.l.b16 %v865
    %v1363 = vunpack.c.h.b16 %v865
    %v1364 = vunpack.c.l.b16 %v866
    %v1365 = vunpack.c.h.b16 %v866
    %v1366 = vunpack.c.l.b16 %v867
    %v1367 = vunpack.c.h.b16 %v867
    %v1368 = vunpack.c.l.b16 %v868
    %v1369 = vunpack.c.h.b16 %v868
    %v1370 = vunpack.c.l.b16 %v869
    %v1371 = vunpack.c.h.b16 %v869
    %v1372 = vunpack.c.l.b16 %v870
    %v1373 = vunpack.c.h.b16 %v870
    %v1374 = vunpack.c.l.b16 %v871
    %v1375 = vunpack.c.h.b16 %v871
    %v1376 = vunpack.c.l.b16 %v872
    %v1377 = vunpack.c.h.b16 %v872
    %v1378 = vunpack.c.l.b16 %v873
    %v1379 = vunpack.c.h.b16 %v873
    %v1380 = vunpack.c.l.b16 %v874
    %v1381 = vunpack.c.h.b16 %v874
    %v1382 = vunpack.c.l.b16 %v875
    %v1383 = vunpack.c.h.b16 %v875
    %v1384 = vunpack.c.l.b16 %v876
    %v1385 = vunpack.c.h.b16 %v876
    %v1386 = vunpack.c.l.b16 %v877
    %v1387 = vunpack.c.h.b16 %v877
    %v1388 = vunpack.c.l.b16 %v878
    %v1389 = vunpack.c.h.b16 %v878
    %v1390 = vunpack.c.l.b16 %v879
    %v1391 = vunpack.c.h.b16 %v879
    %v1392 = vunpack.c.l.b16 %v880
    %v1393 = vunpack.c.h.b16 %v880
    %v1394 = vunpack.c.l.b16 %v881
    %v1395 = vunpack.c.h.b16 %v881
    %v1396 = vunpack.c.l.b16 %v882
    %v1397 = vunpack.c.h.b16 %v882
    %v1398 = vunpack.c.l.b16 %v883
    %v1399 = vunpack.c.h.b16 %v883
    %v1400 = vunpack.c.l.b16 %v884
    %v1401 = vunpack.c.h.b16 %v884
    %v1402 = vunpack.c.l.b16 %v885
    %v1403 = vunpack.c.h.b16 %v885
    %v1404 = vunpack.c.l.b16 %v886
    %v1405 = vunpack.c.h.b16 %v886
    %v1406 = vunpack.c.l.b16 %v887
    %v1407 = vunpack.c.h.b16 %v887
    %v1408 = vunpack.c.l.b16 %v888
    %v1409 = vunpack.c.h.b16 %v888
    %v1410 = vunpack.c.l.b16 %v889
    %v1411 = vunpack.c.h.b16 %v889
    %v1412 = vunpack.c.l.b16 %v890
    %v1413 = vunpack.c.h.b16 %v890
    %v1414 = vunpack.c.l.b16 %v891
    %v1415 = vunpack.c.h.b16 %v891
    %v1416 = vunpack.c.l.b16 %v892
    %v1417 = vunpack.c.h.b16 %v892
    %v1418 = vunpack.c.l.b16 %v893
    %v1419 = vunpack.c.h.b16 %v893
    %v1420 = vunpack.c.l.b16 %v894
    %v1421 = vunpack.c.h.b16 %v894
    %v1422 = vunpack.c.l.b16 %v895
    %v1423 = vunpack.c.h.b16 %v895
    %v1424 = vunpack.c.l.b16 %v896
    %v1425 = vunpack.c.h.b16 %v896
    %v1426 = vunpack.c.l.b16 %v897
    %v1427 = vunpack.c.h.b16 %v897
    %v1428 = vunpack.c.l.b16 %v898
    %v1429 = vunpack.c.h.b16 %v898
    %v1430 = vunpack.c.l.b16 %v899
    %v1431 = vunpack.c.h.b16 %v899
    %v1432 = vunpack.c.l.b16 %v900
    %v1433 = vunpack.c.h.b16 %v900
    %v1434 = vunpack.c.l.b16 %v901
    %v1435 = vunpack.c.h.b16 %v901
    %v1436 = vpack.c.b16 %v1184, %v1180
    %v1437 = vpack.c.b16 %v1185, %v1181
    %v1438 = vpack.c.b16 %v1186, %v1182
    %v1439 = vpack.c.b16 %v1187, %v1183
    %v1440 = vpack.c.b16 %v1192, %v1188
    %v1441 = vpack.c.b16 %v1193, %v1189
    %v1442 = vpack.c.b16 %v1194, %v1190
    %v1443 = vpack.c.b16 %v1195, %v1191
    %v1444 = vpack.c.b16 %v1200, %v1196
    %v1445 = vpack.c.b16 %v1201, %v1197
    %v1446 = vpack.c.b16 %v1202, %v1198
    %v1447 = vpack.c.b16 %v1203, %v1199
    %v1448 = vpack.c.b16 %v1208, %v1204
    %v1449 = vpack.c.b16 %v1209, %v1205
    %v1450 = vpack.c.b16 %v1210, %v1206
    %v1451 = vpack.c.b16 %v1211, %v1207
    %v1452 = vpack.c.b16 %v1216, %v1212
    %v1453 = vpack.c.b16 %v1217, %v1213
    %v1454 = vpack.c.b16 %v1218, %v1214
    %v1455 = vpack.c.b16 %v1219, %v1215
    %v1456 = vpack.c.b16 %v1224, %v1220
    %v1457 = vpack.c.b16 %v1225, %v1221
    %v1458 = vpack.c.b16 %v1226, %v1222
    %v1459 = vpack.c.b16 %v1227, %v1223
    %v1460 = vpack.c.b16 %v1232, %v1228
    %v1461 = vpack.c.b16 %v1233, %v1229
    %v1462 = vpack.c.b16 %v1234, %v1230
    %v1463 = vpack.c.b16 %v1235, %v1231
    %v1464 = vpack.c.b16 %v1240, %v1236
    %v1465 = vpack.c.b16 %v1241, %v1237
    %v1466 = vpack.c.b16 %v1242, %v1238
    %v1467 = vpack.c.b16 %v1243, %v1239
    %v1468 = vpack.c.b16 %v1248, %v1244
    %v1469 = vpack.c.b16 %v1249, %v1245
    %v1470 = vpack.c.b16 %v1250, %v1246
    %v1471 = vpack.c.b16 %v1251, %v1247
    %v1472 = vpack.c.b16 %v1256, %v1252
    %v1473 = vpack.c.b16 %v1257, %v1253
    %v1474 = vpack.c.b16 %v1258, %v1254
    %v1475 = vpack.c.b16 %v1259, %v1255
    %v1476 = vpack.c.b16 %v1264, %v1260
    %v1477 = vpack.c.b16 %v1265, %v1261
    %v1478 = vpack.c.b16 %v1266, %v1262
    %v1479 = vpack.c.b16 %v1267, %v1263
    %v1480 = vpack.c.b16 %v1272, %v1268
    %v1481 = vpack.c.b16 %v1273, %v1269
    %v1482 = vpack.c.b16 %v1274, %v1270
    %v1483 = vpack.c.b16 %v1275, %v1271
    %v1484 = vpack.c.b16 %v1280, %v1276
    %v1485 = vpack.c.b16 %v1281, %v1277
    %v1486 = vpack.c.b16 %v1282, %v1278
    %v1487 = vpack.c.b16 %v1283, %v1279
    %v1488 = vpack.c.b16 %v1288, %v1284
    %v1489 = vpack.c.b16 %v1289, %v1285
    %v1490 = vpack.c.b16 %v1290, %v1286
    %v1491 = vpack.c.b16 %v1291, %v1287
    %v1492 = vpack.c.b16 %v1296, %v1292
    %v1493 = vpack.c.b16 %v1297, %v1293
    %v1494 = vpack.c.b16 %v1298, %v1294
    %v1495 = vpack.c.b16 %v1299, %v1295
    %v1496 = vpack.c.b16 %v1304, %v1300
    %v1497 = vpack.c.b16 %v1305, %v1301
    %v1498 = vpack.c.b16 %v1306, %v1302
    %v1499 = vpack.c.b16 %v1307, %v1303
    %v1500 = vpack.c.b16 %v1312, %v1308
    %v1501 = vpack.c.b16 %v1313, %v1309
    %v1502 = vpack.c.b16 %v1314, %v1310
    %v1503 = vpack.c.b16 %v1315, %v1311
    %v1504 = vpack.c.b16 %v1320, %v1316
    %v1505 = vpack.c.b16 %v1321, %v1317
    %v1506 = vpack.c.b16 %v1322, %v1318
    %v1507 = vpack.c.b16 %v1323, %v1319
    %v1508 = vpack.c.b16 %v1328, %v1324
    %v1509 = vpack.c.b16 %v1329, %v1325
    %v1510 = vpack.c.b16 %v1330, %v1326
    %v1511 = vpack.c.b16 %v1331, %v1327
    %v1512 = vpack.c.b16 %v1336, %v1332
    %v1513 = vpack.c.b16 %v1337, %v1333
    %v1514 = vpack.c.b16 %v1338, %v1334
    %v1515 = vpack.c.b16 %v1339, %v1335
    %v1516 = vpack.c.b16 %v1344, %v1340
    %v1517 = vpack.c.b16 %v1345, %v1341
    %v1518 = vpack.c.b16 %v1346, %v1342
    %v1519 = vpack.c.b16 %v1347, %v1343
    %v1520 = vpack.c.b16 %v1352, %v1348
    %v1521 = vpack.c.b16 %v1353, %v1349
    %v1522 = vpack.c.b16 %v1354, %v1350
    %v1523 = vpack.c.b16 %v1355, %v1351
    %v1524 = vpack.c.b16 %v1360, %v1356
    %v1525 = vpack.c.b16 %v1361, %v1357
    %v1526 = vpack.c.b16 %v1362, %v1358
    %v1527 = vpack.c.b16 %v1363, %v1359
    %v1528 = vpack.c.b16 %v1368, %v1364
    %v1529 = vpack.c.b16 %v1369, %v1365
    %v1530 = vpack.c.b16 %v1370, %v1366
    %v1531 = vpack.c.b16 %v1371, %v1367
    %v1532 = vpack.c.b16 %v1376, %v1372
    %v1533 = vpack.c.b16 %v1377, %v1373
    %v1534 = vpack.c.b16 %v1378, %v1374
    %v1535 = vpack.c.b16 %v1379, %v1375
    %v1536 = vpack.c.b16 %v1384, %v1380
    %v1537 = vpack.c.b16 %v1385, %v1381
    %v1538 = vpack.c.b16 %v1386, %v1382
    %v1539 = vpack.c.b16 %v1387, %v1383
    %v1540 = vpack.c.b16 %v1392, %v1388
    %v1541 = vpack.c.b16 %v1393, %v1389
    %v1542 = vpack.c.b16 %v1394, %v1390
    %v1543 = vpack.c.b16 %v1395, %v1391
    %v1544 = vpack.c.b16 %v1400, %v1396
    %v1545 = vpack.c.b16 %v1401, %v1397
    %v1546 = vpack.c.b16 %v1402, %v1398
    %v1547 = vpack.c.b16 %v1403, %v1399
    %v1548 = vpack.c.b16 %v1408, %v1404
    %v1549 = vpack.c.b16 %v1409, %v1405
    %v1550 = vpack.c.b16 %v1410, %v1406
    %v1551 = vpack.c.b16 %v1411, %v1407
    %v1552 = vpack.c.b16 %v1416, %v1412
    %v1553 = vpack.c.b16 %v1417, %v1413
    %v1554 = vpack.c.b16 %v1418, %v1414
    %v1555 = vpack.c.b16 %v1419, %v1415
    %v1556 = vpack.c.b16 %v1424, %v1420
    %v1557 = vpack.c.b16 %v1425, %v1421
    %v1558 = vpack.c.b16 %v1426, %v1422
    %v1559 = vpack.c.b16 %v1427, %v1423
    %v1560 = vpack.c.b16 %v1432, %v1428
    %v1561 = vpack.c.b16 %v1433, %v1429
    %v1562 = vpack.c.b16 %v1434, %v1430
    %v1563 = vpack.c.b16 %v1435, %v1431
    %1692 = vmatpush.bf16.msra.mxu0 %v1464
    %1693 = vmatpush.bf16.msra.mxu0 %v1460
    %1694 = vmatpush.bf16.msra.mxu0 %v1456
    %1695 = vmatpush.bf16.msra.mxu0 %v1452
    %1696 = vmatpush.bf16.msra.mxu0 %v1448
    %1697 = vmatpush.bf16.msra.mxu0 %v1444
    %1698 = vmatpush.bf16.msra.mxu0 %v1440
    %1699 = vmatpush.bf16.msra.mxu0 %v1436
    %1700 = vmatmul.bf16.gmra.mxu0 %v996
    %v1701 = vpop.f32.mrf.mxu0
    %v1702 = vadd.f32 %v904, %v1701
    %v1703 = vpop.f32.mrf.mxu0
    %v1704 = vadd.f32 %v904, %v1703
    %1705 = vmatmul.bf16.gmra.mxu0 %v1000
    %v1706 = vpop.f32.mrf.mxu0
    %v1707 = vadd.f32 %v904, %v1706
    %v1708 = vpop.f32.mrf.mxu0
    %v1709 = vadd.f32 %v904, %v1708
    %1710 = vmatmul.bf16.gmra.mxu0 %v1004
    %v1711 = vpop.f32.mrf.mxu0
    %v1712 = vadd.f32 %v904, %v1711
    %v1713 = vpop.f32.mrf.mxu0
    %v1714 = vadd.f32 %v904, %v1713
    %1715 = vmatmul.bf16.gmra.mxu0 %v1008
    %v1716 = vpop.f32.mrf.mxu0
    %v1717 = vadd.f32 %v904, %v1716
    %v1718 = vpop.f32.mrf.mxu0
    %v1719 = vadd.f32 %v904, %v1718
    %1720 = vmatmul.bf16.gmra.mxu0 %v1012
    %v1721 = vpop.f32.mrf.mxu0
    %v1722 = vadd.f32 %v904, %v1721
    %v1723 = vpop.f32.mrf.mxu0
    %v1724 = vadd.f32 %v904, %v1723
    %1725 = vmatmul.bf16.gmra.mxu0 %v1016
    %v1726 = vpop.f32.mrf.mxu0
    %v1727 = vadd.f32 %v904, %v1726
    %v1728 = vpop.f32.mrf.mxu0
    %v1729 = vadd.f32 %v904, %v1728
    %1730 = vmatmul.bf16.gmra.mxu0 %v1020
    %v1731 = vpop.f32.mrf.mxu0
    %v1732 = vpop.f32.mrf.mxu0
    %1733 = vdwg.mxu0
    %1734 = vmatpush.bf16.msra.mxu0 %v1496
    %1735 = vmatpush.bf16.msra.mxu0 %v1492
    %1736 = vmatpush.bf16.msra.mxu0 %v1488
    %1737 = vmatpush.bf16.msra.mxu0 %v1484
    %1738 = vmatpush.bf16.msra.mxu0 %v1480
    %1739 = vmatpush.bf16.msra.mxu0 %v1476
    %1740 = vmatpush.bf16.msra.mxu0 %v1472
    %1741 = vmatpush.bf16.msra.mxu0 %v1468
    %1742 = vmatmul.bf16.gmra.mxu0 %v997
    %v1743 = vpop.f32.mrf.mxu0
    %v1744 = vadd.f32 %v1702, %v1743
    %v1745 = vpop.f32.mrf.mxu0
    %v1746 = vadd.f32 %v1704, %v1745
    %1747 = vmatmul.bf16.gmra.mxu0 %v1001
    %v1748 = vpop.f32.mrf.mxu0
    %v1749 = vadd.f32 %v1707, %v1748
    %v1750 = vpop.f32.mrf.mxu0
    %v1751 = vadd.f32 %v1709, %v1750
    %1752 = vmatmul.bf16.gmra.mxu0 %v1005
    %v1753 = vpop.f32.mrf.mxu0
    %v1754 = vadd.f32 %v1712, %v1753
    %v1755 = vpop.f32.mrf.mxu0
    %v1756 = vadd.f32 %v1714, %v1755
    %1757 = vmatmul.bf16.gmra.mxu0 %v1009
    %v1758 = vpop.f32.mrf.mxu0
    %v1759 = vadd.f32 %v1717, %v1758
    %v1760 = vpop.f32.mrf.mxu0
    %v1761 = vadd.f32 %v1719, %v1760
    %1762 = vmatmul.bf16.gmra.mxu0 %v1013
    %v1763 = vpop.f32.mrf.mxu0
    %v1764 = vadd.f32 %v1722, %v1763
    %v1765 = vpop.f32.mrf.mxu0
    %v1766 = vadd.f32 %v1724, %v1765
    %1767 = vmatmul.bf16.gmra.mxu0 %v1017
    %v1768 = vpop.f32.mrf.mxu0
    %v1769 = vadd.f32 %v1727, %v1768
    %v1770 = vpop.f32.mrf.mxu0
    %v1771 = vadd.f32 %v1729, %v1770
    %1772 = vmatmul.bf16.gmra.mxu0 %v1021
    %v1773 = vpop.f32.mrf.mxu0
    %v1774 = vpop.f32.mrf.mxu0
    %1775 = vdwg.mxu0
    %1776 = vmatpush.bf16.msra.mxu0 %v1528
    %1777 = vmatpush.bf16.msra.mxu0 %v1524
    %1778 = vmatpush.bf16.msra.mxu0 %v1520
    %1779 = vmatpush.bf16.msra.mxu0 %v1516
    %1780 = vmatpush.bf16.msra.mxu0 %v1512
    %1781 = vmatpush.bf16.msra.mxu0 %v1508
    %1782 = vmatpush.bf16.msra.mxu0 %v1504
    %1783 = vmatpush.bf16.msra.mxu0 %v1500
    %1784 = vmatmul.bf16.gmra.mxu0 %v998
    %v1785 = vpop.f32.mrf.mxu0
    %v1786 = vadd.f32 %v1744, %v1785
    %v1787 = vpop.f32.mrf.mxu0
    %v1788 = vadd.f32 %v1746, %v1787
    %1789 = vmatmul.bf16.gmra.mxu0 %v1002
    %v1790 = vpop.f32.mrf.mxu0
    %v1791 = vadd.f32 %v1749, %v1790
    %v1792 = vpop.f32.mrf.mxu0
    %v1793 = vadd.f32 %v1751, %v1792
    %1794 = vmatmul.bf16.gmra.mxu0 %v1006
    %v1795 = vpop.f32.mrf.mxu0
    %v1796 = vadd.f32 %v1754, %v1795
    %v1797 = vpop.f32.mrf.mxu0
    %v1798 = vadd.f32 %v1756, %v1797
    %1799 = vmatmul.bf16.gmra.mxu0 %v1010
    %v1800 = vpop.f32.mrf.mxu0
    %v1801 = vadd.f32 %v1759, %v1800
    %v1802 = vpop.f32.mrf.mxu0
    %v1803 = vadd.f32 %v1761, %v1802
    %1804 = vmatmul.bf16.gmra.mxu0 %v1014
    %v1805 = vpop.f32.mrf.mxu0
    %v1806 = vadd.f32 %v1764, %v1805
    %v1807 = vpop.f32.mrf.mxu0
    %v1808 = vadd.f32 %v1766, %v1807
    %1809 = vmatmul.bf16.gmra.mxu0 %v1018
    %v1810 = vpop.f32.mrf.mxu0
    %v1811 = vadd.f32 %v1769, %v1810
    %v1812 = vpop.f32.mrf.mxu0
    %v1813 = vadd.f32 %v1771, %v1812
    %1814 = vmatmul.bf16.gmra.mxu0 %v1022
    %v1815 = vpop.f32.mrf.mxu0
    %v1816 = vpop.f32.mrf.mxu0
    %1817 = vdwg.mxu0
    %1818 = vmatpush.bf16.msra.mxu0 %v1560
    %1819 = vmatpush.bf16.msra.mxu0 %v1556
    %1820 = vmatpush.bf16.msra.mxu0 %v1552
    %1821 = vmatpush.bf16.msra.mxu0 %v1548
    %1822 = vmatpush.bf16.msra.mxu0 %v1544
    %1823 = vmatpush.bf16.msra.mxu0 %v1540
    %1824 = vmatpush.bf16.msra.mxu0 %v1536
    %1825 = vmatpush.bf16.msra.mxu0 %v1532
    %1826 = vmatmul.bf16.gmra.mxu0 %v999
    %v1827 = vpop.f32.mrf.mxu0
    %v1828 = vadd.f32 %v1786, %v1827
    %v1829 = vpop.f32.mrf.mxu0
    %v1830 = vadd.f32 %v1788, %v1829
    %1831 = vmatmul.bf16.gmra.mxu0 %v1003
    %v1832 = vpop.f32.mrf.mxu0
    %v1833 = vadd.f32 %v1791, %v1832
    %v1834 = vpop.f32.mrf.mxu0
    %v1835 = vadd.f32 %v1793, %v1834
    %1836 = vmatmul.bf16.gmra.mxu0 %v1007
    %v1837 = vpop.f32.mrf.mxu0
    %v1838 = vadd.f32 %v1796, %v1837
    %v1839 = vpop.f32.mrf.mxu0
    %v1840 = vadd.f32 %v1798, %v1839
    %1841 = vmatmul.bf16.gmra.mxu0 %v1011
    %v1842 = vpop.f32.mrf.mxu0
    %v1843 = vadd.f32 %v1801, %v1842
    %v1844 = vpop.f32.mrf.mxu0
    %v1845 = vadd.f32 %v1803, %v1844
    %1846 = vmatmul.bf16.gmra.mxu0 %v1015
    %v1847 = vpop.f32.mrf.mxu0
    %v1848 = vadd.f32 %v1806, %v1847
    %v1849 = vpop.f32.mrf.mxu0
    %v1850 = vadd.f32 %v1808, %v1849
    %1851 = vmatmul.bf16.gmra.mxu0 %v1019
    %v1852 = vpop.f32.mrf.mxu0
    %v1853 = vadd.f32 %v1811, %v1852
    %v1854 = vpop.f32.mrf.mxu0
    %v1855 = vadd.f32 %v1813, %v1854
    %1856 = vmatmul.bf16.gmra.mxu0 %v1023
    %v1857 = vpop.f32.mrf.mxu0
    %v1858 = vpop.f32.mrf.mxu0
    %1859 = vdwg.mxu0
    %1860 = vmatpush.bf16.msra.mxu0 %v1465
    %1861 = vmatpush.bf16.msra.mxu0 %v1461
    %1862 = vmatpush.bf16.msra.mxu0 %v1457
    %1863 = vmatpush.bf16.msra.mxu0 %v1453
    %1864 = vmatpush.bf16.msra.mxu0 %v1449
    %1865 = vmatpush.bf16.msra.mxu0 %v1445
    %1866 = vmatpush.bf16.msra.mxu0 %v1441
    %1867 = vmatpush.bf16.msra.mxu0 %v1437
    %1868 = vmatmul.bf16.gmra.mxu0 %v996
    %v1869 = vpop.f32.mrf.mxu0
    %v1870 = vadd.f32 %v905, %v1869
    %v1871 = vpop.f32.mrf.mxu0
    %v1872 = vadd.f32 %v905, %v1871
    %1873 = vmatmul.bf16.gmra.mxu0 %v1000
    %v1874 = vpop.f32.mrf.mxu0
    %v1875 = vadd.f32 %v905, %v1874
    %v1876 = vpop.f32.mrf.mxu0
    %v1877 = vadd.f32 %v905, %v1876
    %1878 = vmatmul.bf16.gmra.mxu0 %v1004
    %v1879 = vpop.f32.mrf.mxu0
    %v1880 = vadd.f32 %v905, %v1879
    %v1881 = vpop.f32.mrf.mxu0
    %v1882 = vadd.f32 %v905, %v1881
    %1883 = vmatmul.bf16.gmra.mxu0 %v1008
    %v1884 = vpop.f32.mrf.mxu0
    %v1885 = vadd.f32 %v905, %v1884
    %v1886 = vpop.f32.mrf.mxu0
    %v1887 = vadd.f32 %v905, %v1886
    %1888 = vmatmul.bf16.gmra.mxu0 %v1012
    %v1889 = vpop.f32.mrf.mxu0
    %v1890 = vadd.f32 %v905, %v1889
    %v1891 = vpop.f32.mrf.mxu0
    %v1892 = vadd.f32 %v905, %v1891
    %1893 = vmatmul.bf16.gmra.mxu0 %v1016
    %v1894 = vpop.f32.mrf.mxu0
    %v1895 = vadd.f32 %v905, %v1894
    %v1896 = vpop.f32.mrf.mxu0
    %v1897 = vadd.f32 %v905, %v1896
    %1898 = vmatmul.bf16.gmra.mxu0 %v1020
    %v1899 = vpop.f32.mrf.mxu0
    %v1900 = vpop.f32.mrf.mxu0
    %1901 = vdwg.mxu0
    %1902 = vmatpush.bf16.msra.mxu0 %v1497
    %1903 = vmatpush.bf16.msra.mxu0 %v1493
    %1904 = vmatpush.bf16.msra.mxu0 %v1489
    %1905 = vmatpush.bf16.msra.mxu0 %v1485
    %1906 = vmatpush.bf16.msra.mxu0 %v1481
    %1907 = vmatpush.bf16.msra.mxu0 %v1477
    %1908 = vmatpush.bf16.msra.mxu0 %v1473
    %1909 = vmatpush.bf16.msra.mxu0 %v1469
    %1910 = vmatmul.bf16.gmra.mxu0 %v997
    %v1911 = vpop.f32.mrf.mxu0
    %v1912 = vadd.f32 %v1870, %v1911
    %v1913 = vpop.f32.mrf.mxu0
    %v1914 = vadd.f32 %v1872, %v1913
    %1915 = vmatmul.bf16.gmra.mxu0 %v1001
    %v1916 = vpop.f32.mrf.mxu0
    %v1917 = vadd.f32 %v1875, %v1916
    %v1918 = vpop.f32.mrf.mxu0
    %v1919 = vadd.f32 %v1877, %v1918
    %1920 = vmatmul.bf16.gmra.mxu0 %v1005
    %v1921 = vpop.f32.mrf.mxu0
    %v1922 = vadd.f32 %v1880, %v1921
    %v1923 = vpop.f32.mrf.mxu0
    %v1924 = vadd.f32 %v1882, %v1923
    %1925 = vmatmul.bf16.gmra.mxu0 %v1009
    %v1926 = vpop.f32.mrf.mxu0
    %v1927 = vadd.f32 %v1885, %v1926
    %v1928 = vpop.f32.mrf.mxu0
    %v1929 = vadd.f32 %v1887, %v1928
    %1930 = vmatmul.bf16.gmra.mxu0 %v1013
    %v1931 = vpop.f32.mrf.mxu0
    %v1932 = vadd.f32 %v1890, %v1931
    %v1933 = vpop.f32.mrf.mxu0
    %v1934 = vadd.f32 %v1892, %v1933
    %1935 = vmatmul.bf16.gmra.mxu0 %v1017
    %v1936 = vpop.f32.mrf.mxu0
    %v1937 = vadd.f32 %v1895, %v1936
    %v1938 = vpop.f32.mrf.mxu0
    %v1939 = vadd.f32 %v1897, %v1938
    %1940 = vmatmul.bf16.gmra.mxu0 %v1021
    %v1941 = vpop.f32.mrf.mxu0
    %v1942 = vpop.f32.mrf.mxu0
    %1943 = vdwg.mxu0
    %1944 = vmatpush.bf16.msra.mxu0 %v1529
    %1945 = vmatpush.bf16.msra.mxu0 %v1525
    %1946 = vmatpush.bf16.msra.mxu0 %v1521
    %1947 = vmatpush.bf16.msra.mxu0 %v1517
    %1948 = vmatpush.bf16.msra.mxu0 %v1513
    %1949 = vmatpush.bf16.msra.mxu0 %v1509
    %1950 = vmatpush.bf16.msra.mxu0 %v1505
    %1951 = vmatpush.bf16.msra.mxu0 %v1501
    %1952 = vmatmul.bf16.gmra.mxu0 %v998
    %v1953 = vpop.f32.mrf.mxu0
    %v1954 = vadd.f32 %v1912, %v1953
    %v1955 = vpop.f32.mrf.mxu0
    %v1956 = vadd.f32 %v1914, %v1955
    %1957 = vmatmul.bf16.gmra.mxu0 %v1002
    %v1958 = vpop.f32.mrf.mxu0
    %v1959 = vadd.f32 %v1917, %v1958
    %v1960 = vpop.f32.mrf.mxu0
    %v1961 = vadd.f32 %v1919, %v1960
    %1962 = vmatmul.bf16.gmra.mxu0 %v1006
    %v1963 = vpop.f32.mrf.mxu0
    %v1964 = vadd.f32 %v1922, %v1963
    %v1965 = vpop.f32.mrf.mxu0
    %v1966 = vadd.f32 %v1924, %v1965
    %1967 = vmatmul.bf16.gmra.mxu0 %v1010
    %v1968 = vpop.f32.mrf.mxu0
    %v1969 = vadd.f32 %v1927, %v1968
    %v1970 = vpop.f32.mrf.mxu0
    %v1971 = vadd.f32 %v1929, %v1970
    %1972 = vmatmul.bf16.gmra.mxu0 %v1014
    %v1973 = vpop.f32.mrf.mxu0
    %v1974 = vadd.f32 %v1932, %v1973
    %v1975 = vpop.f32.mrf.mxu0
    %v1976 = vadd.f32 %v1934, %v1975
    %1977 = vmatmul.bf16.gmra.mxu0 %v1018
    %v1978 = vpop.f32.mrf.mxu0
    %v1979 = vadd.f32 %v1937, %v1978
    %v1980 = vpop.f32.mrf.mxu0
    %v1981 = vadd.f32 %v1939, %v1980
    %1982 = vmatmul.bf16.gmra.mxu0 %v1022
    %v1983 = vpop.f32.mrf.mxu0
    %v1984 = vpop.f32.mrf.mxu0
    %1985 = vdwg.mxu0
    %1986 = vmatpush.bf16.msra.mxu0 %v1561
    %1987 = vmatpush.bf16.msra.mxu0 %v1557
    %1988 = vmatpush.bf16.msra.mxu0 %v1553
    %1989 = vmatpush.bf16.msra.mxu0 %v1549
    %1990 = vmatpush.bf16.msra.mxu0 %v1545
    %1991 = vmatpush.bf16.msra.mxu0 %v1541
    %1992 = vmatpush.bf16.msra.mxu0 %v1537
    %1993 = vmatpush.bf16.msra.mxu0 %v1533
    %1994 = vmatmul.bf16.gmra.mxu0 %v999
    %v1995 = vpop.f32.mrf.mxu0
    %v1996 = vadd.f32 %v1954, %v1995
    %v1997 = vpop.f32.mrf.mxu0
    %v1998 = vadd.f32 %v1956, %v1997
    %1999 = vmatmul.bf16.gmra.mxu0 %v1003
    %v2000 = vpop.f32.mrf.mxu0
    %v2001 = vadd.f32 %v1959, %v2000
    %v2002 = vpop.f32.mrf.mxu0
    %v2003 = vadd.f32 %v1961, %v2002
    %2004 = vmatmul.bf16.gmra.mxu0 %v1007
    %v2005 = vpop.f32.mrf.mxu0
    %v2006 = vadd.f32 %v1964, %v2005
    %v2007 = vpop.f32.mrf.mxu0
    %v2008 = vadd.f32 %v1966, %v2007
    %2009 = vmatmul.bf16.gmra.mxu0 %v1011
    %v2010 = vpop.f32.mrf.mxu0
    %v2011 = vadd.f32 %v1969, %v2010
    %v2012 = vpop.f32.mrf.mxu0
    %v2013 = vadd.f32 %v1971, %v2012
    %2014 = vmatmul.bf16.gmra.mxu0 %v1015
    %v2015 = vpop.f32.mrf.mxu0
    %v2016 = vadd.f32 %v1974, %v2015
    %v2017 = vpop.f32.mrf.mxu0
    %v2018 = vadd.f32 %v1976, %v2017
    %2019 = vmatmul.bf16.gmra.mxu0 %v1019
    %v2020 = vpop.f32.mrf.mxu0
    %v2021 = vadd.f32 %v1979, %v2020
    %v2022 = vpop.f32.mrf.mxu0
    %v2023 = vadd.f32 %v1981, %v2022
    %2024 = vmatmul.bf16.gmra.mxu0 %v1023
    %v2025 = vpop.f32.mrf.mxu0
    %v2026 = vpop.f32.mrf.mxu0
    %2027 = vdwg.mxu0
    %2028 = vmatpush.bf16.msra.mxu0 %v1466
    %2029 = vmatpush.bf16.msra.mxu0 %v1462
    %2030 = vmatpush.bf16.msra.mxu0 %v1458
    %2031 = vmatpush.bf16.msra.mxu0 %v1454
    %2032 = vmatpush.bf16.msra.mxu0 %v1450
    %2033 = vmatpush.bf16.msra.mxu0 %v1446
    %2034 = vmatpush.bf16.msra.mxu0 %v1442
    %2035 = vmatpush.bf16.msra.mxu0 %v1438
    %2036 = vmatmul.bf16.gmra.mxu0 %v996
    %v2037 = vpop.f32.mrf.mxu0
    %v2038 = vadd.f32 %v906, %v2037
    %v2039 = vpop.f32.mrf.mxu0
    %v2040 = vadd.f32 %v906, %v2039
    %2041 = vmatmul.bf16.gmra.mxu0 %v1000
    %v2042 = vpop.f32.mrf.mxu0
    %v2043 = vadd.f32 %v906, %v2042
    %v2044 = vpop.f32.mrf.mxu0
    %v2045 = vadd.f32 %v906, %v2044
    %2046 = vmatmul.bf16.gmra.mxu0 %v1004
    %v2047 = vpop.f32.mrf.mxu0
    %v2048 = vadd.f32 %v906, %v2047
    %v2049 = vpop.f32.mrf.mxu0
    %v2050 = vadd.f32 %v906, %v2049
    %2051 = vmatmul.bf16.gmra.mxu0 %v1008
    %v2052 = vpop.f32.mrf.mxu0
    %v2053 = vadd.f32 %v906, %v2052
    %v2054 = vpop.f32.mrf.mxu0
    %v2055 = vadd.f32 %v906, %v2054
    %2056 = vmatmul.bf16.gmra.mxu0 %v1012
    %v2057 = vpop.f32.mrf.mxu0
    %v2058 = vadd.f32 %v906, %v2057
    %v2059 = vpop.f32.mrf.mxu0
    %v2060 = vadd.f32 %v906, %v2059
    %2061 = vmatmul.bf16.gmra.mxu0 %v1016
    %v2062 = vpop.f32.mrf.mxu0
    %v2063 = vadd.f32 %v906, %v2062
    %v2064 = vpop.f32.mrf.mxu0
    %v2065 = vadd.f32 %v906, %v2064
    %2066 = vmatmul.bf16.gmra.mxu0 %v1020
    %v2067 = vpop.f32.mrf.mxu0
    %v2068 = vpop.f32.mrf.mxu0
    %2069 = vdwg.mxu0
    %2070 = vmatpush.bf16.msra.mxu0 %v1498
    %2071 = vmatpush.bf16.msra.mxu0 %v1494
    %2072 = vmatpush.bf16.msra.mxu0 %v1490
    %2073 = vmatpush.bf16.msra.mxu0 %v1486
    %2074 = vmatpush.bf16.msra.mxu0 %v1482
    %2075 = vmatpush.bf16.msra.mxu0 %v1478
    %2076 = vmatpush.bf16.msra.mxu0 %v1474
    %2077 = vmatpush.bf16.msra.mxu0 %v1470
    %2078 = vmatmul.bf16.gmra.mxu0 %v997
    %v2079 = vpop.f32.mrf.mxu0
    %v2080 = vadd.f32 %v2038, %v2079
    %v2081 = vpop.f32.mrf.mxu0
    %v2082 = vadd.f32 %v2040, %v2081
    %2083 = vmatmul.bf16.gmra.mxu0 %v1001
    %v2084 = vpop.f32.mrf.mxu0
    %v2085 = vadd.f32 %v2043, %v2084
    %v2086 = vpop.f32.mrf.mxu0
    %v2087 = vadd.f32 %v2045, %v2086
    %2088 = vmatmul.bf16.gmra.mxu0 %v1005
    %v2089 = vpop.f32.mrf.mxu0
    %v2090 = vadd.f32 %v2048, %v2089
    %v2091 = vpop.f32.mrf.mxu0
    %v2092 = vadd.f32 %v2050, %v2091
    %2093 = vmatmul.bf16.gmra.mxu0 %v1009
    %v2094 = vpop.f32.mrf.mxu0
    %v2095 = vadd.f32 %v2053, %v2094
    %v2096 = vpop.f32.mrf.mxu0
    %v2097 = vadd.f32 %v2055, %v2096
    %2098 = vmatmul.bf16.gmra.mxu0 %v1013
    %v2099 = vpop.f32.mrf.mxu0
    %v2100 = vadd.f32 %v2058, %v2099
    %v2101 = vpop.f32.mrf.mxu0
    %v2102 = vadd.f32 %v2060, %v2101
    %2103 = vmatmul.bf16.gmra.mxu0 %v1017
    %v2104 = vpop.f32.mrf.mxu0
    %v2105 = vadd.f32 %v2063, %v2104
    %v2106 = vpop.f32.mrf.mxu0
    %v2107 = vadd.f32 %v2065, %v2106
    %2108 = vmatmul.bf16.gmra.mxu0 %v1021
    %v2109 = vpop.f32.mrf.mxu0
    %v2110 = vpop.f32.mrf.mxu0
    %2111 = vdwg.mxu0
    %2112 = vmatpush.bf16.msra.mxu0 %v1530
    %2113 = vmatpush.bf16.msra.mxu0 %v1526
    %2114 = vmatpush.bf16.msra.mxu0 %v1522
    %2115 = vmatpush.bf16.msra.mxu0 %v1518
    %2116 = vmatpush.bf16.msra.mxu0 %v1514
    %2117 = vmatpush.bf16.msra.mxu0 %v1510
    %2118 = vmatpush.bf16.msra.mxu0 %v1506
    %2119 = vmatpush.bf16.msra.mxu0 %v1502
    %2120 = vmatmul.bf16.gmra.mxu0 %v998
    %v2121 = vpop.f32.mrf.mxu0
    %v2122 = vadd.f32 %v2080, %v2121
    %v2123 = vpop.f32.mrf.mxu0
    %v2124 = vadd.f32 %v2082, %v2123
    %2125 = vmatmul.bf16.gmra.mxu0 %v1002
    %v2126 = vpop.f32.mrf.mxu0
    %v2127 = vadd.f32 %v2085, %v2126
    %v2128 = vpop.f32.mrf.mxu0
    %v2129 = vadd.f32 %v2087, %v2128
    %2130 = vmatmul.bf16.gmra.mxu0 %v1006
    %v2131 = vpop.f32.mrf.mxu0
    %v2132 = vadd.f32 %v2090, %v2131
    %v2133 = vpop.f32.mrf.mxu0
    %v2134 = vadd.f32 %v2092, %v2133
    %2135 = vmatmul.bf16.gmra.mxu0 %v1010
    %v2136 = vpop.f32.mrf.mxu0
    %v2137 = vadd.f32 %v2095, %v2136
    %v2138 = vpop.f32.mrf.mxu0
    %v2139 = vadd.f32 %v2097, %v2138
    %2140 = vmatmul.bf16.gmra.mxu0 %v1014
    %v2141 = vpop.f32.mrf.mxu0
    %v2142 = vadd.f32 %v2100, %v2141
    %v2143 = vpop.f32.mrf.mxu0
    %v2144 = vadd.f32 %v2102, %v2143
    %2145 = vmatmul.bf16.gmra.mxu0 %v1018
    %v2146 = vpop.f32.mrf.mxu0
    %v2147 = vadd.f32 %v2105, %v2146
    %v2148 = vpop.f32.mrf.mxu0
    %v2149 = vadd.f32 %v2107, %v2148
    %2150 = vmatmul.bf16.gmra.mxu0 %v1022
    %v2151 = vpop.f32.mrf.mxu0
    %v2152 = vpop.f32.mrf.mxu0
    %2153 = vdwg.mxu0
    %2154 = vmatpush.bf16.msra.mxu0 %v1562
    %2155 = vmatpush.bf16.msra.mxu0 %v1558
    %2156 = vmatpush.bf16.msra.mxu0 %v1554
    %2157 = vmatpush.bf16.msra.mxu0 %v1550
    %2158 = vmatpush.bf16.msra.mxu0 %v1546
    %2159 = vmatpush.bf16.msra.mxu0 %v1542
    %2160 = vmatpush.bf16.msra.mxu0 %v1538
    %2161 = vmatpush.bf16.msra.mxu0 %v1534
    %2162 = vmatmul.bf16.gmra.mxu0 %v999
    %v2163 = vpop.f32.mrf.mxu0
    %v2164 = vadd.f32 %v2122, %v2163
    %v2165 = vpop.f32.mrf.mxu0
    %v2166 = vadd.f32 %v2124, %v2165
    %2167 = vmatmul.bf16.gmra.mxu0 %v1003
    %v2168 = vpop.f32.mrf.mxu0
    %v2169 = vadd.f32 %v2127, %v2168
    %v2170 = vpop.f32.mrf.mxu0
    %v2171 = vadd.f32 %v2129, %v2170
    %2172 = vmatmul.bf16.gmra.mxu0 %v1007
    %v2173 = vpop.f32.mrf.mxu0
    %v2174 = vadd.f32 %v2132, %v2173
    %v2175 = vpop.f32.mrf.mxu0
    %v2176 = vadd.f32 %v2134, %v2175
    %2177 = vmatmul.bf16.gmra.mxu0 %v1011
    %v2178 = vpop.f32.mrf.mxu0
    %v2179 = vadd.f32 %v2137, %v2178
    %v2180 = vpop.f32.mrf.mxu0
    %v2181 = vadd.f32 %v2139, %v2180
    %2182 = vmatmul.bf16.gmra.mxu0 %v1015
    %v2183 = vpop.f32.mrf.mxu0
    %v2184 = vadd.f32 %v2142, %v2183
    %v2185 = vpop.f32.mrf.mxu0
    %v2186 = vadd.f32 %v2144, %v2185
    %2187 = vmatmul.bf16.gmra.mxu0 %v1019
    %v2188 = vpop.f32.mrf.mxu0
    %v2189 = vadd.f32 %v2147, %v2188
    %v2190 = vpop.f32.mrf.mxu0
    %v2191 = vadd.f32 %v2149, %v2190
    %2192 = vmatmul.bf16.gmra.mxu0 %v1023
    %v2193 = vpop.f32.mrf.mxu0
    %v2194 = vpop.f32.mrf.mxu0
    %2195 = vdwg.mxu0
    %2196 = vmatpush.bf16.msra.mxu0 %v1467
    %2197 = vmatpush.bf16.msra.mxu0 %v1463
    %2198 = vmatpush.bf16.msra.mxu0 %v1459
    %2199 = vmatpush.bf16.msra.mxu0 %v1455
    %2200 = vmatpush.bf16.msra.mxu0 %v1451
    %2201 = vmatpush.bf16.msra.mxu0 %v1447
    %2202 = vmatpush.bf16.msra.mxu0 %v1443
    %2203 = vmatpush.bf16.msra.mxu0 %v1439
    %2204 = vmatmul.bf16.gmra.mxu0 %v996
    %v2205 = vpop.f32.mrf.mxu0
    %v2206 = vadd.f32 %v907, %v2205
    %v2207 = vpop.f32.mrf.mxu0
    %v2208 = vadd.f32 %v907, %v2207
    %2209 = vmatmul.bf16.gmra.mxu0 %v1000
    %v2210 = vpop.f32.mrf.mxu0
    %v2211 = vadd.f32 %v907, %v2210
    %v2212 = vpop.f32.mrf.mxu0
    %v2213 = vadd.f32 %v907, %v2212
    %2214 = vmatmul.bf16.gmra.mxu0 %v1004
    %v2215 = vpop.f32.mrf.mxu0
    %v2216 = vadd.f32 %v907, %v2215
    %v2217 = vpop.f32.mrf.mxu0
    %v2218 = vadd.f32 %v907, %v2217
    %2219 = vmatmul.bf16.gmra.mxu0 %v1008
    %v2220 = vpop.f32.mrf.mxu0
    %v2221 = vadd.f32 %v907, %v2220
    %v2222 = vpop.f32.mrf.mxu0
    %v2223 = vadd.f32 %v907, %v2222
    %2224 = vmatmul.bf16.gmra.mxu0 %v1012
    %v2225 = vpop.f32.mrf.mxu0
    %v2226 = vadd.f32 %v907, %v2225
    %v2227 = vpop.f32.mrf.mxu0
    %v2228 = vadd.f32 %v907, %v2227
    %2229 = vmatmul.bf16.gmra.mxu0 %v1016
    %v2230 = vpop.f32.mrf.mxu0
    %v2231 = vadd.f32 %v907, %v2230
    %v2232 = vpop.f32.mrf.mxu0
    %v2233 = vadd.f32 %v907, %v2232
    %2234 = vmatmul.bf16.gmra.mxu0 %v1020
    %v2235 = vpop.f32.mrf.mxu0
    %v2236 = vpop.f32.mrf.mxu0
    %2237 = vdwg.mxu0
    %2238 = vmatpush.bf16.msra.mxu0 %v1499
    %2239 = vmatpush.bf16.msra.mxu0 %v1495
    %2240 = vmatpush.bf16.msra.mxu0 %v1491
    %2241 = vmatpush.bf16.msra.mxu0 %v1487
    %2242 = vmatpush.bf16.msra.mxu0 %v1483
    %2243 = vmatpush.bf16.msra.mxu0 %v1479
    %2244 = vmatpush.bf16.msra.mxu0 %v1475
    %2245 = vmatpush.bf16.msra.mxu0 %v1471
    %2246 = vmatmul.bf16.gmra.mxu0 %v997
    %v2247 = vpop.f32.mrf.mxu0
    %v2248 = vadd.f32 %v2206, %v2247
    %v2249 = vpop.f32.mrf.mxu0
    %v2250 = vadd.f32 %v2208, %v2249
    %2251 = vmatmul.bf16.gmra.mxu0 %v1001
    %v2252 = vpop.f32.mrf.mxu0
    %v2253 = vadd.f32 %v2211, %v2252
    %v2254 = vpop.f32.mrf.mxu0
    %v2255 = vadd.f32 %v2213, %v2254
    %2256 = vmatmul.bf16.gmra.mxu0 %v1005
    %v2257 = vpop.f32.mrf.mxu0
    %v2258 = vadd.f32 %v2216, %v2257
    %v2259 = vpop.f32.mrf.mxu0
    %v2260 = vadd.f32 %v2218, %v2259
    %2261 = vmatmul.bf16.gmra.mxu0 %v1009
    %v2262 = vpop.f32.mrf.mxu0
    %v2263 = vadd.f32 %v2221, %v2262
    %v2264 = vpop.f32.mrf.mxu0
    %v2265 = vadd.f32 %v2223, %v2264
    %2266 = vmatmul.bf16.gmra.mxu0 %v1013
    %v2267 = vpop.f32.mrf.mxu0
    %v2268 = vadd.f32 %v2226, %v2267
    %v2269 = vpop.f32.mrf.mxu0
    %v2270 = vadd.f32 %v2228, %v2269
    %2271 = vmatmul.bf16.gmra.mxu0 %v1017
    %v2272 = vpop.f32.mrf.mxu0
    %v2273 = vadd.f32 %v2231, %v2272
    %v2274 = vpop.f32.mrf.mxu0
    %v2275 = vadd.f32 %v2233, %v2274
    %2276 = vmatmul.bf16.gmra.mxu0 %v1021
    %v2277 = vpop.f32.mrf.mxu0
    %v2278 = vpop.f32.mrf.mxu0
    %2279 = vdwg.mxu0
    %2280 = vmatpush.bf16.msra.mxu0 %v1531
    %2281 = vmatpush.bf16.msra.mxu0 %v1527
    %2282 = vmatpush.bf16.msra.mxu0 %v1523
    %2283 = vmatpush.bf16.msra.mxu0 %v1519
    %2284 = vmatpush.bf16.msra.mxu0 %v1515
    %2285 = vmatpush.bf16.msra.mxu0 %v1511
    %2286 = vmatpush.bf16.msra.mxu0 %v1507
    %2287 = vmatpush.bf16.msra.mxu0 %v1503
    %2288 = vmatmul.bf16.gmra.mxu0 %v998
    %v2289 = vpop.f32.mrf.mxu0
    %v2290 = vadd.f32 %v2248, %v2289
    %v2291 = vpop.f32.mrf.mxu0
    %v2292 = vadd.f32 %v2250, %v2291
    %2293 = vmatmul.bf16.gmra.mxu0 %v1002
    %v2294 = vpop.f32.mrf.mxu0
    %v2295 = vadd.f32 %v2253, %v2294
    %v2296 = vpop.f32.mrf.mxu0
    %v2297 = vadd.f32 %v2255, %v2296
    %2298 = vmatmul.bf16.gmra.mxu0 %v1006
    %v2299 = vpop.f32.mrf.mxu0
    %v2300 = vadd.f32 %v2258, %v2299
    %v2301 = vpop.f32.mrf.mxu0
    %v2302 = vadd.f32 %v2260, %v2301
    %2303 = vmatmul.bf16.gmra.mxu0 %v1010
    %v2304 = vpop.f32.mrf.mxu0
    %v2305 = vadd.f32 %v2263, %v2304
    %v2306 = vpop.f32.mrf.mxu0
    %v2307 = vadd.f32 %v2265, %v2306
    %2308 = vmatmul.bf16.gmra.mxu0 %v1014
    %v2309 = vpop.f32.mrf.mxu0
    %v2310 = vadd.f32 %v2268, %v2309
    %v2311 = vpop.f32.mrf.mxu0
    %v2312 = vadd.f32 %v2270, %v2311
    %2313 = vmatmul.bf16.gmra.mxu0 %v1018
    %v2314 = vpop.f32.mrf.mxu0
    %v2315 = vadd.f32 %v2273, %v2314
    %v2316 = vpop.f32.mrf.mxu0
    %v2317 = vadd.f32 %v2275, %v2316
    %2318 = vmatmul.bf16.gmra.mxu0 %v1022
    %v2319 = vpop.f32.mrf.mxu0
    %v2320 = vpop.f32.mrf.mxu0
    %2321 = vdwg.mxu0
    %2322 = vmatpush.bf16.msra.mxu0 %v1563
    %2323 = vmatpush.bf16.msra.mxu0 %v1559
    %2324 = vmatpush.bf16.msra.mxu0 %v1555
    %2325 = vmatpush.bf16.msra.mxu0 %v1551
    %2326 = vmatpush.bf16.msra.mxu0 %v1547
    %2327 = vmatpush.bf16.msra.mxu0 %v1543
    %2328 = vmatpush.bf16.msra.mxu0 %v1539
    %2329 = vmatpush.bf16.msra.mxu0 %v1535
    %2330 = vmatmul.bf16.gmra.mxu0 %v999
    %v2331 = vpop.f32.mrf.mxu0
    %v2332 = vadd.f32 %v2290, %v2331
    %v2333 = vpop.f32.mrf.mxu0
    %v2334 = vadd.f32 %v2292, %v2333
    %2335 = vmatmul.bf16.gmra.mxu0 %v1003
    %v2336 = vpop.f32.mrf.mxu0
    %v2337 = vadd.f32 %v2295, %v2336
    %v2338 = vpop.f32.mrf.mxu0
    %v2339 = vadd.f32 %v2297, %v2338
    %2340 = vmatmul.bf16.gmra.mxu0 %v1007
    %v2341 = vpop.f32.mrf.mxu0
    %v2342 = vadd.f32 %v2300, %v2341
    %v2343 = vpop.f32.mrf.mxu0
    %v2344 = vadd.f32 %v2302, %v2343
    %2345 = vmatmul.bf16.gmra.mxu0 %v1011
    %v2346 = vpop.f32.mrf.mxu0
    %v2347 = vadd.f32 %v2305, %v2346
    %v2348 = vpop.f32.mrf.mxu0
    %v2349 = vadd.f32 %v2307, %v2348
    %2350 = vmatmul.bf16.gmra.mxu0 %v1015
    %v2351 = vpop.f32.mrf.mxu0
    %v2352 = vadd.f32 %v2310, %v2351
    %v2353 = vpop.f32.mrf.mxu0
    %v2354 = vadd.f32 %v2312, %v2353
    %2355 = vmatmul.bf16.gmra.mxu0 %v1019
    %v2356 = vpop.f32.mrf.mxu0
    %v2357 = vadd.f32 %v2315, %v2356
    %v2358 = vpop.f32.mrf.mxu0
    %v2359 = vadd.f32 %v2317, %v2358
    %2360 = vmatmul.bf16.gmra.mxu0 %v1023
    %v2361 = vpop.f32.mrf.mxu0
    %v2362 = vpop.f32.mrf.mxu0
    %2363 = vdwg.mxu0
    %v2364 = vmul.f32 %v1828, 0.1
    %v2365 = vmul.f32 %v1996, 0.1
    %v2366 = vmul.f32 %v2164, 0.1
    %v2367 = vmul.f32 %v2332, 0.1
    %v2368 = vmul.f32 %v1830, 0.1
    %v2369 = vmul.f32 %v1998, 0.1
    %v2370 = vmul.f32 %v2166, 0.1
    %v2371 = vmul.f32 %v2334, 0.1
    %v2372 = vmul.f32 %v1833, 0.1
    %v2373 = vmul.f32 %v2001, 0.1
    %v2374 = vmul.f32 %v2169, 0.1
    %v2375 = vmul.f32 %v2337, 0.1
    %v2376 = vmul.f32 %v1835, 0.1
    %v2377 = vmul.f32 %v2003, 0.1
    %v2378 = vmul.f32 %v2171, 0.1
    %v2379 = vmul.f32 %v2339, 0.1
    %v2380 = vmul.f32 %v1838, 0.1
    %v2381 = vmul.f32 %v2006, 0.1
    %v2382 = vmul.f32 %v2174, 0.1
    %v2383 = vmul.f32 %v2342, 0.1
    %v2384 = vmul.f32 %v1840, 0.1
    %v2385 = vmul.f32 %v2008, 0.1
    %v2386 = vmul.f32 %v2176, 0.1
    %v2387 = vmul.f32 %v2344, 0.1
    %v2388 = vmul.f32 %v1843, 0.1
    %v2389 = vmul.f32 %v2011, 0.1
    %v2390 = vmul.f32 %v2179, 0.1
    %v2391 = vmul.f32 %v2347, 0.1
    %v2392 = vmul.f32 %v1845, 0.1
    %v2393 = vmul.f32 %v2013, 0.1
    %v2394 = vmul.f32 %v2181, 0.1
    %v2395 = vmul.f32 %v2349, 0.1
    %v2396 = vmul.f32 %v1848, 0.1
    %v2397 = vmul.f32 %v2016, 0.1
    %v2398 = vmul.f32 %v2184, 0.1
    %v2399 = vmul.f32 %v2352, 0.1
    %v2400 = vmul.f32 %v1850, 0.1
    %v2401 = vmul.f32 %v2018, 0.1
    %v2402 = vmul.f32 %v2186, 0.1
    %v2403 = vmul.f32 %v2354, 0.1
    %v2404 = vmul.f32 %v1853, 0.1
    %v2405 = vmul.f32 %v2021, 0.1
    %v2406 = vmul.f32 %v2189, 0.1
    %v2407 = vmul.f32 %v2357, 0.1
    %v2408 = vmul.f32 %v1855, 0.1
    %v2409 = vmul.f32 %v2023, 0.1
    %v2410 = vmul.f32 %v2191, 0.1
    %v2411 = vmul.f32 %v2359, 0.1
    %v2412 = vmax.f32 %v1828, %v2364
    %v2413 = vmax.f32 %v1996, %v2365
    %v2414 = vmax.f32 %v2164, %v2366
    %v2415 = vmax.f32 %v2332, %v2367
    %v2416 = vmax.f32 %v1830, %v2368
    %v2417 = vmax.f32 %v1998, %v2369
    %v2418 = vmax.f32 %v2166, %v2370
    %v2419 = vmax.f32 %v2334, %v2371
    %v2420 = vmax.f32 %v1833, %v2372
    %v2421 = vmax.f32 %v2001, %v2373
    %v2422 = vmax.f32 %v2169, %v2374
    %v2423 = vmax.f32 %v2337, %v2375
    %v2424 = vmax.f32 %v1835, %v2376
    %v2425 = vmax.f32 %v2003, %v2377
    %v2426 = vmax.f32 %v2171, %v2378
    %v2427 = vmax.f32 %v2339, %v2379
    %v2428 = vmax.f32 %v1838, %v2380
    %v2429 = vmax.f32 %v2006, %v2381
    %v2430 = vmax.f32 %v2174, %v2382
    %v2431 = vmax.f32 %v2342, %v2383
    %v2432 = vmax.f32 %v1840, %v2384
    %v2433 = vmax.f32 %v2008, %v2385
    %v2434 = vmax.f32 %v2176, %v2386
    %v2435 = vmax.f32 %v2344, %v2387
    %v2436 = vmax.f32 %v1843, %v2388
    %v2437 = vmax.f32 %v2011, %v2389
    %v2438 = vmax.f32 %v2179, %v2390
    %v2439 = vmax.f32 %v2347, %v2391
    %v2440 = vmax.f32 %v1845, %v2392
    %v2441 = vmax.f32 %v2013, %v2393
    %v2442 = vmax.f32 %v2181, %v2394
    %v2443 = vmax.f32 %v2349, %v2395
    %v2444 = vmax.f32 %v1848, %v2396
    %v2445 = vmax.f32 %v2016, %v2397
    %v2446 = vmax.f32 %v2184, %v2398
    %v2447 = vmax.f32 %v2352, %v2399
    %v2448 = vmax.f32 %v1850, %v2400
    %v2449 = vmax.f32 %v2018, %v2401
    %v2450 = vmax.f32 %v2186, %v2402
    %v2451 = vmax.f32 %v2354, %v2403
    %v2452 = vmax.f32 %v1853, %v2404
    %v2453 = vmax.f32 %v2021, %v2405
    %v2454 = vmax.f32 %v2189, %v2406
    %v2455 = vmax.f32 %v2357, %v2407
    %v2456 = vmax.f32 %v1855, %v2408
    %v2457 = vmax.f32 %v2023, %v2409
    %v2458 = vmax.f32 %v2191, %v2410
    %v2459 = vmax.f32 %v2359, %v2411
    %v2460 = vld [vmem:[#allocation12] sm:$0xff]
    %v2461 = vmax.f32 %v2412, %v2420
    %v2462 = vmax.f32 %v2413, %v2421
    %v2463 = vmax.f32 %v2414, %v2422
    %v2464 = vmax.f32 %v2415, %v2423
    %v2465 = vmax.f32 %v2416, %v2424
    %v2466 = vmax.f32 %v2417, %v2425
    %v2467 = vmax.f32 %v2418, %v2426
    %v2468 = vmax.f32 %v2419, %v2427
    %v2469 = vpack.c.bf16 %v2465, %v2461
    %v2470 = vpack.c.bf16 %v2466, %v2462
    %v2471 = vpack.c.bf16 %v2467, %v2463
    %v2472 = vpack.c.bf16 %v2468, %v2464
    %v2473 = vld [vmem:[#allocation11] sm:$0xff]
    %v2474 = vld [vmem:[#allocation11 + $0x8] sm:$0xff]
    %v2475 = vld [vmem:[#allocation11 + $0x10] sm:$0xff]
    %v2476 = vld [vmem:[#allocation11 + $0x18] sm:$0xff]
    %v2477 = vld [vmem:[#allocation11 + $0x20] sm:$0xff]
    %v2478 = vld [vmem:[#allocation11 + $0x28] sm:$0xff]
    %v2479 = vld [vmem:[#allocation11 + $0x30] sm:$0xff]
    %v2480 = vld [vmem:[#allocation11 + $0x38] sm:$0xff]
    %v2481 = vld [vmem:[#allocation11 + $0x40] sm:$0xff]
    %v2482 = vld [vmem:[#allocation11 + $0x48] sm:$0xff]
    %v2483 = vld [vmem:[#allocation11 + $0x50] sm:$0xff]
    %v2484 = vld [vmem:[#allocation11 + $0x58] sm:$0xff]
    %v2485 = vld [vmem:[#allocation11 + $0x60] sm:$0xff]
    %v2486 = vld [vmem:[#allocation11 + $0x68] sm:$0xff]
    %v2487 = vld [vmem:[#allocation11 + $0x70] sm:$0xff]
    %v2488 = vld [vmem:[#allocation11 + $0x78] sm:$0xff]
    %v2489 = vld [vmem:[#allocation11 + $0x80] sm:$0xff]
    %v2490 = vld [vmem:[#allocation11 + $0x88] sm:$0xff]
    %v2491 = vld [vmem:[#allocation11 + $0x90] sm:$0xff]
    %v2492 = vld [vmem:[#allocation11 + $0x98] sm:$0xff]
    %v2493 = vld [vmem:[#allocation11 + $0xa0] sm:$0xff]
    %v2494 = vld [vmem:[#allocation11 + $0xa8] sm:$0xff]
    %v2495 = vld [vmem:[#allocation11 + $0xb0] sm:$0xff]
    %v2496 = vld [vmem:[#allocation11 + $0xb8] sm:$0xff]
    %v2497 = vld [vmem:[#allocation11 + $0xc0] sm:$0xff]
    %v2498 = vld [vmem:[#allocation11 + $0xc8] sm:$0xff]
    %v2499 = vld [vmem:[#allocation11 + $0xd0] sm:$0xff]
    %v2500 = vld [vmem:[#allocation11 + $0xd8] sm:$0xff]
    %v2501 = vld [vmem:[#allocation11 + $0xe0] sm:$0xff]
    %v2502 = vld [vmem:[#allocation11 + $0xe8] sm:$0xff]
    %v2503 = vld [vmem:[#allocation11 + $0xf0] sm:$0xff]
    %v2504 = vld [vmem:[#allocation11 + $0xf8] sm:$0xff]
    %v2505 = vld [vmem:[#allocation11 + $0x100] sm:$0xff]
    %v2506 = vld [vmem:[#allocation11 + $0x108] sm:$0xff]
    %v2507 = vld [vmem:[#allocation11 + $0x110] sm:$0xff]
    %v2508 = vld [vmem:[#allocation11 + $0x118] sm:$0xff]
    %v2509 = vld [vmem:[#allocation11 + $0x120] sm:$0xff]
    %v2510 = vld [vmem:[#allocation11 + $0x128] sm:$0xff]
    %v2511 = vld [vmem:[#allocation11 + $0x130] sm:$0xff]
    %v2512 = vld [vmem:[#allocation11 + $0x138] sm:$0xff]
    %v2513 = vld [vmem:[#allocation11 + $0x140] sm:$0xff]
    %v2514 = vld [vmem:[#allocation11 + $0x148] sm:$0xff]
    %v2515 = vld [vmem:[#allocation11 + $0x150] sm:$0xff]
    %v2516 = vld [vmem:[#allocation11 + $0x158] sm:$0xff]
    %v2517 = vld [vmem:[#allocation11 + $0x160] sm:$0xff]
    %v2518 = vld [vmem:[#allocation11 + $0x168] sm:$0xff]
    %v2519 = vld [vmem:[#allocation11 + $0x170] sm:$0xff]
    %v2520 = vld [vmem:[#allocation11 + $0x178] sm:$0xff]
    %v2521 = vld [vmem:[#allocation11 + $0x180] sm:$0xff]
    %v2522 = vld [vmem:[#allocation11 + $0x188] sm:$0xff]
    %v2523 = vld [vmem:[#allocation11 + $0x190] sm:$0xff]
    %v2524 = vld [vmem:[#allocation11 + $0x198] sm:$0xff]
    %v2525 = vld [vmem:[#allocation11 + $0x1a0] sm:$0xff]
    %v2526 = vld [vmem:[#allocation11 + $0x1a8] sm:$0xff]
    %v2527 = vld [vmem:[#allocation11 + $0x1b0] sm:$0xff]
    %v2528 = vld [vmem:[#allocation11 + $0x1b8] sm:$0xff]
    %v2529 = vld [vmem:[#allocation11 + $0x1c0] sm:$0xff]
    %v2530 = vld [vmem:[#allocation11 + $0x1c8] sm:$0xff]
    %v2531 = vld [vmem:[#allocation11 + $0x1d0] sm:$0xff]
    %v2532 = vld [vmem:[#allocation11 + $0x1d8] sm:$0xff]
    %v2533 = vld [vmem:[#allocation11 + $0x1e0] sm:$0xff]
    %v2534 = vld [vmem:[#allocation11 + $0x1e8] sm:$0xff]
    %v2535 = vld [vmem:[#allocation11 + $0x1f0] sm:$0xff]
    %v2536 = vld [vmem:[#allocation11 + $0x1f8] sm:$0xff]
    %v2537 = vld [vmem:[#allocation11 + $0x200] sm:$0xff]
    %v2538 = vld [vmem:[#allocation11 + $0x208] sm:$0xff]
    %v2539 = vld [vmem:[#allocation11 + $0x210] sm:$0xff]
    %v2540 = vld [vmem:[#allocation11 + $0x218] sm:$0xff]
    %v2541 = vld [vmem:[#allocation11 + $0x220] sm:$0xff]
    %v2542 = vld [vmem:[#allocation11 + $0x228] sm:$0xff]
    %v2543 = vld [vmem:[#allocation11 + $0x230] sm:$0xff]
    %v2544 = vld [vmem:[#allocation11 + $0x238] sm:$0xff]
    %v2545 = vld [vmem:[#allocation11 + $0x240] sm:$0xff]
    %v2546 = vld [vmem:[#allocation11 + $0x248] sm:$0xff]
    %v2547 = vld [vmem:[#allocation11 + $0x250] sm:$0xff]
    %v2548 = vld [vmem:[#allocation11 + $0x258] sm:$0xff]
    %v2549 = vld [vmem:[#allocation11 + $0x260] sm:$0xff]
    %v2550 = vld [vmem:[#allocation11 + $0x268] sm:$0xff]
    %v2551 = vld [vmem:[#allocation11 + $0x270] sm:$0xff]
    %v2552 = vld [vmem:[#allocation11 + $0x278] sm:$0xff]
    %v2553 = vld [vmem:[#allocation11 + $0x280] sm:$0xff]
    %v2554 = vld [vmem:[#allocation11 + $0x288] sm:$0xff]
    %v2555 = vld [vmem:[#allocation11 + $0x290] sm:$0xff]
    %v2556 = vld [vmem:[#allocation11 + $0x298] sm:$0xff]
    %v2557 = vld [vmem:[#allocation11 + $0x2a0] sm:$0xff]
    %v2558 = vld [vmem:[#allocation11 + $0x2a8] sm:$0xff]
    %v2559 = vld [vmem:[#allocation11 + $0x2b0] sm:$0xff]
    %v2560 = vld [vmem:[#allocation11 + $0x2b8] sm:$0xff]
    %v2561 = vld [vmem:[#allocation11 + $0x2c0] sm:$0xff]
    %v2562 = vld [vmem:[#allocation11 + $0x2c8] sm:$0xff]
    %v2563 = vld [vmem:[#allocation11 + $0x2d0] sm:$0xff]
    %v2564 = vld [vmem:[#allocation11 + $0x2d8] sm:$0xff]
    %v2565 = vld [vmem:[#allocation11 + $0x2e0] sm:$0xff]
    %v2566 = vld [vmem:[#allocation11 + $0x2e8] sm:$0xff]
    %v2567 = vld [vmem:[#allocation11 + $0x2f0] sm:$0xff]
    %v2568 = vld [vmem:[#allocation11 + $0x2f8] sm:$0xff]
    %v2569 = vld [vmem:[#allocation11 + $0x300] sm:$0xff]
    %v2570 = vld [vmem:[#allocation11 + $0x308] sm:$0xff]
    %v2571 = vld [vmem:[#allocation11 + $0x310] sm:$0xff]
    %v2572 = vld [vmem:[#allocation11 + $0x318] sm:$0xff]
    %v2573 = vld [vmem:[#allocation11 + $0x320] sm:$0xff]
    %v2574 = vld [vmem:[#allocation11 + $0x328] sm:$0xff]
    %v2575 = vld [vmem:[#allocation11 + $0x330] sm:$0xff]
    %v2576 = vld [vmem:[#allocation11 + $0x338] sm:$0xff]
    %v2577 = vld [vmem:[#allocation11 + $0x340] sm:$0xff]
    %v2578 = vld [vmem:[#allocation11 + $0x348] sm:$0xff]
    %v2579 = vld [vmem:[#allocation11 + $0x350] sm:$0xff]
    %v2580 = vld [vmem:[#allocation11 + $0x358] sm:$0xff]
    %v2581 = vld [vmem:[#allocation11 + $0x360] sm:$0xff]
    %v2582 = vld [vmem:[#allocation11 + $0x368] sm:$0xff]
    %v2583 = vld [vmem:[#allocation11 + $0x370] sm:$0xff]
    %v2584 = vld [vmem:[#allocation11 + $0x378] sm:$0xff]
    %v2585 = vld [vmem:[#allocation11 + $0x380] sm:$0xff]
    %v2586 = vld [vmem:[#allocation11 + $0x388] sm:$0xff]
    %v2587 = vld [vmem:[#allocation11 + $0x390] sm:$0xff]
    %v2588 = vld [vmem:[#allocation11 + $0x398] sm:$0xff]
    %v2589 = vld [vmem:[#allocation11 + $0x3a0] sm:$0xff]
    %v2590 = vld [vmem:[#allocation11 + $0x3a8] sm:$0xff]
    %v2591 = vld [vmem:[#allocation11 + $0x3b0] sm:$0xff]
    %v2592 = vld [vmem:[#allocation11 + $0x3b8] sm:$0xff]
    %v2593 = vld [vmem:[#allocation11 + $0x3c0] sm:$0xff]
    %v2594 = vld [vmem:[#allocation11 + $0x3c8] sm:$0xff]
    %v2595 = vld [vmem:[#allocation11 + $0x3d0] sm:$0xff]
    %v2596 = vld [vmem:[#allocation11 + $0x3d8] sm:$0xff]
    %v2597 = vld [vmem:[#allocation11 + $0x3e0] sm:$0xff]
    %v2598 = vld [vmem:[#allocation11 + $0x3e8] sm:$0xff]
    %v2599 = vld [vmem:[#allocation11 + $0x3f0] sm:$0xff]
    %v2600 = vld [vmem:[#allocation11 + $0x3f8] sm:$0xff]
    %v2601 = vld [vmem:[#allocation11 + $0x400] sm:$0xff]
    %v2602 = vld [vmem:[#allocation11 + $0x408] sm:$0xff]
    %v2603 = vld [vmem:[#allocation11 + $0x410] sm:$0xff]
    %v2604 = vld [vmem:[#allocation11 + $0x418] sm:$0xff]
    %v2605 = vld [vmem:[#allocation11 + $0x420] sm:$0xff]
    %v2606 = vld [vmem:[#allocation11 + $0x428] sm:$0xff]
    %v2607 = vld [vmem:[#allocation11 + $0x430] sm:$0xff]
    %v2608 = vld [vmem:[#allocation11 + $0x438] sm:$0xff]
    %v2609 = vld [vmem:[#allocation11 + $0x440] sm:$0xff]
    %v2610 = vld [vmem:[#allocation11 + $0x448] sm:$0xff]
    %v2611 = vld [vmem:[#allocation11 + $0x450] sm:$0xff]
    %v2612 = vld [vmem:[#allocation11 + $0x458] sm:$0xff]
    %v2613 = vld [vmem:[#allocation11 + $0x460] sm:$0xff]
    %v2614 = vld [vmem:[#allocation11 + $0x468] sm:$0xff]
    %v2615 = vld [vmem:[#allocation11 + $0x470] sm:$0xff]
    %v2616 = vld [vmem:[#allocation11 + $0x478] sm:$0xff]
    %v2617 = vld [vmem:[#allocation11 + $0x480] sm:$0xff]
    %v2618 = vld [vmem:[#allocation11 + $0x488] sm:$0xff]
    %v2619 = vld [vmem:[#allocation11 + $0x490] sm:$0xff]
    %v2620 = vld [vmem:[#allocation11 + $0x498] sm:$0xff]
    %v2621 = vld [vmem:[#allocation11 + $0x4a0] sm:$0xff]
    %v2622 = vld [vmem:[#allocation11 + $0x4a8] sm:$0xff]
    %v2623 = vld [vmem:[#allocation11 + $0x4b0] sm:$0xff]
    %v2624 = vld [vmem:[#allocation11 + $0x4b8] sm:$0xff]
    %v2625 = vld [vmem:[#allocation11 + $0x4c0] sm:$0xff]
    %v2626 = vld [vmem:[#allocation11 + $0x4c8] sm:$0xff]
    %v2627 = vld [vmem:[#allocation11 + $0x4d0] sm:$0xff]
    %v2628 = vld [vmem:[#allocation11 + $0x4d8] sm:$0xff]
    %v2629 = vld [vmem:[#allocation11 + $0x4e0] sm:$0xff]
    %v2630 = vld [vmem:[#allocation11 + $0x4e8] sm:$0xff]
    %v2631 = vld [vmem:[#allocation11 + $0x4f0] sm:$0xff]
    %v2632 = vld [vmem:[#allocation11 + $0x4f8] sm:$0xff]
    %v2633 = vld [vmem:[#allocation11 + $0x500] sm:$0xff]
    %v2634 = vld [vmem:[#allocation11 + $0x508] sm:$0xff]
    %v2635 = vld [vmem:[#allocation11 + $0x510] sm:$0xff]
    %v2636 = vld [vmem:[#allocation11 + $0x518] sm:$0xff]
    %v2637 = vld [vmem:[#allocation11 + $0x520] sm:$0xff]
    %v2638 = vld [vmem:[#allocation11 + $0x528] sm:$0xff]
    %v2639 = vld [vmem:[#allocation11 + $0x530] sm:$0xff]
    %v2640 = vld [vmem:[#allocation11 + $0x538] sm:$0xff]
    %v2641 = vld [vmem:[#allocation11 + $0x540] sm:$0xff]
    %v2642 = vld [vmem:[#allocation11 + $0x548] sm:$0xff]
    %v2643 = vld [vmem:[#allocation11 + $0x550] sm:$0xff]
    %v2644 = vld [vmem:[#allocation11 + $0x558] sm:$0xff]
    %v2645 = vld [vmem:[#allocation11 + $0x560] sm:$0xff]
    %v2646 = vld [vmem:[#allocation11 + $0x568] sm:$0xff]
    %v2647 = vld [vmem:[#allocation11 + $0x570] sm:$0xff]
    %v2648 = vld [vmem:[#allocation11 + $0x578] sm:$0xff]
    %v2649 = vld [vmem:[#allocation11 + $0x580] sm:$0xff]
    %v2650 = vld [vmem:[#allocation11 + $0x588] sm:$0xff]
    %v2651 = vld [vmem:[#allocation11 + $0x590] sm:$0xff]
    %v2652 = vld [vmem:[#allocation11 + $0x598] sm:$0xff]
    %v2653 = vld [vmem:[#allocation11 + $0x5a0] sm:$0xff]
    %v2654 = vld [vmem:[#allocation11 + $0x5a8] sm:$0xff]
    %v2655 = vld [vmem:[#allocation11 + $0x5b0] sm:$0xff]
    %v2656 = vld [vmem:[#allocation11 + $0x5b8] sm:$0xff]
    %v2657 = vld [vmem:[#allocation11 + $0x5c0] sm:$0xff]
    %v2658 = vld [vmem:[#allocation11 + $0x5c8] sm:$0xff]
    %v2659 = vld [vmem:[#allocation11 + $0x5d0] sm:$0xff]
    %v2660 = vld [vmem:[#allocation11 + $0x5d8] sm:$0xff]
    %v2661 = vld [vmem:[#allocation11 + $0x5e0] sm:$0xff]
    %v2662 = vld [vmem:[#allocation11 + $0x5e8] sm:$0xff]
    %v2663 = vld [vmem:[#allocation11 + $0x5f0] sm:$0xff]
    %v2664 = vld [vmem:[#allocation11 + $0x5f8] sm:$0xff]
    %v2665 = vld [vmem:[#allocation11 + $0x600] sm:$0xff]
    %v2666 = vld [vmem:[#allocation11 + $0x608] sm:$0xff]
    %v2667 = vld [vmem:[#allocation11 + $0x610] sm:$0xff]
    %v2668 = vld [vmem:[#allocation11 + $0x618] sm:$0xff]
    %v2669 = vld [vmem:[#allocation11 + $0x620] sm:$0xff]
    %v2670 = vld [vmem:[#allocation11 + $0x628] sm:$0xff]
    %v2671 = vld [vmem:[#allocation11 + $0x630] sm:$0xff]
    %v2672 = vld [vmem:[#allocation11 + $0x638] sm:$0xff]
    %v2873 = vunpack.c.l.b16 %v2473
    %v2874 = vunpack.c.h.b16 %v2473
    %v2875 = vunpack.c.l.b16 %v2474
    %v2876 = vunpack.c.h.b16 %v2474
    %v2877 = vunpack.c.l.b16 %v2475
    %v2878 = vunpack.c.h.b16 %v2475
    %v2879 = vunpack.c.l.b16 %v2476
    %v2880 = vunpack.c.h.b16 %v2476
    %v2881 = vunpack.c.l.b16 %v2477
    %v2882 = vunpack.c.h.b16 %v2477
    %v2883 = vunpack.c.l.b16 %v2478
    %v2884 = vunpack.c.h.b16 %v2478
    %v2885 = vunpack.c.l.b16 %v2479
    %v2886 = vunpack.c.h.b16 %v2479
    %v2887 = vunpack.c.l.b16 %v2480
    %v2888 = vunpack.c.h.b16 %v2480
    %v2889 = vunpack.c.l.b16 %v2481
    %v2890 = vunpack.c.h.b16 %v2481
    %v2891 = vunpack.c.l.b16 %v2482
    %v2892 = vunpack.c.h.b16 %v2482
    %v2893 = vunpack.c.l.b16 %v2483
    %v2894 = vunpack.c.h.b16 %v2483
    %v2895 = vunpack.c.l.b16 %v2484
    %v2896 = vunpack.c.h.b16 %v2484
    %v2897 = vunpack.c.l.b16 %v2485
    %v2898 = vunpack.c.h.b16 %v2485
    %v2899 = vunpack.c.l.b16 %v2486
    %v2900 = vunpack.c.h.b16 %v2486
    %v2901 = vunpack.c.l.b16 %v2487
    %v2902 = vunpack.c.h.b16 %v2487
    %v2903 = vunpack.c.l.b16 %v2488
    %v2904 = vunpack.c.h.b16 %v2488
    %v2905 = vunpack.c.l.b16 %v2489
    %v2906 = vunpack.c.h.b16 %v2489
    %v2907 = vunpack.c.l.b16 %v2490
    %v2908 = vunpack.c.h.b16 %v2490
    %v2909 = vunpack.c.l.b16 %v2491
    %v2910 = vunpack.c.h.b16 %v2491
    %v2911 = vunpack.c.l.b16 %v2492
    %v2912 = vunpack.c.h.b16 %v2492
    %v2913 = vunpack.c.l.b16 %v2493
    %v2914 = vunpack.c.h.b16 %v2493
    %v2915 = vunpack.c.l.b16 %v2494
    %v2916 = vunpack.c.h.b16 %v2494
    %v2917 = vunpack.c.l.b16 %v2495
    %v2918 = vunpack.c.h.b16 %v2495
    %v2919 = vunpack.c.l.b16 %v2496
    %v2920 = vunpack.c.h.b16 %v2496
    %v2921 = vunpack.c.l.b16 %v2497
    %v2922 = vunpack.c.h.b16 %v2497
    %v2923 = vunpack.c.l.b16 %v2498
    %v2924 = vunpack.c.h.b16 %v2498
    %v2925 = vunpack.c.l.b16 %v2499
    %v2926 = vunpack.c.h.b16 %v2499
    %v2927 = vunpack.c.l.b16 %v2500
    %v2928 = vunpack.c.h.b16 %v2500
    %v2929 = vunpack.c.l.b16 %v2501
    %v2930 = vunpack.c.h.b16 %v2501
    %v2931 = vunpack.c.l.b16 %v2502
    %v2932 = vunpack.c.h.b16 %v2502
    %v2933 = vunpack.c.l.b16 %v2503
    %v2934 = vunpack.c.h.b16 %v2503
    %v2935 = vunpack.c.l.b16 %v2504
    %v2936 = vunpack.c.h.b16 %v2504
    %v2937 = vunpack.c.l.b16 %v2505
    %v2938 = vunpack.c.h.b16 %v2505
    %v2939 = vunpack.c.l.b16 %v2506
    %v2940 = vunpack.c.h.b16 %v2506
    %v2941 = vunpack.c.l.b16 %v2507
    %v2942 = vunpack.c.h.b16 %v2507
    %v2943 = vunpack.c.l.b16 %v2508
    %v2944 = vunpack.c.h.b16 %v2508
    %v2945 = vunpack.c.l.b16 %v2509
    %v2946 = vunpack.c.h.b16 %v2509
    %v2947 = vunpack.c.l.b16 %v2510
    %v2948 = vunpack.c.h.b16 %v2510
    %v2949 = vunpack.c.l.b16 %v2511
    %v2950 = vunpack.c.h.b16 %v2511
    %v2951 = vunpack.c.l.b16 %v2512
    %v2952 = vunpack.c.h.b16 %v2512
    %v2953 = vunpack.c.l.b16 %v2513
    %v2954 = vunpack.c.h.b16 %v2513
    %v2955 = vunpack.c.l.b16 %v2514
    %v2956 = vunpack.c.h.b16 %v2514
    %v2957 = vunpack.c.l.b16 %v2515
    %v2958 = vunpack.c.h.b16 %v2515
    %v2959 = vunpack.c.l.b16 %v2516
    %v2960 = vunpack.c.h.b16 %v2516
    %v2961 = vunpack.c.l.b16 %v2517
    %v2962 = vunpack.c.h.b16 %v2517
    %v2963 = vunpack.c.l.b16 %v2518
    %v2964 = vunpack.c.h.b16 %v2518
    %v2965 = vunpack.c.l.b16 %v2519
    %v2966 = vunpack.c.h.b16 %v2519
    %v2967 = vunpack.c.l.b16 %v2520
    %v2968 = vunpack.c.h.b16 %v2520
    %v2969 = vunpack.c.l.b16 %v2521
    %v2970 = vunpack.c.h.b16 %v2521
    %v2971 = vunpack.c.l.b16 %v2522
    %v2972 = vunpack.c.h.b16 %v2522
    %v2973 = vunpack.c.l.b16 %v2523
    %v2974 = vunpack.c.h.b16 %v2523
    %v2975 = vunpack.c.l.b16 %v2524
    %v2976 = vunpack.c.h.b16 %v2524
    %v2977 = vunpack.c.l.b16 %v2525
    %v2978 = vunpack.c.h.b16 %v2525
    %v2979 = vunpack.c.l.b16 %v2526
    %v2980 = vunpack.c.h.b16 %v2526
    %v2981 = vunpack.c.l.b16 %v2527
    %v2982 = vunpack.c.h.b16 %v2527
    %v2983 = vunpack.c.l.b16 %v2528
    %v2984 = vunpack.c.h.b16 %v2528
    %v2985 = vunpack.c.l.b16 %v2529
    %v2986 = vunpack.c.h.b16 %v2529
    %v2987 = vunpack.c.l.b16 %v2530
    %v2988 = vunpack.c.h.b16 %v2530
    %v2989 = vunpack.c.l.b16 %v2531
    %v2990 = vunpack.c.h.b16 %v2531
    %v2991 = vunpack.c.l.b16 %v2532
    %v2992 = vunpack.c.h.b16 %v2532
    %v2993 = vunpack.c.l.b16 %v2533
    %v2994 = vunpack.c.h.b16 %v2533
    %v2995 = vunpack.c.l.b16 %v2534
    %v2996 = vunpack.c.h.b16 %v2534
    %v2997 = vunpack.c.l.b16 %v2535
    %v2998 = vunpack.c.h.b16 %v2535
    %v2999 = vunpack.c.l.b16 %v2536
    %v3000 = vunpack.c.h.b16 %v2536
    %v3001 = vunpack.c.l.b16 %v2537
    %v3002 = vunpack.c.h.b16 %v2537
    %v3003 = vunpack.c.l.b16 %v2538
    %v3004 = vunpack.c.h.b16 %v2538
    %v3005 = vunpack.c.l.b16 %v2539
    %v3006 = vunpack.c.h.b16 %v2539
    %v3007 = vunpack.c.l.b16 %v2540
    %v3008 = vunpack.c.h.b16 %v2540
    %v3009 = vunpack.c.l.b16 %v2541
    %v3010 = vunpack.c.h.b16 %v2541
    %v3011 = vunpack.c.l.b16 %v2542
    %v3012 = vunpack.c.h.b16 %v2542
    %v3013 = vunpack.c.l.b16 %v2543
    %v3014 = vunpack.c.h.b16 %v2543
    %v3015 = vunpack.c.l.b16 %v2544
    %v3016 = vunpack.c.h.b16 %v2544
    %v3017 = vunpack.c.l.b16 %v2545
    %v3018 = vunpack.c.h.b16 %v2545
    %v3019 = vunpack.c.l.b16 %v2546
    %v3020 = vunpack.c.h.b16 %v2546
    %v3021 = vunpack.c.l.b16 %v2547
    %v3022 = vunpack.c.h.b16 %v2547
    %v3023 = vunpack.c.l.b16 %v2548
    %v3024 = vunpack.c.h.b16 %v2548
    %v3025 = vunpack.c.l.b16 %v2549
    %v3026 = vunpack.c.h.b16 %v2549
    %v3027 = vunpack.c.l.b16 %v2550
    %v3028 = vunpack.c.h.b16 %v2550
    %v3029 = vunpack.c.l.b16 %v2551
    %v3030 = vunpack.c.h.b16 %v2551
    %v3031 = vunpack.c.l.b16 %v2552
    %v3032 = vunpack.c.h.b16 %v2552
    %v3033 = vunpack.c.l.b16 %v2553
    %v3034 = vunpack.c.h.b16 %v2553
    %v3035 = vunpack.c.l.b16 %v2554
    %v3036 = vunpack.c.h.b16 %v2554
    %v3037 = vunpack.c.l.b16 %v2555
    %v3038 = vunpack.c.h.b16 %v2555
    %v3039 = vunpack.c.l.b16 %v2556
    %v3040 = vunpack.c.h.b16 %v2556
    %v3041 = vunpack.c.l.b16 %v2557
    %v3042 = vunpack.c.h.b16 %v2557
    %v3043 = vunpack.c.l.b16 %v2558
    %v3044 = vunpack.c.h.b16 %v2558
    %v3045 = vunpack.c.l.b16 %v2559
    %v3046 = vunpack.c.h.b16 %v2559
    %v3047 = vunpack.c.l.b16 %v2560
    %v3048 = vunpack.c.h.b16 %v2560
    %v3049 = vunpack.c.l.b16 %v2561
    %v3050 = vunpack.c.h.b16 %v2561
    %v3051 = vunpack.c.l.b16 %v2562
    %v3052 = vunpack.c.h.b16 %v2562
    %v3053 = vunpack.c.l.b16 %v2563
    %v3054 = vunpack.c.h.b16 %v2563
    %v3055 = vunpack.c.l.b16 %v2564
    %v3056 = vunpack.c.h.b16 %v2564
    %v3057 = vunpack.c.l.b16 %v2565
    %v3058 = vunpack.c.h.b16 %v2565
    %v3059 = vunpack.c.l.b16 %v2566
    %v3060 = vunpack.c.h.b16 %v2566
    %v3061 = vunpack.c.l.b16 %v2567
    %v3062 = vunpack.c.h.b16 %v2567
    %v3063 = vunpack.c.l.b16 %v2568
    %v3064 = vunpack.c.h.b16 %v2568
    %v3065 = vunpack.c.l.b16 %v2569
    %v3066 = vunpack.c.h.b16 %v2569
    %v3067 = vunpack.c.l.b16 %v2570
    %v3068 = vunpack.c.h.b16 %v2570
    %v3069 = vunpack.c.l.b16 %v2571
    %v3070 = vunpack.c.h.b16 %v2571
    %v3071 = vunpack.c.l.b16 %v2572
    %v3072 = vunpack.c.h.b16 %v2572
    %v3073 = vunpack.c.l.b16 %v2573
    %v3074 = vunpack.c.h.b16 %v2573
    %v3075 = vunpack.c.l.b16 %v2574
    %v3076 = vunpack.c.h.b16 %v2574
    %v3077 = vunpack.c.l.b16 %v2575
    %v3078 = vunpack.c.h.b16 %v2575
    %v3079 = vunpack.c.l.b16 %v2576
    %v3080 = vunpack.c.h.b16 %v2576
    %v3081 = vunpack.c.l.b16 %v2577
    %v3082 = vunpack.c.h.b16 %v2577
    %v3083 = vunpack.c.l.b16 %v2578
    %v3084 = vunpack.c.h.b16 %v2578
    %v3085 = vunpack.c.l.b16 %v2579
    %v3086 = vunpack.c.h.b16 %v2579
    %v3087 = vunpack.c.l.b16 %v2580
    %v3088 = vunpack.c.h.b16 %v2580
    %v3089 = vunpack.c.l.b16 %v2581
    %v3090 = vunpack.c.h.b16 %v2581
    %v3091 = vunpack.c.l.b16 %v2582
    %v3092 = vunpack.c.h.b16 %v2582
    %v3093 = vunpack.c.l.b16 %v2583
    %v3094 = vunpack.c.h.b16 %v2583
    %v3095 = vunpack.c.l.b16 %v2584
    %v3096 = vunpack.c.h.b16 %v2584
    %v3097 = vunpack.c.l.b16 %v2585
    %v3098 = vunpack.c.h.b16 %v2585
    %v3099 = vunpack.c.l.b16 %v2586
    %v3100 = vunpack.c.h.b16 %v2586
    %v3101 = vunpack.c.l.b16 %v2587
    %v3102 = vunpack.c.h.b16 %v2587
    %v3103 = vunpack.c.l.b16 %v2588
    %v3104 = vunpack.c.h.b16 %v2588
    %v3105 = vunpack.c.l.b16 %v2589
    %v3106 = vunpack.c.h.b16 %v2589
    %v3107 = vunpack.c.l.b16 %v2590
    %v3108 = vunpack.c.h.b16 %v2590
    %v3109 = vunpack.c.l.b16 %v2591
    %v3110 = vunpack.c.h.b16 %v2591
    %v3111 = vunpack.c.l.b16 %v2592
    %v3112 = vunpack.c.h.b16 %v2592
    %v3113 = vunpack.c.l.b16 %v2593
    %v3114 = vunpack.c.h.b16 %v2593
    %v3115 = vunpack.c.l.b16 %v2594
    %v3116 = vunpack.c.h.b16 %v2594
    %v3117 = vunpack.c.l.b16 %v2595
    %v3118 = vunpack.c.h.b16 %v2595
    %v3119 = vunpack.c.l.b16 %v2596
    %v3120 = vunpack.c.h.b16 %v2596
    %v3121 = vunpack.c.l.b16 %v2597
    %v3122 = vunpack.c.h.b16 %v2597
    %v3123 = vunpack.c.l.b16 %v2598
    %v3124 = vunpack.c.h.b16 %v2598
    %v3125 = vunpack.c.l.b16 %v2599
    %v3126 = vunpack.c.h.b16 %v2599
    %v3127 = vunpack.c.l.b16 %v2600
    %v3128 = vunpack.c.h.b16 %v2600
    %v3129 = vunpack.c.l.b16 %v2601
    %v3130 = vunpack.c.h.b16 %v2601
    %v3131 = vunpack.c.l.b16 %v2602
    %v3132 = vunpack.c.h.b16 %v2602
    %v3133 = vunpack.c.l.b16 %v2603
    %v3134 = vunpack.c.h.b16 %v2603
    %v3135 = vunpack.c.l.b16 %v2604
    %v3136 = vunpack.c.h.b16 %v2604
    %v3137 = vunpack.c.l.b16 %v2605
    %v3138 = vunpack.c.h.b16 %v2605
    %v3139 = vunpack.c.l.b16 %v2606
    %v3140 = vunpack.c.h.b16 %v2606
    %v3141 = vunpack.c.l.b16 %v2607
    %v3142 = vunpack.c.h.b16 %v2607
    %v3143 = vunpack.c.l.b16 %v2608
    %v3144 = vunpack.c.h.b16 %v2608
    %v3145 = vunpack.c.l.b16 %v2609
    %v3146 = vunpack.c.h.b16 %v2609
    %v3147 = vunpack.c.l.b16 %v2610
    %v3148 = vunpack.c.h.b16 %v2610
    %v3149 = vunpack.c.l.b16 %v2611
    %v3150 = vunpack.c.h.b16 %v2611
    %v3151 = vunpack.c.l.b16 %v2612
    %v3152 = vunpack.c.h.b16 %v2612
    %v3153 = vunpack.c.l.b16 %v2613
    %v3154 = vunpack.c.h.b16 %v2613
    %v3155 = vunpack.c.l.b16 %v2614
    %v3156 = vunpack.c.h.b16 %v2614
    %v3157 = vunpack.c.l.b16 %v2615
    %v3158 = vunpack.c.h.b16 %v2615
    %v3159 = vunpack.c.l.b16 %v2616
    %v3160 = vunpack.c.h.b16 %v2616
    %v3161 = vunpack.c.l.b16 %v2617
    %v3162 = vunpack.c.h.b16 %v2617
    %v3163 = vunpack.c.l.b16 %v2618
    %v3164 = vunpack.c.h.b16 %v2618
    %v3165 = vunpack.c.l.b16 %v2619
    %v3166 = vunpack.c.h.b16 %v2619
    %v3167 = vunpack.c.l.b16 %v2620
    %v3168 = vunpack.c.h.b16 %v2620
    %v3169 = vunpack.c.l.b16 %v2621
    %v3170 = vunpack.c.h.b16 %v2621
    %v3171 = vunpack.c.l.b16 %v2622
    %v3172 = vunpack.c.h.b16 %v2622
    %v3173 = vunpack.c.l.b16 %v2623
    %v3174 = vunpack.c.h.b16 %v2623
    %v3175 = vunpack.c.l.b16 %v2624
    %v3176 = vunpack.c.h.b16 %v2624
    %v3177 = vunpack.c.l.b16 %v2625
    %v3178 = vunpack.c.h.b16 %v2625
    %v3179 = vunpack.c.l.b16 %v2626
    %v3180 = vunpack.c.h.b16 %v2626
    %v3181 = vunpack.c.l.b16 %v2627
    %v3182 = vunpack.c.h.b16 %v2627
    %v3183 = vunpack.c.l.b16 %v2628
    %v3184 = vunpack.c.h.b16 %v2628
    %v3185 = vunpack.c.l.b16 %v2629
    %v3186 = vunpack.c.h.b16 %v2629
    %v3187 = vunpack.c.l.b16 %v2630
    %v3188 = vunpack.c.h.b16 %v2630
    %v3189 = vunpack.c.l.b16 %v2631
    %v3190 = vunpack.c.h.b16 %v2631
    %v3191 = vunpack.c.l.b16 %v2632
    %v3192 = vunpack.c.h.b16 %v2632
    %v3193 = vunpack.c.l.b16 %v2633
    %v3194 = vunpack.c.h.b16 %v2633
    %v3195 = vunpack.c.l.b16 %v2634
    %v3196 = vunpack.c.h.b16 %v2634
    %v3197 = vunpack.c.l.b16 %v2635
    %v3198 = vunpack.c.h.b16 %v2635
    %v3199 = vunpack.c.l.b16 %v2636
    %v3200 = vunpack.c.h.b16 %v2636
    %v3201 = vunpack.c.l.b16 %v2637
    %v3202 = vunpack.c.h.b16 %v2637
    %v3203 = vunpack.c.l.b16 %v2638
    %v3204 = vunpack.c.h.b16 %v2638
    %v3205 = vunpack.c.l.b16 %v2639
    %v3206 = vunpack.c.h.b16 %v2639
    %v3207 = vunpack.c.l.b16 %v2640
    %v3208 = vunpack.c.h.b16 %v2640
    %v3209 = vunpack.c.l.b16 %v2641
    %v3210 = vunpack.c.h.b16 %v2641
    %v3211 = vunpack.c.l.b16 %v2642
    %v3212 = vunpack.c.h.b16 %v2642
    %v3213 = vunpack.c.l.b16 %v2643
    %v3214 = vunpack.c.h.b16 %v2643
    %v3215 = vunpack.c.l.b16 %v2644
    %v3216 = vunpack.c.h.b16 %v2644
    %v3217 = vunpack.c.l.b16 %v2645
    %v3218 = vunpack.c.h.b16 %v2645
    %v3219 = vunpack.c.l.b16 %v2646
    %v3220 = vunpack.c.h.b16 %v2646
    %v3221 = vunpack.c.l.b16 %v2647
    %v3222 = vunpack.c.h.b16 %v2647
    %v3223 = vunpack.c.l.b16 %v2648
    %v3224 = vunpack.c.h.b16 %v2648
    %v3225 = vunpack.c.l.b16 %v2649
    %v3226 = vunpack.c.h.b16 %v2649
    %v3227 = vunpack.c.l.b16 %v2650
    %v3228 = vunpack.c.h.b16 %v2650
    %v3229 = vunpack.c.l.b16 %v2651
    %v3230 = vunpack.c.h.b16 %v2651
    %v3231 = vunpack.c.l.b16 %v2652
    %v3232 = vunpack.c.h.b16 %v2652
    %v3233 = vunpack.c.l.b16 %v2653
    %v3234 = vunpack.c.h.b16 %v2653
    %v3235 = vunpack.c.l.b16 %v2654
    %v3236 = vunpack.c.h.b16 %v2654
    %v3237 = vunpack.c.l.b16 %v2655
    %v3238 = vunpack.c.h.b16 %v2655
    %v3239 = vunpack.c.l.b16 %v2656
    %v3240 = vunpack.c.h.b16 %v2656
    %v3241 = vunpack.c.l.b16 %v2657
    %v3242 = vunpack.c.h.b16 %v2657
    %v3243 = vunpack.c.l.b16 %v2658
    %v3244 = vunpack.c.h.b16 %v2658
    %v3245 = vunpack.c.l.b16 %v2659
    %v3246 = vunpack.c.h.b16 %v2659
    %v3247 = vunpack.c.l.b16 %v2660
    %v3248 = vunpack.c.h.b16 %v2660
    %v3249 = vunpack.c.l.b16 %v2661
    %v3250 = vunpack.c.h.b16 %v2661
    %v3251 = vunpack.c.l.b16 %v2662
    %v3252 = vunpack.c.h.b16 %v2662
    %v3253 = vunpack.c.l.b16 %v2663
    %v3254 = vunpack.c.h.b16 %v2663
    %v3255 = vunpack.c.l.b16 %v2664
    %v3256 = vunpack.c.h.b16 %v2664
    %v3257 = vunpack.c.l.b16 %v2665
    %v3258 = vunpack.c.h.b16 %v2665
    %v3259 = vunpack.c.l.b16 %v2666
    %v3260 = vunpack.c.h.b16 %v2666
    %v3261 = vunpack.c.l.b16 %v2667
    %v3262 = vunpack.c.h.b16 %v2667
    %v3263 = vunpack.c.l.b16 %v2668
    %v3264 = vunpack.c.h.b16 %v2668
    %v3265 = vunpack.c.l.b16 %v2669
    %v3266 = vunpack.c.h.b16 %v2669
    %v3267 = vunpack.c.l.b16 %v2670
    %v3268 = vunpack.c.h.b16 %v2670
    %v3269 = vunpack.c.l.b16 %v2671
    %v3270 = vunpack.c.h.b16 %v2671
    %v3271 = vunpack.c.l.b16 %v2672
    %v3272 = vunpack.c.h.b16 %v2672
    %v3273 = vpack.c.b16 %v2881, %v2873
    %v3274 = vpack.c.b16 %v2882, %v2874
    %v3275 = vpack.c.b16 %v2883, %v2875
    %v3276 = vpack.c.b16 %v2884, %v2876
    %v3277 = vpack.c.b16 %v2885, %v2877
    %v3278 = vpack.c.b16 %v2886, %v2878
    %v3279 = vpack.c.b16 %v2887, %v2879
    %v3280 = vpack.c.b16 %v2888, %v2880
    %v3281 = vpack.c.b16 %v2897, %v2889
    %v3282 = vpack.c.b16 %v2898, %v2890
    %v3283 = vpack.c.b16 %v2899, %v2891
    %v3284 = vpack.c.b16 %v2900, %v2892
    %v3285 = vpack.c.b16 %v2901, %v2893
    %v3286 = vpack.c.b16 %v2902, %v2894
    %v3287 = vpack.c.b16 %v2903, %v2895
    %v3288 = vpack.c.b16 %v2904, %v2896
    %v3289 = vpack.c.b16 %v2913, %v2905
    %v3290 = vpack.c.b16 %v2914, %v2906
    %v3291 = vpack.c.b16 %v2915, %v2907
    %v3292 = vpack.c.b16 %v2916, %v2908
    %v3293 = vpack.c.b16 %v2917, %v2909
    %v3294 = vpack.c.b16 %v2918, %v2910
    %v3295 = vpack.c.b16 %v2919, %v2911
    %v3296 = vpack.c.b16 %v2920, %v2912
    %v3297 = vpack.c.b16 %v2929, %v2921
    %v3298 = vpack.c.b16 %v2930, %v2922
    %v3299 = vpack.c.b16 %v2931, %v2923
    %v3300 = vpack.c.b16 %v2932, %v2924
    %v3301 = vpack.c.b16 %v2933, %v2925
    %v3302 = vpack.c.b16 %v2934, %v2926
    %v3303 = vpack.c.b16 %v2935, %v2927
    %v3304 = vpack.c.b16 %v2936, %v2928
    %v3305 = vpack.c.b16 %v2945, %v2937
    %v3306 = vpack.c.b16 %v2946, %v2938
    %v3307 = vpack.c.b16 %v2947, %v2939
    %v3308 = vpack.c.b16 %v2948, %v2940
    %v3309 = vpack.c.b16 %v2949, %v2941
    %v3310 = vpack.c.b16 %v2950, %v2942
    %v3311 = vpack.c.b16 %v2951, %v2943
    %v3312 = vpack.c.b16 %v2952, %v2944
    %v3313 = vpack.c.b16 %v2961, %v2953
    %v3314 = vpack.c.b16 %v2962, %v2954
    %v3315 = vpack.c.b16 %v2963, %v2955
    %v3316 = vpack.c.b16 %v2964, %v2956
    %v3317 = vpack.c.b16 %v2965, %v2957
    %v3318 = vpack.c.b16 %v2966, %v2958
    %v3319 = vpack.c.b16 %v2967, %v2959
    %v3320 = vpack.c.b16 %v2968, %v2960
    %v3321 = vpack.c.b16 %v2977, %v2969
    %v3322 = vpack.c.b16 %v2978, %v2970
    %v3323 = vpack.c.b16 %v2979, %v2971
    %v3324 = vpack.c.b16 %v2980, %v2972
    %v3325 = vpack.c.b16 %v2981, %v2973
    %v3326 = vpack.c.b16 %v2982, %v2974
    %v3327 = vpack.c.b16 %v2983, %v2975
    %v3328 = vpack.c.b16 %v2984, %v2976
    %v3329 = vpack.c.b16 %v2993, %v2985
    %v3330 = vpack.c.b16 %v2994, %v2986
    %v3331 = vpack.c.b16 %v2995, %v2987
    %v3332 = vpack.c.b16 %v2996, %v2988
    %v3333 = vpack.c.b16 %v2997, %v2989
    %v3334 = vpack.c.b16 %v2998, %v2990
    %v3335 = vpack.c.b16 %v2999, %v2991
    %v3336 = vpack.c.b16 %v3000, %v2992
    %v3337 = vpack.c.b16 %v3009, %v3001
    %v3338 = vpack.c.b16 %v3010, %v3002
    %v3339 = vpack.c.b16 %v3011, %v3003
    %v3340 = vpack.c.b16 %v3012, %v3004
    %v3341 = vpack.c.b16 %v3013, %v3005
    %v3342 = vpack.c.b16 %v3014, %v3006
    %v3343 = vpack.c.b16 %v3015, %v3007
    %v3344 = vpack.c.b16 %v3016, %v3008
    %v3345 = vpack.c.b16 %v3025, %v3017
    %v3346 = vpack.c.b16 %v3026, %v3018
    %v3347 = vpack.c.b16 %v3027, %v3019
    %v3348 = vpack.c.b16 %v3028, %v3020
    %v3349 = vpack.c.b16 %v3029, %v3021
    %v3350 = vpack.c.b16 %v3030, %v3022
    %v3351 = vpack.c.b16 %v3031, %v3023
    %v3352 = vpack.c.b16 %v3032, %v3024
    %v3353 = vpack.c.b16 %v3041, %v3033
    %v3354 = vpack.c.b16 %v3042, %v3034
    %v3355 = vpack.c.b16 %v3043, %v3035
    %v3356 = vpack.c.b16 %v3044, %v3036
    %v3357 = vpack.c.b16 %v3045, %v3037
    %v3358 = vpack.c.b16 %v3046, %v3038
    %v3359 = vpack.c.b16 %v3047, %v3039
    %v3360 = vpack.c.b16 %v3048, %v3040
    %v3361 = vpack.c.b16 %v3057, %v3049
    %v3362 = vpack.c.b16 %v3058, %v3050
    %v3363 = vpack.c.b16 %v3059, %v3051
    %v3364 = vpack.c.b16 %v3060, %v3052
    %v3365 = vpack.c.b16 %v3061, %v3053
    %v3366 = vpack.c.b16 %v3062, %v3054
    %v3367 = vpack.c.b16 %v3063, %v3055
    %v3368 = vpack.c.b16 %v3064, %v3056
    %v3369 = vpack.c.b16 %v3073, %v3065
    %v3370 = vpack.c.b16 %v3074, %v3066
    %v3371 = vpack.c.b16 %v3075, %v3067
    %v3372 = vpack.c.b16 %v3076, %v3068
    %v3373 = vpack.c.b16 %v3077, %v3069
    %v3374 = vpack.c.b16 %v3078, %v3070
    %v3375 = vpack.c.b16 %v3079, %v3071
    %v3376 = vpack.c.b16 %v3080, %v3072
    %v3377 = vpack.c.b16 %v3089, %v3081
    %v3378 = vpack.c.b16 %v3090, %v3082
    %v3379 = vpack.c.b16 %v3091, %v3083
    %v3380 = vpack.c.b16 %v3092, %v3084
    %v3381 = vpack.c.b16 %v3093, %v3085
    %v3382 = vpack.c.b16 %v3094, %v3086
    %v3383 = vpack.c.b16 %v3095, %v3087
    %v3384 = vpack.c.b16 %v3096, %v3088
    %v3385 = vpack.c.b16 %v3105, %v3097
    %v3386 = vpack.c.b16 %v3106, %v3098
    %v3387 = vpack.c.b16 %v3107, %v3099
    %v3388 = vpack.c.b16 %v3108, %v3100
    %v3389 = vpack.c.b16 %v3109, %v3101
    %v3390 = vpack.c.b16 %v3110, %v3102
    %v3391 = vpack.c.b16 %v3111, %v3103
    %v3392 = vpack.c.b16 %v3112, %v3104
    %v3393 = vpack.c.b16 %v3121, %v3113
    %v3394 = vpack.c.b16 %v3122, %v3114
    %v3395 = vpack.c.b16 %v3123, %v3115
    %v3396 = vpack.c.b16 %v3124, %v3116
    %v3397 = vpack.c.b16 %v3125, %v3117
    %v3398 = vpack.c.b16 %v3126, %v3118
    %v3399 = vpack.c.b16 %v3127, %v3119
    %v3400 = vpack.c.b16 %v3128, %v3120
    %v3401 = vpack.c.b16 %v3137, %v3129
    %v3402 = vpack.c.b16 %v3138, %v3130
    %v3403 = vpack.c.b16 %v3139, %v3131
    %v3404 = vpack.c.b16 %v3140, %v3132
    %v3405 = vpack.c.b16 %v3141, %v3133
    %v3406 = vpack.c.b16 %v3142, %v3134
    %v3407 = vpack.c.b16 %v3143, %v3135
    %v3408 = vpack.c.b16 %v3144, %v3136
    %v3409 = vpack.c.b16 %v3153, %v3145
    %v3410 = vpack.c.b16 %v3154, %v3146
    %v3411 = vpack.c.b16 %v3155, %v3147
    %v3412 = vpack.c.b16 %v3156, %v3148
    %v3413 = vpack.c.b16 %v3157, %v3149
    %v3414 = vpack.c.b16 %v3158, %v3150
    %v3415 = vpack.c.b16 %v3159, %v3151
    %v3416 = vpack.c.b16 %v3160, %v3152
    %v3417 = vpack.c.b16 %v3169, %v3161
    %v3418 = vpack.c.b16 %v3170, %v3162
    %v3419 = vpack.c.b16 %v3171, %v3163
    %v3420 = vpack.c.b16 %v3172, %v3164
    %v3421 = vpack.c.b16 %v3173, %v3165
    %v3422 = vpack.c.b16 %v3174, %v3166
    %v3423 = vpack.c.b16 %v3175, %v3167
    %v3424 = vpack.c.b16 %v3176, %v3168
    %v3425 = vpack.c.b16 %v3185, %v3177
    %v3426 = vpack.c.b16 %v3186, %v3178
    %v3427 = vpack.c.b16 %v3187, %v3179
    %v3428 = vpack.c.b16 %v3188, %v3180
    %v3429 = vpack.c.b16 %v3189, %v3181
    %v3430 = vpack.c.b16 %v3190, %v3182
    %v3431 = vpack.c.b16 %v3191, %v3183
    %v3432 = vpack.c.b16 %v3192, %v3184
    %v3433 = vpack.c.b16 %v3201, %v3193
    %v3434 = vpack.c.b16 %v3202, %v3194
    %v3435 = vpack.c.b16 %v3203, %v3195
    %v3436 = vpack.c.b16 %v3204, %v3196
    %v3437 = vpack.c.b16 %v3205, %v3197
    %v3438 = vpack.c.b16 %v3206, %v3198
    %v3439 = vpack.c.b16 %v3207, %v3199
    %v3440 = vpack.c.b16 %v3208, %v3200
    %v3441 = vpack.c.b16 %v3217, %v3209
    %v3442 = vpack.c.b16 %v3218, %v3210
    %v3443 = vpack.c.b16 %v3219, %v3211
    %v3444 = vpack.c.b16 %v3220, %v3212
    %v3445 = vpack.c.b16 %v3221, %v3213
    %v3446 = vpack.c.b16 %v3222, %v3214
    %v3447 = vpack.c.b16 %v3223, %v3215
    %v3448 = vpack.c.b16 %v3224, %v3216
    %v3449 = vpack.c.b16 %v3233, %v3225
    %v3450 = vpack.c.b16 %v3234, %v3226
    %v3451 = vpack.c.b16 %v3235, %v3227
    %v3452 = vpack.c.b16 %v3236, %v3228
    %v3453 = vpack.c.b16 %v3237, %v3229
    %v3454 = vpack.c.b16 %v3238, %v3230
    %v3455 = vpack.c.b16 %v3239, %v3231
    %v3456 = vpack.c.b16 %v3240, %v3232
    %v3457 = vpack.c.b16 %v3249, %v3241
    %v3458 = vpack.c.b16 %v3250, %v3242
    %v3459 = vpack.c.b16 %v3251, %v3243
    %v3460 = vpack.c.b16 %v3252, %v3244
    %v3461 = vpack.c.b16 %v3253, %v3245
    %v3462 = vpack.c.b16 %v3254, %v3246
    %v3463 = vpack.c.b16 %v3255, %v3247
    %v3464 = vpack.c.b16 %v3256, %v3248
    %v3465 = vpack.c.b16 %v3265, %v3257
    %v3466 = vpack.c.b16 %v3266, %v3258
    %v3467 = vpack.c.b16 %v3267, %v3259
    %v3468 = vpack.c.b16 %v3268, %v3260
    %v3469 = vpack.c.b16 %v3269, %v3261
    %v3470 = vpack.c.b16 %v3270, %v3262
    %v3471 = vpack.c.b16 %v3271, %v3263
    %v3472 = vpack.c.b16 %v3272, %v3264
    %vm3673 = vcmask 130048
    %v3675 = vsel %vm3673, %v2472, 0
    %3677 = vmatpush.bf16.msra.mxu0 %v3329
    %3678 = vmatpush.bf16.msra.mxu0 %v3321
    %3679 = vmatpush.bf16.msra.mxu0 %v3313
    %3680 = vmatpush.bf16.msra.mxu0 %v3305
    %3681 = vmatpush.bf16.msra.mxu0 %v3297
    %3682 = vmatpush.bf16.msra.mxu0 %v3289
    %3683 = vmatpush.bf16.msra.mxu0 %v3281
    %3684 = vmatpush.bf16.msra.mxu0 %v3273
    %3685 = vmatmul.bf16.gmra.mxu0 %v2469
    %v3686 = vpop.f32.mrf.mxu0
    %v3687 = vadd.f32 0.0, %v3686
    %v3688 = vpop.f32.mrf.mxu0
    %v3689 = vadd.f32 0.0, %v3688
    %3690 = vdwg.mxu0
    %3691 = vmatpush.bf16.msra.mxu0 %v3393
    %3692 = vmatpush.bf16.msra.mxu0 %v3385
    %3693 = vmatpush.bf16.msra.mxu0 %v3377
    %3694 = vmatpush.bf16.msra.mxu0 %v3369
    %3695 = vmatpush.bf16.msra.mxu0 %v3361
    %3696 = vmatpush.bf16.msra.mxu0 %v3353
    %3697 = vmatpush.bf16.msra.mxu0 %v3345
    %3698 = vmatpush.bf16.msra.mxu0 %v3337
    %3699 = vmatmul.bf16.gmra.mxu0 %v2470
    %v3700 = vpop.f32.mrf.mxu0
    %v3701 = vadd.f32 %v3687, %v3700
    %v3702 = vpop.f32.mrf.mxu0
    %v3703 = vadd.f32 %v3689, %v3702
    %3704 = vdwg.mxu0
    %3705 = vmatpush.bf16.msra.mxu0 %v3457
    %3706 = vmatpush.bf16.msra.mxu0 %v3449
    %3707 = vmatpush.bf16.msra.mxu0 %v3441
    %3708 = vmatpush.bf16.msra.mxu0 %v3433
    %3709 = vmatpush.bf16.msra.mxu0 %v3425
    %3710 = vmatpush.bf16.msra.mxu0 %v3417
    %3711 = vmatpush.bf16.msra.mxu0 %v3409
    %3712 = vmatpush.bf16.msra.mxu0 %v3401
    %3713 = vmatmul.bf16.gmra.mxu0 %v2471
    %v3714 = vpop.f32.mrf.mxu0
    %v3715 = vadd.f32 %v3701, %v3714
    %v3716 = vpop.f32.mrf.mxu0
    %v3717 = vadd.f32 %v3703, %v3716
    %3718 = vdwg.mxu0
    %3719 = vmatpush.bf16.msra.mxu0 0
    %3720 = vmatpush.bf16.msra.mxu0 0
    %3721 = vmatpush.bf16.msra.mxu0 0
    %3722 = vmatpush.bf16.msra.mxu0 0
    %3723 = vmatpush.bf16.msra.mxu0 0
    %3724 = vmatpush.bf16.msra.mxu0 0
    %3725 = vmatpush.bf16.msra.mxu0 0
    %3726 = vmatpush.bf16.msra.mxu0 %v3465
    %3727 = vmatmul.bf16.gmra.mxu0 %v3675
    %v3728 = vpop.f32.mrf.mxu0
    %v3729 = vadd.f32 %v3715, %v3728
    %v3730 = vpop.f32.mrf.mxu0
    %v3731 = vadd.f32 %v3717, %v3730
    %3732 = vdwg.mxu0
    %3733 = vmatpush.bf16.msra.mxu0 %v3330
    %3734 = vmatpush.bf16.msra.mxu0 %v3322
    %3735 = vmatpush.bf16.msra.mxu0 %v3314
    %3736 = vmatpush.bf16.msra.mxu0 %v3306
    %3737 = vmatpush.bf16.msra.mxu0 %v3298
    %3738 = vmatpush.bf16.msra.mxu0 %v3290
    %3739 = vmatpush.bf16.msra.mxu0 %v3282
    %3740 = vmatpush.bf16.msra.mxu0 %v3274
    %3741 = vmatmul.bf16.gmra.mxu0 %v2469
    %v3742 = vpop.f32.mrf.mxu0
    %v3743 = vadd.f32 0.0, %v3742
    %v3744 = vpop.f32.mrf.mxu0
    %v3745 = vadd.f32 0.0, %v3744
    %3746 = vdwg.mxu0
    %3747 = vmatpush.bf16.msra.mxu0 %v3394
    %3748 = vmatpush.bf16.msra.mxu0 %v3386
    %3749 = vmatpush.bf16.msra.mxu0 %v3378
    %3750 = vmatpush.bf16.msra.mxu0 %v3370
    %3751 = vmatpush.bf16.msra.mxu0 %v3362
    %3752 = vmatpush.bf16.msra.mxu0 %v3354
    %3753 = vmatpush.bf16.msra.mxu0 %v3346
    %3754 = vmatpush.bf16.msra.mxu0 %v3338
    %3755 = vmatmul.bf16.gmra.mxu0 %v2470
    %v3756 = vpop.f32.mrf.mxu0
    %v3757 = vadd.f32 %v3743, %v3756
    %v3758 = vpop.f32.mrf.mxu0
    %v3759 = vadd.f32 %v3745, %v3758
    %3760 = vdwg.mxu0
    %3761 = vmatpush.bf16.msra.mxu0 %v3458
    %3762 = vmatpush.bf16.msra.mxu0 %v3450
    %3763 = vmatpush.bf16.msra.mxu0 %v3442
    %3764 = vmatpush.bf16.msra.mxu0 %v3434
    %3765 = vmatpush.bf16.msra.mxu0 %v3426
    %3766 = vmatpush.bf16.msra.mxu0 %v3418
    %3767 = vmatpush.bf16.msra.mxu0 %v3410
    %3768 = vmatpush.bf16.msra.mxu0 %v3402
    %3769 = vmatmul.bf16.gmra.mxu0 %v2471
    %v3770 = vpop.f32.mrf.mxu0
    %v3771 = vadd.f32 %v3757, %v3770
    %v3772 = vpop.f32.mrf.mxu0
    %v3773 = vadd.f32 %v3759, %v3772
    %3774 = vdwg.mxu0
    %3775 = vmatpush.bf16.msra.mxu0 0
    %3776 = vmatpush.bf16.msra.mxu0 0
    %3777 = vmatpush.bf16.msra.mxu0 0
    %3778 = vmatpush.bf16.msra.mxu0 0
    %3779 = vmatpush.bf16.msra.mxu0 0
    %3780 = vmatpush.bf16.msra.mxu0 0
    %3781 = vmatpush.bf16.msra.mxu0 0
    %3782 = vmatpush.bf16.msra.mxu0 %v3466
    %3783 = vmatmul.bf16.gmra.mxu0 %v3675
    %v3784 = vpop.f32.mrf.mxu0
    %v3785 = vadd.f32 %v3771, %v3784
    %v3786 = vpop.f32.mrf.mxu0
    %v3787 = vadd.f32 %v3773, %v3786
    %3788 = vdwg.mxu0
    %3789 = vmatpush.bf16.msra.mxu0 %v3331
    %3790 = vmatpush.bf16.msra.mxu0 %v3323
    %3791 = vmatpush.bf16.msra.mxu0 %v3315
    %3792 = vmatpush.bf16.msra.mxu0 %v3307
    %3793 = vmatpush.bf16.msra.mxu0 %v3299
    %3794 = vmatpush.bf16.msra.mxu0 %v3291
    %3795 = vmatpush.bf16.msra.mxu0 %v3283
    %3796 = vmatpush.bf16.msra.mxu0 %v3275
    %3797 = vmatmul.bf16.gmra.mxu0 %v2469
    %v3798 = vpop.f32.mrf.mxu0
    %v3799 = vadd.f32 0.0, %v3798
    %v3800 = vpop.f32.mrf.mxu0
    %v3801 = vadd.f32 0.0, %v3800
    %3802 = vdwg.mxu0
    %3803 = vmatpush.bf16.msra.mxu0 %v3395
    %3804 = vmatpush.bf16.msra.mxu0 %v3387
    %3805 = vmatpush.bf16.msra.mxu0 %v3379
    %3806 = vmatpush.bf16.msra.mxu0 %v3371
    %3807 = vmatpush.bf16.msra.mxu0 %v3363
    %3808 = vmatpush.bf16.msra.mxu0 %v3355
    %3809 = vmatpush.bf16.msra.mxu0 %v3347
    %3810 = vmatpush.bf16.msra.mxu0 %v3339
    %3811 = vmatmul.bf16.gmra.mxu0 %v2470
    %v3812 = vpop.f32.mrf.mxu0
    %v3813 = vadd.f32 %v3799, %v3812
    %v3814 = vpop.f32.mrf.mxu0
    %v3815 = vadd.f32 %v3801, %v3814
    %3816 = vdwg.mxu0
    %3817 = vmatpush.bf16.msra.mxu0 %v3459
    %3818 = vmatpush.bf16.msra.mxu0 %v3451
    %3819 = vmatpush.bf16.msra.mxu0 %v3443
    %3820 = vmatpush.bf16.msra.mxu0 %v3435
    %3821 = vmatpush.bf16.msra.mxu0 %v3427
    %3822 = vmatpush.bf16.msra.mxu0 %v3419
    %3823 = vmatpush.bf16.msra.mxu0 %v3411
    %3824 = vmatpush.bf16.msra.mxu0 %v3403
    %3825 = vmatmul.bf16.gmra.mxu0 %v2471
    %v3826 = vpop.f32.mrf.mxu0
    %v3827 = vadd.f32 %v3813, %v3826
    %v3828 = vpop.f32.mrf.mxu0
    %v3829 = vadd.f32 %v3815, %v3828
    %3830 = vdwg.mxu0
    %3831 = vmatpush.bf16.msra.mxu0 0
    %3832 = vmatpush.bf16.msra.mxu0 0
    %3833 = vmatpush.bf16.msra.mxu0 0
    %3834 = vmatpush.bf16.msra.mxu0 0
    %3835 = vmatpush.bf16.msra.mxu0 0
    %3836 = vmatpush.bf16.msra.mxu0 0
    %3837 = vmatpush.bf16.msra.mxu0 0
    %3838 = vmatpush.bf16.msra.mxu0 %v3467
    %3839 = vmatmul.bf16.gmra.mxu0 %v3675
    %v3840 = vpop.f32.mrf.mxu0
    %v3841 = vadd.f32 %v3827, %v3840
    %v3842 = vpop.f32.mrf.mxu0
    %v3843 = vadd.f32 %v3829, %v3842
    %3844 = vdwg.mxu0
    %3845 = vmatpush.bf16.msra.mxu0 %v3332
    %3846 = vmatpush.bf16.msra.mxu0 %v3324
    %3847 = vmatpush.bf16.msra.mxu0 %v3316
    %3848 = vmatpush.bf16.msra.mxu0 %v3308
    %3849 = vmatpush.bf16.msra.mxu0 %v3300
    %3850 = vmatpush.bf16.msra.mxu0 %v3292
    %3851 = vmatpush.bf16.msra.mxu0 %v3284
    %3852 = vmatpush.bf16.msra.mxu0 %v3276
    %3853 = vmatmul.bf16.gmra.mxu0 %v2469
    %v3854 = vpop.f32.mrf.mxu0
    %v3855 = vadd.f32 0.0, %v3854
    %v3856 = vpop.f32.mrf.mxu0
    %v3857 = vadd.f32 0.0, %v3856
    %3858 = vdwg.mxu0
    %3859 = vmatpush.bf16.msra.mxu0 %v3396
    %3860 = vmatpush.bf16.msra.mxu0 %v3388
    %3861 = vmatpush.bf16.msra.mxu0 %v3380
    %3862 = vmatpush.bf16.msra.mxu0 %v3372
    %3863 = vmatpush.bf16.msra.mxu0 %v3364
    %3864 = vmatpush.bf16.msra.mxu0 %v3356
    %3865 = vmatpush.bf16.msra.mxu0 %v3348
    %3866 = vmatpush.bf16.msra.mxu0 %v3340
    %3867 = vmatmul.bf16.gmra.mxu0 %v2470
    %v3868 = vpop.f32.mrf.mxu0
    %v3869 = vadd.f32 %v3855, %v3868
    %v3870 = vpop.f32.mrf.mxu0
    %v3871 = vadd.f32 %v3857, %v3870
    %3872 = vdwg.mxu0
    %3873 = vmatpush.bf16.msra.mxu0 %v3460
    %3874 = vmatpush.bf16.msra.mxu0 %v3452
    %3875 = vmatpush.bf16.msra.mxu0 %v3444
    %3876 = vmatpush.bf16.msra.mxu0 %v3436
    %3877 = vmatpush.bf16.msra.mxu0 %v3428
    %3878 = vmatpush.bf16.msra.mxu0 %v3420
    %3879 = vmatpush.bf16.msra.mxu0 %v3412
    %3880 = vmatpush.bf16.msra.mxu0 %v3404
    %3881 = vmatmul.bf16.gmra.mxu0 %v2471
    %v3882 = vpop.f32.mrf.mxu0
    %v3883 = vadd.f32 %v3869, %v3882
    %v3884 = vpop.f32.mrf.mxu0
    %v3885 = vadd.f32 %v3871, %v3884
    %3886 = vdwg.mxu0
    %3887 = vmatpush.bf16.msra.mxu0 0
    %3888 = vmatpush.bf16.msra.mxu0 0
    %3889 = vmatpush.bf16.msra.mxu0 0
    %3890 = vmatpush.bf16.msra.mxu0 0
    %3891 = vmatpush.bf16.msra.mxu0 0
    %3892 = vmatpush.bf16.msra.mxu0 0
    %3893 = vmatpush.bf16.msra.mxu0 0
    %3894 = vmatpush.bf16.msra.mxu0 %v3468
    %3895 = vmatmul.bf16.gmra.mxu0 %v3675
    %v3896 = vpop.f32.mrf.mxu0
    %v3897 = vadd.f32 %v3883, %v3896
    %v3898 = vpop.f32.mrf.mxu0
    %v3899 = vadd.f32 %v3885, %v3898
    %3900 = vdwg.mxu0
    %3901 = vmatpush.bf16.msra.mxu0 %v3333
    %3902 = vmatpush.bf16.msra.mxu0 %v3325
    %3903 = vmatpush.bf16.msra.mxu0 %v3317
    %3904 = vmatpush.bf16.msra.mxu0 %v3309
    %3905 = vmatpush.bf16.msra.mxu0 %v3301
    %3906 = vmatpush.bf16.msra.mxu0 %v3293
    %3907 = vmatpush.bf16.msra.mxu0 %v3285
    %3908 = vmatpush.bf16.msra.mxu0 %v3277
    %3909 = vmatmul.bf16.gmra.mxu0 %v2469
    %v3910 = vpop.f32.mrf.mxu0
    %v3911 = vadd.f32 0.0, %v3910
    %v3912 = vpop.f32.mrf.mxu0
    %v3913 = vadd.f32 0.0, %v3912
    %3914 = vdwg.mxu0
    %3915 = vmatpush.bf16.msra.mxu0 %v3397
    %3916 = vmatpush.bf16.msra.mxu0 %v3389
    %3917 = vmatpush.bf16.msra.mxu0 %v3381
    %3918 = vmatpush.bf16.msra.mxu0 %v3373
    %3919 = vmatpush.bf16.msra.mxu0 %v3365
    %3920 = vmatpush.bf16.msra.mxu0 %v3357
    %3921 = vmatpush.bf16.msra.mxu0 %v3349
    %3922 = vmatpush.bf16.msra.mxu0 %v3341
    %3923 = vmatmul.bf16.gmra.mxu0 %v2470
    %v3924 = vpop.f32.mrf.mxu0
    %v3925 = vadd.f32 %v3911, %v3924
    %v3926 = vpop.f32.mrf.mxu0
    %v3927 = vadd.f32 %v3913, %v3926
    %3928 = vdwg.mxu0
    %3929 = vmatpush.bf16.msra.mxu0 %v3461
    %3930 = vmatpush.bf16.msra.mxu0 %v3453
    %3931 = vmatpush.bf16.msra.mxu0 %v3445
    %3932 = vmatpush.bf16.msra.mxu0 %v3437
    %3933 = vmatpush.bf16.msra.mxu0 %v3429
    %3934 = vmatpush.bf16.msra.mxu0 %v3421
    %3935 = vmatpush.bf16.msra.mxu0 %v3413
    %3936 = vmatpush.bf16.msra.mxu0 %v3405
    %3937 = vmatmul.bf16.gmra.mxu0 %v2471
    %v3938 = vpop.f32.mrf.mxu0
    %v3939 = vadd.f32 %v3925, %v3938
    %v3940 = vpop.f32.mrf.mxu0
    %v3941 = vadd.f32 %v3927, %v3940
    %3942 = vdwg.mxu0
    %3943 = vmatpush.bf16.msra.mxu0 0
    %3944 = vmatpush.bf16.msra.mxu0 0
    %3945 = vmatpush.bf16.msra.mxu0 0
    %3946 = vmatpush.bf16.msra.mxu0 0
    %3947 = vmatpush.bf16.msra.mxu0 0
    %3948 = vmatpush.bf16.msra.mxu0 0
    %3949 = vmatpush.bf16.msra.mxu0 0
    %3950 = vmatpush.bf16.msra.mxu0 %v3469
    %3951 = vmatmul.bf16.gmra.mxu0 %v3675
    %v3952 = vpop.f32.mrf.mxu0
    %v3953 = vadd.f32 %v3939, %v3952
    %v3954 = vpop.f32.mrf.mxu0
    %v3955 = vadd.f32 %v3941, %v3954
    %3956 = vdwg.mxu0
    %3957 = vmatpush.bf16.msra.mxu0 %v3334
    %3958 = vmatpush.bf16.msra.mxu0 %v3326
    %3959 = vmatpush.bf16.msra.mxu0 %v3318
    %3960 = vmatpush.bf16.msra.mxu0 %v3310
    %3961 = vmatpush.bf16.msra.mxu0 %v3302
    %3962 = vmatpush.bf16.msra.mxu0 %v3294
    %3963 = vmatpush.bf16.msra.mxu0 %v3286
    %3964 = vmatpush.bf16.msra.mxu0 %v3278
    %3965 = vmatmul.bf16.gmra.mxu0 %v2469
    %v3966 = vpop.f32.mrf.mxu0
    %v3967 = vadd.f32 0.0, %v3966
    %v3968 = vpop.f32.mrf.mxu0
    %v3969 = vadd.f32 0.0, %v3968
    %3970 = vdwg.mxu0
    %3971 = vmatpush.bf16.msra.mxu0 %v3398
    %3972 = vmatpush.bf16.msra.mxu0 %v3390
    %3973 = vmatpush.bf16.msra.mxu0 %v3382
    %3974 = vmatpush.bf16.msra.mxu0 %v3374
    %3975 = vmatpush.bf16.msra.mxu0 %v3366
    %3976 = vmatpush.bf16.msra.mxu0 %v3358
    %3977 = vmatpush.bf16.msra.mxu0 %v3350
    %3978 = vmatpush.bf16.msra.mxu0 %v3342
    %3979 = vmatmul.bf16.gmra.mxu0 %v2470
    %v3980 = vpop.f32.mrf.mxu0
    %v3981 = vadd.f32 %v3967, %v3980
    %v3982 = vpop.f32.mrf.mxu0
    %v3983 = vadd.f32 %v3969, %v3982
    %3984 = vdwg.mxu0
    %3985 = vmatpush.bf16.msra.mxu0 %v3462
    %3986 = vmatpush.bf16.msra.mxu0 %v3454
    %3987 = vmatpush.bf16.msra.mxu0 %v3446
    %3988 = vmatpush.bf16.msra.mxu0 %v3438
    %3989 = vmatpush.bf16.msra.mxu0 %v3430
    %3990 = vmatpush.bf16.msra.mxu0 %v3422
    %3991 = vmatpush.bf16.msra.mxu0 %v3414
    %3992 = vmatpush.bf16.msra.mxu0 %v3406
    %3993 = vmatmul.bf16.gmra.mxu0 %v2471
    %v3994 = vpop.f32.mrf.mxu0
    %v3995 = vadd.f32 %v3981, %v3994
    %v3996 = vpop.f32.mrf.mxu0
    %v3997 = vadd.f32 %v3983, %v3996
    %3998 = vdwg.mxu0
    %3999 = vmatpush.bf16.msra.mxu0 0
    %4000 = vmatpush.bf16.msra.mxu0 0
    %4001 = vmatpush.bf16.msra.mxu0 0
    %4002 = vmatpush.bf16.msra.mxu0 0
    %4003 = vmatpush.bf16.msra.mxu0 0
    %4004 = vmatpush.bf16.msra.mxu0 0
    %4005 = vmatpush.bf16.msra.mxu0 0
    %4006 = vmatpush.bf16.msra.mxu0 %v3470
    %4007 = vmatmul.bf16.gmra.mxu0 %v3675
    %v4008 = vpop.f32.mrf.mxu0
    %v4009 = vadd.f32 %v3995, %v4008
    %v4010 = vpop.f32.mrf.mxu0
    %v4011 = vadd.f32 %v3997, %v4010
    %4012 = vdwg.mxu0
    %4013 = vmatpush.bf16.msra.mxu0 %v3335
    %4014 = vmatpush.bf16.msra.mxu0 %v3327
    %4015 = vmatpush.bf16.msra.mxu0 %v3319
    %4016 = vmatpush.bf16.msra.mxu0 %v3311
    %4017 = vmatpush.bf16.msra.mxu0 %v3303
    %4018 = vmatpush.bf16.msra.mxu0 %v3295
    %4019 = vmatpush.bf16.msra.mxu0 %v3287
    %4020 = vmatpush.bf16.msra.mxu0 %v3279
    %4021 = vmatmul.bf16.gmra.mxu0 %v2469
    %v4022 = vpop.f32.mrf.mxu0
    %v4023 = vadd.f32 0.0, %v4022
    %v4024 = vpop.f32.mrf.mxu0
    %v4025 = vadd.f32 0.0, %v4024
    %4026 = vdwg.mxu0
    %4027 = vmatpush.bf16.msra.mxu0 %v3399
    %4028 = vmatpush.bf16.msra.mxu0 %v3391
    %4029 = vmatpush.bf16.msra.mxu0 %v3383
    %4030 = vmatpush.bf16.msra.mxu0 %v3375
    %4031 = vmatpush.bf16.msra.mxu0 %v3367
    %4032 = vmatpush.bf16.msra.mxu0 %v3359
    %4033 = vmatpush.bf16.msra.mxu0 %v3351
    %4034 = vmatpush.bf16.msra.mxu0 %v3343
    %4035 = vmatmul.bf16.gmra.mxu0 %v2470
    %v4036 = vpop.f32.mrf.mxu0
    %v4037 = vadd.f32 %v4023, %v4036
    %v4038 = vpop.f32.mrf.mxu0
    %v4039 = vadd.f32 %v4025, %v4038
    %4040 = vdwg.mxu0
    %4041 = vmatpush.bf16.msra.mxu0 %v3463
    %4042 = vmatpush.bf16.msra.mxu0 %v3455
    %4043 = vmatpush.bf16.msra.mxu0 %v3447
    %4044 = vmatpush.bf16.msra.mxu0 %v3439
    %4045 = vmatpush.bf16.msra.mxu0 %v3431
    %4046 = vmatpush.bf16.msra.mxu0 %v3423
    %4047 = vmatpush.bf16.msra.mxu0 %v3415
    %4048 = vmatpush.bf16.msra.mxu0 %v3407
    %4049 = vmatmul.bf16.gmra.mxu0 %v2471
    %v4050 = vpop.f32.mrf.mxu0
    %v4051 = vadd.f32 %v4037, %v4050
    %v4052 = vpop.f32.mrf.mxu0
    %v4053 = vadd.f32 %v4039, %v4052
    %4054 = vdwg.mxu0
    %4055 = vmatpush.bf16.msra.mxu0 0
    %4056 = vmatpush.bf16.msra.mxu0 0
    %4057 = vmatpush.bf16.msra.mxu0 0
    %4058 = vmatpush.bf16.msra.mxu0 0
    %4059 = vmatpush.bf16.msra.mxu0 0
    %4060 = vmatpush.bf16.msra.mxu0 0
    %4061 = vmatpush.bf16.msra.mxu0 0
    %4062 = vmatpush.bf16.msra.mxu0 %v3471
    %4063 = vmatmul.bf16.gmra.mxu0 %v3675
    %v4064 = vpop.f32.mrf.mxu0
    %v4065 = vadd.f32 %v4051, %v4064
    %v4066 = vpop.f32.mrf.mxu0
    %v4067 = vadd.f32 %v4053, %v4066
    %4068 = vdwg.mxu0
    %4069 = vmatpush.bf16.msra.mxu0 %v3336
    %4070 = vmatpush.bf16.msra.mxu0 %v3328
    %4071 = vmatpush.bf16.msra.mxu0 %v3320
    %4072 = vmatpush.bf16.msra.mxu0 %v3312
    %4073 = vmatpush.bf16.msra.mxu0 %v3304
    %4074 = vmatpush.bf16.msra.mxu0 %v3296
    %4075 = vmatpush.bf16.msra.mxu0 %v3288
    %4076 = vmatpush.bf16.msra.mxu0 %v3280
    %4077 = vmatmul.bf16.gmra.mxu0 %v2469
    %v4078 = vpop.f32.mrf.mxu0
    %v4079 = vadd.f32 0.0, %v4078
    %v4080 = vpop.f32.mrf.mxu0
    %v4081 = vadd.f32 0.0, %v4080
    %4082 = vdwg.mxu0
    %4083 = vmatpush.bf16.msra.mxu0 %v3400
    %4084 = vmatpush.bf16.msra.mxu0 %v3392
    %4085 = vmatpush.bf16.msra.mxu0 %v3384
    %4086 = vmatpush.bf16.msra.mxu0 %v3376
    %4087 = vmatpush.bf16.msra.mxu0 %v3368
    %4088 = vmatpush.bf16.msra.mxu0 %v3360
    %4089 = vmatpush.bf16.msra.mxu0 %v3352
    %4090 = vmatpush.bf16.msra.mxu0 %v3344
    %4091 = vmatmul.bf16.gmra.mxu0 %v2470
    %v4092 = vpop.f32.mrf.mxu0
    %v4093 = vadd.f32 %v4079, %v4092
    %v4094 = vpop.f32.mrf.mxu0
    %v4095 = vadd.f32 %v4081, %v4094
    %4096 = vdwg.mxu0
    %4097 = vmatpush.bf16.msra.mxu0 %v3464
    %4098 = vmatpush.bf16.msra.mxu0 %v3456
    %4099 = vmatpush.bf16.msra.mxu0 %v3448
    %4100 = vmatpush.bf16.msra.mxu0 %v3440
    %4101 = vmatpush.bf16.msra.mxu0 %v3432
    %4102 = vmatpush.bf16.msra.mxu0 %v3424
    %4103 = vmatpush.bf16.msra.mxu0 %v3416
    %4104 = vmatpush.bf16.msra.mxu0 %v3408
    %4105 = vmatmul.bf16.gmra.mxu0 %v2471
    %v4106 = vpop.f32.mrf.mxu0
    %v4107 = vadd.f32 %v4093, %v4106
    %v4108 = vpop.f32.mrf.mxu0
    %v4109 = vadd.f32 %v4095, %v4108
    %4110 = vdwg.mxu0
    %4111 = vmatpush.bf16.msra.mxu0 0
    %4112 = vmatpush.bf16.msra.mxu0 0
    %4113 = vmatpush.bf16.msra.mxu0 0
    %4114 = vmatpush.bf16.msra.mxu0 0
    %4115 = vmatpush.bf16.msra.mxu0 0
    %4116 = vmatpush.bf16.msra.mxu0 0
    %4117 = vmatpush.bf16.msra.mxu0 0
    %4118 = vmatpush.bf16.msra.mxu0 %v3472
    %4119 = vmatmul.bf16.gmra.mxu0 %v3675
    %v4120 = vpop.f32.mrf.mxu0
    %v4121 = vadd.f32 %v4107, %v4120
    %v4122 = vpop.f32.mrf.mxu0
    %v4123 = vadd.f32 %v4109, %v4122
    %4124 = vdwg.mxu0
    %v4126 = vperm.slane %v2460, 0
    %v4127 = vperm.slane %v2460, 1
    %v4128 = vperm.slane %v2460, 2
    %v4129 = vperm.slane %v2460, 3
    %v4130 = vperm.slane %v2460, 4
    %v4131 = vperm.slane %v2460, 5
    %v4132 = vperm.slane %v2460, 6
    %v4133 = vperm.slane %v2460, 7
    %v4142 = vadd.f32 %v4126, %v3729
    %v4143 = vadd.f32 %v4127, %v3785
    %v4144 = vadd.f32 %v4128, %v3841
    %v4145 = vadd.f32 %v4129, %v3897
    %v4146 = vadd.f32 %v4130, %v3953
    %v4147 = vadd.f32 %v4131, %v4009
    %v4148 = vadd.f32 %v4132, %v4065
    %v4149 = vadd.f32 %v4133, %v4121
    %v4150 = vadd.f32 %v4126, %v3731
    %v4151 = vadd.f32 %v4127, %v3787
    %v4152 = vadd.f32 %v4128, %v3843
    %v4153 = vadd.f32 %v4129, %v3899
    %v4154 = vadd.f32 %v4130, %v3955
    %v4155 = vadd.f32 %v4131, %v4011
    %v4156 = vadd.f32 %v4132, %v4067
    %v4157 = vadd.f32 %v4133, %v4123
    %v4158 = vmax.f32 %v2428, %v2436
    %v4159 = vmax.f32 %v2429, %v2437
    %v4160 = vmax.f32 %v2430, %v2438
    %v4161 = vmax.f32 %v2431, %v2439
    %v4162 = vmax.f32 %v2432, %v2440
    %v4163 = vmax.f32 %v2433, %v2441
    %v4164 = vmax.f32 %v2434, %v2442
    %v4165 = vmax.f32 %v2435, %v2443
    %v4166 = vpack.c.bf16 %v4162, %v4158
    %v4167 = vpack.c.bf16 %v4163, %v4159
    %v4168 = vpack.c.bf16 %v4164, %v4160
    %v4169 = vpack.c.bf16 %v4165, %v4161
    %s4170 = scalar_lea.vmem [#allocation11], 1600
    %v4171 = vld [vmem:[%s4170] sm:$0xff]
    %v4172 = vld [vmem:[%s4170 + $0x8] sm:$0xff]
    %v4173 = vld [vmem:[%s4170 + $0x10] sm:$0xff]
    %v4174 = vld [vmem:[%s4170 + $0x18] sm:$0xff]
    %v4175 = vld [vmem:[%s4170 + $0x20] sm:$0xff]
    %v4176 = vld [vmem:[%s4170 + $0x28] sm:$0xff]
    %v4177 = vld [vmem:[%s4170 + $0x30] sm:$0xff]
    %v4178 = vld [vmem:[%s4170 + $0x38] sm:$0xff]
    %v4179 = vld [vmem:[%s4170 + $0x40] sm:$0xff]
    %v4180 = vld [vmem:[%s4170 + $0x48] sm:$0xff]
    %v4181 = vld [vmem:[%s4170 + $0x50] sm:$0xff]
    %v4182 = vld [vmem:[%s4170 + $0x58] sm:$0xff]
    %v4183 = vld [vmem:[%s4170 + $0x60] sm:$0xff]
    %v4184 = vld [vmem:[%s4170 + $0x68] sm:$0xff]
    %v4185 = vld [vmem:[%s4170 + $0x70] sm:$0xff]
    %v4186 = vld [vmem:[%s4170 + $0x78] sm:$0xff]
    %v4187 = vld [vmem:[%s4170 + $0x80] sm:$0xff]
    %v4188 = vld [vmem:[%s4170 + $0x88] sm:$0xff]
    %v4189 = vld [vmem:[%s4170 + $0x90] sm:$0xff]
    %v4190 = vld [vmem:[%s4170 + $0x98] sm:$0xff]
    %v4191 = vld [vmem:[%s4170 + $0xa0] sm:$0xff]
    %v4192 = vld [vmem:[%s4170 + $0xa8] sm:$0xff]
    %v4193 = vld [vmem:[%s4170 + $0xb0] sm:$0xff]
    %v4194 = vld [vmem:[%s4170 + $0xb8] sm:$0xff]
    %v4195 = vld [vmem:[%s4170 + $0xc0] sm:$0xff]
    %v4196 = vld [vmem:[%s4170 + $0xc8] sm:$0xff]
    %v4197 = vld [vmem:[%s4170 + $0xd0] sm:$0xff]
    %v4198 = vld [vmem:[%s4170 + $0xd8] sm:$0xff]
    %v4199 = vld [vmem:[%s4170 + $0xe0] sm:$0xff]
    %v4200 = vld [vmem:[%s4170 + $0xe8] sm:$0xff]
    %v4201 = vld [vmem:[%s4170 + $0xf0] sm:$0xff]
    %v4202 = vld [vmem:[%s4170 + $0xf8] sm:$0xff]
    %v4203 = vld [vmem:[%s4170 + $0x100] sm:$0xff]
    %v4204 = vld [vmem:[%s4170 + $0x108] sm:$0xff]
    %v4205 = vld [vmem:[%s4170 + $0x110] sm:$0xff]
    %v4206 = vld [vmem:[%s4170 + $0x118] sm:$0xff]
    %v4207 = vld [vmem:[%s4170 + $0x120] sm:$0xff]
    %v4208 = vld [vmem:[%s4170 + $0x128] sm:$0xff]
    %v4209 = vld [vmem:[%s4170 + $0x130] sm:$0xff]
    %v4210 = vld [vmem:[%s4170 + $0x138] sm:$0xff]
    %v4211 = vld [vmem:[%s4170 + $0x140] sm:$0xff]
    %v4212 = vld [vmem:[%s4170 + $0x148] sm:$0xff]
    %v4213 = vld [vmem:[%s4170 + $0x150] sm:$0xff]
    %v4214 = vld [vmem:[%s4170 + $0x158] sm:$0xff]
    %v4215 = vld [vmem:[%s4170 + $0x160] sm:$0xff]
    %v4216 = vld [vmem:[%s4170 + $0x168] sm:$0xff]
    %v4217 = vld [vmem:[%s4170 + $0x170] sm:$0xff]
    %v4218 = vld [vmem:[%s4170 + $0x178] sm:$0xff]
    %v4219 = vld [vmem:[%s4170 + $0x180] sm:$0xff]
    %v4220 = vld [vmem:[%s4170 + $0x188] sm:$0xff]
    %v4221 = vld [vmem:[%s4170 + $0x190] sm:$0xff]
    %v4222 = vld [vmem:[%s4170 + $0x198] sm:$0xff]
    %v4223 = vld [vmem:[%s4170 + $0x1a0] sm:$0xff]
    %v4224 = vld [vmem:[%s4170 + $0x1a8] sm:$0xff]
    %v4225 = vld [vmem:[%s4170 + $0x1b0] sm:$0xff]
    %v4226 = vld [vmem:[%s4170 + $0x1b8] sm:$0xff]
    %v4227 = vld [vmem:[%s4170 + $0x1c0] sm:$0xff]
    %v4228 = vld [vmem:[%s4170 + $0x1c8] sm:$0xff]
    %v4229 = vld [vmem:[%s4170 + $0x1d0] sm:$0xff]
    %v4230 = vld [vmem:[%s4170 + $0x1d8] sm:$0xff]
    %v4231 = vld [vmem:[%s4170 + $0x1e0] sm:$0xff]
    %v4232 = vld [vmem:[%s4170 + $0x1e8] sm:$0xff]
    %v4233 = vld [vmem:[%s4170 + $0x1f0] sm:$0xff]
    %v4234 = vld [vmem:[%s4170 + $0x1f8] sm:$0xff]
    %v4235 = vld [vmem:[%s4170 + $0x200] sm:$0xff]
    %v4236 = vld [vmem:[%s4170 + $0x208] sm:$0xff]
    %v4237 = vld [vmem:[%s4170 + $0x210] sm:$0xff]
    %v4238 = vld [vmem:[%s4170 + $0x218] sm:$0xff]
    %v4239 = vld [vmem:[%s4170 + $0x220] sm:$0xff]
    %v4240 = vld [vmem:[%s4170 + $0x228] sm:$0xff]
    %v4241 = vld [vmem:[%s4170 + $0x230] sm:$0xff]
    %v4242 = vld [vmem:[%s4170 + $0x238] sm:$0xff]
    %v4243 = vld [vmem:[%s4170 + $0x240] sm:$0xff]
    %v4244 = vld [vmem:[%s4170 + $0x248] sm:$0xff]
    %v4245 = vld [vmem:[%s4170 + $0x250] sm:$0xff]
    %v4246 = vld [vmem:[%s4170 + $0x258] sm:$0xff]
    %v4247 = vld [vmem:[%s4170 + $0x260] sm:$0xff]
    %v4248 = vld [vmem:[%s4170 + $0x268] sm:$0xff]
    %v4249 = vld [vmem:[%s4170 + $0x270] sm:$0xff]
    %v4250 = vld [vmem:[%s4170 + $0x278] sm:$0xff]
    %v4251 = vld [vmem:[%s4170 + $0x280] sm:$0xff]
    %v4252 = vld [vmem:[%s4170 + $0x288] sm:$0xff]
    %v4253 = vld [vmem:[%s4170 + $0x290] sm:$0xff]
    %v4254 = vld [vmem:[%s4170 + $0x298] sm:$0xff]
    %v4255 = vld [vmem:[%s4170 + $0x2a0] sm:$0xff]
    %v4256 = vld [vmem:[%s4170 + $0x2a8] sm:$0xff]
    %v4257 = vld [vmem:[%s4170 + $0x2b0] sm:$0xff]
    %v4258 = vld [vmem:[%s4170 + $0x2b8] sm:$0xff]
    %v4259 = vld [vmem:[%s4170 + $0x2c0] sm:$0xff]
    %v4260 = vld [vmem:[%s4170 + $0x2c8] sm:$0xff]
    %v4261 = vld [vmem:[%s4170 + $0x2d0] sm:$0xff]
    %v4262 = vld [vmem:[%s4170 + $0x2d8] sm:$0xff]
    %v4263 = vld [vmem:[%s4170 + $0x2e0] sm:$0xff]
    %v4264 = vld [vmem:[%s4170 + $0x2e8] sm:$0xff]
    %v4265 = vld [vmem:[%s4170 + $0x2f0] sm:$0xff]
    %v4266 = vld [vmem:[%s4170 + $0x2f8] sm:$0xff]
    %v4267 = vld [vmem:[%s4170 + $0x300] sm:$0xff]
    %v4268 = vld [vmem:[%s4170 + $0x308] sm:$0xff]
    %v4269 = vld [vmem:[%s4170 + $0x310] sm:$0xff]
    %v4270 = vld [vmem:[%s4170 + $0x318] sm:$0xff]
    %v4271 = vld [vmem:[%s4170 + $0x320] sm:$0xff]
    %v4272 = vld [vmem:[%s4170 + $0x328] sm:$0xff]
    %v4273 = vld [vmem:[%s4170 + $0x330] sm:$0xff]
    %v4274 = vld [vmem:[%s4170 + $0x338] sm:$0xff]
    %v4275 = vld [vmem:[%s4170 + $0x340] sm:$0xff]
    %v4276 = vld [vmem:[%s4170 + $0x348] sm:$0xff]
    %v4277 = vld [vmem:[%s4170 + $0x350] sm:$0xff]
    %v4278 = vld [vmem:[%s4170 + $0x358] sm:$0xff]
    %v4279 = vld [vmem:[%s4170 + $0x360] sm:$0xff]
    %v4280 = vld [vmem:[%s4170 + $0x368] sm:$0xff]
    %v4281 = vld [vmem:[%s4170 + $0x370] sm:$0xff]
    %v4282 = vld [vmem:[%s4170 + $0x378] sm:$0xff]
    %v4283 = vld [vmem:[%s4170 + $0x380] sm:$0xff]
    %v4284 = vld [vmem:[%s4170 + $0x388] sm:$0xff]
    %v4285 = vld [vmem:[%s4170 + $0x390] sm:$0xff]
    %v4286 = vld [vmem:[%s4170 + $0x398] sm:$0xff]
    %v4287 = vld [vmem:[%s4170 + $0x3a0] sm:$0xff]
    %v4288 = vld [vmem:[%s4170 + $0x3a8] sm:$0xff]
    %v4289 = vld [vmem:[%s4170 + $0x3b0] sm:$0xff]
    %v4290 = vld [vmem:[%s4170 + $0x3b8] sm:$0xff]
    %v4291 = vld [vmem:[%s4170 + $0x3c0] sm:$0xff]
    %v4292 = vld [vmem:[%s4170 + $0x3c8] sm:$0xff]
    %v4293 = vld [vmem:[%s4170 + $0x3d0] sm:$0xff]
    %v4294 = vld [vmem:[%s4170 + $0x3d8] sm:$0xff]
    %v4295 = vld [vmem:[%s4170 + $0x3e0] sm:$0xff]
    %v4296 = vld [vmem:[%s4170 + $0x3e8] sm:$0xff]
    %v4297 = vld [vmem:[%s4170 + $0x3f0] sm:$0xff]
    %v4298 = vld [vmem:[%s4170 + $0x3f8] sm:$0xff]
    %v4299 = vld [vmem:[%s4170 + $0x400] sm:$0xff]
    %v4300 = vld [vmem:[%s4170 + $0x408] sm:$0xff]
    %v4301 = vld [vmem:[%s4170 + $0x410] sm:$0xff]
    %v4302 = vld [vmem:[%s4170 + $0x418] sm:$0xff]
    %v4303 = vld [vmem:[%s4170 + $0x420] sm:$0xff]
    %v4304 = vld [vmem:[%s4170 + $0x428] sm:$0xff]
    %v4305 = vld [vmem:[%s4170 + $0x430] sm:$0xff]
    %v4306 = vld [vmem:[%s4170 + $0x438] sm:$0xff]
    %v4307 = vld [vmem:[%s4170 + $0x440] sm:$0xff]
    %v4308 = vld [vmem:[%s4170 + $0x448] sm:$0xff]
    %v4309 = vld [vmem:[%s4170 + $0x450] sm:$0xff]
    %v4310 = vld [vmem:[%s4170 + $0x458] sm:$0xff]
    %v4311 = vld [vmem:[%s4170 + $0x460] sm:$0xff]
    %v4312 = vld [vmem:[%s4170 + $0x468] sm:$0xff]
    %v4313 = vld [vmem:[%s4170 + $0x470] sm:$0xff]
    %v4314 = vld [vmem:[%s4170 + $0x478] sm:$0xff]
    %v4315 = vld [vmem:[%s4170 + $0x480] sm:$0xff]
    %v4316 = vld [vmem:[%s4170 + $0x488] sm:$0xff]
    %v4317 = vld [vmem:[%s4170 + $0x490] sm:$0xff]
    %v4318 = vld [vmem:[%s4170 + $0x498] sm:$0xff]
    %v4319 = vld [vmem:[%s4170 + $0x4a0] sm:$0xff]
    %v4320 = vld [vmem:[%s4170 + $0x4a8] sm:$0xff]
    %v4321 = vld [vmem:[%s4170 + $0x4b0] sm:$0xff]
    %v4322 = vld [vmem:[%s4170 + $0x4b8] sm:$0xff]
    %v4323 = vld [vmem:[%s4170 + $0x4c0] sm:$0xff]
    %v4324 = vld [vmem:[%s4170 + $0x4c8] sm:$0xff]
    %v4325 = vld [vmem:[%s4170 + $0x4d0] sm:$0xff]
    %v4326 = vld [vmem:[%s4170 + $0x4d8] sm:$0xff]
    %v4327 = vld [vmem:[%s4170 + $0x4e0] sm:$0xff]
    %v4328 = vld [vmem:[%s4170 + $0x4e8] sm:$0xff]
    %v4329 = vld [vmem:[%s4170 + $0x4f0] sm:$0xff]
    %v4330 = vld [vmem:[%s4170 + $0x4f8] sm:$0xff]
    %v4331 = vld [vmem:[%s4170 + $0x500] sm:$0xff]
    %v4332 = vld [vmem:[%s4170 + $0x508] sm:$0xff]
    %v4333 = vld [vmem:[%s4170 + $0x510] sm:$0xff]
    %v4334 = vld [vmem:[%s4170 + $0x518] sm:$0xff]
    %v4335 = vld [vmem:[%s4170 + $0x520] sm:$0xff]
    %v4336 = vld [vmem:[%s4170 + $0x528] sm:$0xff]
    %v4337 = vld [vmem:[%s4170 + $0x530] sm:$0xff]
    %v4338 = vld [vmem:[%s4170 + $0x538] sm:$0xff]
    %v4339 = vld [vmem:[%s4170 + $0x540] sm:$0xff]
    %v4340 = vld [vmem:[%s4170 + $0x548] sm:$0xff]
    %v4341 = vld [vmem:[%s4170 + $0x550] sm:$0xff]
    %v4342 = vld [vmem:[%s4170 + $0x558] sm:$0xff]
    %v4343 = vld [vmem:[%s4170 + $0x560] sm:$0xff]
    %v4344 = vld [vmem:[%s4170 + $0x568] sm:$0xff]
    %v4345 = vld [vmem:[%s4170 + $0x570] sm:$0xff]
    %v4346 = vld [vmem:[%s4170 + $0x578] sm:$0xff]
    %v4347 = vld [vmem:[%s4170 + $0x580] sm:$0xff]
    %v4348 = vld [vmem:[%s4170 + $0x588] sm:$0xff]
    %v4349 = vld [vmem:[%s4170 + $0x590] sm:$0xff]
    %v4350 = vld [vmem:[%s4170 + $0x598] sm:$0xff]
    %v4351 = vld [vmem:[%s4170 + $0x5a0] sm:$0xff]
    %v4352 = vld [vmem:[%s4170 + $0x5a8] sm:$0xff]
    %v4353 = vld [vmem:[%s4170 + $0x5b0] sm:$0xff]
    %v4354 = vld [vmem:[%s4170 + $0x5b8] sm:$0xff]
    %v4355 = vld [vmem:[%s4170 + $0x5c0] sm:$0xff]
    %v4356 = vld [vmem:[%s4170 + $0x5c8] sm:$0xff]
    %v4357 = vld [vmem:[%s4170 + $0x5d0] sm:$0xff]
    %v4358 = vld [vmem:[%s4170 + $0x5d8] sm:$0xff]
    %v4359 = vld [vmem:[%s4170 + $0x5e0] sm:$0xff]
    %v4360 = vld [vmem:[%s4170 + $0x5e8] sm:$0xff]
    %v4361 = vld [vmem:[%s4170 + $0x5f0] sm:$0xff]
    %v4362 = vld [vmem:[%s4170 + $0x5f8] sm:$0xff]
    %v4363 = vld [vmem:[%s4170 + $0x600] sm:$0xff]
    %v4364 = vld [vmem:[%s4170 + $0x608] sm:$0xff]
    %v4365 = vld [vmem:[%s4170 + $0x610] sm:$0xff]
    %v4366 = vld [vmem:[%s4170 + $0x618] sm:$0xff]
    %v4367 = vld [vmem:[%s4170 + $0x620] sm:$0xff]
    %v4368 = vld [vmem:[%s4170 + $0x628] sm:$0xff]
    %v4369 = vld [vmem:[%s4170 + $0x630] sm:$0xff]
    %v4370 = vld [vmem:[%s4170 + $0x638] sm:$0xff]
    %v4571 = vunpack.c.l.b16 %v4171
    %v4572 = vunpack.c.h.b16 %v4171
    %v4573 = vunpack.c.l.b16 %v4172
    %v4574 = vunpack.c.h.b16 %v4172
    %v4575 = vunpack.c.l.b16 %v4173
    %v4576 = vunpack.c.h.b16 %v4173
    %v4577 = vunpack.c.l.b16 %v4174
    %v4578 = vunpack.c.h.b16 %v4174
    %v4579 = vunpack.c.l.b16 %v4175
    %v4580 = vunpack.c.h.b16 %v4175
    %v4581 = vunpack.c.l.b16 %v4176
    %v4582 = vunpack.c.h.b16 %v4176
    %v4583 = vunpack.c.l.b16 %v4177
    %v4584 = vunpack.c.h.b16 %v4177
    %v4585 = vunpack.c.l.b16 %v4178
    %v4586 = vunpack.c.h.b16 %v4178
    %v4587 = vunpack.c.l.b16 %v4179
    %v4588 = vunpack.c.h.b16 %v4179
    %v4589 = vunpack.c.l.b16 %v4180
    %v4590 = vunpack.c.h.b16 %v4180
    %v4591 = vunpack.c.l.b16 %v4181
    %v4592 = vunpack.c.h.b16 %v4181
    %v4593 = vunpack.c.l.b16 %v4182
    %v4594 = vunpack.c.h.b16 %v4182
    %v4595 = vunpack.c.l.b16 %v4183
    %v4596 = vunpack.c.h.b16 %v4183
    %v4597 = vunpack.c.l.b16 %v4184
    %v4598 = vunpack.c.h.b16 %v4184
    %v4599 = vunpack.c.l.b16 %v4185
    %v4600 = vunpack.c.h.b16 %v4185
    %v4601 = vunpack.c.l.b16 %v4186
    %v4602 = vunpack.c.h.b16 %v4186
    %v4603 = vunpack.c.l.b16 %v4187
    %v4604 = vunpack.c.h.b16 %v4187
    %v4605 = vunpack.c.l.b16 %v4188
    %v4606 = vunpack.c.h.b16 %v4188
    %v4607 = vunpack.c.l.b16 %v4189
    %v4608 = vunpack.c.h.b16 %v4189
    %v4609 = vunpack.c.l.b16 %v4190
    %v4610 = vunpack.c.h.b16 %v4190
    %v4611 = vunpack.c.l.b16 %v4191
    %v4612 = vunpack.c.h.b16 %v4191
    %v4613 = vunpack.c.l.b16 %v4192
    %v4614 = vunpack.c.h.b16 %v4192
    %v4615 = vunpack.c.l.b16 %v4193
    %v4616 = vunpack.c.h.b16 %v4193
    %v4617 = vunpack.c.l.b16 %v4194
    %v4618 = vunpack.c.h.b16 %v4194
    %v4619 = vunpack.c.l.b16 %v4195
    %v4620 = vunpack.c.h.b16 %v4195
    %v4621 = vunpack.c.l.b16 %v4196
    %v4622 = vunpack.c.h.b16 %v4196
    %v4623 = vunpack.c.l.b16 %v4197
    %v4624 = vunpack.c.h.b16 %v4197
    %v4625 = vunpack.c.l.b16 %v4198
    %v4626 = vunpack.c.h.b16 %v4198
    %v4627 = vunpack.c.l.b16 %v4199
    %v4628 = vunpack.c.h.b16 %v4199
    %v4629 = vunpack.c.l.b16 %v4200
    %v4630 = vunpack.c.h.b16 %v4200
    %v4631 = vunpack.c.l.b16 %v4201
    %v4632 = vunpack.c.h.b16 %v4201
    %v4633 = vunpack.c.l.b16 %v4202
    %v4634 = vunpack.c.h.b16 %v4202
    %v4635 = vunpack.c.l.b16 %v4203
    %v4636 = vunpack.c.h.b16 %v4203
    %v4637 = vunpack.c.l.b16 %v4204
    %v4638 = vunpack.c.h.b16 %v4204
    %v4639 = vunpack.c.l.b16 %v4205
    %v4640 = vunpack.c.h.b16 %v4205
    %v4641 = vunpack.c.l.b16 %v4206
    %v4642 = vunpack.c.h.b16 %v4206
    %v4643 = vunpack.c.l.b16 %v4207
    %v4644 = vunpack.c.h.b16 %v4207
    %v4645 = vunpack.c.l.b16 %v4208
    %v4646 = vunpack.c.h.b16 %v4208
    %v4647 = vunpack.c.l.b16 %v4209
    %v4648 = vunpack.c.h.b16 %v4209
    %v4649 = vunpack.c.l.b16 %v4210
    %v4650 = vunpack.c.h.b16 %v4210
    %v4651 = vunpack.c.l.b16 %v4211
    %v4652 = vunpack.c.h.b16 %v4211
    %v4653 = vunpack.c.l.b16 %v4212
    %v4654 = vunpack.c.h.b16 %v4212
    %v4655 = vunpack.c.l.b16 %v4213
    %v4656 = vunpack.c.h.b16 %v4213
    %v4657 = vunpack.c.l.b16 %v4214
    %v4658 = vunpack.c.h.b16 %v4214
    %v4659 = vunpack.c.l.b16 %v4215
    %v4660 = vunpack.c.h.b16 %v4215
    %v4661 = vunpack.c.l.b16 %v4216
    %v4662 = vunpack.c.h.b16 %v4216
    %v4663 = vunpack.c.l.b16 %v4217
    %v4664 = vunpack.c.h.b16 %v4217
    %v4665 = vunpack.c.l.b16 %v4218
    %v4666 = vunpack.c.h.b16 %v4218
    %v4667 = vunpack.c.l.b16 %v4219
    %v4668 = vunpack.c.h.b16 %v4219
    %v4669 = vunpack.c.l.b16 %v4220
    %v4670 = vunpack.c.h.b16 %v4220
    %v4671 = vunpack.c.l.b16 %v4221
    %v4672 = vunpack.c.h.b16 %v4221
    %v4673 = vunpack.c.l.b16 %v4222
    %v4674 = vunpack.c.h.b16 %v4222
    %v4675 = vunpack.c.l.b16 %v4223
    %v4676 = vunpack.c.h.b16 %v4223
    %v4677 = vunpack.c.l.b16 %v4224
    %v4678 = vunpack.c.h.b16 %v4224
    %v4679 = vunpack.c.l.b16 %v4225
    %v4680 = vunpack.c.h.b16 %v4225
    %v4681 = vunpack.c.l.b16 %v4226
    %v4682 = vunpack.c.h.b16 %v4226
    %v4683 = vunpack.c.l.b16 %v4227
    %v4684 = vunpack.c.h.b16 %v4227
    %v4685 = vunpack.c.l.b16 %v4228
    %v4686 = vunpack.c.h.b16 %v4228
    %v4687 = vunpack.c.l.b16 %v4229
    %v4688 = vunpack.c.h.b16 %v4229
    %v4689 = vunpack.c.l.b16 %v4230
    %v4690 = vunpack.c.h.b16 %v4230
    %v4691 = vunpack.c.l.b16 %v4231
    %v4692 = vunpack.c.h.b16 %v4231
    %v4693 = vunpack.c.l.b16 %v4232
    %v4694 = vunpack.c.h.b16 %v4232
    %v4695 = vunpack.c.l.b16 %v4233
    %v4696 = vunpack.c.h.b16 %v4233
    %v4697 = vunpack.c.l.b16 %v4234
    %v4698 = vunpack.c.h.b16 %v4234
    %v4699 = vunpack.c.l.b16 %v4235
    %v4700 = vunpack.c.h.b16 %v4235
    %v4701 = vunpack.c.l.b16 %v4236
    %v4702 = vunpack.c.h.b16 %v4236
    %v4703 = vunpack.c.l.b16 %v4237
    %v4704 = vunpack.c.h.b16 %v4237
    %v4705 = vunpack.c.l.b16 %v4238
    %v4706 = vunpack.c.h.b16 %v4238
    %v4707 = vunpack.c.l.b16 %v4239
    %v4708 = vunpack.c.h.b16 %v4239
    %v4709 = vunpack.c.l.b16 %v4240
    %v4710 = vunpack.c.h.b16 %v4240
    %v4711 = vunpack.c.l.b16 %v4241
    %v4712 = vunpack.c.h.b16 %v4241
    %v4713 = vunpack.c.l.b16 %v4242
    %v4714 = vunpack.c.h.b16 %v4242
    %v4715 = vunpack.c.l.b16 %v4243
    %v4716 = vunpack.c.h.b16 %v4243
    %v4717 = vunpack.c.l.b16 %v4244
    %v4718 = vunpack.c.h.b16 %v4244
    %v4719 = vunpack.c.l.b16 %v4245
    %v4720 = vunpack.c.h.b16 %v4245
    %v4721 = vunpack.c.l.b16 %v4246
    %v4722 = vunpack.c.h.b16 %v4246
    %v4723 = vunpack.c.l.b16 %v4247
    %v4724 = vunpack.c.h.b16 %v4247
    %v4725 = vunpack.c.l.b16 %v4248
    %v4726 = vunpack.c.h.b16 %v4248
    %v4727 = vunpack.c.l.b16 %v4249
    %v4728 = vunpack.c.h.b16 %v4249
    %v4729 = vunpack.c.l.b16 %v4250
    %v4730 = vunpack.c.h.b16 %v4250
    %v4731 = vunpack.c.l.b16 %v4251
    %v4732 = vunpack.c.h.b16 %v4251
    %v4733 = vunpack.c.l.b16 %v4252
    %v4734 = vunpack.c.h.b16 %v4252
    %v4735 = vunpack.c.l.b16 %v4253
    %v4736 = vunpack.c.h.b16 %v4253
    %v4737 = vunpack.c.l.b16 %v4254
    %v4738 = vunpack.c.h.b16 %v4254
    %v4739 = vunpack.c.l.b16 %v4255
    %v4740 = vunpack.c.h.b16 %v4255
    %v4741 = vunpack.c.l.b16 %v4256
    %v4742 = vunpack.c.h.b16 %v4256
    %v4743 = vunpack.c.l.b16 %v4257
    %v4744 = vunpack.c.h.b16 %v4257
    %v4745 = vunpack.c.l.b16 %v4258
    %v4746 = vunpack.c.h.b16 %v4258
    %v4747 = vunpack.c.l.b16 %v4259
    %v4748 = vunpack.c.h.b16 %v4259
    %v4749 = vunpack.c.l.b16 %v4260
    %v4750 = vunpack.c.h.b16 %v4260
    %v4751 = vunpack.c.l.b16 %v4261
    %v4752 = vunpack.c.h.b16 %v4261
    %v4753 = vunpack.c.l.b16 %v4262
    %v4754 = vunpack.c.h.b16 %v4262
    %v4755 = vunpack.c.l.b16 %v4263
    %v4756 = vunpack.c.h.b16 %v4263
    %v4757 = vunpack.c.l.b16 %v4264
    %v4758 = vunpack.c.h.b16 %v4264
    %v4759 = vunpack.c.l.b16 %v4265
    %v4760 = vunpack.c.h.b16 %v4265
    %v4761 = vunpack.c.l.b16 %v4266
    %v4762 = vunpack.c.h.b16 %v4266
    %v4763 = vunpack.c.l.b16 %v4267
    %v4764 = vunpack.c.h.b16 %v4267
    %v4765 = vunpack.c.l.b16 %v4268
    %v4766 = vunpack.c.h.b16 %v4268
    %v4767 = vunpack.c.l.b16 %v4269
    %v4768 = vunpack.c.h.b16 %v4269
    %v4769 = vunpack.c.l.b16 %v4270
    %v4770 = vunpack.c.h.b16 %v4270
    %v4771 = vunpack.c.l.b16 %v4271
    %v4772 = vunpack.c.h.b16 %v4271
    %v4773 = vunpack.c.l.b16 %v4272
    %v4774 = vunpack.c.h.b16 %v4272
    %v4775 = vunpack.c.l.b16 %v4273
    %v4776 = vunpack.c.h.b16 %v4273
    %v4777 = vunpack.c.l.b16 %v4274
    %v4778 = vunpack.c.h.b16 %v4274
    %v4779 = vunpack.c.l.b16 %v4275
    %v4780 = vunpack.c.h.b16 %v4275
    %v4781 = vunpack.c.l.b16 %v4276
    %v4782 = vunpack.c.h.b16 %v4276
    %v4783 = vunpack.c.l.b16 %v4277
    %v4784 = vunpack.c.h.b16 %v4277
    %v4785 = vunpack.c.l.b16 %v4278
    %v4786 = vunpack.c.h.b16 %v4278
    %v4787 = vunpack.c.l.b16 %v4279
    %v4788 = vunpack.c.h.b16 %v4279
    %v4789 = vunpack.c.l.b16 %v4280
    %v4790 = vunpack.c.h.b16 %v4280
    %v4791 = vunpack.c.l.b16 %v4281
    %v4792 = vunpack.c.h.b16 %v4281
    %v4793 = vunpack.c.l.b16 %v4282
    %v4794 = vunpack.c.h.b16 %v4282
    %v4795 = vunpack.c.l.b16 %v4283
    %v4796 = vunpack.c.h.b16 %v4283
    %v4797 = vunpack.c.l.b16 %v4284
    %v4798 = vunpack.c.h.b16 %v4284
    %v4799 = vunpack.c.l.b16 %v4285
    %v4800 = vunpack.c.h.b16 %v4285
    %v4801 = vunpack.c.l.b16 %v4286
    %v4802 = vunpack.c.h.b16 %v4286
    %v4803 = vunpack.c.l.b16 %v4287
    %v4804 = vunpack.c.h.b16 %v4287
    %v4805 = vunpack.c.l.b16 %v4288
    %v4806 = vunpack.c.h.b16 %v4288
    %v4807 = vunpack.c.l.b16 %v4289
    %v4808 = vunpack.c.h.b16 %v4289
    %v4809 = vunpack.c.l.b16 %v4290
    %v4810 = vunpack.c.h.b16 %v4290
    %v4811 = vunpack.c.l.b16 %v4291
    %v4812 = vunpack.c.h.b16 %v4291
    %v4813 = vunpack.c.l.b16 %v4292
    %v4814 = vunpack.c.h.b16 %v4292
    %v4815 = vunpack.c.l.b16 %v4293
    %v4816 = vunpack.c.h.b16 %v4293
    %v4817 = vunpack.c.l.b16 %v4294
    %v4818 = vunpack.c.h.b16 %v4294
    %v4819 = vunpack.c.l.b16 %v4295
    %v4820 = vunpack.c.h.b16 %v4295
    %v4821 = vunpack.c.l.b16 %v4296
    %v4822 = vunpack.c.h.b16 %v4296
    %v4823 = vunpack.c.l.b16 %v4297
    %v4824 = vunpack.c.h.b16 %v4297
    %v4825 = vunpack.c.l.b16 %v4298
    %v4826 = vunpack.c.h.b16 %v4298
    %v4827 = vunpack.c.l.b16 %v4299
    %v4828 = vunpack.c.h.b16 %v4299
    %v4829 = vunpack.c.l.b16 %v4300
    %v4830 = vunpack.c.h.b16 %v4300
    %v4831 = vunpack.c.l.b16 %v4301
    %v4832 = vunpack.c.h.b16 %v4301
    %v4833 = vunpack.c.l.b16 %v4302
    %v4834 = vunpack.c.h.b16 %v4302
    %v4835 = vunpack.c.l.b16 %v4303
    %v4836 = vunpack.c.h.b16 %v4303
    %v4837 = vunpack.c.l.b16 %v4304
    %v4838 = vunpack.c.h.b16 %v4304
    %v4839 = vunpack.c.l.b16 %v4305
    %v4840 = vunpack.c.h.b16 %v4305
    %v4841 = vunpack.c.l.b16 %v4306
    %v4842 = vunpack.c.h.b16 %v4306
    %v4843 = vunpack.c.l.b16 %v4307
    %v4844 = vunpack.c.h.b16 %v4307
    %v4845 = vunpack.c.l.b16 %v4308
    %v4846 = vunpack.c.h.b16 %v4308
    %v4847 = vunpack.c.l.b16 %v4309
    %v4848 = vunpack.c.h.b16 %v4309
    %v4849 = vunpack.c.l.b16 %v4310
    %v4850 = vunpack.c.h.b16 %v4310
    %v4851 = vunpack.c.l.b16 %v4311
    %v4852 = vunpack.c.h.b16 %v4311
    %v4853 = vunpack.c.l.b16 %v4312
    %v4854 = vunpack.c.h.b16 %v4312
    %v4855 = vunpack.c.l.b16 %v4313
    %v4856 = vunpack.c.h.b16 %v4313
    %v4857 = vunpack.c.l.b16 %v4314
    %v4858 = vunpack.c.h.b16 %v4314
    %v4859 = vunpack.c.l.b16 %v4315
    %v4860 = vunpack.c.h.b16 %v4315
    %v4861 = vunpack.c.l.b16 %v4316
    %v4862 = vunpack.c.h.b16 %v4316
    %v4863 = vunpack.c.l.b16 %v4317
    %v4864 = vunpack.c.h.b16 %v4317
    %v4865 = vunpack.c.l.b16 %v4318
    %v4866 = vunpack.c.h.b16 %v4318
    %v4867 = vunpack.c.l.b16 %v4319
    %v4868 = vunpack.c.h.b16 %v4319
    %v4869 = vunpack.c.l.b16 %v4320
    %v4870 = vunpack.c.h.b16 %v4320
    %v4871 = vunpack.c.l.b16 %v4321
    %v4872 = vunpack.c.h.b16 %v4321
    %v4873 = vunpack.c.l.b16 %v4322
    %v4874 = vunpack.c.h.b16 %v4322
    %v4875 = vunpack.c.l.b16 %v4323
    %v4876 = vunpack.c.h.b16 %v4323
    %v4877 = vunpack.c.l.b16 %v4324
    %v4878 = vunpack.c.h.b16 %v4324
    %v4879 = vunpack.c.l.b16 %v4325
    %v4880 = vunpack.c.h.b16 %v4325
    %v4881 = vunpack.c.l.b16 %v4326
    %v4882 = vunpack.c.h.b16 %v4326
    %v4883 = vunpack.c.l.b16 %v4327
    %v4884 = vunpack.c.h.b16 %v4327
    %v4885 = vunpack.c.l.b16 %v4328
    %v4886 = vunpack.c.h.b16 %v4328
    %v4887 = vunpack.c.l.b16 %v4329
    %v4888 = vunpack.c.h.b16 %v4329
    %v4889 = vunpack.c.l.b16 %v4330
    %v4890 = vunpack.c.h.b16 %v4330
    %v4891 = vunpack.c.l.b16 %v4331
    %v4892 = vunpack.c.h.b16 %v4331
    %v4893 = vunpack.c.l.b16 %v4332
    %v4894 = vunpack.c.h.b16 %v4332
    %v4895 = vunpack.c.l.b16 %v4333
    %v4896 = vunpack.c.h.b16 %v4333
    %v4897 = vunpack.c.l.b16 %v4334
    %v4898 = vunpack.c.h.b16 %v4334
    %v4899 = vunpack.c.l.b16 %v4335
    %v4900 = vunpack.c.h.b16 %v4335
    %v4901 = vunpack.c.l.b16 %v4336
    %v4902 = vunpack.c.h.b16 %v4336
    %v4903 = vunpack.c.l.b16 %v4337
    %v4904 = vunpack.c.h.b16 %v4337
    %v4905 = vunpack.c.l.b16 %v4338
    %v4906 = vunpack.c.h.b16 %v4338
    %v4907 = vunpack.c.l.b16 %v4339
    %v4908 = vunpack.c.h.b16 %v4339
    %v4909 = vunpack.c.l.b16 %v4340
    %v4910 = vunpack.c.h.b16 %v4340
    %v4911 = vunpack.c.l.b16 %v4341
    %v4912 = vunpack.c.h.b16 %v4341
    %v4913 = vunpack.c.l.b16 %v4342
    %v4914 = vunpack.c.h.b16 %v4342
    %v4915 = vunpack.c.l.b16 %v4343
    %v4916 = vunpack.c.h.b16 %v4343
    %v4917 = vunpack.c.l.b16 %v4344
    %v4918 = vunpack.c.h.b16 %v4344
    %v4919 = vunpack.c.l.b16 %v4345
    %v4920 = vunpack.c.h.b16 %v4345
    %v4921 = vunpack.c.l.b16 %v4346
    %v4922 = vunpack.c.h.b16 %v4346
    %v4923 = vunpack.c.l.b16 %v4347
    %v4924 = vunpack.c.h.b16 %v4347
    %v4925 = vunpack.c.l.b16 %v4348
    %v4926 = vunpack.c.h.b16 %v4348
    %v4927 = vunpack.c.l.b16 %v4349
    %v4928 = vunpack.c.h.b16 %v4349
    %v4929 = vunpack.c.l.b16 %v4350
    %v4930 = vunpack.c.h.b16 %v4350
    %v4931 = vunpack.c.l.b16 %v4351
    %v4932 = vunpack.c.h.b16 %v4351
    %v4933 = vunpack.c.l.b16 %v4352
    %v4934 = vunpack.c.h.b16 %v4352
    %v4935 = vunpack.c.l.b16 %v4353
    %v4936 = vunpack.c.h.b16 %v4353
    %v4937 = vunpack.c.l.b16 %v4354
    %v4938 = vunpack.c.h.b16 %v4354
    %v4939 = vunpack.c.l.b16 %v4355
    %v4940 = vunpack.c.h.b16 %v4355
    %v4941 = vunpack.c.l.b16 %v4356
    %v4942 = vunpack.c.h.b16 %v4356
    %v4943 = vunpack.c.l.b16 %v4357
    %v4944 = vunpack.c.h.b16 %v4357
    %v4945 = vunpack.c.l.b16 %v4358
    %v4946 = vunpack.c.h.b16 %v4358
    %v4947 = vunpack.c.l.b16 %v4359
    %v4948 = vunpack.c.h.b16 %v4359
    %v4949 = vunpack.c.l.b16 %v4360
    %v4950 = vunpack.c.h.b16 %v4360
    %v4951 = vunpack.c.l.b16 %v4361
    %v4952 = vunpack.c.h.b16 %v4361
    %v4953 = vunpack.c.l.b16 %v4362
    %v4954 = vunpack.c.h.b16 %v4362
    %v4955 = vunpack.c.l.b16 %v4363
    %v4956 = vunpack.c.h.b16 %v4363
    %v4957 = vunpack.c.l.b16 %v4364
    %v4958 = vunpack.c.h.b16 %v4364
    %v4959 = vunpack.c.l.b16 %v4365
    %v4960 = vunpack.c.h.b16 %v4365
    %v4961 = vunpack.c.l.b16 %v4366
    %v4962 = vunpack.c.h.b16 %v4366
    %v4963 = vunpack.c.l.b16 %v4367
    %v4964 = vunpack.c.h.b16 %v4367
    %v4965 = vunpack.c.l.b16 %v4368
    %v4966 = vunpack.c.h.b16 %v4368
    %v4967 = vunpack.c.l.b16 %v4369
    %v4968 = vunpack.c.h.b16 %v4369
    %v4969 = vunpack.c.l.b16 %v4370
    %v4970 = vunpack.c.h.b16 %v4370
    %v4971 = vpack.c.b16 %v4579, %v4571
    %v4972 = vpack.c.b16 %v4580, %v4572
    %v4973 = vpack.c.b16 %v4581, %v4573
    %v4974 = vpack.c.b16 %v4582, %v4574
    %v4975 = vpack.c.b16 %v4583, %v4575
    %v4976 = vpack.c.b16 %v4584, %v4576
    %v4977 = vpack.c.b16 %v4585, %v4577
    %v4978 = vpack.c.b16 %v4586, %v4578
    %v4979 = vpack.c.b16 %v4595, %v4587
    %v4980 = vpack.c.b16 %v4596, %v4588
    %v4981 = vpack.c.b16 %v4597, %v4589
    %v4982 = vpack.c.b16 %v4598, %v4590
    %v4983 = vpack.c.b16 %v4599, %v4591
    %v4984 = vpack.c.b16 %v4600, %v4592
    %v4985 = vpack.c.b16 %v4601, %v4593
    %v4986 = vpack.c.b16 %v4602, %v4594
    %v4987 = vpack.c.b16 %v4611, %v4603
    %v4988 = vpack.c.b16 %v4612, %v4604
    %v4989 = vpack.c.b16 %v4613, %v4605
    %v4990 = vpack.c.b16 %v4614, %v4606
    %v4991 = vpack.c.b16 %v4615, %v4607
    %v4992 = vpack.c.b16 %v4616, %v4608
    %v4993 = vpack.c.b16 %v4617, %v4609
    %v4994 = vpack.c.b16 %v4618, %v4610
    %v4995 = vpack.c.b16 %v4627, %v4619
    %v4996 = vpack.c.b16 %v4628, %v4620
    %v4997 = vpack.c.b16 %v4629, %v4621
    %v4998 = vpack.c.b16 %v4630, %v4622
    %v4999 = vpack.c.b16 %v4631, %v4623
    %v5000 = vpack.c.b16 %v4632, %v4624
    %v5001 = vpack.c.b16 %v4633, %v4625
    %v5002 = vpack.c.b16 %v4634, %v4626
    %v5003 = vpack.c.b16 %v4643, %v4635
    %v5004 = vpack.c.b16 %v4644, %v4636
    %v5005 = vpack.c.b16 %v4645, %v4637
    %v5006 = vpack.c.b16 %v4646, %v4638
    %v5007 = vpack.c.b16 %v4647, %v4639
    %v5008 = vpack.c.b16 %v4648, %v4640
    %v5009 = vpack.c.b16 %v4649, %v4641
    %v5010 = vpack.c.b16 %v4650, %v4642
    %v5011 = vpack.c.b16 %v4659, %v4651
    %v5012 = vpack.c.b16 %v4660, %v4652
    %v5013 = vpack.c.b16 %v4661, %v4653
    %v5014 = vpack.c.b16 %v4662, %v4654
    %v5015 = vpack.c.b16 %v4663, %v4655
    %v5016 = vpack.c.b16 %v4664, %v4656
    %v5017 = vpack.c.b16 %v4665, %v4657
    %v5018 = vpack.c.b16 %v4666, %v4658
    %v5019 = vpack.c.b16 %v4675, %v4667
    %v5020 = vpack.c.b16 %v4676, %v4668
    %v5021 = vpack.c.b16 %v4677, %v4669
    %v5022 = vpack.c.b16 %v4678, %v4670
    %v5023 = vpack.c.b16 %v4679, %v4671
    %v5024 = vpack.c.b16 %v4680, %v4672
    %v5025 = vpack.c.b16 %v4681, %v4673
    %v5026 = vpack.c.b16 %v4682, %v4674
    %v5027 = vpack.c.b16 %v4691, %v4683
    %v5028 = vpack.c.b16 %v4692, %v4684
    %v5029 = vpack.c.b16 %v4693, %v4685
    %v5030 = vpack.c.b16 %v4694, %v4686
    %v5031 = vpack.c.b16 %v4695, %v4687
    %v5032 = vpack.c.b16 %v4696, %v4688
    %v5033 = vpack.c.b16 %v4697, %v4689
    %v5034 = vpack.c.b16 %v4698, %v4690
    %v5035 = vpack.c.b16 %v4707, %v4699
    %v5036 = vpack.c.b16 %v4708, %v4700
    %v5037 = vpack.c.b16 %v4709, %v4701
    %v5038 = vpack.c.b16 %v4710, %v4702
    %v5039 = vpack.c.b16 %v4711, %v4703
    %v5040 = vpack.c.b16 %v4712, %v4704
    %v5041 = vpack.c.b16 %v4713, %v4705
    %v5042 = vpack.c.b16 %v4714, %v4706
    %v5043 = vpack.c.b16 %v4723, %v4715
    %v5044 = vpack.c.b16 %v4724, %v4716
    %v5045 = vpack.c.b16 %v4725, %v4717
    %v5046 = vpack.c.b16 %v4726, %v4718
    %v5047 = vpack.c.b16 %v4727, %v4719
    %v5048 = vpack.c.b16 %v4728, %v4720
    %v5049 = vpack.c.b16 %v4729, %v4721
    %v5050 = vpack.c.b16 %v4730, %v4722
    %v5051 = vpack.c.b16 %v4739, %v4731
    %v5052 = vpack.c.b16 %v4740, %v4732
    %v5053 = vpack.c.b16 %v4741, %v4733
    %v5054 = vpack.c.b16 %v4742, %v4734
    %v5055 = vpack.c.b16 %v4743, %v4735
    %v5056 = vpack.c.b16 %v4744, %v4736
    %v5057 = vpack.c.b16 %v4745, %v4737
    %v5058 = vpack.c.b16 %v4746, %v4738
    %v5059 = vpack.c.b16 %v4755, %v4747
    %v5060 = vpack.c.b16 %v4756, %v4748
    %v5061 = vpack.c.b16 %v4757, %v4749
    %v5062 = vpack.c.b16 %v4758, %v4750
    %v5063 = vpack.c.b16 %v4759, %v4751
    %v5064 = vpack.c.b16 %v4760, %v4752
    %v5065 = vpack.c.b16 %v4761, %v4753
    %v5066 = vpack.c.b16 %v4762, %v4754
    %v5067 = vpack.c.b16 %v4771, %v4763
    %v5068 = vpack.c.b16 %v4772, %v4764
    %v5069 = vpack.c.b16 %v4773, %v4765
    %v5070 = vpack.c.b16 %v4774, %v4766
    %v5071 = vpack.c.b16 %v4775, %v4767
    %v5072 = vpack.c.b16 %v4776, %v4768
    %v5073 = vpack.c.b16 %v4777, %v4769
    %v5074 = vpack.c.b16 %v4778, %v4770
    %v5075 = vpack.c.b16 %v4787, %v4779
    %v5076 = vpack.c.b16 %v4788, %v4780
    %v5077 = vpack.c.b16 %v4789, %v4781
    %v5078 = vpack.c.b16 %v4790, %v4782
    %v5079 = vpack.c.b16 %v4791, %v4783
    %v5080 = vpack.c.b16 %v4792, %v4784
    %v5081 = vpack.c.b16 %v4793, %v4785
    %v5082 = vpack.c.b16 %v4794, %v4786
    %v5083 = vpack.c.b16 %v4803, %v4795
    %v5084 = vpack.c.b16 %v4804, %v4796
    %v5085 = vpack.c.b16 %v4805, %v4797
    %v5086 = vpack.c.b16 %v4806, %v4798
    %v5087 = vpack.c.b16 %v4807, %v4799
    %v5088 = vpack.c.b16 %v4808, %v4800
    %v5089 = vpack.c.b16 %v4809, %v4801
    %v5090 = vpack.c.b16 %v4810, %v4802
    %v5091 = vpack.c.b16 %v4819, %v4811
    %v5092 = vpack.c.b16 %v4820, %v4812
    %v5093 = vpack.c.b16 %v4821, %v4813
    %v5094 = vpack.c.b16 %v4822, %v4814
    %v5095 = vpack.c.b16 %v4823, %v4815
    %v5096 = vpack.c.b16 %v4824, %v4816
    %v5097 = vpack.c.b16 %v4825, %v4817
    %v5098 = vpack.c.b16 %v4826, %v4818
    %v5099 = vpack.c.b16 %v4835, %v4827
    %v5100 = vpack.c.b16 %v4836, %v4828
    %v5101 = vpack.c.b16 %v4837, %v4829
    %v5102 = vpack.c.b16 %v4838, %v4830
    %v5103 = vpack.c.b16 %v4839, %v4831
    %v5104 = vpack.c.b16 %v4840, %v4832
    %v5105 = vpack.c.b16 %v4841, %v4833
    %v5106 = vpack.c.b16 %v4842, %v4834
    %v5107 = vpack.c.b16 %v4851, %v4843
    %v5108 = vpack.c.b16 %v4852, %v4844
    %v5109 = vpack.c.b16 %v4853, %v4845
    %v5110 = vpack.c.b16 %v4854, %v4846
    %v5111 = vpack.c.b16 %v4855, %v4847
    %v5112 = vpack.c.b16 %v4856, %v4848
    %v5113 = vpack.c.b16 %v4857, %v4849
    %v5114 = vpack.c.b16 %v4858, %v4850
    %v5115 = vpack.c.b16 %v4867, %v4859
    %v5116 = vpack.c.b16 %v4868, %v4860
    %v5117 = vpack.c.b16 %v4869, %v4861
    %v5118 = vpack.c.b16 %v4870, %v4862
    %v5119 = vpack.c.b16 %v4871, %v4863
    %v5120 = vpack.c.b16 %v4872, %v4864
    %v5121 = vpack.c.b16 %v4873, %v4865
    %v5122 = vpack.c.b16 %v4874, %v4866
    %v5123 = vpack.c.b16 %v4883, %v4875
    %v5124 = vpack.c.b16 %v4884, %v4876
    %v5125 = vpack.c.b16 %v4885, %v4877
    %v5126 = vpack.c.b16 %v4886, %v4878
    %v5127 = vpack.c.b16 %v4887, %v4879
    %v5128 = vpack.c.b16 %v4888, %v4880
    %v5129 = vpack.c.b16 %v4889, %v4881
    %v5130 = vpack.c.b16 %v4890, %v4882
    %v5131 = vpack.c.b16 %v4899, %v4891
    %v5132 = vpack.c.b16 %v4900, %v4892
    %v5133 = vpack.c.b16 %v4901, %v4893
    %v5134 = vpack.c.b16 %v4902, %v4894
    %v5135 = vpack.c.b16 %v4903, %v4895
    %v5136 = vpack.c.b16 %v4904, %v4896
    %v5137 = vpack.c.b16 %v4905, %v4897
    %v5138 = vpack.c.b16 %v4906, %v4898
    %v5139 = vpack.c.b16 %v4915, %v4907
    %v5140 = vpack.c.b16 %v4916, %v4908
    %v5141 = vpack.c.b16 %v4917, %v4909
    %v5142 = vpack.c.b16 %v4918, %v4910
    %v5143 = vpack.c.b16 %v4919, %v4911
    %v5144 = vpack.c.b16 %v4920, %v4912
    %v5145 = vpack.c.b16 %v4921, %v4913
    %v5146 = vpack.c.b16 %v4922, %v4914
    %v5147 = vpack.c.b16 %v4931, %v4923
    %v5148 = vpack.c.b16 %v4932, %v4924
    %v5149 = vpack.c.b16 %v4933, %v4925
    %v5150 = vpack.c.b16 %v4934, %v4926
    %v5151 = vpack.c.b16 %v4935, %v4927
    %v5152 = vpack.c.b16 %v4936, %v4928
    %v5153 = vpack.c.b16 %v4937, %v4929
    %v5154 = vpack.c.b16 %v4938, %v4930
    %v5155 = vpack.c.b16 %v4947, %v4939
    %v5156 = vpack.c.b16 %v4948, %v4940
    %v5157 = vpack.c.b16 %v4949, %v4941
    %v5158 = vpack.c.b16 %v4950, %v4942
    %v5159 = vpack.c.b16 %v4951, %v4943
    %v5160 = vpack.c.b16 %v4952, %v4944
    %v5161 = vpack.c.b16 %v4953, %v4945
    %v5162 = vpack.c.b16 %v4954, %v4946
    %v5163 = vpack.c.b16 %v4963, %v4955
    %v5164 = vpack.c.b16 %v4964, %v4956
    %v5165 = vpack.c.b16 %v4965, %v4957
    %v5166 = vpack.c.b16 %v4966, %v4958
    %v5167 = vpack.c.b16 %v4967, %v4959
    %v5168 = vpack.c.b16 %v4968, %v4960
    %v5169 = vpack.c.b16 %v4969, %v4961
    %v5170 = vpack.c.b16 %v4970, %v4962
    %v5372 = vsel %vm3673, %v4169, 0
    %5374 = vmatpush.bf16.msra.mxu0 %v5027
    %5375 = vmatpush.bf16.msra.mxu0 %v5019
    %5376 = vmatpush.bf16.msra.mxu0 %v5011
    %5377 = vmatpush.bf16.msra.mxu0 %v5003
    %5378 = vmatpush.bf16.msra.mxu0 %v4995
    %5379 = vmatpush.bf16.msra.mxu0 %v4987
    %5380 = vmatpush.bf16.msra.mxu0 %v4979
    %5381 = vmatpush.bf16.msra.mxu0 %v4971
    %5382 = vmatmul.bf16.gmra.mxu0 %v4166
    %v5383 = vpop.f32.mrf.mxu0
    %v5384 = vadd.f32 0.0, %v5383
    %v5385 = vpop.f32.mrf.mxu0
    %v5386 = vadd.f32 0.0, %v5385
    %5387 = vdwg.mxu0
    %5388 = vmatpush.bf16.msra.mxu0 %v5091
    %5389 = vmatpush.bf16.msra.mxu0 %v5083
    %5390 = vmatpush.bf16.msra.mxu0 %v5075
    %5391 = vmatpush.bf16.msra.mxu0 %v5067
    %5392 = vmatpush.bf16.msra.mxu0 %v5059
    %5393 = vmatpush.bf16.msra.mxu0 %v5051
    %5394 = vmatpush.bf16.msra.mxu0 %v5043
    %5395 = vmatpush.bf16.msra.mxu0 %v5035
    %5396 = vmatmul.bf16.gmra.mxu0 %v4167
    %v5397 = vpop.f32.mrf.mxu0
    %v5398 = vadd.f32 %v5384, %v5397
    %v5399 = vpop.f32.mrf.mxu0
    %v5400 = vadd.f32 %v5386, %v5399
    %5401 = vdwg.mxu0
    %5402 = vmatpush.bf16.msra.mxu0 %v5155
    %5403 = vmatpush.bf16.msra.mxu0 %v5147
    %5404 = vmatpush.bf16.msra.mxu0 %v5139
    %5405 = vmatpush.bf16.msra.mxu0 %v5131
    %5406 = vmatpush.bf16.msra.mxu0 %v5123
    %5407 = vmatpush.bf16.msra.mxu0 %v5115
    %5408 = vmatpush.bf16.msra.mxu0 %v5107
    %5409 = vmatpush.bf16.msra.mxu0 %v5099
    %5410 = vmatmul.bf16.gmra.mxu0 %v4168
    %v5411 = vpop.f32.mrf.mxu0
    %v5412 = vadd.f32 %v5398, %v5411
    %v5413 = vpop.f32.mrf.mxu0
    %v5414 = vadd.f32 %v5400, %v5413
    %5415 = vdwg.mxu0
    %5416 = vmatpush.bf16.msra.mxu0 0
    %5417 = vmatpush.bf16.msra.mxu0 0
    %5418 = vmatpush.bf16.msra.mxu0 0
    %5419 = vmatpush.bf16.msra.mxu0 0
    %5420 = vmatpush.bf16.msra.mxu0 0
    %5421 = vmatpush.bf16.msra.mxu0 0
    %5422 = vmatpush.bf16.msra.mxu0 0
    %5423 = vmatpush.bf16.msra.mxu0 %v5163
    %5424 = vmatmul.bf16.gmra.mxu0 %v5372
    %v5425 = vpop.f32.mrf.mxu0
    %v5426 = vadd.f32 %v5412, %v5425
    %v5427 = vpop.f32.mrf.mxu0
    %v5428 = vadd.f32 %v5414, %v5427
    %5429 = vdwg.mxu0
    %5430 = vmatpush.bf16.msra.mxu0 %v5028
    %5431 = vmatpush.bf16.msra.mxu0 %v5020
    %5432 = vmatpush.bf16.msra.mxu0 %v5012
    %5433 = vmatpush.bf16.msra.mxu0 %v5004
    %5434 = vmatpush.bf16.msra.mxu0 %v4996
    %5435 = vmatpush.bf16.msra.mxu0 %v4988
    %5436 = vmatpush.bf16.msra.mxu0 %v4980
    %5437 = vmatpush.bf16.msra.mxu0 %v4972
    %5438 = vmatmul.bf16.gmra.mxu0 %v4166
    %v5439 = vpop.f32.mrf.mxu0
    %v5440 = vadd.f32 0.0, %v5439
    %v5441 = vpop.f32.mrf.mxu0
    %v5442 = vadd.f32 0.0, %v5441
    %5443 = vdwg.mxu0
    %5444 = vmatpush.bf16.msra.mxu0 %v5092
    %5445 = vmatpush.bf16.msra.mxu0 %v5084
    %5446 = vmatpush.bf16.msra.mxu0 %v5076
    %5447 = vmatpush.bf16.msra.mxu0 %v5068
    %5448 = vmatpush.bf16.msra.mxu0 %v5060
    %5449 = vmatpush.bf16.msra.mxu0 %v5052
    %5450 = vmatpush.bf16.msra.mxu0 %v5044
    %5451 = vmatpush.bf16.msra.mxu0 %v5036
    %5452 = vmatmul.bf16.gmra.mxu0 %v4167
    %v5453 = vpop.f32.mrf.mxu0
    %v5454 = vadd.f32 %v5440, %v5453
    %v5455 = vpop.f32.mrf.mxu0
    %v5456 = vadd.f32 %v5442, %v5455
    %5457 = vdwg.mxu0
    %5458 = vmatpush.bf16.msra.mxu0 %v5156
    %5459 = vmatpush.bf16.msra.mxu0 %v5148
    %5460 = vmatpush.bf16.msra.mxu0 %v5140
    %5461 = vmatpush.bf16.msra.mxu0 %v5132
    %5462 = vmatpush.bf16.msra.mxu0 %v5124
    %5463 = vmatpush.bf16.msra.mxu0 %v5116
    %5464 = vmatpush.bf16.msra.mxu0 %v5108
    %5465 = vmatpush.bf16.msra.mxu0 %v5100
    %5466 = vmatmul.bf16.gmra.mxu0 %v4168
    %v5467 = vpop.f32.mrf.mxu0
    %v5468 = vadd.f32 %v5454, %v5467
    %v5469 = vpop.f32.mrf.mxu0
    %v5470 = vadd.f32 %v5456, %v5469
    %5471 = vdwg.mxu0
    %5472 = vmatpush.bf16.msra.mxu0 0
    %5473 = vmatpush.bf16.msra.mxu0 0
    %5474 = vmatpush.bf16.msra.mxu0 0
    %5475 = vmatpush.bf16.msra.mxu0 0
    %5476 = vmatpush.bf16.msra.mxu0 0
    %5477 = vmatpush.bf16.msra.mxu0 0
    %5478 = vmatpush.bf16.msra.mxu0 0
    %5479 = vmatpush.bf16.msra.mxu0 %v5164
    %5480 = vmatmul.bf16.gmra.mxu0 %v5372
    %v5481 = vpop.f32.mrf.mxu0
    %v5482 = vadd.f32 %v5468, %v5481
    %v5483 = vpop.f32.mrf.mxu0
    %v5484 = vadd.f32 %v5470, %v5483
    %5485 = vdwg.mxu0
    %5486 = vmatpush.bf16.msra.mxu0 %v5029
    %5487 = vmatpush.bf16.msra.mxu0 %v5021
    %5488 = vmatpush.bf16.msra.mxu0 %v5013
    %5489 = vmatpush.bf16.msra.mxu0 %v5005
    %5490 = vmatpush.bf16.msra.mxu0 %v4997
    %5491 = vmatpush.bf16.msra.mxu0 %v4989
    %5492 = vmatpush.bf16.msra.mxu0 %v4981
    %5493 = vmatpush.bf16.msra.mxu0 %v4973
    %5494 = vmatmul.bf16.gmra.mxu0 %v4166
    %v5495 = vpop.f32.mrf.mxu0
    %v5496 = vadd.f32 0.0, %v5495
    %v5497 = vpop.f32.mrf.mxu0
    %v5498 = vadd.f32 0.0, %v5497
    %5499 = vdwg.mxu0
    %5500 = vmatpush.bf16.msra.mxu0 %v5093
    %5501 = vmatpush.bf16.msra.mxu0 %v5085
    %5502 = vmatpush.bf16.msra.mxu0 %v5077
    %5503 = vmatpush.bf16.msra.mxu0 %v5069
    %5504 = vmatpush.bf16.msra.mxu0 %v5061
    %5505 = vmatpush.bf16.msra.mxu0 %v5053
    %5506 = vmatpush.bf16.msra.mxu0 %v5045
    %5507 = vmatpush.bf16.msra.mxu0 %v5037
    %5508 = vmatmul.bf16.gmra.mxu0 %v4167
    %v5509 = vpop.f32.mrf.mxu0
    %v5510 = vadd.f32 %v5496, %v5509
    %v5511 = vpop.f32.mrf.mxu0
    %v5512 = vadd.f32 %v5498, %v5511
    %5513 = vdwg.mxu0
    %5514 = vmatpush.bf16.msra.mxu0 %v5157
    %5515 = vmatpush.bf16.msra.mxu0 %v5149
    %5516 = vmatpush.bf16.msra.mxu0 %v5141
    %5517 = vmatpush.bf16.msra.mxu0 %v5133
    %5518 = vmatpush.bf16.msra.mxu0 %v5125
    %5519 = vmatpush.bf16.msra.mxu0 %v5117
    %5520 = vmatpush.bf16.msra.mxu0 %v5109
    %5521 = vmatpush.bf16.msra.mxu0 %v5101
    %5522 = vmatmul.bf16.gmra.mxu0 %v4168
    %v5523 = vpop.f32.mrf.mxu0
    %v5524 = vadd.f32 %v5510, %v5523
    %v5525 = vpop.f32.mrf.mxu0
    %v5526 = vadd.f32 %v5512, %v5525
    %5527 = vdwg.mxu0
    %5528 = vmatpush.bf16.msra.mxu0 0
    %5529 = vmatpush.bf16.msra.mxu0 0
    %5530 = vmatpush.bf16.msra.mxu0 0
    %5531 = vmatpush.bf16.msra.mxu0 0
    %5532 = vmatpush.bf16.msra.mxu0 0
    %5533 = vmatpush.bf16.msra.mxu0 0
    %5534 = vmatpush.bf16.msra.mxu0 0
    %5535 = vmatpush.bf16.msra.mxu0 %v5165
    %5536 = vmatmul.bf16.gmra.mxu0 %v5372
    %v5537 = vpop.f32.mrf.mxu0
    %v5538 = vadd.f32 %v5524, %v5537
    %v5539 = vpop.f32.mrf.mxu0
    %v5540 = vadd.f32 %v5526, %v5539
    %5541 = vdwg.mxu0
    %5542 = vmatpush.bf16.msra.mxu0 %v5030
    %5543 = vmatpush.bf16.msra.mxu0 %v5022
    %5544 = vmatpush.bf16.msra.mxu0 %v5014
    %5545 = vmatpush.bf16.msra.mxu0 %v5006
    %5546 = vmatpush.bf16.msra.mxu0 %v4998
    %5547 = vmatpush.bf16.msra.mxu0 %v4990
    %5548 = vmatpush.bf16.msra.mxu0 %v4982
    %5549 = vmatpush.bf16.msra.mxu0 %v4974
    %5550 = vmatmul.bf16.gmra.mxu0 %v4166
    %v5551 = vpop.f32.mrf.mxu0
    %v5552 = vadd.f32 0.0, %v5551
    %v5553 = vpop.f32.mrf.mxu0
    %v5554 = vadd.f32 0.0, %v5553
    %5555 = vdwg.mxu0
    %5556 = vmatpush.bf16.msra.mxu0 %v5094
    %5557 = vmatpush.bf16.msra.mxu0 %v5086
    %5558 = vmatpush.bf16.msra.mxu0 %v5078
    %5559 = vmatpush.bf16.msra.mxu0 %v5070
    %5560 = vmatpush.bf16.msra.mxu0 %v5062
    %5561 = vmatpush.bf16.msra.mxu0 %v5054
    %5562 = vmatpush.bf16.msra.mxu0 %v5046
    %5563 = vmatpush.bf16.msra.mxu0 %v5038
    %5564 = vmatmul.bf16.gmra.mxu0 %v4167
    %v5565 = vpop.f32.mrf.mxu0
    %v5566 = vadd.f32 %v5552, %v5565
    %v5567 = vpop.f32.mrf.mxu0
    %v5568 = vadd.f32 %v5554, %v5567
    %5569 = vdwg.mxu0
    %5570 = vmatpush.bf16.msra.mxu0 %v5158
    %5571 = vmatpush.bf16.msra.mxu0 %v5150
    %5572 = vmatpush.bf16.msra.mxu0 %v5142
    %5573 = vmatpush.bf16.msra.mxu0 %v5134
    %5574 = vmatpush.bf16.msra.mxu0 %v5126
    %5575 = vmatpush.bf16.msra.mxu0 %v5118
    %5576 = vmatpush.bf16.msra.mxu0 %v5110
    %5577 = vmatpush.bf16.msra.mxu0 %v5102
    %5578 = vmatmul.bf16.gmra.mxu0 %v4168
    %v5579 = vpop.f32.mrf.mxu0
    %v5580 = vadd.f32 %v5566, %v5579
    %v5581 = vpop.f32.mrf.mxu0
    %v5582 = vadd.f32 %v5568, %v5581
    %5583 = vdwg.mxu0
    %5584 = vmatpush.bf16.msra.mxu0 0
    %5585 = vmatpush.bf16.msra.mxu0 0
    %5586 = vmatpush.bf16.msra.mxu0 0
    %5587 = vmatpush.bf16.msra.mxu0 0
    %5588 = vmatpush.bf16.msra.mxu0 0
    %5589 = vmatpush.bf16.msra.mxu0 0
    %5590 = vmatpush.bf16.msra.mxu0 0
    %5591 = vmatpush.bf16.msra.mxu0 %v5166
    %5592 = vmatmul.bf16.gmra.mxu0 %v5372
    %v5593 = vpop.f32.mrf.mxu0
    %v5594 = vadd.f32 %v5580, %v5593
    %v5595 = vpop.f32.mrf.mxu0
    %v5596 = vadd.f32 %v5582, %v5595
    %5597 = vdwg.mxu0
    %5598 = vmatpush.bf16.msra.mxu0 %v5031
    %5599 = vmatpush.bf16.msra.mxu0 %v5023
    %5600 = vmatpush.bf16.msra.mxu0 %v5015
    %5601 = vmatpush.bf16.msra.mxu0 %v5007
    %5602 = vmatpush.bf16.msra.mxu0 %v4999
    %5603 = vmatpush.bf16.msra.mxu0 %v4991
    %5604 = vmatpush.bf16.msra.mxu0 %v4983
    %5605 = vmatpush.bf16.msra.mxu0 %v4975
    %5606 = vmatmul.bf16.gmra.mxu0 %v4166
    %v5607 = vpop.f32.mrf.mxu0
    %v5608 = vadd.f32 0.0, %v5607
    %v5609 = vpop.f32.mrf.mxu0
    %v5610 = vadd.f32 0.0, %v5609
    %5611 = vdwg.mxu0
    %5612 = vmatpush.bf16.msra.mxu0 %v5095
    %5613 = vmatpush.bf16.msra.mxu0 %v5087
    %5614 = vmatpush.bf16.msra.mxu0 %v5079
    %5615 = vmatpush.bf16.msra.mxu0 %v5071
    %5616 = vmatpush.bf16.msra.mxu0 %v5063
    %5617 = vmatpush.bf16.msra.mxu0 %v5055
    %5618 = vmatpush.bf16.msra.mxu0 %v5047
    %5619 = vmatpush.bf16.msra.mxu0 %v5039
    %5620 = vmatmul.bf16.gmra.mxu0 %v4167
    %v5621 = vpop.f32.mrf.mxu0
    %v5622 = vadd.f32 %v5608, %v5621
    %v5623 = vpop.f32.mrf.mxu0
    %v5624 = vadd.f32 %v5610, %v5623
    %5625 = vdwg.mxu0
    %5626 = vmatpush.bf16.msra.mxu0 %v5159
    %5627 = vmatpush.bf16.msra.mxu0 %v5151
    %5628 = vmatpush.bf16.msra.mxu0 %v5143
    %5629 = vmatpush.bf16.msra.mxu0 %v5135
    %5630 = vmatpush.bf16.msra.mxu0 %v5127
    %5631 = vmatpush.bf16.msra.mxu0 %v5119
    %5632 = vmatpush.bf16.msra.mxu0 %v5111
    %5633 = vmatpush.bf16.msra.mxu0 %v5103
    %5634 = vmatmul.bf16.gmra.mxu0 %v4168
    %v5635 = vpop.f32.mrf.mxu0
    %v5636 = vadd.f32 %v5622, %v5635
    %v5637 = vpop.f32.mrf.mxu0
    %v5638 = vadd.f32 %v5624, %v5637
    %5639 = vdwg.mxu0
    %5640 = vmatpush.bf16.msra.mxu0 0
    %5641 = vmatpush.bf16.msra.mxu0 0
    %5642 = vmatpush.bf16.msra.mxu0 0
    %5643 = vmatpush.bf16.msra.mxu0 0
    %5644 = vmatpush.bf16.msra.mxu0 0
    %5645 = vmatpush.bf16.msra.mxu0 0
    %5646 = vmatpush.bf16.msra.mxu0 0
    %5647 = vmatpush.bf16.msra.mxu0 %v5167
    %5648 = vmatmul.bf16.gmra.mxu0 %v5372
    %v5649 = vpop.f32.mrf.mxu0
    %v5650 = vadd.f32 %v5636, %v5649
    %v5651 = vpop.f32.mrf.mxu0
    %v5652 = vadd.f32 %v5638, %v5651
    %5653 = vdwg.mxu0
    %5654 = vmatpush.bf16.msra.mxu0 %v5032
    %5655 = vmatpush.bf16.msra.mxu0 %v5024
    %5656 = vmatpush.bf16.msra.mxu0 %v5016
    %5657 = vmatpush.bf16.msra.mxu0 %v5008
    %5658 = vmatpush.bf16.msra.mxu0 %v5000
    %5659 = vmatpush.bf16.msra.mxu0 %v4992
    %5660 = vmatpush.bf16.msra.mxu0 %v4984
    %5661 = vmatpush.bf16.msra.mxu0 %v4976
    %5662 = vmatmul.bf16.gmra.mxu0 %v4166
    %v5663 = vpop.f32.mrf.mxu0
    %v5664 = vadd.f32 0.0, %v5663
    %v5665 = vpop.f32.mrf.mxu0
    %v5666 = vadd.f32 0.0, %v5665
    %5667 = vdwg.mxu0
    %5668 = vmatpush.bf16.msra.mxu0 %v5096
    %5669 = vmatpush.bf16.msra.mxu0 %v5088
    %5670 = vmatpush.bf16.msra.mxu0 %v5080
    %5671 = vmatpush.bf16.msra.mxu0 %v5072
    %5672 = vmatpush.bf16.msra.mxu0 %v5064
    %5673 = vmatpush.bf16.msra.mxu0 %v5056
    %5674 = vmatpush.bf16.msra.mxu0 %v5048
    %5675 = vmatpush.bf16.msra.mxu0 %v5040
    %5676 = vmatmul.bf16.gmra.mxu0 %v4167
    %v5677 = vpop.f32.mrf.mxu0
    %v5678 = vadd.f32 %v5664, %v5677
    %v5679 = vpop.f32.mrf.mxu0
    %v5680 = vadd.f32 %v5666, %v5679
    %5681 = vdwg.mxu0
    %5682 = vmatpush.bf16.msra.mxu0 %v5160
    %5683 = vmatpush.bf16.msra.mxu0 %v5152
    %5684 = vmatpush.bf16.msra.mxu0 %v5144
    %5685 = vmatpush.bf16.msra.mxu0 %v5136
    %5686 = vmatpush.bf16.msra.mxu0 %v5128
    %5687 = vmatpush.bf16.msra.mxu0 %v5120
    %5688 = vmatpush.bf16.msra.mxu0 %v5112
    %5689 = vmatpush.bf16.msra.mxu0 %v5104
    %5690 = vmatmul.bf16.gmra.mxu0 %v4168
    %v5691 = vpop.f32.mrf.mxu0
    %v5692 = vadd.f32 %v5678, %v5691
    %v5693 = vpop.f32.mrf.mxu0
    %v5694 = vadd.f32 %v5680, %v5693
    %5695 = vdwg.mxu0
    %5696 = vmatpush.bf16.msra.mxu0 0
    %5697 = vmatpush.bf16.msra.mxu0 0
    %5698 = vmatpush.bf16.msra.mxu0 0
    %5699 = vmatpush.bf16.msra.mxu0 0
    %5700 = vmatpush.bf16.msra.mxu0 0
    %5701 = vmatpush.bf16.msra.mxu0 0
    %5702 = vmatpush.bf16.msra.mxu0 0
    %5703 = vmatpush.bf16.msra.mxu0 %v5168
    %5704 = vmatmul.bf16.gmra.mxu0 %v5372
    %v5705 = vpop.f32.mrf.mxu0
    %v5706 = vadd.f32 %v5692, %v5705
    %v5707 = vpop.f32.mrf.mxu0
    %v5708 = vadd.f32 %v5694, %v5707
    %5709 = vdwg.mxu0
    %5710 = vmatpush.bf16.msra.mxu0 %v5033
    %5711 = vmatpush.bf16.msra.mxu0 %v5025
    %5712 = vmatpush.bf16.msra.mxu0 %v5017
    %5713 = vmatpush.bf16.msra.mxu0 %v5009
    %5714 = vmatpush.bf16.msra.mxu0 %v5001
    %5715 = vmatpush.bf16.msra.mxu0 %v4993
    %5716 = vmatpush.bf16.msra.mxu0 %v4985
    %5717 = vmatpush.bf16.msra.mxu0 %v4977
    %5718 = vmatmul.bf16.gmra.mxu0 %v4166
    %v5719 = vpop.f32.mrf.mxu0
    %v5720 = vadd.f32 0.0, %v5719
    %v5721 = vpop.f32.mrf.mxu0
    %v5722 = vadd.f32 0.0, %v5721
    %5723 = vdwg.mxu0
    %5724 = vmatpush.bf16.msra.mxu0 %v5097
    %5725 = vmatpush.bf16.msra.mxu0 %v5089
    %5726 = vmatpush.bf16.msra.mxu0 %v5081
    %5727 = vmatpush.bf16.msra.mxu0 %v5073
    %5728 = vmatpush.bf16.msra.mxu0 %v5065
    %5729 = vmatpush.bf16.msra.mxu0 %v5057
    %5730 = vmatpush.bf16.msra.mxu0 %v5049
    %5731 = vmatpush.bf16.msra.mxu0 %v5041
    %5732 = vmatmul.bf16.gmra.mxu0 %v4167
    %v5733 = vpop.f32.mrf.mxu0
    %v5734 = vadd.f32 %v5720, %v5733
    %v5735 = vpop.f32.mrf.mxu0
    %v5736 = vadd.f32 %v5722, %v5735
    %5737 = vdwg.mxu0
    %5738 = vmatpush.bf16.msra.mxu0 %v5161
    %5739 = vmatpush.bf16.msra.mxu0 %v5153
    %5740 = vmatpush.bf16.msra.mxu0 %v5145
    %5741 = vmatpush.bf16.msra.mxu0 %v5137
    %5742 = vmatpush.bf16.msra.mxu0 %v5129
    %5743 = vmatpush.bf16.msra.mxu0 %v5121
    %5744 = vmatpush.bf16.msra.mxu0 %v5113
    %5745 = vmatpush.bf16.msra.mxu0 %v5105
    %5746 = vmatmul.bf16.gmra.mxu0 %v4168
    %v5747 = vpop.f32.mrf.mxu0
    %v5748 = vadd.f32 %v5734, %v5747
    %v5749 = vpop.f32.mrf.mxu0
    %v5750 = vadd.f32 %v5736, %v5749
    %5751 = vdwg.mxu0
    %5752 = vmatpush.bf16.msra.mxu0 0
    %5753 = vmatpush.bf16.msra.mxu0 0
    %5754 = vmatpush.bf16.msra.mxu0 0
    %5755 = vmatpush.bf16.msra.mxu0 0
    %5756 = vmatpush.bf16.msra.mxu0 0
    %5757 = vmatpush.bf16.msra.mxu0 0
    %5758 = vmatpush.bf16.msra.mxu0 0
    %5759 = vmatpush.bf16.msra.mxu0 %v5169
    %5760 = vmatmul.bf16.gmra.mxu0 %v5372
    %v5761 = vpop.f32.mrf.mxu0
    %v5762 = vadd.f32 %v5748, %v5761
    %v5763 = vpop.f32.mrf.mxu0
    %v5764 = vadd.f32 %v5750, %v5763
    %5765 = vdwg.mxu0
    %5766 = vmatpush.bf16.msra.mxu0 %v5034
    %5767 = vmatpush.bf16.msra.mxu0 %v5026
    %5768 = vmatpush.bf16.msra.mxu0 %v5018
    %5769 = vmatpush.bf16.msra.mxu0 %v5010
    %5770 = vmatpush.bf16.msra.mxu0 %v5002
    %5771 = vmatpush.bf16.msra.mxu0 %v4994
    %5772 = vmatpush.bf16.msra.mxu0 %v4986
    %5773 = vmatpush.bf16.msra.mxu0 %v4978
    %5774 = vmatmul.bf16.gmra.mxu0 %v4166
    %v5775 = vpop.f32.mrf.mxu0
    %v5776 = vadd.f32 0.0, %v5775
    %v5777 = vpop.f32.mrf.mxu0
    %v5778 = vadd.f32 0.0, %v5777
    %5779 = vdwg.mxu0
    %5780 = vmatpush.bf16.msra.mxu0 %v5098
    %5781 = vmatpush.bf16.msra.mxu0 %v5090
    %5782 = vmatpush.bf16.msra.mxu0 %v5082
    %5783 = vmatpush.bf16.msra.mxu0 %v5074
    %5784 = vmatpush.bf16.msra.mxu0 %v5066
    %5785 = vmatpush.bf16.msra.mxu0 %v5058
    %5786 = vmatpush.bf16.msra.mxu0 %v5050
    %5787 = vmatpush.bf16.msra.mxu0 %v5042
    %5788 = vmatmul.bf16.gmra.mxu0 %v4167
    %v5789 = vpop.f32.mrf.mxu0
    %v5790 = vadd.f32 %v5776, %v5789
    %v5791 = vpop.f32.mrf.mxu0
    %v5792 = vadd.f32 %v5778, %v5791
    %5793 = vdwg.mxu0
    %5794 = vmatpush.bf16.msra.mxu0 %v5162
    %5795 = vmatpush.bf16.msra.mxu0 %v5154
    %5796 = vmatpush.bf16.msra.mxu0 %v5146
    %5797 = vmatpush.bf16.msra.mxu0 %v5138
    %5798 = vmatpush.bf16.msra.mxu0 %v5130
    %5799 = vmatpush.bf16.msra.mxu0 %v5122
    %5800 = vmatpush.bf16.msra.mxu0 %v5114
    %5801 = vmatpush.bf16.msra.mxu0 %v5106
    %5802 = vmatmul.bf16.gmra.mxu0 %v4168
    %v5803 = vpop.f32.mrf.mxu0
    %v5804 = vadd.f32 %v5790, %v5803
    %v5805 = vpop.f32.mrf.mxu0
    %v5806 = vadd.f32 %v5792, %v5805
    %5807 = vdwg.mxu0
    %5808 = vmatpush.bf16.msra.mxu0 0
    %5809 = vmatpush.bf16.msra.mxu0 0
    %5810 = vmatpush.bf16.msra.mxu0 0
    %5811 = vmatpush.bf16.msra.mxu0 0
    %5812 = vmatpush.bf16.msra.mxu0 0
    %5813 = vmatpush.bf16.msra.mxu0 0
    %5814 = vmatpush.bf16.msra.mxu0 0
    %5815 = vmatpush.bf16.msra.mxu0 %v5170
    %5816 = vmatmul.bf16.gmra.mxu0 %v5372
    %v5817 = vpop.f32.mrf.mxu0
    %v5818 = vadd.f32 %v5804, %v5817
    %v5819 = vpop.f32.mrf.mxu0
    %v5820 = vadd.f32 %v5806, %v5819
    %5821 = vdwg.mxu0
    %v5822 = vadd.f32 %v4142, %v5426
    %v5823 = vadd.f32 %v4143, %v5482
    %v5824 = vadd.f32 %v4144, %v5538
    %v5825 = vadd.f32 %v4145, %v5594
    %v5826 = vadd.f32 %v4146, %v5650
    %v5827 = vadd.f32 %v4147, %v5706
    %v5828 = vadd.f32 %v4148, %v5762
    %v5829 = vadd.f32 %v4149, %v5818
    %v5830 = vadd.f32 %v4150, %v5428
    %v5831 = vadd.f32 %v4151, %v5484
    %v5832 = vadd.f32 %v4152, %v5540
    %v5833 = vadd.f32 %v4153, %v5596
    %v5834 = vadd.f32 %v4154, %v5652
    %v5835 = vadd.f32 %v4155, %v5708
    %v5836 = vadd.f32 %v4156, %v5764
    %v5837 = vadd.f32 %v4157, %v5820
    %v5838 = vmax.f32 %v2444, %v2452
    %v5839 = vmax.f32 %v2445, %v2453
    %v5840 = vmax.f32 %v2446, %v2454
    %v5841 = vmax.f32 %v2447, %v2455
    %v5842 = vmax.f32 %v2448, %v2456
    %v5843 = vmax.f32 %v2449, %v2457
    %v5844 = vmax.f32 %v2450, %v2458
    %v5845 = vmax.f32 %v2451, %v2459
    %v5846 = vpack.c.bf16 %v5842, %v5838
    %v5847 = vpack.c.bf16 %v5843, %v5839
    %v5848 = vpack.c.bf16 %v5844, %v5840
    %v5849 = vpack.c.bf16 %v5845, %v5841
    %s5850 = scalar_lea.vmem [#allocation11], 3200
    %v5851 = vld [vmem:[%s5850] sm:$0xff]
    %v5852 = vld [vmem:[%s5850 + $0x8] sm:$0xff]
    %v5853 = vld [vmem:[%s5850 + $0x10] sm:$0xff]
    %v5854 = vld [vmem:[%s5850 + $0x18] sm:$0xff]
    %v5855 = vld [vmem:[%s5850 + $0x20] sm:$0xff]
    %v5856 = vld [vmem:[%s5850 + $0x28] sm:$0xff]
    %v5857 = vld [vmem:[%s5850 + $0x30] sm:$0xff]
    %v5858 = vld [vmem:[%s5850 + $0x38] sm:$0xff]
    %v5859 = vld [vmem:[%s5850 + $0x40] sm:$0xff]
    %v5860 = vld [vmem:[%s5850 + $0x48] sm:$0xff]
    %v5861 = vld [vmem:[%s5850 + $0x50] sm:$0xff]
    %v5862 = vld [vmem:[%s5850 + $0x58] sm:$0xff]
    %v5863 = vld [vmem:[%s5850 + $0x60] sm:$0xff]
    %v5864 = vld [vmem:[%s5850 + $0x68] sm:$0xff]
    %v5865 = vld [vmem:[%s5850 + $0x70] sm:$0xff]
    %v5866 = vld [vmem:[%s5850 + $0x78] sm:$0xff]
    %v5867 = vld [vmem:[%s5850 + $0x80] sm:$0xff]
    %v5868 = vld [vmem:[%s5850 + $0x88] sm:$0xff]
    %v5869 = vld [vmem:[%s5850 + $0x90] sm:$0xff]
    %v5870 = vld [vmem:[%s5850 + $0x98] sm:$0xff]
    %v5871 = vld [vmem:[%s5850 + $0xa0] sm:$0xff]
    %v5872 = vld [vmem:[%s5850 + $0xa8] sm:$0xff]
    %v5873 = vld [vmem:[%s5850 + $0xb0] sm:$0xff]
    %v5874 = vld [vmem:[%s5850 + $0xb8] sm:$0xff]
    %v5875 = vld [vmem:[%s5850 + $0xc0] sm:$0xff]
    %v5876 = vld [vmem:[%s5850 + $0xc8] sm:$0xff]
    %v5877 = vld [vmem:[%s5850 + $0xd0] sm:$0xff]
    %v5878 = vld [vmem:[%s5850 + $0xd8] sm:$0xff]
    %v5879 = vld [vmem:[%s5850 + $0xe0] sm:$0xff]
    %v5880 = vld [vmem:[%s5850 + $0xe8] sm:$0xff]
    %v5881 = vld [vmem:[%s5850 + $0xf0] sm:$0xff]
    %v5882 = vld [vmem:[%s5850 + $0xf8] sm:$0xff]
    %v5883 = vld [vmem:[%s5850 + $0x100] sm:$0xff]
    %v5884 = vld [vmem:[%s5850 + $0x108] sm:$0xff]
    %v5885 = vld [vmem:[%s5850 + $0x110] sm:$0xff]
    %v5886 = vld [vmem:[%s5850 + $0x118] sm:$0xff]
    %v5887 = vld [vmem:[%s5850 + $0x120] sm:$0xff]
    %v5888 = vld [vmem:[%s5850 + $0x128] sm:$0xff]
    %v5889 = vld [vmem:[%s5850 + $0x130] sm:$0xff]
    %v5890 = vld [vmem:[%s5850 + $0x138] sm:$0xff]
    %v5891 = vld [vmem:[%s5850 + $0x140] sm:$0xff]
    %v5892 = vld [vmem:[%s5850 + $0x148] sm:$0xff]
    %v5893 = vld [vmem:[%s5850 + $0x150] sm:$0xff]
    %v5894 = vld [vmem:[%s5850 + $0x158] sm:$0xff]
    %v5895 = vld [vmem:[%s5850 + $0x160] sm:$0xff]
    %v5896 = vld [vmem:[%s5850 + $0x168] sm:$0xff]
    %v5897 = vld [vmem:[%s5850 + $0x170] sm:$0xff]
    %v5898 = vld [vmem:[%s5850 + $0x178] sm:$0xff]
    %v5899 = vld [vmem:[%s5850 + $0x180] sm:$0xff]
    %v5900 = vld [vmem:[%s5850 + $0x188] sm:$0xff]
    %v5901 = vld [vmem:[%s5850 + $0x190] sm:$0xff]
    %v5902 = vld [vmem:[%s5850 + $0x198] sm:$0xff]
    %v5903 = vld [vmem:[%s5850 + $0x1a0] sm:$0xff]
    %v5904 = vld [vmem:[%s5850 + $0x1a8] sm:$0xff]
    %v5905 = vld [vmem:[%s5850 + $0x1b0] sm:$0xff]
    %v5906 = vld [vmem:[%s5850 + $0x1b8] sm:$0xff]
    %v5907 = vld [vmem:[%s5850 + $0x1c0] sm:$0xff]
    %v5908 = vld [vmem:[%s5850 + $0x1c8] sm:$0xff]
    %v5909 = vld [vmem:[%s5850 + $0x1d0] sm:$0xff]
    %v5910 = vld [vmem:[%s5850 + $0x1d8] sm:$0xff]
    %v5911 = vld [vmem:[%s5850 + $0x1e0] sm:$0xff]
    %v5912 = vld [vmem:[%s5850 + $0x1e8] sm:$0xff]
    %v5913 = vld [vmem:[%s5850 + $0x1f0] sm:$0xff]
    %v5914 = vld [vmem:[%s5850 + $0x1f8] sm:$0xff]
    %v5915 = vld [vmem:[%s5850 + $0x200] sm:$0xff]
    %v5916 = vld [vmem:[%s5850 + $0x208] sm:$0xff]
    %v5917 = vld [vmem:[%s5850 + $0x210] sm:$0xff]
    %v5918 = vld [vmem:[%s5850 + $0x218] sm:$0xff]
    %v5919 = vld [vmem:[%s5850 + $0x220] sm:$0xff]
    %v5920 = vld [vmem:[%s5850 + $0x228] sm:$0xff]
    %v5921 = vld [vmem:[%s5850 + $0x230] sm:$0xff]
    %v5922 = vld [vmem:[%s5850 + $0x238] sm:$0xff]
    %v5923 = vld [vmem:[%s5850 + $0x240] sm:$0xff]
    %v5924 = vld [vmem:[%s5850 + $0x248] sm:$0xff]
    %v5925 = vld [vmem:[%s5850 + $0x250] sm:$0xff]
    %v5926 = vld [vmem:[%s5850 + $0x258] sm:$0xff]
    %v5927 = vld [vmem:[%s5850 + $0x260] sm:$0xff]
    %v5928 = vld [vmem:[%s5850 + $0x268] sm:$0xff]
    %v5929 = vld [vmem:[%s5850 + $0x270] sm:$0xff]
    %v5930 = vld [vmem:[%s5850 + $0x278] sm:$0xff]
    %v5931 = vld [vmem:[%s5850 + $0x280] sm:$0xff]
    %v5932 = vld [vmem:[%s5850 + $0x288] sm:$0xff]
    %v5933 = vld [vmem:[%s5850 + $0x290] sm:$0xff]
    %v5934 = vld [vmem:[%s5850 + $0x298] sm:$0xff]
    %v5935 = vld [vmem:[%s5850 + $0x2a0] sm:$0xff]
    %v5936 = vld [vmem:[%s5850 + $0x2a8] sm:$0xff]
    %v5937 = vld [vmem:[%s5850 + $0x2b0] sm:$0xff]
    %v5938 = vld [vmem:[%s5850 + $0x2b8] sm:$0xff]
    %v5939 = vld [vmem:[%s5850 + $0x2c0] sm:$0xff]
    %v5940 = vld [vmem:[%s5850 + $0x2c8] sm:$0xff]
    %v5941 = vld [vmem:[%s5850 + $0x2d0] sm:$0xff]
    %v5942 = vld [vmem:[%s5850 + $0x2d8] sm:$0xff]
    %v5943 = vld [vmem:[%s5850 + $0x2e0] sm:$0xff]
    %v5944 = vld [vmem:[%s5850 + $0x2e8] sm:$0xff]
    %v5945 = vld [vmem:[%s5850 + $0x2f0] sm:$0xff]
    %v5946 = vld [vmem:[%s5850 + $0x2f8] sm:$0xff]
    %v5947 = vld [vmem:[%s5850 + $0x300] sm:$0xff]
    %v5948 = vld [vmem:[%s5850 + $0x308] sm:$0xff]
    %v5949 = vld [vmem:[%s5850 + $0x310] sm:$0xff]
    %v5950 = vld [vmem:[%s5850 + $0x318] sm:$0xff]
    %v5951 = vld [vmem:[%s5850 + $0x320] sm:$0xff]
    %v5952 = vld [vmem:[%s5850 + $0x328] sm:$0xff]
    %v5953 = vld [vmem:[%s5850 + $0x330] sm:$0xff]
    %v5954 = vld [vmem:[%s5850 + $0x338] sm:$0xff]
    %v5955 = vld [vmem:[%s5850 + $0x340] sm:$0xff]
    %v5956 = vld [vmem:[%s5850 + $0x348] sm:$0xff]
    %v5957 = vld [vmem:[%s5850 + $0x350] sm:$0xff]
    %v5958 = vld [vmem:[%s5850 + $0x358] sm:$0xff]
    %v5959 = vld [vmem:[%s5850 + $0x360] sm:$0xff]
    %v5960 = vld [vmem:[%s5850 + $0x368] sm:$0xff]
    %v5961 = vld [vmem:[%s5850 + $0x370] sm:$0xff]
    %v5962 = vld [vmem:[%s5850 + $0x378] sm:$0xff]
    %v5963 = vld [vmem:[%s5850 + $0x380] sm:$0xff]
    %v5964 = vld [vmem:[%s5850 + $0x388] sm:$0xff]
    %v5965 = vld [vmem:[%s5850 + $0x390] sm:$0xff]
    %v5966 = vld [vmem:[%s5850 + $0x398] sm:$0xff]
    %v5967 = vld [vmem:[%s5850 + $0x3a0] sm:$0xff]
    %v5968 = vld [vmem:[%s5850 + $0x3a8] sm:$0xff]
    %v5969 = vld [vmem:[%s5850 + $0x3b0] sm:$0xff]
    %v5970 = vld [vmem:[%s5850 + $0x3b8] sm:$0xff]
    %v5971 = vld [vmem:[%s5850 + $0x3c0] sm:$0xff]
    %v5972 = vld [vmem:[%s5850 + $0x3c8] sm:$0xff]
    %v5973 = vld [vmem:[%s5850 + $0x3d0] sm:$0xff]
    %v5974 = vld [vmem:[%s5850 + $0x3d8] sm:$0xff]
    %v5975 = vld [vmem:[%s5850 + $0x3e0] sm:$0xff]
    %v5976 = vld [vmem:[%s5850 + $0x3e8] sm:$0xff]
    %v5977 = vld [vmem:[%s5850 + $0x3f0] sm:$0xff]
    %v5978 = vld [vmem:[%s5850 + $0x3f8] sm:$0xff]
    %v5979 = vld [vmem:[%s5850 + $0x400] sm:$0xff]
    %v5980 = vld [vmem:[%s5850 + $0x408] sm:$0xff]
    %v5981 = vld [vmem:[%s5850 + $0x410] sm:$0xff]
    %v5982 = vld [vmem:[%s5850 + $0x418] sm:$0xff]
    %v5983 = vld [vmem:[%s5850 + $0x420] sm:$0xff]
    %v5984 = vld [vmem:[%s5850 + $0x428] sm:$0xff]
    %v5985 = vld [vmem:[%s5850 + $0x430] sm:$0xff]
    %v5986 = vld [vmem:[%s5850 + $0x438] sm:$0xff]
    %v5987 = vld [vmem:[%s5850 + $0x440] sm:$0xff]
    %v5988 = vld [vmem:[%s5850 + $0x448] sm:$0xff]
    %v5989 = vld [vmem:[%s5850 + $0x450] sm:$0xff]
    %v5990 = vld [vmem:[%s5850 + $0x458] sm:$0xff]
    %v5991 = vld [vmem:[%s5850 + $0x460] sm:$0xff]
    %v5992 = vld [vmem:[%s5850 + $0x468] sm:$0xff]
    %v5993 = vld [vmem:[%s5850 + $0x470] sm:$0xff]
    %v5994 = vld [vmem:[%s5850 + $0x478] sm:$0xff]
    %v5995 = vld [vmem:[%s5850 + $0x480] sm:$0xff]
    %v5996 = vld [vmem:[%s5850 + $0x488] sm:$0xff]
    %v5997 = vld [vmem:[%s5850 + $0x490] sm:$0xff]
    %v5998 = vld [vmem:[%s5850 + $0x498] sm:$0xff]
    %v5999 = vld [vmem:[%s5850 + $0x4a0] sm:$0xff]
    %v6000 = vld [vmem:[%s5850 + $0x4a8] sm:$0xff]
    %v6001 = vld [vmem:[%s5850 + $0x4b0] sm:$0xff]
    %v6002 = vld [vmem:[%s5850 + $0x4b8] sm:$0xff]
    %v6003 = vld [vmem:[%s5850 + $0x4c0] sm:$0xff]
    %v6004 = vld [vmem:[%s5850 + $0x4c8] sm:$0xff]
    %v6005 = vld [vmem:[%s5850 + $0x4d0] sm:$0xff]
    %v6006 = vld [vmem:[%s5850 + $0x4d8] sm:$0xff]
    %v6007 = vld [vmem:[%s5850 + $0x4e0] sm:$0xff]
    %v6008 = vld [vmem:[%s5850 + $0x4e8] sm:$0xff]
    %v6009 = vld [vmem:[%s5850 + $0x4f0] sm:$0xff]
    %v6010 = vld [vmem:[%s5850 + $0x4f8] sm:$0xff]
    %v6011 = vld [vmem:[%s5850 + $0x500] sm:$0xff]
    %v6012 = vld [vmem:[%s5850 + $0x508] sm:$0xff]
    %v6013 = vld [vmem:[%s5850 + $0x510] sm:$0xff]
    %v6014 = vld [vmem:[%s5850 + $0x518] sm:$0xff]
    %v6015 = vld [vmem:[%s5850 + $0x520] sm:$0xff]
    %v6016 = vld [vmem:[%s5850 + $0x528] sm:$0xff]
    %v6017 = vld [vmem:[%s5850 + $0x530] sm:$0xff]
    %v6018 = vld [vmem:[%s5850 + $0x538] sm:$0xff]
    %v6019 = vld [vmem:[%s5850 + $0x540] sm:$0xff]
    %v6020 = vld [vmem:[%s5850 + $0x548] sm:$0xff]
    %v6021 = vld [vmem:[%s5850 + $0x550] sm:$0xff]
    %v6022 = vld [vmem:[%s5850 + $0x558] sm:$0xff]
    %v6023 = vld [vmem:[%s5850 + $0x560] sm:$0xff]
    %v6024 = vld [vmem:[%s5850 + $0x568] sm:$0xff]
    %v6025 = vld [vmem:[%s5850 + $0x570] sm:$0xff]
    %v6026 = vld [vmem:[%s5850 + $0x578] sm:$0xff]
    %v6027 = vld [vmem:[%s5850 + $0x580] sm:$0xff]
    %v6028 = vld [vmem:[%s5850 + $0x588] sm:$0xff]
    %v6029 = vld [vmem:[%s5850 + $0x590] sm:$0xff]
    %v6030 = vld [vmem:[%s5850 + $0x598] sm:$0xff]
    %v6031 = vld [vmem:[%s5850 + $0x5a0] sm:$0xff]
    %v6032 = vld [vmem:[%s5850 + $0x5a8] sm:$0xff]
    %v6033 = vld [vmem:[%s5850 + $0x5b0] sm:$0xff]
    %v6034 = vld [vmem:[%s5850 + $0x5b8] sm:$0xff]
    %v6035 = vld [vmem:[%s5850 + $0x5c0] sm:$0xff]
    %v6036 = vld [vmem:[%s5850 + $0x5c8] sm:$0xff]
    %v6037 = vld [vmem:[%s5850 + $0x5d0] sm:$0xff]
    %v6038 = vld [vmem:[%s5850 + $0x5d8] sm:$0xff]
    %v6039 = vld [vmem:[%s5850 + $0x5e0] sm:$0xff]
    %v6040 = vld [vmem:[%s5850 + $0x5e8] sm:$0xff]
    %v6041 = vld [vmem:[%s5850 + $0x5f0] sm:$0xff]
    %v6042 = vld [vmem:[%s5850 + $0x5f8] sm:$0xff]
    %v6043 = vld [vmem:[%s5850 + $0x600] sm:$0xff]
    %v6044 = vld [vmem:[%s5850 + $0x608] sm:$0xff]
    %v6045 = vld [vmem:[%s5850 + $0x610] sm:$0xff]
    %v6046 = vld [vmem:[%s5850 + $0x618] sm:$0xff]
    %v6047 = vld [vmem:[%s5850 + $0x620] sm:$0xff]
    %v6048 = vld [vmem:[%s5850 + $0x628] sm:$0xff]
    %v6049 = vld [vmem:[%s5850 + $0x630] sm:$0xff]
    %v6050 = vld [vmem:[%s5850 + $0x638] sm:$0xff]
    %v6251 = vunpack.c.l.b16 %v5851
    %v6252 = vunpack.c.h.b16 %v5851
    %v6253 = vunpack.c.l.b16 %v5852
    %v6254 = vunpack.c.h.b16 %v5852
    %v6255 = vunpack.c.l.b16 %v5853
    %v6256 = vunpack.c.h.b16 %v5853
    %v6257 = vunpack.c.l.b16 %v5854
    %v6258 = vunpack.c.h.b16 %v5854
    %v6259 = vunpack.c.l.b16 %v5855
    %v6260 = vunpack.c.h.b16 %v5855
    %v6261 = vunpack.c.l.b16 %v5856
    %v6262 = vunpack.c.h.b16 %v5856
    %v6263 = vunpack.c.l.b16 %v5857
    %v6264 = vunpack.c.h.b16 %v5857
    %v6265 = vunpack.c.l.b16 %v5858
    %v6266 = vunpack.c.h.b16 %v5858
    %v6267 = vunpack.c.l.b16 %v5859
    %v6268 = vunpack.c.h.b16 %v5859
    %v6269 = vunpack.c.l.b16 %v5860
    %v6270 = vunpack.c.h.b16 %v5860
    %v6271 = vunpack.c.l.b16 %v5861
    %v6272 = vunpack.c.h.b16 %v5861
    %v6273 = vunpack.c.l.b16 %v5862
    %v6274 = vunpack.c.h.b16 %v5862
    %v6275 = vunpack.c.l.b16 %v5863
    %v6276 = vunpack.c.h.b16 %v5863
    %v6277 = vunpack.c.l.b16 %v5864
    %v6278 = vunpack.c.h.b16 %v5864
    %v6279 = vunpack.c.l.b16 %v5865
    %v6280 = vunpack.c.h.b16 %v5865
    %v6281 = vunpack.c.l.b16 %v5866
    %v6282 = vunpack.c.h.b16 %v5866
    %v6283 = vunpack.c.l.b16 %v5867
    %v6284 = vunpack.c.h.b16 %v5867
    %v6285 = vunpack.c.l.b16 %v5868
    %v6286 = vunpack.c.h.b16 %v5868
    %v6287 = vunpack.c.l.b16 %v5869
    %v6288 = vunpack.c.h.b16 %v5869
    %v6289 = vunpack.c.l.b16 %v5870
    %v6290 = vunpack.c.h.b16 %v5870
    %v6291 = vunpack.c.l.b16 %v5871
    %v6292 = vunpack.c.h.b16 %v5871
    %v6293 = vunpack.c.l.b16 %v5872
    %v6294 = vunpack.c.h.b16 %v5872
    %v6295 = vunpack.c.l.b16 %v5873
    %v6296 = vunpack.c.h.b16 %v5873
    %v6297 = vunpack.c.l.b16 %v5874
    %v6298 = vunpack.c.h.b16 %v5874
    %v6299 = vunpack.c.l.b16 %v5875
    %v6300 = vunpack.c.h.b16 %v5875
    %v6301 = vunpack.c.l.b16 %v5876
    %v6302 = vunpack.c.h.b16 %v5876
    %v6303 = vunpack.c.l.b16 %v5877
    %v6304 = vunpack.c.h.b16 %v5877
    %v6305 = vunpack.c.l.b16 %v5878
    %v6306 = vunpack.c.h.b16 %v5878
    %v6307 = vunpack.c.l.b16 %v5879
    %v6308 = vunpack.c.h.b16 %v5879
    %v6309 = vunpack.c.l.b16 %v5880
    %v6310 = vunpack.c.h.b16 %v5880
    %v6311 = vunpack.c.l.b16 %v5881
    %v6312 = vunpack.c.h.b16 %v5881
    %v6313 = vunpack.c.l.b16 %v5882
    %v6314 = vunpack.c.h.b16 %v5882
    %v6315 = vunpack.c.l.b16 %v5883
    %v6316 = vunpack.c.h.b16 %v5883
    %v6317 = vunpack.c.l.b16 %v5884
    %v6318 = vunpack.c.h.b16 %v5884
    %v6319 = vunpack.c.l.b16 %v5885
    %v6320 = vunpack.c.h.b16 %v5885
    %v6321 = vunpack.c.l.b16 %v5886
    %v6322 = vunpack.c.h.b16 %v5886
    %v6323 = vunpack.c.l.b16 %v5887
    %v6324 = vunpack.c.h.b16 %v5887
    %v6325 = vunpack.c.l.b16 %v5888
    %v6326 = vunpack.c.h.b16 %v5888
    %v6327 = vunpack.c.l.b16 %v5889
    %v6328 = vunpack.c.h.b16 %v5889
    %v6329 = vunpack.c.l.b16 %v5890
    %v6330 = vunpack.c.h.b16 %v5890
    %v6331 = vunpack.c.l.b16 %v5891
    %v6332 = vunpack.c.h.b16 %v5891
    %v6333 = vunpack.c.l.b16 %v5892
    %v6334 = vunpack.c.h.b16 %v5892
    %v6335 = vunpack.c.l.b16 %v5893
    %v6336 = vunpack.c.h.b16 %v5893
    %v6337 = vunpack.c.l.b16 %v5894
    %v6338 = vunpack.c.h.b16 %v5894
    %v6339 = vunpack.c.l.b16 %v5895
    %v6340 = vunpack.c.h.b16 %v5895
    %v6341 = vunpack.c.l.b16 %v5896
    %v6342 = vunpack.c.h.b16 %v5896
    %v6343 = vunpack.c.l.b16 %v5897
    %v6344 = vunpack.c.h.b16 %v5897
    %v6345 = vunpack.c.l.b16 %v5898
    %v6346 = vunpack.c.h.b16 %v5898
    %v6347 = vunpack.c.l.b16 %v5899
    %v6348 = vunpack.c.h.b16 %v5899
    %v6349 = vunpack.c.l.b16 %v5900
    %v6350 = vunpack.c.h.b16 %v5900
    %v6351 = vunpack.c.l.b16 %v5901
    %v6352 = vunpack.c.h.b16 %v5901
    %v6353 = vunpack.c.l.b16 %v5902
    %v6354 = vunpack.c.h.b16 %v5902
    %v6355 = vunpack.c.l.b16 %v5903
    %v6356 = vunpack.c.h.b16 %v5903
    %v6357 = vunpack.c.l.b16 %v5904
    %v6358 = vunpack.c.h.b16 %v5904
    %v6359 = vunpack.c.l.b16 %v5905
    %v6360 = vunpack.c.h.b16 %v5905
    %v6361 = vunpack.c.l.b16 %v5906
    %v6362 = vunpack.c.h.b16 %v5906
    %v6363 = vunpack.c.l.b16 %v5907
    %v6364 = vunpack.c.h.b16 %v5907
    %v6365 = vunpack.c.l.b16 %v5908
    %v6366 = vunpack.c.h.b16 %v5908
    %v6367 = vunpack.c.l.b16 %v5909
    %v6368 = vunpack.c.h.b16 %v5909
    %v6369 = vunpack.c.l.b16 %v5910
    %v6370 = vunpack.c.h.b16 %v5910
    %v6371 = vunpack.c.l.b16 %v5911
    %v6372 = vunpack.c.h.b16 %v5911
    %v6373 = vunpack.c.l.b16 %v5912
    %v6374 = vunpack.c.h.b16 %v5912
    %v6375 = vunpack.c.l.b16 %v5913
    %v6376 = vunpack.c.h.b16 %v5913
    %v6377 = vunpack.c.l.b16 %v5914
    %v6378 = vunpack.c.h.b16 %v5914
    %v6379 = vunpack.c.l.b16 %v5915
    %v6380 = vunpack.c.h.b16 %v5915
    %v6381 = vunpack.c.l.b16 %v5916
    %v6382 = vunpack.c.h.b16 %v5916
    %v6383 = vunpack.c.l.b16 %v5917
    %v6384 = vunpack.c.h.b16 %v5917
    %v6385 = vunpack.c.l.b16 %v5918
    %v6386 = vunpack.c.h.b16 %v5918
    %v6387 = vunpack.c.l.b16 %v5919
    %v6388 = vunpack.c.h.b16 %v5919
    %v6389 = vunpack.c.l.b16 %v5920
    %v6390 = vunpack.c.h.b16 %v5920
    %v6391 = vunpack.c.l.b16 %v5921
    %v6392 = vunpack.c.h.b16 %v5921
    %v6393 = vunpack.c.l.b16 %v5922
    %v6394 = vunpack.c.h.b16 %v5922
    %v6395 = vunpack.c.l.b16 %v5923
    %v6396 = vunpack.c.h.b16 %v5923
    %v6397 = vunpack.c.l.b16 %v5924
    %v6398 = vunpack.c.h.b16 %v5924
    %v6399 = vunpack.c.l.b16 %v5925
    %v6400 = vunpack.c.h.b16 %v5925
    %v6401 = vunpack.c.l.b16 %v5926
    %v6402 = vunpack.c.h.b16 %v5926
    %v6403 = vunpack.c.l.b16 %v5927
    %v6404 = vunpack.c.h.b16 %v5927
    %v6405 = vunpack.c.l.b16 %v5928
    %v6406 = vunpack.c.h.b16 %v5928
    %v6407 = vunpack.c.l.b16 %v5929
    %v6408 = vunpack.c.h.b16 %v5929
    %v6409 = vunpack.c.l.b16 %v5930
    %v6410 = vunpack.c.h.b16 %v5930
    %v6411 = vunpack.c.l.b16 %v5931
    %v6412 = vunpack.c.h.b16 %v5931
    %v6413 = vunpack.c.l.b16 %v5932
    %v6414 = vunpack.c.h.b16 %v5932
    %v6415 = vunpack.c.l.b16 %v5933
    %v6416 = vunpack.c.h.b16 %v5933
    %v6417 = vunpack.c.l.b16 %v5934
    %v6418 = vunpack.c.h.b16 %v5934
    %v6419 = vunpack.c.l.b16 %v5935
    %v6420 = vunpack.c.h.b16 %v5935
    %v6421 = vunpack.c.l.b16 %v5936
    %v6422 = vunpack.c.h.b16 %v5936
    %v6423 = vunpack.c.l.b16 %v5937
    %v6424 = vunpack.c.h.b16 %v5937
    %v6425 = vunpack.c.l.b16 %v5938
    %v6426 = vunpack.c.h.b16 %v5938
    %v6427 = vunpack.c.l.b16 %v5939
    %v6428 = vunpack.c.h.b16 %v5939
    %v6429 = vunpack.c.l.b16 %v5940
    %v6430 = vunpack.c.h.b16 %v5940
    %v6431 = vunpack.c.l.b16 %v5941
    %v6432 = vunpack.c.h.b16 %v5941
    %v6433 = vunpack.c.l.b16 %v5942
    %v6434 = vunpack.c.h.b16 %v5942
    %v6435 = vunpack.c.l.b16 %v5943
    %v6436 = vunpack.c.h.b16 %v5943
    %v6437 = vunpack.c.l.b16 %v5944
    %v6438 = vunpack.c.h.b16 %v5944
    %v6439 = vunpack.c.l.b16 %v5945
    %v6440 = vunpack.c.h.b16 %v5945
    %v6441 = vunpack.c.l.b16 %v5946
    %v6442 = vunpack.c.h.b16 %v5946
    %v6443 = vunpack.c.l.b16 %v5947
    %v6444 = vunpack.c.h.b16 %v5947
    %v6445 = vunpack.c.l.b16 %v5948
    %v6446 = vunpack.c.h.b16 %v5948
    %v6447 = vunpack.c.l.b16 %v5949
    %v6448 = vunpack.c.h.b16 %v5949
    %v6449 = vunpack.c.l.b16 %v5950
    %v6450 = vunpack.c.h.b16 %v5950
    %v6451 = vunpack.c.l.b16 %v5951
    %v6452 = vunpack.c.h.b16 %v5951
    %v6453 = vunpack.c.l.b16 %v5952
    %v6454 = vunpack.c.h.b16 %v5952
    %v6455 = vunpack.c.l.b16 %v5953
    %v6456 = vunpack.c.h.b16 %v5953
    %v6457 = vunpack.c.l.b16 %v5954
    %v6458 = vunpack.c.h.b16 %v5954
    %v6459 = vunpack.c.l.b16 %v5955
    %v6460 = vunpack.c.h.b16 %v5955
    %v6461 = vunpack.c.l.b16 %v5956
    %v6462 = vunpack.c.h.b16 %v5956
    %v6463 = vunpack.c.l.b16 %v5957
    %v6464 = vunpack.c.h.b16 %v5957
    %v6465 = vunpack.c.l.b16 %v5958
    %v6466 = vunpack.c.h.b16 %v5958
    %v6467 = vunpack.c.l.b16 %v5959
    %v6468 = vunpack.c.h.b16 %v5959
    %v6469 = vunpack.c.l.b16 %v5960
    %v6470 = vunpack.c.h.b16 %v5960
    %v6471 = vunpack.c.l.b16 %v5961
    %v6472 = vunpack.c.h.b16 %v5961
    %v6473 = vunpack.c.l.b16 %v5962
    %v6474 = vunpack.c.h.b16 %v5962
    %v6475 = vunpack.c.l.b16 %v5963
    %v6476 = vunpack.c.h.b16 %v5963
    %v6477 = vunpack.c.l.b16 %v5964
    %v6478 = vunpack.c.h.b16 %v5964
    %v6479 = vunpack.c.l.b16 %v5965
    %v6480 = vunpack.c.h.b16 %v5965
    %v6481 = vunpack.c.l.b16 %v5966
    %v6482 = vunpack.c.h.b16 %v5966
    %v6483 = vunpack.c.l.b16 %v5967
    %v6484 = vunpack.c.h.b16 %v5967
    %v6485 = vunpack.c.l.b16 %v5968
    %v6486 = vunpack.c.h.b16 %v5968
    %v6487 = vunpack.c.l.b16 %v5969
    %v6488 = vunpack.c.h.b16 %v5969
    %v6489 = vunpack.c.l.b16 %v5970
    %v6490 = vunpack.c.h.b16 %v5970
    %v6491 = vunpack.c.l.b16 %v5971
    %v6492 = vunpack.c.h.b16 %v5971
    %v6493 = vunpack.c.l.b16 %v5972
    %v6494 = vunpack.c.h.b16 %v5972
    %v6495 = vunpack.c.l.b16 %v5973
    %v6496 = vunpack.c.h.b16 %v5973
    %v6497 = vunpack.c.l.b16 %v5974
    %v6498 = vunpack.c.h.b16 %v5974
    %v6499 = vunpack.c.l.b16 %v5975
    %v6500 = vunpack.c.h.b16 %v5975
    %v6501 = vunpack.c.l.b16 %v5976
    %v6502 = vunpack.c.h.b16 %v5976
    %v6503 = vunpack.c.l.b16 %v5977
    %v6504 = vunpack.c.h.b16 %v5977
    %v6505 = vunpack.c.l.b16 %v5978
    %v6506 = vunpack.c.h.b16 %v5978
    %v6507 = vunpack.c.l.b16 %v5979
    %v6508 = vunpack.c.h.b16 %v5979
    %v6509 = vunpack.c.l.b16 %v5980
    %v6510 = vunpack.c.h.b16 %v5980
    %v6511 = vunpack.c.l.b16 %v5981
    %v6512 = vunpack.c.h.b16 %v5981
    %v6513 = vunpack.c.l.b16 %v5982
    %v6514 = vunpack.c.h.b16 %v5982
    %v6515 = vunpack.c.l.b16 %v5983
    %v6516 = vunpack.c.h.b16 %v5983
    %v6517 = vunpack.c.l.b16 %v5984
    %v6518 = vunpack.c.h.b16 %v5984
    %v6519 = vunpack.c.l.b16 %v5985
    %v6520 = vunpack.c.h.b16 %v5985
    %v6521 = vunpack.c.l.b16 %v5986
    %v6522 = vunpack.c.h.b16 %v5986
    %v6523 = vunpack.c.l.b16 %v5987
    %v6524 = vunpack.c.h.b16 %v5987
    %v6525 = vunpack.c.l.b16 %v5988
    %v6526 = vunpack.c.h.b16 %v5988
    %v6527 = vunpack.c.l.b16 %v5989
    %v6528 = vunpack.c.h.b16 %v5989
    %v6529 = vunpack.c.l.b16 %v5990
    %v6530 = vunpack.c.h.b16 %v5990
    %v6531 = vunpack.c.l.b16 %v5991
    %v6532 = vunpack.c.h.b16 %v5991
    %v6533 = vunpack.c.l.b16 %v5992
    %v6534 = vunpack.c.h.b16 %v5992
    %v6535 = vunpack.c.l.b16 %v5993
    %v6536 = vunpack.c.h.b16 %v5993
    %v6537 = vunpack.c.l.b16 %v5994
    %v6538 = vunpack.c.h.b16 %v5994
    %v6539 = vunpack.c.l.b16 %v5995
    %v6540 = vunpack.c.h.b16 %v5995
    %v6541 = vunpack.c.l.b16 %v5996
    %v6542 = vunpack.c.h.b16 %v5996
    %v6543 = vunpack.c.l.b16 %v5997
    %v6544 = vunpack.c.h.b16 %v5997
    %v6545 = vunpack.c.l.b16 %v5998
    %v6546 = vunpack.c.h.b16 %v5998
    %v6547 = vunpack.c.l.b16 %v5999
    %v6548 = vunpack.c.h.b16 %v5999
    %v6549 = vunpack.c.l.b16 %v6000
    %v6550 = vunpack.c.h.b16 %v6000
    %v6551 = vunpack.c.l.b16 %v6001
    %v6552 = vunpack.c.h.b16 %v6001
    %v6553 = vunpack.c.l.b16 %v6002
    %v6554 = vunpack.c.h.b16 %v6002
    %v6555 = vunpack.c.l.b16 %v6003
    %v6556 = vunpack.c.h.b16 %v6003
    %v6557 = vunpack.c.l.b16 %v6004
    %v6558 = vunpack.c.h.b16 %v6004
    %v6559 = vunpack.c.l.b16 %v6005
    %v6560 = vunpack.c.h.b16 %v6005
    %v6561 = vunpack.c.l.b16 %v6006
    %v6562 = vunpack.c.h.b16 %v6006
    %v6563 = vunpack.c.l.b16 %v6007
    %v6564 = vunpack.c.h.b16 %v6007
    %v6565 = vunpack.c.l.b16 %v6008
    %v6566 = vunpack.c.h.b16 %v6008
    %v6567 = vunpack.c.l.b16 %v6009
    %v6568 = vunpack.c.h.b16 %v6009
    %v6569 = vunpack.c.l.b16 %v6010
    %v6570 = vunpack.c.h.b16 %v6010
    %v6571 = vunpack.c.l.b16 %v6011
    %v6572 = vunpack.c.h.b16 %v6011
    %v6573 = vunpack.c.l.b16 %v6012
    %v6574 = vunpack.c.h.b16 %v6012
    %v6575 = vunpack.c.l.b16 %v6013
    %v6576 = vunpack.c.h.b16 %v6013
    %v6577 = vunpack.c.l.b16 %v6014
    %v6578 = vunpack.c.h.b16 %v6014
    %v6579 = vunpack.c.l.b16 %v6015
    %v6580 = vunpack.c.h.b16 %v6015
    %v6581 = vunpack.c.l.b16 %v6016
    %v6582 = vunpack.c.h.b16 %v6016
    %v6583 = vunpack.c.l.b16 %v6017
    %v6584 = vunpack.c.h.b16 %v6017
    %v6585 = vunpack.c.l.b16 %v6018
    %v6586 = vunpack.c.h.b16 %v6018
    %v6587 = vunpack.c.l.b16 %v6019
    %v6588 = vunpack.c.h.b16 %v6019
    %v6589 = vunpack.c.l.b16 %v6020
    %v6590 = vunpack.c.h.b16 %v6020
    %v6591 = vunpack.c.l.b16 %v6021
    %v6592 = vunpack.c.h.b16 %v6021
    %v6593 = vunpack.c.l.b16 %v6022
    %v6594 = vunpack.c.h.b16 %v6022
    %v6595 = vunpack.c.l.b16 %v6023
    %v6596 = vunpack.c.h.b16 %v6023
    %v6597 = vunpack.c.l.b16 %v6024
    %v6598 = vunpack.c.h.b16 %v6024
    %v6599 = vunpack.c.l.b16 %v6025
    %v6600 = vunpack.c.h.b16 %v6025
    %v6601 = vunpack.c.l.b16 %v6026
    %v6602 = vunpack.c.h.b16 %v6026
    %v6603 = vunpack.c.l.b16 %v6027
    %v6604 = vunpack.c.h.b16 %v6027
    %v6605 = vunpack.c.l.b16 %v6028
    %v6606 = vunpack.c.h.b16 %v6028
    %v6607 = vunpack.c.l.b16 %v6029
    %v6608 = vunpack.c.h.b16 %v6029
    %v6609 = vunpack.c.l.b16 %v6030
    %v6610 = vunpack.c.h.b16 %v6030
    %v6611 = vunpack.c.l.b16 %v6031
    %v6612 = vunpack.c.h.b16 %v6031
    %v6613 = vunpack.c.l.b16 %v6032
    %v6614 = vunpack.c.h.b16 %v6032
    %v6615 = vunpack.c.l.b16 %v6033
    %v6616 = vunpack.c.h.b16 %v6033
    %v6617 = vunpack.c.l.b16 %v6034
    %v6618 = vunpack.c.h.b16 %v6034
    %v6619 = vunpack.c.l.b16 %v6035
    %v6620 = vunpack.c.h.b16 %v6035
    %v6621 = vunpack.c.l.b16 %v6036
    %v6622 = vunpack.c.h.b16 %v6036
    %v6623 = vunpack.c.l.b16 %v6037
    %v6624 = vunpack.c.h.b16 %v6037
    %v6625 = vunpack.c.l.b16 %v6038
    %v6626 = vunpack.c.h.b16 %v6038
    %v6627 = vunpack.c.l.b16 %v6039
    %v6628 = vunpack.c.h.b16 %v6039
    %v6629 = vunpack.c.l.b16 %v6040
    %v6630 = vunpack.c.h.b16 %v6040
    %v6631 = vunpack.c.l.b16 %v6041
    %v6632 = vunpack.c.h.b16 %v6041
    %v6633 = vunpack.c.l.b16 %v6042
    %v6634 = vunpack.c.h.b16 %v6042
    %v6635 = vunpack.c.l.b16 %v6043
    %v6636 = vunpack.c.h.b16 %v6043
    %v6637 = vunpack.c.l.b16 %v6044
    %v6638 = vunpack.c.h.b16 %v6044
    %v6639 = vunpack.c.l.b16 %v6045
    %v6640 = vunpack.c.h.b16 %v6045
    %v6641 = vunpack.c.l.b16 %v6046
    %v6642 = vunpack.c.h.b16 %v6046
    %v6643 = vunpack.c.l.b16 %v6047
    %v6644 = vunpack.c.h.b16 %v6047
    %v6645 = vunpack.c.l.b16 %v6048
    %v6646 = vunpack.c.h.b16 %v6048
    %v6647 = vunpack.c.l.b16 %v6049
    %v6648 = vunpack.c.h.b16 %v6049
    %v6649 = vunpack.c.l.b16 %v6050
    %v6650 = vunpack.c.h.b16 %v6050
    %v6651 = vpack.c.b16 %v6259, %v6251
    %v6652 = vpack.c.b16 %v6260, %v6252
    %v6653 = vpack.c.b16 %v6261, %v6253
    %v6654 = vpack.c.b16 %v6262, %v6254
    %v6655 = vpack.c.b16 %v6263, %v6255
    %v6656 = vpack.c.b16 %v6264, %v6256
    %v6657 = vpack.c.b16 %v6265, %v6257
    %v6658 = vpack.c.b16 %v6266, %v6258
    %v6659 = vpack.c.b16 %v6275, %v6267
    %v6660 = vpack.c.b16 %v6276, %v6268
    %v6661 = vpack.c.b16 %v6277, %v6269
    %v6662 = vpack.c.b16 %v6278, %v6270
    %v6663 = vpack.c.b16 %v6279, %v6271
    %v6664 = vpack.c.b16 %v6280, %v6272
    %v6665 = vpack.c.b16 %v6281, %v6273
    %v6666 = vpack.c.b16 %v6282, %v6274
    %v6667 = vpack.c.b16 %v6291, %v6283
    %v6668 = vpack.c.b16 %v6292, %v6284
    %v6669 = vpack.c.b16 %v6293, %v6285
    %v6670 = vpack.c.b16 %v6294, %v6286
    %v6671 = vpack.c.b16 %v6295, %v6287
    %v6672 = vpack.c.b16 %v6296, %v6288
    %v6673 = vpack.c.b16 %v6297, %v6289
    %v6674 = vpack.c.b16 %v6298, %v6290
    %v6675 = vpack.c.b16 %v6307, %v6299
    %v6676 = vpack.c.b16 %v6308, %v6300
    %v6677 = vpack.c.b16 %v6309, %v6301
    %v6678 = vpack.c.b16 %v6310, %v6302
    %v6679 = vpack.c.b16 %v6311, %v6303
    %v6680 = vpack.c.b16 %v6312, %v6304
    %v6681 = vpack.c.b16 %v6313, %v6305
    %v6682 = vpack.c.b16 %v6314, %v6306
    %v6683 = vpack.c.b16 %v6323, %v6315
    %v6684 = vpack.c.b16 %v6324, %v6316
    %v6685 = vpack.c.b16 %v6325, %v6317
    %v6686 = vpack.c.b16 %v6326, %v6318
    %v6687 = vpack.c.b16 %v6327, %v6319
    %v6688 = vpack.c.b16 %v6328, %v6320
    %v6689 = vpack.c.b16 %v6329, %v6321
    %v6690 = vpack.c.b16 %v6330, %v6322
    %v6691 = vpack.c.b16 %v6339, %v6331
    %v6692 = vpack.c.b16 %v6340, %v6332
    %v6693 = vpack.c.b16 %v6341, %v6333
    %v6694 = vpack.c.b16 %v6342, %v6334
    %v6695 = vpack.c.b16 %v6343, %v6335
    %v6696 = vpack.c.b16 %v6344, %v6336
    %v6697 = vpack.c.b16 %v6345, %v6337
    %v6698 = vpack.c.b16 %v6346, %v6338
    %v6699 = vpack.c.b16 %v6355, %v6347
    %v6700 = vpack.c.b16 %v6356, %v6348
    %v6701 = vpack.c.b16 %v6357, %v6349
    %v6702 = vpack.c.b16 %v6358, %v6350
    %v6703 = vpack.c.b16 %v6359, %v6351
    %v6704 = vpack.c.b16 %v6360, %v6352
    %v6705 = vpack.c.b16 %v6361, %v6353
    %v6706 = vpack.c.b16 %v6362, %v6354
    %v6707 = vpack.c.b16 %v6371, %v6363
    %v6708 = vpack.c.b16 %v6372, %v6364
    %v6709 = vpack.c.b16 %v6373, %v6365
    %v6710 = vpack.c.b16 %v6374, %v6366
    %v6711 = vpack.c.b16 %v6375, %v6367
    %v6712 = vpack.c.b16 %v6376, %v6368
    %v6713 = vpack.c.b16 %v6377, %v6369
    %v6714 = vpack.c.b16 %v6378, %v6370
    %v6715 = vpack.c.b16 %v6387, %v6379
    %v6716 = vpack.c.b16 %v6388, %v6380
    %v6717 = vpack.c.b16 %v6389, %v6381
    %v6718 = vpack.c.b16 %v6390, %v6382
    %v6719 = vpack.c.b16 %v6391, %v6383
    %v6720 = vpack.c.b16 %v6392, %v6384
    %v6721 = vpack.c.b16 %v6393, %v6385
    %v6722 = vpack.c.b16 %v6394, %v6386
    %v6723 = vpack.c.b16 %v6403, %v6395
    %v6724 = vpack.c.b16 %v6404, %v6396
    %v6725 = vpack.c.b16 %v6405, %v6397
    %v6726 = vpack.c.b16 %v6406, %v6398
    %v6727 = vpack.c.b16 %v6407, %v6399
    %v6728 = vpack.c.b16 %v6408, %v6400
    %v6729 = vpack.c.b16 %v6409, %v6401
    %v6730 = vpack.c.b16 %v6410, %v6402
    %v6731 = vpack.c.b16 %v6419, %v6411
    %v6732 = vpack.c.b16 %v6420, %v6412
    %v6733 = vpack.c.b16 %v6421, %v6413
    %v6734 = vpack.c.b16 %v6422, %v6414
    %v6735 = vpack.c.b16 %v6423, %v6415
    %v6736 = vpack.c.b16 %v6424, %v6416
    %v6737 = vpack.c.b16 %v6425, %v6417
    %v6738 = vpack.c.b16 %v6426, %v6418
    %v6739 = vpack.c.b16 %v6435, %v6427
    %v6740 = vpack.c.b16 %v6436, %v6428
    %v6741 = vpack.c.b16 %v6437, %v6429
    %v6742 = vpack.c.b16 %v6438, %v6430
    %v6743 = vpack.c.b16 %v6439, %v6431
    %v6744 = vpack.c.b16 %v6440, %v6432
    %v6745 = vpack.c.b16 %v6441, %v6433
    %v6746 = vpack.c.b16 %v6442, %v6434
    %v6747 = vpack.c.b16 %v6451, %v6443
    %v6748 = vpack.c.b16 %v6452, %v6444
    %v6749 = vpack.c.b16 %v6453, %v6445
    %v6750 = vpack.c.b16 %v6454, %v6446
    %v6751 = vpack.c.b16 %v6455, %v6447
    %v6752 = vpack.c.b16 %v6456, %v6448
    %v6753 = vpack.c.b16 %v6457, %v6449
    %v6754 = vpack.c.b16 %v6458, %v6450
    %v6755 = vpack.c.b16 %v6467, %v6459
    %v6756 = vpack.c.b16 %v6468, %v6460
    %v6757 = vpack.c.b16 %v6469, %v6461
    %v6758 = vpack.c.b16 %v6470, %v6462
    %v6759 = vpack.c.b16 %v6471, %v6463
    %v6760 = vpack.c.b16 %v6472, %v6464
    %v6761 = vpack.c.b16 %v6473, %v6465
    %v6762 = vpack.c.b16 %v6474, %v6466
    %v6763 = vpack.c.b16 %v6483, %v6475
    %v6764 = vpack.c.b16 %v6484, %v6476
    %v6765 = vpack.c.b16 %v6485, %v6477
    %v6766 = vpack.c.b16 %v6486, %v6478
    %v6767 = vpack.c.b16 %v6487, %v6479
    %v6768 = vpack.c.b16 %v6488, %v6480
    %v6769 = vpack.c.b16 %v6489, %v6481
    %v6770 = vpack.c.b16 %v6490, %v6482
    %v6771 = vpack.c.b16 %v6499, %v6491
    %v6772 = vpack.c.b16 %v6500, %v6492
    %v6773 = vpack.c.b16 %v6501, %v6493
    %v6774 = vpack.c.b16 %v6502, %v6494
    %v6775 = vpack.c.b16 %v6503, %v6495
    %v6776 = vpack.c.b16 %v6504, %v6496
    %v6777 = vpack.c.b16 %v6505, %v6497
    %v6778 = vpack.c.b16 %v6506, %v6498
    %v6779 = vpack.c.b16 %v6515, %v6507
    %v6780 = vpack.c.b16 %v6516, %v6508
    %v6781 = vpack.c.b16 %v6517, %v6509
    %v6782 = vpack.c.b16 %v6518, %v6510
    %v6783 = vpack.c.b16 %v6519, %v6511
    %v6784 = vpack.c.b16 %v6520, %v6512
    %v6785 = vpack.c.b16 %v6521, %v6513
    %v6786 = vpack.c.b16 %v6522, %v6514
    %v6787 = vpack.c.b16 %v6531, %v6523
    %v6788 = vpack.c.b16 %v6532, %v6524
    %v6789 = vpack.c.b16 %v6533, %v6525
    %v6790 = vpack.c.b16 %v6534, %v6526
    %v6791 = vpack.c.b16 %v6535, %v6527
    %v6792 = vpack.c.b16 %v6536, %v6528
    %v6793 = vpack.c.b16 %v6537, %v6529
    %v6794 = vpack.c.b16 %v6538, %v6530
    %v6795 = vpack.c.b16 %v6547, %v6539
    %v6796 = vpack.c.b16 %v6548, %v6540
    %v6797 = vpack.c.b16 %v6549, %v6541
    %v6798 = vpack.c.b16 %v6550, %v6542
    %v6799 = vpack.c.b16 %v6551, %v6543
    %v6800 = vpack.c.b16 %v6552, %v6544
    %v6801 = vpack.c.b16 %v6553, %v6545
    %v6802 = vpack.c.b16 %v6554, %v6546
    %v6803 = vpack.c.b16 %v6563, %v6555
    %v6804 = vpack.c.b16 %v6564, %v6556
    %v6805 = vpack.c.b16 %v6565, %v6557
    %v6806 = vpack.c.b16 %v6566, %v6558
    %v6807 = vpack.c.b16 %v6567, %v6559
    %v6808 = vpack.c.b16 %v6568, %v6560
    %v6809 = vpack.c.b16 %v6569, %v6561
    %v6810 = vpack.c.b16 %v6570, %v6562
    %v6811 = vpack.c.b16 %v6579, %v6571
    %v6812 = vpack.c.b16 %v6580, %v6572
    %v6813 = vpack.c.b16 %v6581, %v6573
    %v6814 = vpack.c.b16 %v6582, %v6574
    %v6815 = vpack.c.b16 %v6583, %v6575
    %v6816 = vpack.c.b16 %v6584, %v6576
    %v6817 = vpack.c.b16 %v6585, %v6577
    %v6818 = vpack.c.b16 %v6586, %v6578
    %v6819 = vpack.c.b16 %v6595, %v6587
    %v6820 = vpack.c.b16 %v6596, %v6588
    %v6821 = vpack.c.b16 %v6597, %v6589
    %v6822 = vpack.c.b16 %v6598, %v6590
    %v6823 = vpack.c.b16 %v6599, %v6591
    %v6824 = vpack.c.b16 %v6600, %v6592
    %v6825 = vpack.c.b16 %v6601, %v6593
    %v6826 = vpack.c.b16 %v6602, %v6594
    %v6827 = vpack.c.b16 %v6611, %v6603
    %v6828 = vpack.c.b16 %v6612, %v6604
    %v6829 = vpack.c.b16 %v6613, %v6605
    %v6830 = vpack.c.b16 %v6614, %v6606
    %v6831 = vpack.c.b16 %v6615, %v6607
    %v6832 = vpack.c.b16 %v6616, %v6608
    %v6833 = vpack.c.b16 %v6617, %v6609
    %v6834 = vpack.c.b16 %v6618, %v6610
    %v6835 = vpack.c.b16 %v6627, %v6619
    %v6836 = vpack.c.b16 %v6628, %v6620
    %v6837 = vpack.c.b16 %v6629, %v6621
    %v6838 = vpack.c.b16 %v6630, %v6622
    %v6839 = vpack.c.b16 %v6631, %v6623
    %v6840 = vpack.c.b16 %v6632, %v6624
    %v6841 = vpack.c.b16 %v6633, %v6625
    %v6842 = vpack.c.b16 %v6634, %v6626
    %v6843 = vpack.c.b16 %v6643, %v6635
    %v6844 = vpack.c.b16 %v6644, %v6636
    %v6845 = vpack.c.b16 %v6645, %v6637
    %v6846 = vpack.c.b16 %v6646, %v6638
    %v6847 = vpack.c.b16 %v6647, %v6639
    %v6848 = vpack.c.b16 %v6648, %v6640
    %v6849 = vpack.c.b16 %v6649, %v6641
    %v6850 = vpack.c.b16 %v6650, %v6642
    %v7052 = vsel %vm3673, %v5849, 0
    %7054 = vmatpush.bf16.msra.mxu0 %v6707
    %7055 = vmatpush.bf16.msra.mxu0 %v6699
    %7056 = vmatpush.bf16.msra.mxu0 %v6691
    %7057 = vmatpush.bf16.msra.mxu0 %v6683
    %7058 = vmatpush.bf16.msra.mxu0 %v6675
    %7059 = vmatpush.bf16.msra.mxu0 %v6667
    %7060 = vmatpush.bf16.msra.mxu0 %v6659
    %7061 = vmatpush.bf16.msra.mxu0 %v6651
    %7062 = vmatmul.bf16.gmra.mxu0 %v5846
    %v7063 = vpop.f32.mrf.mxu0
    %v7064 = vadd.f32 0.0, %v7063
    %v7065 = vpop.f32.mrf.mxu0
    %v7066 = vadd.f32 0.0, %v7065
    %7067 = vdwg.mxu0
    %7068 = vmatpush.bf16.msra.mxu0 %v6771
    %7069 = vmatpush.bf16.msra.mxu0 %v6763
    %7070 = vmatpush.bf16.msra.mxu0 %v6755
    %7071 = vmatpush.bf16.msra.mxu0 %v6747
    %7072 = vmatpush.bf16.msra.mxu0 %v6739
    %7073 = vmatpush.bf16.msra.mxu0 %v6731
    %7074 = vmatpush.bf16.msra.mxu0 %v6723
    %7075 = vmatpush.bf16.msra.mxu0 %v6715
    %7076 = vmatmul.bf16.gmra.mxu0 %v5847
    %v7077 = vpop.f32.mrf.mxu0
    %v7078 = vadd.f32 %v7064, %v7077
    %v7079 = vpop.f32.mrf.mxu0
    %v7080 = vadd.f32 %v7066, %v7079
    %7081 = vdwg.mxu0
    %7082 = vmatpush.bf16.msra.mxu0 %v6835
    %7083 = vmatpush.bf16.msra.mxu0 %v6827
    %7084 = vmatpush.bf16.msra.mxu0 %v6819
    %7085 = vmatpush.bf16.msra.mxu0 %v6811
    %7086 = vmatpush.bf16.msra.mxu0 %v6803
    %7087 = vmatpush.bf16.msra.mxu0 %v6795
    %7088 = vmatpush.bf16.msra.mxu0 %v6787
    %7089 = vmatpush.bf16.msra.mxu0 %v6779
    %7090 = vmatmul.bf16.gmra.mxu0 %v5848
    %v7091 = vpop.f32.mrf.mxu0
    %v7092 = vadd.f32 %v7078, %v7091
    %v7093 = vpop.f32.mrf.mxu0
    %v7094 = vadd.f32 %v7080, %v7093
    %7095 = vdwg.mxu0
    %7096 = vmatpush.bf16.msra.mxu0 0
    %7097 = vmatpush.bf16.msra.mxu0 0
    %7098 = vmatpush.bf16.msra.mxu0 0
    %7099 = vmatpush.bf16.msra.mxu0 0
    %7100 = vmatpush.bf16.msra.mxu0 0
    %7101 = vmatpush.bf16.msra.mxu0 0
    %7102 = vmatpush.bf16.msra.mxu0 0
    %7103 = vmatpush.bf16.msra.mxu0 %v6843
    %7104 = vmatmul.bf16.gmra.mxu0 %v7052
    %v7105 = vpop.f32.mrf.mxu0
    %v7106 = vadd.f32 %v7092, %v7105
    %v7107 = vpop.f32.mrf.mxu0
    %v7108 = vadd.f32 %v7094, %v7107
    %7109 = vdwg.mxu0
    %7110 = vmatpush.bf16.msra.mxu0 %v6708
    %7111 = vmatpush.bf16.msra.mxu0 %v6700
    %7112 = vmatpush.bf16.msra.mxu0 %v6692
    %7113 = vmatpush.bf16.msra.mxu0 %v6684
    %7114 = vmatpush.bf16.msra.mxu0 %v6676
    %7115 = vmatpush.bf16.msra.mxu0 %v6668
    %7116 = vmatpush.bf16.msra.mxu0 %v6660
    %7117 = vmatpush.bf16.msra.mxu0 %v6652
    %7118 = vmatmul.bf16.gmra.mxu0 %v5846
    %v7119 = vpop.f32.mrf.mxu0
    %v7120 = vadd.f32 0.0, %v7119
    %v7121 = vpop.f32.mrf.mxu0
    %v7122 = vadd.f32 0.0, %v7121
    %7123 = vdwg.mxu0
    %7124 = vmatpush.bf16.msra.mxu0 %v6772
    %7125 = vmatpush.bf16.msra.mxu0 %v6764
    %7126 = vmatpush.bf16.msra.mxu0 %v6756
    %7127 = vmatpush.bf16.msra.mxu0 %v6748
    %7128 = vmatpush.bf16.msra.mxu0 %v6740
    %7129 = vmatpush.bf16.msra.mxu0 %v6732
    %7130 = vmatpush.bf16.msra.mxu0 %v6724
    %7131 = vmatpush.bf16.msra.mxu0 %v6716
    %7132 = vmatmul.bf16.gmra.mxu0 %v5847
    %v7133 = vpop.f32.mrf.mxu0
    %v7134 = vadd.f32 %v7120, %v7133
    %v7135 = vpop.f32.mrf.mxu0
    %v7136 = vadd.f32 %v7122, %v7135
    %7137 = vdwg.mxu0
    %7138 = vmatpush.bf16.msra.mxu0 %v6836
    %7139 = vmatpush.bf16.msra.mxu0 %v6828
    %7140 = vmatpush.bf16.msra.mxu0 %v6820
    %7141 = vmatpush.bf16.msra.mxu0 %v6812
    %7142 = vmatpush.bf16.msra.mxu0 %v6804
    %7143 = vmatpush.bf16.msra.mxu0 %v6796
    %7144 = vmatpush.bf16.msra.mxu0 %v6788
    %7145 = vmatpush.bf16.msra.mxu0 %v6780
    %7146 = vmatmul.bf16.gmra.mxu0 %v5848
    %v7147 = vpop.f32.mrf.mxu0
    %v7148 = vadd.f32 %v7134, %v7147
    %v7149 = vpop.f32.mrf.mxu0
    %v7150 = vadd.f32 %v7136, %v7149
    %7151 = vdwg.mxu0
    %7152 = vmatpush.bf16.msra.mxu0 0
    %7153 = vmatpush.bf16.msra.mxu0 0
    %7154 = vmatpush.bf16.msra.mxu0 0
    %7155 = vmatpush.bf16.msra.mxu0 0
    %7156 = vmatpush.bf16.msra.mxu0 0
    %7157 = vmatpush.bf16.msra.mxu0 0
    %7158 = vmatpush.bf16.msra.mxu0 0
    %7159 = vmatpush.bf16.msra.mxu0 %v6844
    %7160 = vmatmul.bf16.gmra.mxu0 %v7052
    %v7161 = vpop.f32.mrf.mxu0
    %v7162 = vadd.f32 %v7148, %v7161
    %v7163 = vpop.f32.mrf.mxu0
    %v7164 = vadd.f32 %v7150, %v7163
    %7165 = vdwg.mxu0
    %7166 = vmatpush.bf16.msra.mxu0 %v6709
    %7167 = vmatpush.bf16.msra.mxu0 %v6701
    %7168 = vmatpush.bf16.msra.mxu0 %v6693
    %7169 = vmatpush.bf16.msra.mxu0 %v6685
    %7170 = vmatpush.bf16.msra.mxu0 %v6677
    %7171 = vmatpush.bf16.msra.mxu0 %v6669
    %7172 = vmatpush.bf16.msra.mxu0 %v6661
    %7173 = vmatpush.bf16.msra.mxu0 %v6653
    %7174 = vmatmul.bf16.gmra.mxu0 %v5846
    %v7175 = vpop.f32.mrf.mxu0
    %v7176 = vadd.f32 0.0, %v7175
    %v7177 = vpop.f32.mrf.mxu0
    %v7178 = vadd.f32 0.0, %v7177
    %7179 = vdwg.mxu0
    %7180 = vmatpush.bf16.msra.mxu0 %v6773
    %7181 = vmatpush.bf16.msra.mxu0 %v6765
    %7182 = vmatpush.bf16.msra.mxu0 %v6757
    %7183 = vmatpush.bf16.msra.mxu0 %v6749
    %7184 = vmatpush.bf16.msra.mxu0 %v6741
    %7185 = vmatpush.bf16.msra.mxu0 %v6733
    %7186 = vmatpush.bf16.msra.mxu0 %v6725
    %7187 = vmatpush.bf16.msra.mxu0 %v6717
    %7188 = vmatmul.bf16.gmra.mxu0 %v5847
    %v7189 = vpop.f32.mrf.mxu0
    %v7190 = vadd.f32 %v7176, %v7189
    %v7191 = vpop.f32.mrf.mxu0
    %v7192 = vadd.f32 %v7178, %v7191
    %7193 = vdwg.mxu0
    %7194 = vmatpush.bf16.msra.mxu0 %v6837
    %7195 = vmatpush.bf16.msra.mxu0 %v6829
    %7196 = vmatpush.bf16.msra.mxu0 %v6821
    %7197 = vmatpush.bf16.msra.mxu0 %v6813
    %7198 = vmatpush.bf16.msra.mxu0 %v6805
    %7199 = vmatpush.bf16.msra.mxu0 %v6797
    %7200 = vmatpush.bf16.msra.mxu0 %v6789
    %7201 = vmatpush.bf16.msra.mxu0 %v6781
    %7202 = vmatmul.bf16.gmra.mxu0 %v5848
    %v7203 = vpop.f32.mrf.mxu0
    %v7204 = vadd.f32 %v7190, %v7203
    %v7205 = vpop.f32.mrf.mxu0
    %v7206 = vadd.f32 %v7192, %v7205
    %7207 = vdwg.mxu0
    %7208 = vmatpush.bf16.msra.mxu0 0
    %7209 = vmatpush.bf16.msra.mxu0 0
    %7210 = vmatpush.bf16.msra.mxu0 0
    %7211 = vmatpush.bf16.msra.mxu0 0
    %7212 = vmatpush.bf16.msra.mxu0 0
    %7213 = vmatpush.bf16.msra.mxu0 0
    %7214 = vmatpush.bf16.msra.mxu0 0
    %7215 = vmatpush.bf16.msra.mxu0 %v6845
    %7216 = vmatmul.bf16.gmra.mxu0 %v7052
    %v7217 = vpop.f32.mrf.mxu0
    %v7218 = vadd.f32 %v7204, %v7217
    %v7219 = vpop.f32.mrf.mxu0
    %v7220 = vadd.f32 %v7206, %v7219
    %7221 = vdwg.mxu0
    %7222 = vmatpush.bf16.msra.mxu0 %v6710
    %7223 = vmatpush.bf16.msra.mxu0 %v6702
    %7224 = vmatpush.bf16.msra.mxu0 %v6694
    %7225 = vmatpush.bf16.msra.mxu0 %v6686
    %7226 = vmatpush.bf16.msra.mxu0 %v6678
    %7227 = vmatpush.bf16.msra.mxu0 %v6670
    %7228 = vmatpush.bf16.msra.mxu0 %v6662
    %7229 = vmatpush.bf16.msra.mxu0 %v6654
    %7230 = vmatmul.bf16.gmra.mxu0 %v5846
    %v7231 = vpop.f32.mrf.mxu0
    %v7232 = vadd.f32 0.0, %v7231
    %v7233 = vpop.f32.mrf.mxu0
    %v7234 = vadd.f32 0.0, %v7233
    %7235 = vdwg.mxu0
    %7236 = vmatpush.bf16.msra.mxu0 %v6774
    %7237 = vmatpush.bf16.msra.mxu0 %v6766
    %7238 = vmatpush.bf16.msra.mxu0 %v6758
    %7239 = vmatpush.bf16.msra.mxu0 %v6750
    %7240 = vmatpush.bf16.msra.mxu0 %v6742
    %7241 = vmatpush.bf16.msra.mxu0 %v6734
    %7242 = vmatpush.bf16.msra.mxu0 %v6726
    %7243 = vmatpush.bf16.msra.mxu0 %v6718
    %7244 = vmatmul.bf16.gmra.mxu0 %v5847
    %v7245 = vpop.f32.mrf.mxu0
    %v7246 = vadd.f32 %v7232, %v7245
    %v7247 = vpop.f32.mrf.mxu0
    %v7248 = vadd.f32 %v7234, %v7247
    %7249 = vdwg.mxu0
    %7250 = vmatpush.bf16.msra.mxu0 %v6838
    %7251 = vmatpush.bf16.msra.mxu0 %v6830
    %7252 = vmatpush.bf16.msra.mxu0 %v6822
    %7253 = vmatpush.bf16.msra.mxu0 %v6814
    %7254 = vmatpush.bf16.msra.mxu0 %v6806
    %7255 = vmatpush.bf16.msra.mxu0 %v6798
    %7256 = vmatpush.bf16.msra.mxu0 %v6790
    %7257 = vmatpush.bf16.msra.mxu0 %v6782
    %7258 = vmatmul.bf16.gmra.mxu0 %v5848
    %v7259 = vpop.f32.mrf.mxu0
    %v7260 = vadd.f32 %v7246, %v7259
    %v7261 = vpop.f32.mrf.mxu0
    %v7262 = vadd.f32 %v7248, %v7261
    %7263 = vdwg.mxu0
    %7264 = vmatpush.bf16.msra.mxu0 0
    %7265 = vmatpush.bf16.msra.mxu0 0
    %7266 = vmatpush.bf16.msra.mxu0 0
    %7267 = vmatpush.bf16.msra.mxu0 0
    %7268 = vmatpush.bf16.msra.mxu0 0
    %7269 = vmatpush.bf16.msra.mxu0 0
    %7270 = vmatpush.bf16.msra.mxu0 0
    %7271 = vmatpush.bf16.msra.mxu0 %v6846
    %7272 = vmatmul.bf16.gmra.mxu0 %v7052
    %v7273 = vpop.f32.mrf.mxu0
    %v7274 = vadd.f32 %v7260, %v7273
    %v7275 = vpop.f32.mrf.mxu0
    %v7276 = vadd.f32 %v7262, %v7275
    %7277 = vdwg.mxu0
    %7278 = vmatpush.bf16.msra.mxu0 %v6711
    %7279 = vmatpush.bf16.msra.mxu0 %v6703
    %7280 = vmatpush.bf16.msra.mxu0 %v6695
    %7281 = vmatpush.bf16.msra.mxu0 %v6687
    %7282 = vmatpush.bf16.msra.mxu0 %v6679
    %7283 = vmatpush.bf16.msra.mxu0 %v6671
    %7284 = vmatpush.bf16.msra.mxu0 %v6663
    %7285 = vmatpush.bf16.msra.mxu0 %v6655
    %7286 = vmatmul.bf16.gmra.mxu0 %v5846
    %v7287 = vpop.f32.mrf.mxu0
    %v7288 = vadd.f32 0.0, %v7287
    %v7289 = vpop.f32.mrf.mxu0
    %v7290 = vadd.f32 0.0, %v7289
    %7291 = vdwg.mxu0
    %7292 = vmatpush.bf16.msra.mxu0 %v6775
    %7293 = vmatpush.bf16.msra.mxu0 %v6767
    %7294 = vmatpush.bf16.msra.mxu0 %v6759
    %7295 = vmatpush.bf16.msra.mxu0 %v6751
    %7296 = vmatpush.bf16.msra.mxu0 %v6743
    %7297 = vmatpush.bf16.msra.mxu0 %v6735
    %7298 = vmatpush.bf16.msra.mxu0 %v6727
    %7299 = vmatpush.bf16.msra.mxu0 %v6719
    %7300 = vmatmul.bf16.gmra.mxu0 %v5847
    %v7301 = vpop.f32.mrf.mxu0
    %v7302 = vadd.f32 %v7288, %v7301
    %v7303 = vpop.f32.mrf.mxu0
    %v7304 = vadd.f32 %v7290, %v7303
    %7305 = vdwg.mxu0
    %7306 = vmatpush.bf16.msra.mxu0 %v6839
    %7307 = vmatpush.bf16.msra.mxu0 %v6831
    %7308 = vmatpush.bf16.msra.mxu0 %v6823
    %7309 = vmatpush.bf16.msra.mxu0 %v6815
    %7310 = vmatpush.bf16.msra.mxu0 %v6807
    %7311 = vmatpush.bf16.msra.mxu0 %v6799
    %7312 = vmatpush.bf16.msra.mxu0 %v6791
    %7313 = vmatpush.bf16.msra.mxu0 %v6783
    %7314 = vmatmul.bf16.gmra.mxu0 %v5848
    %v7315 = vpop.f32.mrf.mxu0
    %v7316 = vadd.f32 %v7302, %v7315
    %v7317 = vpop.f32.mrf.mxu0
    %v7318 = vadd.f32 %v7304, %v7317
    %7319 = vdwg.mxu0
    %7320 = vmatpush.bf16.msra.mxu0 0
    %7321 = vmatpush.bf16.msra.mxu0 0
    %7322 = vmatpush.bf16.msra.mxu0 0
    %7323 = vmatpush.bf16.msra.mxu0 0
    %7324 = vmatpush.bf16.msra.mxu0 0
    %7325 = vmatpush.bf16.msra.mxu0 0
    %7326 = vmatpush.bf16.msra.mxu0 0
    %7327 = vmatpush.bf16.msra.mxu0 %v6847
    %7328 = vmatmul.bf16.gmra.mxu0 %v7052
    %v7329 = vpop.f32.mrf.mxu0
    %v7330 = vadd.f32 %v7316, %v7329
    %v7331 = vpop.f32.mrf.mxu0
    %v7332 = vadd.f32 %v7318, %v7331
    %7333 = vdwg.mxu0
    %7334 = vmatpush.bf16.msra.mxu0 %v6712
    %7335 = vmatpush.bf16.msra.mxu0 %v6704
    %7336 = vmatpush.bf16.msra.mxu0 %v6696
    %7337 = vmatpush.bf16.msra.mxu0 %v6688
    %7338 = vmatpush.bf16.msra.mxu0 %v6680
    %7339 = vmatpush.bf16.msra.mxu0 %v6672
    %7340 = vmatpush.bf16.msra.mxu0 %v6664
    %7341 = vmatpush.bf16.msra.mxu0 %v6656
    %7342 = vmatmul.bf16.gmra.mxu0 %v5846
    %v7343 = vpop.f32.mrf.mxu0
    %v7344 = vadd.f32 0.0, %v7343
    %v7345 = vpop.f32.mrf.mxu0
    %v7346 = vadd.f32 0.0, %v7345
    %7347 = vdwg.mxu0
    %7348 = vmatpush.bf16.msra.mxu0 %v6776
    %7349 = vmatpush.bf16.msra.mxu0 %v6768
    %7350 = vmatpush.bf16.msra.mxu0 %v6760
    %7351 = vmatpush.bf16.msra.mxu0 %v6752
    %7352 = vmatpush.bf16.msra.mxu0 %v6744
    %7353 = vmatpush.bf16.msra.mxu0 %v6736
    %7354 = vmatpush.bf16.msra.mxu0 %v6728
    %7355 = vmatpush.bf16.msra.mxu0 %v6720
    %7356 = vmatmul.bf16.gmra.mxu0 %v5847
    %v7357 = vpop.f32.mrf.mxu0
    %v7358 = vadd.f32 %v7344, %v7357
    %v7359 = vpop.f32.mrf.mxu0
    %v7360 = vadd.f32 %v7346, %v7359
    %7361 = vdwg.mxu0
    %7362 = vmatpush.bf16.msra.mxu0 %v6840
    %7363 = vmatpush.bf16.msra.mxu0 %v6832
    %7364 = vmatpush.bf16.msra.mxu0 %v6824
    %7365 = vmatpush.bf16.msra.mxu0 %v6816
    %7366 = vmatpush.bf16.msra.mxu0 %v6808
    %7367 = vmatpush.bf16.msra.mxu0 %v6800
    %7368 = vmatpush.bf16.msra.mxu0 %v6792
    %7369 = vmatpush.bf16.msra.mxu0 %v6784
    %7370 = vmatmul.bf16.gmra.mxu0 %v5848
    %v7371 = vpop.f32.mrf.mxu0
    %v7372 = vadd.f32 %v7358, %v7371
    %v7373 = vpop.f32.mrf.mxu0
    %v7374 = vadd.f32 %v7360, %v7373
    %7375 = vdwg.mxu0
    %7376 = vmatpush.bf16.msra.mxu0 0
    %7377 = vmatpush.bf16.msra.mxu0 0
    %7378 = vmatpush.bf16.msra.mxu0 0
    %7379 = vmatpush.bf16.msra.mxu0 0
    %7380 = vmatpush.bf16.msra.mxu0 0
    %7381 = vmatpush.bf16.msra.mxu0 0
    %7382 = vmatpush.bf16.msra.mxu0 0
    %7383 = vmatpush.bf16.msra.mxu0 %v6848
    %7384 = vmatmul.bf16.gmra.mxu0 %v7052
    %v7385 = vpop.f32.mrf.mxu0
    %v7386 = vadd.f32 %v7372, %v7385
    %v7387 = vpop.f32.mrf.mxu0
    %v7388 = vadd.f32 %v7374, %v7387
    %7389 = vdwg.mxu0
    %7390 = vmatpush.bf16.msra.mxu0 %v6713
    %7391 = vmatpush.bf16.msra.mxu0 %v6705
    %7392 = vmatpush.bf16.msra.mxu0 %v6697
    %7393 = vmatpush.bf16.msra.mxu0 %v6689
    %7394 = vmatpush.bf16.msra.mxu0 %v6681
    %7395 = vmatpush.bf16.msra.mxu0 %v6673
    %7396 = vmatpush.bf16.msra.mxu0 %v6665
    %7397 = vmatpush.bf16.msra.mxu0 %v6657
    %7398 = vmatmul.bf16.gmra.mxu0 %v5846
    %v7399 = vpop.f32.mrf.mxu0
    %v7400 = vadd.f32 0.0, %v7399
    %v7401 = vpop.f32.mrf.mxu0
    %v7402 = vadd.f32 0.0, %v7401
    %7403 = vdwg.mxu0
    %7404 = vmatpush.bf16.msra.mxu0 %v6777
    %7405 = vmatpush.bf16.msra.mxu0 %v6769
    %7406 = vmatpush.bf16.msra.mxu0 %v6761
    %7407 = vmatpush.bf16.msra.mxu0 %v6753
    %7408 = vmatpush.bf16.msra.mxu0 %v6745
    %7409 = vmatpush.bf16.msra.mxu0 %v6737
    %7410 = vmatpush.bf16.msra.mxu0 %v6729
    %7411 = vmatpush.bf16.msra.mxu0 %v6721
    %7412 = vmatmul.bf16.gmra.mxu0 %v5847
    %v7413 = vpop.f32.mrf.mxu0
    %v7414 = vadd.f32 %v7400, %v7413
    %v7415 = vpop.f32.mrf.mxu0
    %v7416 = vadd.f32 %v7402, %v7415
    %7417 = vdwg.mxu0
    %7418 = vmatpush.bf16.msra.mxu0 %v6841
    %7419 = vmatpush.bf16.msra.mxu0 %v6833
    %7420 = vmatpush.bf16.msra.mxu0 %v6825
    %7421 = vmatpush.bf16.msra.mxu0 %v6817
    %7422 = vmatpush.bf16.msra.mxu0 %v6809
    %7423 = vmatpush.bf16.msra.mxu0 %v6801
    %7424 = vmatpush.bf16.msra.mxu0 %v6793
    %7425 = vmatpush.bf16.msra.mxu0 %v6785
    %7426 = vmatmul.bf16.gmra.mxu0 %v5848
    %v7427 = vpop.f32.mrf.mxu0
    %v7428 = vadd.f32 %v7414, %v7427
    %v7429 = vpop.f32.mrf.mxu0
    %v7430 = vadd.f32 %v7416, %v7429
    %7431 = vdwg.mxu0
    %7432 = vmatpush.bf16.msra.mxu0 0
    %7433 = vmatpush.bf16.msra.mxu0 0
    %7434 = vmatpush.bf16.msra.mxu0 0
    %7435 = vmatpush.bf16.msra.mxu0 0
    %7436 = vmatpush.bf16.msra.mxu0 0
    %7437 = vmatpush.bf16.msra.mxu0 0
    %7438 = vmatpush.bf16.msra.mxu0 0
    %7439 = vmatpush.bf16.msra.mxu0 %v6849
    %7440 = vmatmul.bf16.gmra.mxu0 %v7052
    %v7441 = vpop.f32.mrf.mxu0
    %v7442 = vadd.f32 %v7428, %v7441
    %v7443 = vpop.f32.mrf.mxu0
    %v7444 = vadd.f32 %v7430, %v7443
    %7445 = vdwg.mxu0
    %7446 = vmatpush.bf16.msra.mxu0 %v6714
    %7447 = vmatpush.bf16.msra.mxu0 %v6706
    %7448 = vmatpush.bf16.msra.mxu0 %v6698
    %7449 = vmatpush.bf16.msra.mxu0 %v6690
    %7450 = vmatpush.bf16.msra.mxu0 %v6682
    %7451 = vmatpush.bf16.msra.mxu0 %v6674
    %7452 = vmatpush.bf16.msra.mxu0 %v6666
    %7453 = vmatpush.bf16.msra.mxu0 %v6658
    %7454 = vmatmul.bf16.gmra.mxu0 %v5846
    %v7455 = vpop.f32.mrf.mxu0
    %v7456 = vadd.f32 0.0, %v7455
    %v7457 = vpop.f32.mrf.mxu0
    %v7458 = vadd.f32 0.0, %v7457
    %7459 = vdwg.mxu0
    %7460 = vmatpush.bf16.msra.mxu0 %v6778
    %7461 = vmatpush.bf16.msra.mxu0 %v6770
    %7462 = vmatpush.bf16.msra.mxu0 %v6762
    %7463 = vmatpush.bf16.msra.mxu0 %v6754
    %7464 = vmatpush.bf16.msra.mxu0 %v6746
    %7465 = vmatpush.bf16.msra.mxu0 %v6738
    %7466 = vmatpush.bf16.msra.mxu0 %v6730
    %7467 = vmatpush.bf16.msra.mxu0 %v6722
    %7468 = vmatmul.bf16.gmra.mxu0 %v5847
    %v7469 = vpop.f32.mrf.mxu0
    %v7470 = vadd.f32 %v7456, %v7469
    %v7471 = vpop.f32.mrf.mxu0
    %v7472 = vadd.f32 %v7458, %v7471
    %7473 = vdwg.mxu0
    %7474 = vmatpush.bf16.msra.mxu0 %v6842
    %7475 = vmatpush.bf16.msra.mxu0 %v6834
    %7476 = vmatpush.bf16.msra.mxu0 %v6826
    %7477 = vmatpush.bf16.msra.mxu0 %v6818
    %7478 = vmatpush.bf16.msra.mxu0 %v6810
    %7479 = vmatpush.bf16.msra.mxu0 %v6802
    %7480 = vmatpush.bf16.msra.mxu0 %v6794
    %7481 = vmatpush.bf16.msra.mxu0 %v6786
    %7482 = vmatmul.bf16.gmra.mxu0 %v5848
    %v7483 = vpop.f32.mrf.mxu0
    %v7484 = vadd.f32 %v7470, %v7483
    %v7485 = vpop.f32.mrf.mxu0
    %v7486 = vadd.f32 %v7472, %v7485
    %7487 = vdwg.mxu0
    %7488 = vmatpush.bf16.msra.mxu0 0
    %7489 = vmatpush.bf16.msra.mxu0 0
    %7490 = vmatpush.bf16.msra.mxu0 0
    %7491 = vmatpush.bf16.msra.mxu0 0
    %7492 = vmatpush.bf16.msra.mxu0 0
    %7493 = vmatpush.bf16.msra.mxu0 0
    %7494 = vmatpush.bf16.msra.mxu0 0
    %7495 = vmatpush.bf16.msra.mxu0 %v6850
    %7496 = vmatmul.bf16.gmra.mxu0 %v7052
    %v7497 = vpop.f32.mrf.mxu0
    %v7498 = vadd.f32 %v7484, %v7497
    %v7499 = vpop.f32.mrf.mxu0
    %v7500 = vadd.f32 %v7486, %v7499
    %7501 = vdwg.mxu0
    %v7502 = vadd.f32 %v5822, %v7106
    %v7503 = vadd.f32 %v5823, %v7162
    %v7504 = vadd.f32 %v5824, %v7218
    %v7505 = vadd.f32 %v5825, %v7274
    %v7506 = vadd.f32 %v5826, %v7330
    %v7507 = vadd.f32 %v5827, %v7386
    %v7508 = vadd.f32 %v5828, %v7442
    %v7509 = vadd.f32 %v5829, %v7498
    %v7510 = vadd.f32 %v5830, %v7108
    %v7511 = vadd.f32 %v5831, %v7164
    %v7512 = vadd.f32 %v5832, %v7220
    %v7513 = vadd.f32 %v5833, %v7276
    %v7514 = vadd.f32 %v5834, %v7332
    %v7515 = vadd.f32 %v5835, %v7388
    %v7516 = vadd.f32 %v5836, %v7444
    %v7517 = vadd.f32 %v5837, %v7500
    %v7518 = vmax.f32 %v7502, 0.0
    %v7519 = vmax.f32 %v7503, 0.0
    %v7520 = vmax.f32 %v7504, 0.0
    %v7521 = vmax.f32 %v7505, 0.0
    %v7522 = vmax.f32 %v7506, 0.0
    %v7523 = vmax.f32 %v7507, 0.0
    %v7524 = vmax.f32 %v7508, 0.0
    %v7525 = vmax.f32 %v7509, 0.0
    %v7526 = vmax.f32 %v7510, 0.0
    %v7527 = vmax.f32 %v7511, 0.0
    %v7528 = vmax.f32 %v7512, 0.0
    %v7529 = vmax.f32 %v7513, 0.0
    %v7530 = vmax.f32 %v7514, 0.0
    %v7531 = vmax.f32 %v7515, 0.0
    %v7532 = vmax.f32 %v7516, 0.0
    %v7533 = vmax.f32 %v7517, 0.0
    %7534 = vst [vmem:[#allocation14] sm:$0xff] %v7518
    %7535 = vst [vmem:[#allocation14 + $0x8] sm:$0xff] %v7519
    %7536 = vst [vmem:[#allocation14 + $0x10] sm:$0xff] %v7520
    %7537 = vst [vmem:[#allocation14 + $0x18] sm:$0xff] %v7521
    %7538 = vst [vmem:[#allocation14 + $0x20] sm:$0xff] %v7522
    %7539 = vst [vmem:[#allocation14 + $0x28] sm:$0xff] %v7523
    %7540 = vst [vmem:[#allocation14 + $0x30] sm:$0xff] %v7524
    %7541 = vst [vmem:[#allocation14 + $0x38] sm:$0xff] %v7525
    %7542 = vst [vmem:[#allocation14 + $0x40] sm:$0xff] %v7526
    %7543 = vst [vmem:[#allocation14 + $0x48] sm:$0xff] %v7527
    %7544 = vst [vmem:[#allocation14 + $0x50] sm:$0xff] %v7528
    %7545 = vst [vmem:[#allocation14 + $0x58] sm:$0xff] %v7529
    %7546 = vst [vmem:[#allocation14 + $0x60] sm:$0xff] %v7530
    %7547 = vst [vmem:[#allocation14 + $0x68] sm:$0xff] %v7531
    %7548 = vst [vmem:[#allocation14 + $0x70] sm:$0xff] %v7532
    %7549 = vst [vmem:[#allocation14 + $0x78] sm:$0xff] %v7533
    // Predicated region
    $region54: #{tpu_custom_call.1} parent=1 // pred_check
      _
    $region55: #{tpu_custom_call.1} parent=1 // pred_check_branch
      %7551 = sbr.rel (0) target = $region57
    $region56: #{tpu_custom_call.1} parent=1 // pred_region
      %7553 = vsyncadd [#allocation5], 0
      %s7554 = sshll.u32 [#allocation14], 4
      %s7555 = int_to_ptr.vmem [resolvable:$true] %s7554
      %s7556 = sshll.u32 %s7, 4
      %s7557 = int_to_ptr.hbm [resolvable:$true] %s7556
      %7562 = dma.vmem_to_hbm [thread:$0]  %s7555, 2048, %s7557, [#allocation5], 1024, 1024, 64
    $region57: #{tpu_custom_call.1} parent=1 // pred_fallthru
      _
    // Predicated region
    $region58: #{tpu_custom_call.1} parent=1 // pred_check
      _
    $region59: #{tpu_custom_call.1} parent=1 // pred_check_branch
      %7564 = sbr.rel (0) target = $region61
    $region60: #{tpu_custom_call.1} parent=1 // pred_region
      %7566 = dma.done [#allocation5], 2048
    $region61: #{tpu_custom_call.1} parent=1 // pred_fallthru
      _
    %7567 = vsyncpa [#allocation4], 1
    %7568 = vsyncpa [#allocation7], 1
    %7569 = vsyncpa [#allocation10], 1
    %7570 = vsyncpa [#allocation13], 1
    %7571 = vsyncpa [#allocation5], 1

</llo_original>
